<compile_context>
chip_gen: v5e
topology: v5e:2x2
jax: 0.10.0
libtpu: 0.0.40
codegen_flags: <defaults>
</compile_context>

<pallas_src>
import functools

import jax
import jax.numpy as jnp
from jax.experimental import pallas as pl
from jax.experimental.pallas import tpu as pltpu


# ----------------------------------------------------------------------------
# In-kernel helpers (traced inline; all sizes are static Python ints).
# ----------------------------------------------------------------------------
def _zero_border(p_ref):
    """Zero the 1-pixel spatial halo of a (bn, Hc+2, Wc+2, C) VMEM scratch."""
    bn, hp2, wp2, c = p_ref.shape
    zrow = jnp.zeros((bn, 1, wp2, c), p_ref.dtype)
    p_ref[:, 0:1, :, :] = zrow
    p_ref[:, hp2 - 1:hp2, :, :] = zrow
    zcol = jnp.zeros((bn, hp2, 1, c), p_ref.dtype)
    p_ref[:, :, 0:1, :] = zcol
    p_ref[:, :, wp2 - 1:wp2, :] = zcol


def _conv3x3_relu_im2col(xp_ref, wv, bv, Hc, Wc, Ci, bn):
    """Small-Cin conv: full 9-tap im2col -> ONE matmul with K = 9*Ci.

    xp_ref: (bn, Hc+2, Wc+2, Ci) f32 zero-padded input (VMEM ref)
    wv    : (9*Ci, Co) bf16, tap order (kh, kw, ci)
    bv    : (1, Co) f32
    returns (bn*Hc*Wc, Co) f32 post-ReLU
    """
    patches = []
    for b in range(bn):
        taps = [xp_ref[b, kh:kh + Hc, kw:kw + Wc, :].reshape(Hc * Wc, Ci)
                for kh in range(3) for kw in range(3)]
        patches.append(jnp.concatenate(taps, axis=-1).astype(jnp.bfloat16))
    patch = jnp.concatenate(patches, axis=0)            # (bn*Hc*Wc, 9*Ci)
    acc = jnp.dot(patch, wv, preferred_element_type=jnp.float32)
    return jnp.maximum(acc + bv, 0.0)


def _conv3x3_relu_fusedk(xp_ref, w_ref, bv, Hc, Wc, Ci, Co, bn):
    """Wide-Cin conv: kw folded into K (K = 3*Ci), 3 matmuls (one per kh).

    The kw lane-concat is built once per conv (not per kh) and re-sliced.
    xp_ref: (bn, Hc+2, Wc+2, Ci) f32 zero-padded input (VMEM ref)
    w_ref : (3, 3*Ci, Co) bf16 ref (per-kh weight, col = kw*Ci + ci)
    bv    : (1, Co) f32
    returns (bn*Hc*Wc, Co) f32 post-ReLU
    """
    cats = []
    for b in range(bn):
        cat = jnp.concatenate(
            [xp_ref[b, :, kw:kw + Wc, :] for kw in range(3)], axis=-1)
        cats.append(cat.astype(jnp.bfloat16))           # (Hc+2, Wc, 3*Ci)
    acc = jnp.zeros((bn * Hc * Wc, Co), jnp.float32)
    for kh in range(3):
        patch = jnp.concatenate(
            [cats[b][kh:kh + Hc].reshape(Hc * Wc, 3 * Ci) for b in range(bn)],
            axis=0)                                      # (bn*Hc*Wc, 3*Ci)
        acc = acc + jnp.dot(patch, w_ref[kh],
                            preferred_element_type=jnp.float32)
    return jnp.maximum(acc + bv, 0.0)


def _maxpool2x2(act, bn, Hc, Wc, Co):
    """2x2 / stride-2 max-pool, entirely register-level (no VMEM staging)."""
    Hp, Wp = Hc // 2, Wc // 2
    a = act.reshape(bn, Hp, 2, Wc, Co)
    h = jnp.maximum(a[:, :, 0], a[:, :, 1])              # pool over H
    g = h.reshape(bn, Hp, Wp, 2, Co)
    return jnp.maximum(g[:, :, :, 0], g[:, :, :, 1])     # pool over W


# ----------------------------------------------------------------------------
# Fused whole-network kernel: conv1..conv4 on VMEM-resident activations.
# ----------------------------------------------------------------------------
def _outer_part_kernel(x_ref, w1_ref, b1_ref, w2_ref, b2_ref, w3_ref, b3_ref,
                       w4_ref, b4_ref, o_ref, p0, p1, p2, p3,
                       *, bn, H, W, Cin, C1, C2, C3, C4):
    H1, W1 = H // 2, W // 2
    H2, W2 = H1 // 2, W1 // 2
    H3, W3 = H2 // 2, W2 // 2

    # Zero only the 1-pixel halo borders each step; interiors are fully
    # overwritten below.  (A program_id==0 one-shot would break under a
    # "parallel" grid axis split across TensorCores.)
    for p in (p0, p1, p2, p3):
        _zero_border(p)

    # ---- layer 1: conv(Cin -> C1) + ReLU + 2x2/s2 max-pool -----------------
    p0[:, 1:H + 1, 1:W + 1, :] = x_ref[...]
    a1 = _conv3x3_relu_im2col(p0, w1_ref[...], b1_ref[...], H, W, Cin, bn)
    p1[:, 1:H1 + 1, 1:W1 + 1, :] = _maxpool2x2(a1, bn, H, W, C1)

    # ---- layer 2: conv(C1 -> C2) + ReLU + max-pool --------------------------
    a2 = _conv3x3_relu_fusedk(p1, w2_ref, b2_ref[...], H1, W1, C1, C2, bn)
    p2[:, 1:H2 + 1, 1:W2 + 1, :] = _maxpool2x2(a2, bn, H1, W1, C2)

    # ---- layer 3: conv(C2 -> C3) + ReLU + max-pool --------------------------
    a3 = _conv3x3_relu_fusedk(p2, w3_ref, b3_ref[...], H2, W2, C2, C3, bn)
    p3[:, 1:H3 + 1, 1:W3 + 1, :] = _maxpool2x2(a3, bn, H2, W2, C3)

    # ---- layer 4: conv(C3 -> C4) + ReLU (no pool) -> output -----------------
    a4 = _conv3x3_relu_fusedk(p3, w4_ref, b4_ref[...], H3, W3, C3, C4, bn)
    o_ref[...] = a4.reshape(bn, H3, W3, C4).astype(o_ref.dtype)


# ----------------------------------------------------------------------------
# Wrapper
# ----------------------------------------------------------------------------
def outer_part_forward_impl(x, params):
    (w1, b1), (w2, b2), (w3, b3), (w4, b4) = params
    N, H, W, Cin = x.shape
    assert H % 8 == 0 and W % 8 == 0, "three 2x2/s2 max-pools need H, W % 8 == 0"
    C1, C2, C3, C4 = (w1.shape[-1], w2.shape[-1], w3.shape[-1], w4.shape[-1])

    # Keep a size-2 "parallel" axis (v7x megacore) when possible; images
    # inside a chunk are folded into the matmul M dimension.
    num_chunks = 2 if (N % 2 == 0 and N >= 2) else 1
    bn = N // num_chunks

    H1, W1 = H // 2, W // 2
    H2, W2 = H1 // 2, W1 // 2
    H3, W3 = H2 // 2, W2 // 2

    # Weight packing: layer 1 -> full im2col (9*Cin, C1); layers 2-4 -> kw
    # folded into K (3, 3*Ci, Co).  bf16 operands, f32 accumulation.
    w1_r = w1.reshape(9 * Cin, C1).astype(jnp.bfloat16)
    w2_r = w2.reshape(3, 3 * C1, C2).astype(jnp.bfloat16)
    w3_r = w3.reshape(3, 3 * C2, C3).astype(jnp.bfloat16)
    w4_r = w4.reshape(3, 3 * C3, C4).astype(jnp.bfloat16)
    b1_r = b1.reshape(1, C1).astype(jnp.float32)
    b2_r = b2.reshape(1, C2).astype(jnp.float32)
    b3_r = b3.reshape(1, C3).astype(jnp.float32)
    b4_r = b4.reshape(1, C4).astype(jnp.float32)

    kernel = functools.partial(_outer_part_kernel, bn=bn, H=H, W=W, Cin=Cin,
                               C1=C1, C2=C2, C3=C3, C4=C4)
    const2 = lambda c: (0, 0)
    const3 = lambda c: (0, 0, 0)

    return pl.pallas_call(
        kernel,
        out_shape=jax.ShapeDtypeStruct((N, H3, W3, C4), jnp.float32),
        grid=(num_chunks,),
        in_specs=[
            pl.BlockSpec((bn, H, W, Cin), lambda c: (c, 0, 0, 0)),
            pl.BlockSpec((9 * Cin, C1), const2),
            pl.BlockSpec((1, C1), const2),
            pl.BlockSpec((3, 3 * C1, C2), const3),
            pl.BlockSpec((1, C2), const2),
            pl.BlockSpec((3, 3 * C2, C3), const3),
            pl.BlockSpec((1, C3), const2),
            pl.BlockSpec((3, 3 * C3, C4), const3),
            pl.BlockSpec((1, C4), const2),
        ],
        out_specs=pl.BlockSpec((bn, H3, W3, C4), lambda c: (c, 0, 0, 0)),
        scratch_shapes=[
            pltpu.VMEM((bn, H + 2, W + 2, Cin), jnp.float32),
            pltpu.VMEM((bn, H1 + 2, W1 + 2, C1), jnp.float32),
            pltpu.VMEM((bn, H2 + 2, W2 + 2, C2), jnp.float32),
            pltpu.VMEM((bn, H3 + 2, W3 + 2, C3), jnp.float32),
        ],
        compiler_params=pltpu.CompilerParams(
            dimension_semantics=("parallel",)),
    )(x, w1_r, b1_r, w2_r, b2_r, w3_r, b3_r, w4_r, b4_r)


outer_part_forward = jax.jit(outer_part_forward_impl)


# ----------------------------------------------------------------------------
# Parameter init (matches the module's layer shapes / PyTorch-style init)
# ----------------------------------------------------------------------------
def init_params(key, inc):
    chans = [(inc, 64), (64, 128), (128, 256), (256, 256)]
    params = []
    for i, (ci, co) in enumerate(chans):
        kw_key, kb_key = jax.random.split(jax.random.fold_in(key, i))
        fan_in = 3 * 3 * ci
        bound = 1.0 / jnp.sqrt(fan_in)
        w = jax.random.uniform(kw_key, (3, 3, ci, co), jnp.float32,
                               -bound, bound)
        b = jax.random.uniform(kb_key, (co,), jnp.float32, -bound, bound)
        params.append((w, b))
    return params


# ----------------------------------------------------------------------------
# Pure-JAX f32 reference (validation only)
# ----------------------------------------------------------------------------
def _ref_conv_relu(x, w, b):
    y = jax.lax.conv_general_dilated(
        x, w, window_strides=(1, 1), padding="SAME",
        dimension_numbers=("NHWC", "HWIO", "NHWC"))
    return jnp.maximum(y + b[None, None, None, :], 0.0)


def _ref_maxpool(x):
    a = x[:, 0::2, 0::2, :]
    b = x[:, 0::2, 1::2, :]
    c = x[:, 1::2, 0::2, :]
    d = x[:, 1::2, 1::2, :]
    return jnp.maximum(jnp.maximum(a, b), jnp.maximum(c, d))


def ref_forward(x, params):
    (w1, b1), (w2, b2), (w3, b3), (w4, b4) = params
    x = _ref_maxpool(_ref_conv_relu(x, w1, b1))
    x = _ref_maxpool(_ref_conv_relu(x, w2, b2))
    x = _ref_maxpool(_ref_conv_relu(x, w3, b3))
    x = _ref_conv_relu(x, w4, b4)
    return x


if __name__ == "__main__":
    key = jax.random.PRNGKey(0)
    xkey, pkey = jax.random.split(key)

    N, Cin, H, W = 2, 4, 16, 16           # small shapes; NHWC layout
    x = jax.random.normal(xkey, (N, H, W, Cin), jnp.float32)
    params = init_params(pkey, Cin)

    out = jax.block_until_ready(outer_part_forward(x, params))
    assert out.shape == (N, H // 8, W // 8, 256), out.shape

    ref = ref_forward(x, params)
    max_err = float(jnp.max(jnp.abs(out - ref)))
    # bf16 matmul operands (f32 accumulation) vs pure-f32 reference.
    assert jnp.allclose(out, ref, rtol=2e-2, atol=1e-2), max_err

    print("KERNEL_OK")
</pallas_src>

<mosaic_0001>
module attributes {stable_mosaic.version = 11 : i64} {
  func.func @_outer_part_kernel(%arg0: i32, %arg1: memref<1x16x16x4xf32, #tpu.memory_space<vmem>>, %arg2: memref<36x64xbf16, #tpu.memory_space<vmem>>, %arg3: memref<1x64xf32, #tpu.memory_space<vmem>>, %arg4: memref<3x192x128xbf16, #tpu.memory_space<vmem>>, %arg5: memref<1x128xf32, #tpu.memory_space<vmem>>, %arg6: memref<3x384x256xbf16, #tpu.memory_space<vmem>>, %arg7: memref<1x256xf32, #tpu.memory_space<vmem>>, %arg8: memref<3x768x256xbf16, #tpu.memory_space<vmem>>, %arg9: memref<1x256xf32, #tpu.memory_space<vmem>>, %arg10: memref<1x2x2x256xf32, #tpu.memory_space<vmem>>, %arg11: memref<1x18x18x4xf32, #tpu.memory_space<vmem>>, %arg12: memref<1x10x10x64xf32, #tpu.memory_space<vmem>>, %arg13: memref<1x6x6x128xf32, #tpu.memory_space<vmem>>, %arg14: memref<1x4x4x256xf32, #tpu.memory_space<vmem>>) attributes {dimension_semantics = [#tpu.dimension_semantics<parallel>], iteration_bounds = array<i64: 2>, scalar_prefetch = 0 : i64, scratch_operands = 4 : i64, tpu.core_type = #tpu.core_type<tc>, window_params = [{transform_indices = @transform_0, window_bounds = array<i64: 1, 16, 16, 4>}, {pipeline_mode = #tpu.pipeline_mode<synchronous>, transform_indices = @transform_1, window_bounds = array<i64: 36, 64>}, {pipeline_mode = #tpu.pipeline_mode<synchronous>, transform_indices = @transform_2, window_bounds = array<i64: 1, 64>}, {pipeline_mode = #tpu.pipeline_mode<synchronous>, transform_indices = @transform_3, window_bounds = array<i64: 3, 192, 128>}, {pipeline_mode = #tpu.pipeline_mode<synchronous>, transform_indices = @transform_4, window_bounds = array<i64: 1, 128>}, {pipeline_mode = #tpu.pipeline_mode<synchronous>, transform_indices = @transform_5, window_bounds = array<i64: 3, 384, 256>}, {pipeline_mode = #tpu.pipeline_mode<synchronous>, transform_indices = @transform_6, window_bounds = array<i64: 1, 256>}, {pipeline_mode = #tpu.pipeline_mode<synchronous>, transform_indices = @transform_7, window_bounds = array<i64: 3, 768, 256>}, {pipeline_mode = #tpu.pipeline_mode<synchronous>, transform_indices = @transform_8, window_bounds = array<i64: 1, 256>}, {transform_indices = @transform_9, window_bounds = array<i64: 1, 2, 2, 256>}]} {
    %cst = arith.constant 0.000000e+00 : f32
    %0 = vector.broadcast %cst : f32 to vector<1x1x18x4xf32>
    %c0 = arith.constant 0 : index
    %c0_0 = arith.constant 0 : index
    %c0_1 = arith.constant 0 : index
    %c0_2 = arith.constant 0 : index
    %1 = vector.load %arg11[%c0, %c0_0, %c0_1, %c0_2] : memref<1x18x18x4xf32, #tpu.memory_space<vmem>>, vector<1x1x18x4xf32>
    tpu.vector_store %arg11[%c0, %c0_0, %c0_1, %c0_2], %0 {strides = array<i32>} : memref<1x18x18x4xf32, #tpu.memory_space<vmem>>, vector<1x1x18x4xf32>,
    %c0_3 = arith.constant 0 : index
    %c17 = arith.constant 17 : index
    %c0_4 = arith.constant 0 : index
    %c0_5 = arith.constant 0 : index
    %2 = vector.load %arg11[%c0_3, %c17, %c0_4, %c0_5] : memref<1x18x18x4xf32, #tpu.memory_space<vmem>>, vector<1x1x18x4xf32>
    tpu.vector_store %arg11[%c0_3, %c17, %c0_4, %c0_5], %0 {strides = array<i32>} : memref<1x18x18x4xf32, #tpu.memory_space<vmem>>, vector<1x1x18x4xf32>,
    %cst_6 = arith.constant 0.000000e+00 : f32
    %3 = vector.broadcast %cst_6 : f32 to vector<1x18x1x4xf32>
    %c0_7 = arith.constant 0 : index
    %c0_8 = arith.constant 0 : index
    %c0_9 = arith.constant 0 : index
    %c0_10 = arith.constant 0 : index
    %4 = vector.load %arg11[%c0_7, %c0_8, %c0_9, %c0_10] : memref<1x18x18x4xf32, #tpu.memory_space<vmem>>, vector<1x18x1x4xf32>
    tpu.vector_store %arg11[%c0_7, %c0_8, %c0_9, %c0_10], %3 {strides = array<i32>} : memref<1x18x18x4xf32, #tpu.memory_space<vmem>>, vector<1x18x1x4xf32>,
    %c0_11 = arith.constant 0 : index
    %c0_12 = arith.constant 0 : index
    %c17_13 = arith.constant 17 : index
    %c0_14 = arith.constant 0 : index
    %5 = vector.load %arg11[%c0_11, %c0_12, %c17_13, %c0_14] : memref<1x18x18x4xf32, #tpu.memory_space<vmem>>, vector<1x18x1x4xf32>
    tpu.vector_store %arg11[%c0_11, %c0_12, %c17_13, %c0_14], %3 {strides = array<i32>} : memref<1x18x18x4xf32, #tpu.memory_space<vmem>>, vector<1x18x1x4xf32>,
    %cst_15 = arith.constant 0.000000e+00 : f32
    %6 = vector.broadcast %cst_15 : f32 to vector<1x1x10x64xf32>
    %c0_16 = arith.constant 0 : index
    %c0_17 = arith.constant 0 : index
    %c0_18 = arith.constant 0 : index
    %c0_19 = arith.constant 0 : index
    %7 = vector.load %arg12[%c0_16, %c0_17, %c0_18, %c0_19] : memref<1x10x10x64xf32, #tpu.memory_space<vmem>>, vector<1x1x10x64xf32>
    tpu.vector_store %arg12[%c0_16, %c0_17, %c0_18, %c0_19], %6 {strides = array<i32>} : memref<1x10x10x64xf32, #tpu.memory_space<vmem>>, vector<1x1x10x64xf32>,
    %c0_20 = arith.constant 0 : index
    %c9 = arith.constant 9 : index
    %c0_21 = arith.constant 0 : index
    %c0_22 = arith.constant 0 : index
    %8 = vector.load %arg12[%c0_20, %c9, %c0_21, %c0_22] : memref<1x10x10x64xf32, #tpu.memory_space<vmem>>, vector<1x1x10x64xf32>
    tpu.vector_store %arg12[%c0_20, %c9, %c0_21, %c0_22], %6 {strides = array<i32>} : memref<1x10x10x64xf32, #tpu.memory_space<vmem>>, vector<1x1x10x64xf32>,
    %cst_23 = arith.constant 0.000000e+00 : f32
    %9 = vector.broadcast %cst_23 : f32 to vector<1x10x1x64xf32>
    %c0_24 = arith.constant 0 : index
    %c0_25 = arith.constant 0 : index
    %c0_26 = arith.constant 0 : index
    %c0_27 = arith.constant 0 : index
    %10 = vector.load %arg12[%c0_24, %c0_25, %c0_26, %c0_27] : memref<1x10x10x64xf32, #tpu.memory_space<vmem>>, vector<1x10x1x64xf32>
    tpu.vector_store %arg12[%c0_24, %c0_25, %c0_26, %c0_27], %9 {strides = array<i32>} : memref<1x10x10x64xf32, #tpu.memory_space<vmem>>, vector<1x10x1x64xf32>,
    %c0_28 = arith.constant 0 : index
    %c0_29 = arith.constant 0 : index
    %c9_30 = arith.constant 9 : index
    %c0_31 = arith.constant 0 : index
    %11 = vector.load %arg12[%c0_28, %c0_29, %c9_30, %c0_31] : memref<1x10x10x64xf32, #tpu.memory_space<vmem>>, vector<1x10x1x64xf32>
    tpu.vector_store %arg12[%c0_28, %c0_29, %c9_30, %c0_31], %9 {strides = array<i32>} : memref<1x10x10x64xf32, #tpu.memory_space<vmem>>, vector<1x10x1x64xf32>,
    %cst_32 = arith.constant 0.000000e+00 : f32
    %12 = vector.broadcast %cst_32 : f32 to vector<1x1x6x128xf32>
    %c0_33 = arith.constant 0 : index
    %c0_34 = arith.constant 0 : index
    %c0_35 = arith.constant 0 : index
    %c0_36 = arith.constant 0 : index
    %13 = vector.load %arg13[%c0_33, %c0_34, %c0_35, %c0_36] : memref<1x6x6x128xf32, #tpu.memory_space<vmem>>, vector<1x1x6x128xf32>
    tpu.vector_store %arg13[%c0_33, %c0_34, %c0_35, %c0_36], %12 {strides = array<i32>} : memref<1x6x6x128xf32, #tpu.memory_space<vmem>>, vector<1x1x6x128xf32>,
    %c0_37 = arith.constant 0 : index
    %c5 = arith.constant 5 : index
    %c0_38 = arith.constant 0 : index
    %c0_39 = arith.constant 0 : index
    %14 = vector.load %arg13[%c0_37, %c5, %c0_38, %c0_39] : memref<1x6x6x128xf32, #tpu.memory_space<vmem>>, vector<1x1x6x128xf32>
    tpu.vector_store %arg13[%c0_37, %c5, %c0_38, %c0_39], %12 {strides = array<i32>} : memref<1x6x6x128xf32, #tpu.memory_space<vmem>>, vector<1x1x6x128xf32>,
    %cst_40 = arith.constant 0.000000e+00 : f32
    %15 = vector.broadcast %cst_40 : f32 to vector<1x6x1x128xf32>
    %c0_41 = arith.constant 0 : index
    %c0_42 = arith.constant 0 : index
    %c0_43 = arith.constant 0 : index
    %c0_44 = arith.constant 0 : index
    %16 = vector.load %arg13[%c0_41, %c0_42, %c0_43, %c0_44] : memref<1x6x6x128xf32, #tpu.memory_space<vmem>>, vector<1x6x1x128xf32>
    tpu.vector_store %arg13[%c0_41, %c0_42, %c0_43, %c0_44], %15 {strides = array<i32>} : memref<1x6x6x128xf32, #tpu.memory_space<vmem>>, vector<1x6x1x128xf32>,
    %c0_45 = arith.constant 0 : index
    %c0_46 = arith.constant 0 : index
    %c5_47 = arith.constant 5 : index
    %c0_48 = arith.constant 0 : index
    %17 = vector.load %arg13[%c0_45, %c0_46, %c5_47, %c0_48] : memref<1x6x6x128xf32, #tpu.memory_space<vmem>>, vector<1x6x1x128xf32>
    tpu.vector_store %arg13[%c0_45, %c0_46, %c5_47, %c0_48], %15 {strides = array<i32>} : memref<1x6x6x128xf32, #tpu.memory_space<vmem>>, vector<1x6x1x128xf32>,
    %cst_49 = arith.constant 0.000000e+00 : f32
    %18 = vector.broadcast %cst_49 : f32 to vector<1x1x4x256xf32>
    %c0_50 = arith.constant 0 : index
    %c0_51 = arith.constant 0 : index
    %c0_52 = arith.constant 0 : index
    %c0_53 = arith.constant 0 : index
    %19 = vector.load %arg14[%c0_50, %c0_51, %c0_52, %c0_53] : memref<1x4x4x256xf32, #tpu.memory_space<vmem>>, vector<1x1x4x256xf32>
    tpu.vector_store %arg14[%c0_50, %c0_51, %c0_52, %c0_53], %18 {strides = array<i32>} : memref<1x4x4x256xf32, #tpu.memory_space<vmem>>, vector<1x1x4x256xf32>,
    %c0_54 = arith.constant 0 : index
    %c3 = arith.constant 3 : index
    %c0_55 = arith.constant 0 : index
    %c0_56 = arith.constant 0 : index
    %20 = vector.load %arg14[%c0_54, %c3, %c0_55, %c0_56] : memref<1x4x4x256xf32, #tpu.memory_space<vmem>>, vector<1x1x4x256xf32>
    tpu.vector_store %arg14[%c0_54, %c3, %c0_55, %c0_56], %18 {strides = array<i32>} : memref<1x4x4x256xf32, #tpu.memory_space<vmem>>, vector<1x1x4x256xf32>,
    %cst_57 = arith.constant 0.000000e+00 : f32
    %21 = vector.broadcast %cst_57 : f32 to vector<1x4x1x256xf32>
    %c0_58 = arith.constant 0 : index
    %c0_59 = arith.constant 0 : index
    %c0_60 = arith.constant 0 : index
    %c0_61 = arith.constant 0 : index
    %22 = vector.load %arg14[%c0_58, %c0_59, %c0_60, %c0_61] : memref<1x4x4x256xf32, #tpu.memory_space<vmem>>, vector<1x4x1x256xf32>
    tpu.vector_store %arg14[%c0_58, %c0_59, %c0_60, %c0_61], %21 {strides = array<i32>} : memref<1x4x4x256xf32, #tpu.memory_space<vmem>>, vector<1x4x1x256xf32>,
    %c0_62 = arith.constant 0 : index
    %c0_63 = arith.constant 0 : index
    %c3_64 = arith.constant 3 : index
    %c0_65 = arith.constant 0 : index
    %23 = vector.load %arg14[%c0_62, %c0_63, %c3_64, %c0_65] : memref<1x4x4x256xf32, #tpu.memory_space<vmem>>, vector<1x4x1x256xf32>
    tpu.vector_store %arg14[%c0_62, %c0_63, %c3_64, %c0_65], %21 {strides = array<i32>} : memref<1x4x4x256xf32, #tpu.memory_space<vmem>>, vector<1x4x1x256xf32>,
    %c0_66 = arith.constant 0 : index
    %c0_67 = arith.constant 0 : index
    %c0_68 = arith.constant 0 : index
    %c0_69 = arith.constant 0 : index
    %24 = vector.load %arg1[%c0_66, %c0_67, %c0_68, %c0_69] : memref<1x16x16x4xf32, #tpu.memory_space<vmem>>, vector<1x16x16x4xf32>
    %c0_70 = arith.constant 0 : index
    %c1 = arith.constant 1 : index
    %c1_71 = arith.constant 1 : index
    %c0_72 = arith.constant 0 : index
    %25 = vector.load %arg11[%c0_70, %c1, %c1_71, %c0_72] : memref<1x18x18x4xf32, #tpu.memory_space<vmem>>, vector<1x16x16x4xf32>
    tpu.vector_store %arg11[%c0_70, %c1, %c1_71, %c0_72], %24 {strides = array<i32>} : memref<1x18x18x4xf32, #tpu.memory_space<vmem>>, vector<1x16x16x4xf32>,
    %c0_73 = arith.constant 0 : index
    %c0_74 = arith.constant 0 : index
    %26 = vector.load %arg2[%c0_73, %c0_74] : memref<36x64xbf16, #tpu.memory_space<vmem>>, vector<36x64xbf16>
    %c0_75 = arith.constant 0 : index
    %c0_76 = arith.constant 0 : index
    %27 = vector.load %arg3[%c0_75, %c0_76] : memref<1x64xf32, #tpu.memory_space<vmem>>, vector<1x64xf32>
    %c0_77 = arith.constant 0 : index
    %c0_78 = arith.constant 0 : index
    %c0_79 = arith.constant 0 : index
    %c0_80 = arith.constant 0 : index
    %28 = vector.load %arg11[%c0_77, %c0_78, %c0_79, %c0_80] : memref<1x18x18x4xf32, #tpu.memory_space<vmem>>, vector<1x16x16x4xf32>
    %29 = vector.shape_cast %28 : vector<1x16x16x4xf32> to vector<16x16x4xf32>
    %30 = vector.shape_cast %29 : vector<16x16x4xf32> to vector<256x4xf32>
    %c0_81 = arith.constant 0 : index
    %c0_82 = arith.constant 0 : index
    %c1_83 = arith.constant 1 : index
    %c0_84 = arith.constant 0 : index
    %31 = vector.load %arg11[%c0_81, %c0_82, %c1_83, %c0_84] : memref<1x18x18x4xf32, #tpu.memory_space<vmem>>, vector<1x16x16x4xf32>
    %32 = vector.shape_cast %31 : vector<1x16x16x4xf32> to vector<16x16x4xf32>
    %33 = vector.shape_cast %32 : vector<16x16x4xf32> to vector<256x4xf32>
    %c0_85 = arith.constant 0 : index
    %c0_86 = arith.constant 0 : index
    %c2 = arith.constant 2 : index
    %c0_87 = arith.constant 0 : index
    %34 = vector.load %arg11[%c0_85, %c0_86, %c2, %c0_87] : memref<1x18x18x4xf32, #tpu.memory_space<vmem>>, vector<1x16x16x4xf32>
    %35 = vector.shape_cast %34 : vector<1x16x16x4xf32> to vector<16x16x4xf32>
    %36 = vector.shape_cast %35 : vector<16x16x4xf32> to vector<256x4xf32>
    %c0_88 = arith.constant 0 : index
    %c1_89 = arith.constant 1 : index
    %c0_90 = arith.constant 0 : index
    %c0_91 = arith.constant 0 : index
    %37 = vector.load %arg11[%c0_88, %c1_89, %c0_90, %c0_91] : memref<1x18x18x4xf32, #tpu.memory_space<vmem>>, vector<1x16x16x4xf32>
    %38 = vector.shape_cast %37 : vector<1x16x16x4xf32> to vector<16x16x4xf32>
    %39 = vector.shape_cast %38 : vector<16x16x4xf32> to vector<256x4xf32>
    %c0_92 = arith.constant 0 : index
    %c1_93 = arith.constant 1 : index
    %c1_94 = arith.constant 1 : index
    %c0_95 = arith.constant 0 : index
    %40 = vector.load %arg11[%c0_92, %c1_93, %c1_94, %c0_95] : memref<1x18x18x4xf32, #tpu.memory_space<vmem>>, vector<1x16x16x4xf32>
    %41 = vector.shape_cast %40 : vector<1x16x16x4xf32> to vector<16x16x4xf32>
    %42 = vector.shape_cast %41 : vector<16x16x4xf32> to vector<256x4xf32>
    %c0_96 = arith.constant 0 : index
    %c1_97 = arith.constant 1 : index
    %c2_98 = arith.constant 2 : index
    %c0_99 = arith.constant 0 : index
    %43 = vector.load %arg11[%c0_96, %c1_97, %c2_98, %c0_99] : memref<1x18x18x4xf32, #tpu.memory_space<vmem>>, vector<1x16x16x4xf32>
    %44 = vector.shape_cast %43 : vector<1x16x16x4xf32> to vector<16x16x4xf32>
    %45 = vector.shape_cast %44 : vector<16x16x4xf32> to vector<256x4xf32>
    %c0_100 = arith.constant 0 : index
    %c2_101 = arith.constant 2 : index
    %c0_102 = arith.constant 0 : index
    %c0_103 = arith.constant 0 : index
    %46 = vector.load %arg11[%c0_100, %c2_101, %c0_102, %c0_103] : memref<1x18x18x4xf32, #tpu.memory_space<vmem>>, vector<1x16x16x4xf32>
    %47 = vector.shape_cast %46 : vector<1x16x16x4xf32> to vector<16x16x4xf32>
    %48 = vector.shape_cast %47 : vector<16x16x4xf32> to vector<256x4xf32>
    %c0_104 = arith.constant 0 : index
    %c2_105 = arith.constant 2 : index
    %c1_106 = arith.constant 1 : index
    %c0_107 = arith.constant 0 : index
    %49 = vector.load %arg11[%c0_104, %c2_105, %c1_106, %c0_107] : memref<1x18x18x4xf32, #tpu.memory_space<vmem>>, vector<1x16x16x4xf32>
    %50 = vector.shape_cast %49 : vector<1x16x16x4xf32> to vector<16x16x4xf32>
    %51 = vector.shape_cast %50 : vector<16x16x4xf32> to vector<256x4xf32>
    %c0_108 = arith.constant 0 : index
    %c2_109 = arith.constant 2 : index
    %c2_110 = arith.constant 2 : index
    %c0_111 = arith.constant 0 : index
    %52 = vector.load %arg11[%c0_108, %c2_109, %c2_110, %c0_111] : memref<1x18x18x4xf32, #tpu.memory_space<vmem>>, vector<1x16x16x4xf32>
    %53 = vector.shape_cast %52 : vector<1x16x16x4xf32> to vector<16x16x4xf32>
    %54 = vector.shape_cast %53 : vector<16x16x4xf32> to vector<256x4xf32>
    %55 = tpu.concatenate %30, %33, %36, %39, %42, %45, %48, %51, %54 in 1 : vector<256x4xf32>, vector<256x4xf32>, vector<256x4xf32>, vector<256x4xf32>, vector<256x4xf32>, vector<256x4xf32>, vector<256x4xf32>, vector<256x4xf32>, vector<256x4xf32> -> vector<256x36xf32>
    %56 = arith.truncf %55 : vector<256x36xf32> to vector<256x36xbf16>
    %cst_112 = arith.constant dense<0.000000e+00> : vector<256x64xf32>
    %57 = tpu.matmul %56, %26, %cst_112 {dimension_numbers = #tpu.dot_dimension_numbers<[1], [0], [0], [1], [0, 0, 1, 1], [], []>} : vector<256x36xbf16>, vector<36x64xbf16>, vector<256x64xf32> -> vector<256x64xf32>
    %58 = vector.broadcast %27 : vector<1x64xf32> to vector<256x64xf32>
    %59 = arith.addf %57, %58 : vector<256x64xf32>
    %cst_113 = arith.constant 0.000000e+00 : f32
    %60 = vector.broadcast %cst_113 : f32 to vector<256x64xf32>
    %61 = arith.maximumf %59, %60 : vector<256x64xf32>
    %62 = vector.shape_cast %61 : vector<256x64xf32> to vector<1x8x2x16x64xf32>
    %63 = vector.extract_strided_slice %62 {offsets = [0, 0, 0, 0, 0], sizes = [1, 8, 1, 16, 64], strides = [1, 1, 1, 1, 1]} : vector<1x8x2x16x64xf32> to vector<1x8x1x16x64xf32>
    %64 = vector.shape_cast %63 : vector<1x8x1x16x64xf32> to vector<1x8x16x64xf32>
    %65 = vector.extract_strided_slice %62 {offsets = [0, 0, 1, 0, 0], sizes = [1, 8, 1, 16, 64], strides = [1, 1, 1, 1, 1]} : vector<1x8x2x16x64xf32> to vector<1x8x1x16x64xf32>
    %66 = vector.shape_cast %65 : vector<1x8x1x16x64xf32> to vector<1x8x16x64xf32>
    %67 = arith.maximumf %64, %66 : vector<1x8x16x64xf32>
    %68 = vector.shape_cast %67 : vector<1x8x16x64xf32> to vector<1x8x8x2x64xf32>
    %69 = vector.extract_strided_slice %68 {offsets = [0, 0, 0, 0, 0], sizes = [1, 8, 8, 1, 64], strides = [1, 1, 1, 1, 1]} : vector<1x8x8x2x64xf32> to vector<1x8x8x1x64xf32>
    %70 = vector.shape_cast %69 : vector<1x8x8x1x64xf32> to vector<1x8x8x64xf32>
    %71 = vector.extract_strided_slice %68 {offsets = [0, 0, 0, 1, 0], sizes = [1, 8, 8, 1, 64], strides = [1, 1, 1, 1, 1]} : vector<1x8x8x2x64xf32> to vector<1x8x8x1x64xf32>
    %72 = vector.shape_cast %71 : vector<1x8x8x1x64xf32> to vector<1x8x8x64xf32>
    %73 = arith.maximumf %70, %72 : vector<1x8x8x64xf32>
    %c0_114 = arith.constant 0 : index
    %c1_115 = arith.constant 1 : index
    %c1_116 = arith.constant 1 : index
    %c0_117 = arith.constant 0 : index
    %74 = vector.load %arg12[%c0_114, %c1_115, %c1_116, %c0_117] : memref<1x10x10x64xf32, #tpu.memory_space<vmem>>, vector<1x8x8x64xf32>
    tpu.vector_store %arg12[%c0_114, %c1_115, %c1_116, %c0_117], %73 {strides = array<i32>} : memref<1x10x10x64xf32, #tpu.memory_space<vmem>>, vector<1x8x8x64xf32>,
    %c0_118 = arith.constant 0 : index
    %c0_119 = arith.constant 0 : index
    %75 = vector.load %arg5[%c0_118, %c0_119] : memref<1x128xf32, #tpu.memory_space<vmem>>, vector<1x128xf32>
    %c0_120 = arith.constant 0 : index
    %c0_121 = arith.constant 0 : index
    %c0_122 = arith.constant 0 : index
    %c0_123 = arith.constant 0 : index
    %76 = vector.load %arg12[%c0_120, %c0_121, %c0_122, %c0_123] : memref<1x10x10x64xf32, #tpu.memory_space<vmem>>, vector<1x10x8x64xf32>
    %77 = vector.shape_cast %76 : vector<1x10x8x64xf32> to vector<10x8x64xf32>
    %c0_124 = arith.constant 0 : index
    %c0_125 = arith.constant 0 : index
    %c1_126 = arith.constant 1 : index
    %c0_127 = arith.constant 0 : index
    %78 = vector.load %arg12[%c0_124, %c0_125, %c1_126, %c0_127] : memref<1x10x10x64xf32, #tpu.memory_space<vmem>>, vector<1x10x8x64xf32>
    %79 = vector.shape_cast %78 : vector<1x10x8x64xf32> to vector<10x8x64xf32>
    %c0_128 = arith.constant 0 : index
    %c0_129 = arith.constant 0 : index
    %c2_130 = arith.constant 2 : index
    %c0_131 = arith.constant 0 : index
    %80 = vector.load %arg12[%c0_128, %c0_129, %c2_130, %c0_131] : memref<1x10x10x64xf32, #tpu.memory_space<vmem>>, vector<1x10x8x64xf32>
    %81 = vector.shape_cast %80 : vector<1x10x8x64xf32> to vector<10x8x64xf32>
    %82 = tpu.concatenate %77, %79, %81 in 2 : vector<10x8x64xf32>, vector<10x8x64xf32>, vector<10x8x64xf32> -> vector<10x8x192xf32>
    %83 = arith.truncf %82 : vector<10x8x192xf32> to vector<10x8x192xbf16>
    %cst_132 = arith.constant 0.000000e+00 : f32
    %84 = vector.broadcast %cst_132 : f32 to vector<64x128xf32>
    %85 = vector.extract_strided_slice %83 {offsets = [0, 0, 0], sizes = [8, 8, 192], strides = [1, 1, 1]} : vector<10x8x192xbf16> to vector<8x8x192xbf16>
    %86 = vector.shape_cast %85 : vector<8x8x192xbf16> to vector<64x192xbf16>
    %c0_133 = arith.constant 0 : index
    %c0_134 = arith.constant 0 : index
    %c0_135 = arith.constant 0 : index
    %87 = vector.load %arg4[%c0_133, %c0_134, %c0_135] : memref<3x192x128xbf16, #tpu.memory_space<vmem>>, vector<1x192x128xbf16>
    %88 = vector.shape_cast %87 : vector<1x192x128xbf16> to vector<192x128xbf16>
    %cst_136 = arith.constant dense<0.000000e+00> : vector<64x128xf32>
    %89 = tpu.matmul %86, %88, %cst_136 {dimension_numbers = #tpu.dot_dimension_numbers<[1], [0], [0], [1], [0, 0, 1, 1], [], []>} : vector<64x192xbf16>, vector<192x128xbf16>, vector<64x128xf32> -> vector<64x128xf32>
    %90 = arith.addf %84, %89 : vector<64x128xf32>
    %91 = vector.extract_strided_slice %83 {offsets = [1, 0, 0], sizes = [8, 8, 192], strides = [1, 1, 1]} : vector<10x8x192xbf16> to vector<8x8x192xbf16>
    %92 = vector.shape_cast %91 : vector<8x8x192xbf16> to vector<64x192xbf16>
    %c1_137 = arith.constant 1 : index
    %c0_138 = arith.constant 0 : index
    %c0_139 = arith.constant 0 : index
    %93 = vector.load %arg4[%c1_137, %c0_138, %c0_139] : memref<3x192x128xbf16, #tpu.memory_space<vmem>>, vector<1x192x128xbf16>
    %94 = vector.shape_cast %93 : vector<1x192x128xbf16> to vector<192x128xbf16>
    %cst_140 = arith.constant dense<0.000000e+00> : vector<64x128xf32>
    %95 = tpu.matmul %92, %94, %cst_140 {dimension_numbers = #tpu.dot_dimension_numbers<[1], [0], [0], [1], [0, 0, 1, 1], [], []>} : vector<64x192xbf16>, vector<192x128xbf16>, vector<64x128xf32> -> vector<64x128xf32>
    %96 = arith.addf %90, %95 : vector<64x128xf32>
    %97 = vector.extract_strided_slice %83 {offsets = [2, 0, 0], sizes = [8, 8, 192], strides = [1, 1, 1]} : vector<10x8x192xbf16> to vector<8x8x192xbf16>
    %98 = vector.shape_cast %97 : vector<8x8x192xbf16> to vector<64x192xbf16>
    %c2_141 = arith.constant 2 : index
    %c0_142 = arith.constant 0 : index
    %c0_143 = arith.constant 0 : index
    %99 = vector.load %arg4[%c2_141, %c0_142, %c0_143] : memref<3x192x128xbf16, #tpu.memory_space<vmem>>, vector<1x192x128xbf16>
    %100 = vector.shape_cast %99 : vector<1x192x128xbf16> to vector<192x128xbf16>
    %cst_144 = arith.constant dense<0.000000e+00> : vector<64x128xf32>
    %101 = tpu.matmul %98, %100, %cst_144 {dimension_numbers = #tpu.dot_dimension_numbers<[1], [0], [0], [1], [0, 0, 1, 1], [], []>} : vector<64x192xbf16>, vector<192x128xbf16>, vector<64x128xf32> -> vector<64x128xf32>
    %102 = arith.addf %96, %101 : vector<64x128xf32>
    %103 = vector.broadcast %75 : vector<1x128xf32> to vector<64x128xf32>
    %104 = arith.addf %102, %103 : vector<64x128xf32>
    %cst_145 = arith.constant 0.000000e+00 : f32
    %105 = vector.broadcast %cst_145 : f32 to vector<64x128xf32>
    %106 = arith.maximumf %104, %105 : vector<64x128xf32>
    %107 = vector.shape_cast %106 : vector<64x128xf32> to vector<1x4x2x8x128xf32>
    %108 = vector.extract_strided_slice %107 {offsets = [0, 0, 0, 0, 0], sizes = [1, 4, 1, 8, 128], strides = [1, 1, 1, 1, 1]} : vector<1x4x2x8x128xf32> to vector<1x4x1x8x128xf32>
    %109 = vector.shape_cast %108 : vector<1x4x1x8x128xf32> to vector<1x4x8x128xf32>
    %110 = vector.extract_strided_slice %107 {offsets = [0, 0, 1, 0, 0], sizes = [1, 4, 1, 8, 128], strides = [1, 1, 1, 1, 1]} : vector<1x4x2x8x128xf32> to vector<1x4x1x8x128xf32>
    %111 = vector.shape_cast %110 : vector<1x4x1x8x128xf32> to vector<1x4x8x128xf32>
    %112 = arith.maximumf %109, %111 : vector<1x4x8x128xf32>
    %113 = vector.shape_cast %112 : vector<1x4x8x128xf32> to vector<1x4x4x2x128xf32>
    %114 = vector.extract_strided_slice %113 {offsets = [0, 0, 0, 0, 0], sizes = [1, 4, 4, 1, 128], strides = [1, 1, 1, 1, 1]} : vector<1x4x4x2x128xf32> to vector<1x4x4x1x128xf32>
    %115 = vector.shape_cast %114 : vector<1x4x4x1x128xf32> to vector<1x4x4x128xf32>
    %116 = vector.extract_strided_slice %113 {offsets = [0, 0, 0, 1, 0], sizes = [1, 4, 4, 1, 128], strides = [1, 1, 1, 1, 1]} : vector<1x4x4x2x128xf32> to vector<1x4x4x1x128xf32>
    %117 = vector.shape_cast %116 : vector<1x4x4x1x128xf32> to vector<1x4x4x128xf32>
    %118 = arith.maximumf %115, %117 : vector<1x4x4x128xf32>
    %c0_146 = arith.constant 0 : index
    %c1_147 = arith.constant 1 : index
    %c1_148 = arith.constant 1 : index
    %c0_149 = arith.constant 0 : index
    %119 = vector.load %arg13[%c0_146, %c1_147, %c1_148, %c0_149] : memref<1x6x6x128xf32, #tpu.memory_space<vmem>>, vector<1x4x4x128xf32>
    tpu.vector_store %arg13[%c0_146, %c1_147, %c1_148, %c0_149], %118 {strides = array<i32>} : memref<1x6x6x128xf32, #tpu.memory_space<vmem>>, vector<1x4x4x128xf32>,
    %c0_150 = arith.constant 0 : index
    %c0_151 = arith.constant 0 : index
    %120 = vector.load %arg7[%c0_150, %c0_151] : memref<1x256xf32, #tpu.memory_space<vmem>>, vector<1x256xf32>
    %c0_152 = arith.constant 0 : index
    %c0_153 = arith.constant 0 : index
    %c0_154 = arith.constant 0 : index
    %c0_155 = arith.constant 0 : index
    %121 = vector.load %arg13[%c0_152, %c0_153, %c0_154, %c0_155] : memref<1x6x6x128xf32, #tpu.memory_space<vmem>>, vector<1x6x4x128xf32>
    %122 = vector.shape_cast %121 : vector<1x6x4x128xf32> to vector<6x4x128xf32>
    %c0_156 = arith.constant 0 : index
    %c0_157 = arith.constant 0 : index
    %c1_158 = arith.constant 1 : index
    %c0_159 = arith.constant 0 : index
    %123 = vector.load %arg13[%c0_156, %c0_157, %c1_158, %c0_159] : memref<1x6x6x128xf32, #tpu.memory_space<vmem>>, vector<1x6x4x128xf32>
    %124 = vector.shape_cast %123 : vector<1x6x4x128xf32> to vector<6x4x128xf32>
    %c0_160 = arith.constant 0 : index
    %c0_161 = arith.constant 0 : index
    %c2_162 = arith.constant 2 : index
    %c0_163 = arith.constant 0 : index
    %125 = vector.load %arg13[%c0_160, %c0_161, %c2_162, %c0_163] : memref<1x6x6x128xf32, #tpu.memory_space<vmem>>, vector<1x6x4x128xf32>
    %126 = vector.shape_cast %125 : vector<1x6x4x128xf32> to vector<6x4x128xf32>
    %127 = tpu.concatenate %122, %124, %126 in 2 : vector<6x4x128xf32>, vector<6x4x128xf32>, vector<6x4x128xf32> -> vector<6x4x384xf32>
    %128 = arith.truncf %127 : vector<6x4x384xf32> to vector<6x4x384xbf16>
    %cst_164 = arith.constant 0.000000e+00 : f32
    %129 = vector.broadcast %cst_164 : f32 to vector<16x256xf32>
    %130 = vector.extract_strided_slice %128 {offsets = [0, 0, 0], sizes = [4, 4, 384], strides = [1, 1, 1]} : vector<6x4x384xbf16> to vector<4x4x384xbf16>
    %131 = vector.shape_cast %130 : vector<4x4x384xbf16> to vector<16x384xbf16>
    %c0_165 = arith.constant 0 : index
    %c0_166 = arith.constant 0 : index
    %c0_167 = arith.constant 0 : index
    %132 = vector.load %arg6[%c0_165, %c0_166, %c0_167] : memref<3x384x256xbf16, #tpu.memory_space<vmem>>, vector<1x384x256xbf16>
    %133 = vector.shape_cast %132 : vector<1x384x256xbf16> to vector<384x256xbf16>
    %cst_168 = arith.constant dense<0.000000e+00> : vector<16x256xf32>
    %134 = tpu.matmul %131, %133, %cst_168 {dimension_numbers = #tpu.dot_dimension_numbers<[1], [0], [0], [1], [0, 0, 1, 1], [], []>} : vector<16x384xbf16>, vector<384x256xbf16>, vector<16x256xf32> -> vector<16x256xf32>
    %135 = arith.addf %129, %134 : vector<16x256xf32>
    %136 = vector.extract_strided_slice %128 {offsets = [1, 0, 0], sizes = [4, 4, 384], strides = [1, 1, 1]} : vector<6x4x384xbf16> to vector<4x4x384xbf16>
    %137 = vector.shape_cast %136 : vector<4x4x384xbf16> to vector<16x384xbf16>
    %c1_169 = arith.constant 1 : index
    %c0_170 = arith.constant 0 : index
    %c0_171 = arith.constant 0 : index
    %138 = vector.load %arg6[%c1_169, %c0_170, %c0_171] : memref<3x384x256xbf16, #tpu.memory_space<vmem>>, vector<1x384x256xbf16>
    %139 = vector.shape_cast %138 : vector<1x384x256xbf16> to vector<384x256xbf16>
    %cst_172 = arith.constant dense<0.000000e+00> : vector<16x256xf32>
    %140 = tpu.matmul %137, %139, %cst_172 {dimension_numbers = #tpu.dot_dimension_numbers<[1], [0], [0], [1], [0, 0, 1, 1], [], []>} : vector<16x384xbf16>, vector<384x256xbf16>, vector<16x256xf32> -> vector<16x256xf32>
    %141 = arith.addf %135, %140 : vector<16x256xf32>
    %142 = vector.extract_strided_slice %128 {offsets = [2, 0, 0], sizes = [4, 4, 384], strides = [1, 1, 1]} : vector<6x4x384xbf16> to vector<4x4x384xbf16>
    %143 = vector.shape_cast %142 : vector<4x4x384xbf16> to vector<16x384xbf16>
    %c2_173 = arith.constant 2 : index
    %c0_174 = arith.constant 0 : index
    %c0_175 = arith.constant 0 : index
    %144 = vector.load %arg6[%c2_173, %c0_174, %c0_175] : memref<3x384x256xbf16, #tpu.memory_space<vmem>>, vector<1x384x256xbf16>
    %145 = vector.shape_cast %144 : vector<1x384x256xbf16> to vector<384x256xbf16>
    %cst_176 = arith.constant dense<0.000000e+00> : vector<16x256xf32>
    %146 = tpu.matmul %143, %145, %cst_176 {dimension_numbers = #tpu.dot_dimension_numbers<[1], [0], [0], [1], [0, 0, 1, 1], [], []>} : vector<16x384xbf16>, vector<384x256xbf16>, vector<16x256xf32> -> vector<16x256xf32>
    %147 = arith.addf %141, %146 : vector<16x256xf32>
    %148 = vector.broadcast %120 : vector<1x256xf32> to vector<16x256xf32>
    %149 = arith.addf %147, %148 : vector<16x256xf32>
    %cst_177 = arith.constant 0.000000e+00 : f32
    %150 = vector.broadcast %cst_177 : f32 to vector<16x256xf32>
    %151 = arith.maximumf %149, %150 : vector<16x256xf32>
    %152 = vector.shape_cast %151 : vector<16x256xf32> to vector<1x2x2x4x256xf32>
    %153 = vector.extract_strided_slice %152 {offsets = [0, 0, 0, 0, 0], sizes = [1, 2, 1, 4, 256], strides = [1, 1, 1, 1, 1]} : vector<1x2x2x4x256xf32> to vector<1x2x1x4x256xf32>
    %154 = vector.shape_cast %153 : vector<1x2x1x4x256xf32> to vector<1x2x4x256xf32>
    %155 = vector.extract_strided_slice %152 {offsets = [0, 0, 1, 0, 0], sizes = [1, 2, 1, 4, 256], strides = [1, 1, 1, 1, 1]} : vector<1x2x2x4x256xf32> to vector<1x2x1x4x256xf32>
    %156 = vector.shape_cast %155 : vector<1x2x1x4x256xf32> to vector<1x2x4x256xf32>
    %157 = arith.maximumf %154, %156 : vector<1x2x4x256xf32>
    %158 = vector.shape_cast %157 : vector<1x2x4x256xf32> to vector<1x2x2x2x256xf32>
    %159 = vector.extract_strided_slice %158 {offsets = [0, 0, 0, 0, 0], sizes = [1, 2, 2, 1, 256], strides = [1, 1, 1, 1, 1]} : vector<1x2x2x2x256xf32> to vector<1x2x2x1x256xf32>
    %160 = vector.shape_cast %159 : vector<1x2x2x1x256xf32> to vector<1x2x2x256xf32>
    %161 = vector.extract_strided_slice %158 {offsets = [0, 0, 0, 1, 0], sizes = [1, 2, 2, 1, 256], strides = [1, 1, 1, 1, 1]} : vector<1x2x2x2x256xf32> to vector<1x2x2x1x256xf32>
    %162 = vector.shape_cast %161 : vector<1x2x2x1x256xf32> to vector<1x2x2x256xf32>
    %163 = arith.maximumf %160, %162 : vector<1x2x2x256xf32>
    %c0_178 = arith.constant 0 : index
    %c1_179 = arith.constant 1 : index
    %c1_180 = arith.constant 1 : index
    %c0_181 = arith.constant 0 : index
    %164 = vector.load %arg14[%c0_178, %c1_179, %c1_180, %c0_181] : memref<1x4x4x256xf32, #tpu.memory_space<vmem>>, vector<1x2x2x256xf32>
    tpu.vector_store %arg14[%c0_178, %c1_179, %c1_180, %c0_181], %163 {strides = array<i32>} : memref<1x4x4x256xf32, #tpu.memory_space<vmem>>, vector<1x2x2x256xf32>,
    %c0_182 = arith.constant 0 : index
    %c0_183 = arith.constant 0 : index
    %165 = vector.load %arg9[%c0_182, %c0_183] : memref<1x256xf32, #tpu.memory_space<vmem>>, vector<1x256xf32>
    %c0_184 = arith.constant 0 : index
    %c0_185 = arith.constant 0 : index
    %c0_186 = arith.constant 0 : index
    %c0_187 = arith.constant 0 : index
    %166 = vector.load %arg14[%c0_184, %c0_185, %c0_186, %c0_187] : memref<1x4x4x256xf32, #tpu.memory_space<vmem>>, vector<1x4x2x256xf32>
    %167 = vector.shape_cast %166 : vector<1x4x2x256xf32> to vector<4x2x256xf32>
    %c0_188 = arith.constant 0 : index
    %c0_189 = arith.constant 0 : index
    %c1_190 = arith.constant 1 : index
    %c0_191 = arith.constant 0 : index
    %168 = vector.load %arg14[%c0_188, %c0_189, %c1_190, %c0_191] : memref<1x4x4x256xf32, #tpu.memory_space<vmem>>, vector<1x4x2x256xf32>
    %169 = vector.shape_cast %168 : vector<1x4x2x256xf32> to vector<4x2x256xf32>
    %c0_192 = arith.constant 0 : index
    %c0_193 = arith.constant 0 : index
    %c2_194 = arith.constant 2 : index
    %c0_195 = arith.constant 0 : index
    %170 = vector.load %arg14[%c0_192, %c0_193, %c2_194, %c0_195] : memref<1x4x4x256xf32, #tpu.memory_space<vmem>>, vector<1x4x2x256xf32>
    %171 = vector.shape_cast %170 : vector<1x4x2x256xf32> to vector<4x2x256xf32>
    %172 = tpu.concatenate %167, %169, %171 in 2 : vector<4x2x256xf32>, vector<4x2x256xf32>, vector<4x2x256xf32> -> vector<4x2x768xf32>
    %173 = arith.truncf %172 : vector<4x2x768xf32> to vector<4x2x768xbf16>
    %cst_196 = arith.constant 0.000000e+00 : f32
    %174 = vector.broadcast %cst_196 : f32 to vector<4x256xf32>
    %175 = vector.extract_strided_slice %173 {offsets = [0, 0, 0], sizes = [2, 2, 768], strides = [1, 1, 1]} : vector<4x2x768xbf16> to vector<2x2x768xbf16>
    %176 = vector.shape_cast %175 : vector<2x2x768xbf16> to vector<4x768xbf16>
    %c0_197 = arith.constant 0 : index
    %c0_198 = arith.constant 0 : index
    %c0_199 = arith.constant 0 : index
    %177 = vector.load %arg8[%c0_197, %c0_198, %c0_199] : memref<3x768x256xbf16, #tpu.memory_space<vmem>>, vector<1x768x256xbf16>
    %178 = vector.shape_cast %177 : vector<1x768x256xbf16> to vector<768x256xbf16>
    %cst_200 = arith.constant dense<0.000000e+00> : vector<4x256xf32>
    %179 = tpu.matmul %176, %178, %cst_200 {dimension_numbers = #tpu.dot_dimension_numbers<[1], [0], [0], [1], [0, 0, 1, 1], [], []>} : vector<4x768xbf16>, vector<768x256xbf16>, vector<4x256xf32> -> vector<4x256xf32>
    %180 = arith.addf %174, %179 : vector<4x256xf32>
    %181 = vector.extract_strided_slice %173 {offsets = [1, 0, 0], sizes = [2, 2, 768], strides = [1, 1, 1]} : vector<4x2x768xbf16> to vector<2x2x768xbf16>
    %182 = vector.shape_cast %181 : vector<2x2x768xbf16> to vector<4x768xbf16>
    %c1_201 = arith.constant 1 : index
    %c0_202 = arith.constant 0 : index
    %c0_203 = arith.constant 0 : index
    %183 = vector.load %arg8[%c1_201, %c0_202, %c0_203] : memref<3x768x256xbf16, #tpu.memory_space<vmem>>, vector<1x768x256xbf16>
    %184 = vector.shape_cast %183 : vector<1x768x256xbf16> to vector<768x256xbf16>
    %cst_204 = arith.constant dense<0.000000e+00> : vector<4x256xf32>
    %185 = tpu.matmul %182, %184, %cst_204 {dimension_numbers = #tpu.dot_dimension_numbers<[1], [0], [0], [1], [0, 0, 1, 1], [], []>} : vector<4x768xbf16>, vector<768x256xbf16>, vector<4x256xf32> -> vector<4x256xf32>
    %186 = arith.addf %180, %185 : vector<4x256xf32>
    %187 = vector.extract_strided_slice %173 {offsets = [2, 0, 0], sizes = [2, 2, 768], strides = [1, 1, 1]} : vector<4x2x768xbf16> to vector<2x2x768xbf16>
    %188 = vector.shape_cast %187 : vector<2x2x768xbf16> to vector<4x768xbf16>
    %c2_205 = arith.constant 2 : index
    %c0_206 = arith.constant 0 : index
    %c0_207 = arith.constant 0 : index
    %189 = vector.load %arg8[%c2_205, %c0_206, %c0_207] : memref<3x768x256xbf16, #tpu.memory_space<vmem>>, vector<1x768x256xbf16>
    %190 = vector.shape_cast %189 : vector<1x768x256xbf16> to vector<768x256xbf16>
    %cst_208 = arith.constant dense<0.000000e+00> : vector<4x256xf32>
    %191 = tpu.matmul %188, %190, %cst_208 {dimension_numbers = #tpu.dot_dimension_numbers<[1], [0], [0], [1], [0, 0, 1, 1], [], []>} : vector<4x768xbf16>, vector<768x256xbf16>, vector<4x256xf32> -> vector<4x256xf32>
    %192 = arith.addf %186, %191 : vector<4x256xf32>
    %193 = vector.broadcast %165 : vector<1x256xf32> to vector<4x256xf32>
    %194 = arith.addf %192, %193 : vector<4x256xf32>
    %cst_209 = arith.constant 0.000000e+00 : f32
    %195 = vector.broadcast %cst_209 : f32 to vector<4x256xf32>
    %196 = arith.maximumf %194, %195 : vector<4x256xf32>
    %197 = vector.shape_cast %196 : vector<4x256xf32> to vector<1x2x2x256xf32>
    %c0_210 = arith.constant 0 : index
    %c0_211 = arith.constant 0 : index
    %c0_212 = arith.constant 0 : index
    %c0_213 = arith.constant 0 : index
    %198 = vector.load %arg10[%c0_210, %c0_211, %c0_212, %c0_213] : memref<1x2x2x256xf32, #tpu.memory_space<vmem>>, vector<1x2x2x256xf32>
    tpu.vector_store %arg10[%c0_210, %c0_211, %c0_212, %c0_213], %197 {strides = array<i32>} : memref<1x2x2x256xf32, #tpu.memory_space<vmem>>, vector<1x2x2x256xf32>,
    return
  }
  func.func @transform_0(%arg0: i32) -> (i32, i32, i32, i32) {
    %c0_i32 = arith.constant 0 : i32
    %c0_i32_0 = arith.constant 0 : i32
    %c0_i32_1 = arith.constant 0 : i32
    %c0_i32_2 = arith.constant 0 : i32
    return %arg0, %c0_i32, %c0_i32_0, %c0_i32_1 : i32, i32, i32, i32
  }
  func.func @transform_1(%arg0: i32) -> (i32, i32) {
    %c0_i32 = arith.constant 0 : i32
    %c0_i32_0 = arith.constant 0 : i32
    %c0_i32_1 = arith.constant 0 : i32
    return %c0_i32, %c0_i32_0 : i32, i32
  }
  func.func @transform_2(%arg0: i32) -> (i32, i32) {
    %c0_i32 = arith.constant 0 : i32
    %c0_i32_0 = arith.constant 0 : i32
    %c0_i32_1 = arith.constant 0 : i32
    return %c0_i32, %c0_i32_0 : i32, i32
  }
  func.func @transform_3(%arg0: i32) -> (i32, i32, i32) {
    %c0_i32 = arith.constant 0 : i32
    %c0_i32_0 = arith.constant 0 : i32
    %c0_i32_1 = arith.constant 0 : i32
    %c0_i32_2 = arith.constant 0 : i32
    return %c0_i32, %c0_i32_0, %c0_i32_1 : i32, i32, i32
  }
  func.func @transform_4(%arg0: i32) -> (i32, i32) {
    %c0_i32 = arith.constant 0 : i32
    %c0_i32_0 = arith.constant 0 : i32
    %c0_i32_1 = arith.constant 0 : i32
    return %c0_i32, %c0_i32_0 : i32, i32
  }
  func.func @transform_5(%arg0: i32) -> (i32, i32, i32) {
    %c0_i32 = arith.constant 0 : i32
    %c0_i32_0 = arith.constant 0 : i32
    %c0_i32_1 = arith.constant 0 : i32
    %c0_i32_2 = arith.constant 0 : i32
    return %c0_i32, %c0_i32_0, %c0_i32_1 : i32, i32, i32
  }
  func.func @transform_6(%arg0: i32) -> (i32, i32) {
    %c0_i32 = arith.constant 0 : i32
    %c0_i32_0 = arith.constant 0 : i32
    %c0_i32_1 = arith.constant 0 : i32
    return %c0_i32, %c0_i32_0 : i32, i32
  }
  func.func @transform_7(%arg0: i32) -> (i32, i32, i32) {
    %c0_i32 = arith.constant 0 : i32
    %c0_i32_0 = arith.constant 0 : i32
    %c0_i32_1 = arith.constant 0 : i32
    %c0_i32_2 = arith.constant 0 : i32
    return %c0_i32, %c0_i32_0, %c0_i32_1 : i32, i32, i32
  }
  func.func @transform_8(%arg0: i32) -> (i32, i32) {
    %c0_i32 = arith.constant 0 : i32
    %c0_i32_0 = arith.constant 0 : i32
    %c0_i32_1 = arith.constant 0 : i32
    return %c0_i32, %c0_i32_0 : i32, i32
  }
  func.func @transform_9(%arg0: i32) -> (i32, i32, i32, i32) {
    %c0_i32 = arith.constant 0 : i32
    %c0_i32_0 = arith.constant 0 : i32
    %c0_i32_1 = arith.constant 0 : i32
    %c0_i32_2 = arith.constant 0 : i32
    return %arg0, %c0_i32, %c0_i32_0, %c0_i32_1 : i32, i32, i32, i32
  }
}

</mosaic_0001>

<llo_original>
// kernel: outer_part_forward_impl.1
$region0: #{outer_part_forward_impl.1}
  #allocation0 [shape = 'u32[]', space=smem, size = 0x4, offset = 0x4, fixed_abs, tag = 'smem constant byte address 0x4 - core index']
  #allocation1 [shape = 'u32[72,128]{1,0:T(1,128)}', space=vmem, size = 0x9000, scoped, tag = 'internal scratch']
  #allocation2 [shape = 'f32[1,18,18,4]{3,2,1,0:T(8,128)}', space=vmem, size = 0x36000, scoped, tag = 'scratch operand']
  #allocation3 [shape = 'f32[1,10,10,64]{3,2,1,0:T(8,128)}', space=vmem, size = 0x14000, scoped, tag = 'scratch operand']
  #allocation4 [shape = 'f32[1,6,6,128]{3,2,1,0:T(8,128)}', space=vmem, size = 0x6000, scoped, tag = 'scratch operand']
  #allocation5 [shape = 'f32[1,4,4,256]{3,2,1,0:T(4,128)}', space=vmem, size = 0x4000, scoped, tag = 'scratch operand']
  %s0 = inlined_call_operand.vmem [shape: f32[2,16,16,4], index: 0, kind: input, shape index: {}]
  %s1 = inlined_call_operand.vmem [shape: bf16[36,64], index: 1, kind: input, shape index: {}]
  %s2 = inlined_call_operand.vmem [shape: f32[1,64], index: 2, kind: input, shape index: {}]
  %s3 = inlined_call_operand.vmem [shape: bf16[3,192,128], index: 3, kind: input, shape index: {}]
  %s4 = inlined_call_operand.vmem [shape: f32[1,128], index: 4, kind: input, shape index: {}]
  %s5 = inlined_call_operand.vmem [shape: bf16[3,384,256], index: 5, kind: input, shape index: {}]
  %s6 = inlined_call_operand.vmem [shape: f32[1,256], index: 6, kind: input, shape index: {}]
  %s7 = inlined_call_operand.vmem [shape: bf16[3,768,256], index: 7, kind: input, shape index: {}]
  %s8 = inlined_call_operand.vmem [shape: f32[1,256], index: 8, kind: input, shape index: {}]
  %s9 = inlined_call_operand.hbm [shape: f32[2,2,2,256], index: 9, kind: output, shape index: {}]
  %s10 = sld [smem:[#allocation0]]
  $region69: #{outer_part_forward_impl.1} parent=0
    _
  %s12 = ssub.s32 1, %s10
  %s13 = scalar_select 0, %s12, %s10
  $region1: #{outer_part_forward_impl.1} parent=0
    #allocation6 [shape = 'u8[8192]{0}', space=vmem, size = 0x2000, scoped, tag = 'output window, operand 0']
    #allocation7 [shape = 's32[2]{0}', space=sflag, size = 0x8, scoped, tag = 'scoped memory for outer_part_forward_impl.1']
    %14 = vsyncpa [#allocation7], 0
    %s15 = scalar_lea.sflag [#allocation7], 1
    %16 = vsyncpa %s15, 0
    loop: start=0, step=1, limit=4
    $region2: #{outer_part_forward_impl.1} parent=1 // loop_pre_header
      _
    $region3: #{outer_part_forward_impl.1} parent=1 // loop_header
      %s18 = sphi 0, %s22
      %p19 = scmp.ge.s32.totalorder %s18, 4
      %s28 = sphi 0, %s30
      %s31 = sphi 0, %s28
      %s32 = sphi 0, %s31
      %s48 = sphi 0, %s32
      %s52 = sphi 0, %s52
      %s54 = sphi 0, %s52
      %s55 = sphi 0, %s54
      %s69 = sphi 0, %s55
      %s73 = sphi 0, %s73
      %s75 = sphi 0, %s73
      %s76 = sphi 0, %s75
      %s90 = sphi 0, %s76
      %s94 = sphi 0, %s94
      %s96 = sphi 0, %s94
      %s97 = sphi 0, %s96
      %s111 = sphi 0, %s97
      %s115 = sphi 0, %s115
      %s117 = sphi 0, %s115
      %s118 = sphi 0, %s117
      %s132 = sphi 0, %s118
      %s136 = sphi 0, %s136
      %s138 = sphi 0, %s136
      %s139 = sphi 0, %s138
      %s153 = sphi 0, %s139
      %s157 = sphi 0, %s157
      %s159 = sphi 0, %s157
      %s160 = sphi 0, %s159
      %s174 = sphi 0, %s160
      %s178 = sphi 0, %s178
      %s180 = sphi 0, %s178
      %s181 = sphi 0, %s180
      %s195 = sphi 0, %s181
      %s199 = sphi 0, %s199
      %s201 = sphi 0, %s199
      %s202 = sphi 0, %s201
      %s216 = sphi 0, %s202
      %s222 = sphi 0, %s224
      %s225 = sphi 0, %s222
      %s226 = sphi 0, %s225
      %s242 = sphi 0, %s226
    $region4: #{outer_part_forward_impl.1} parent=1 // loop_header_branch
      %21 = sbr.rel (%p19) target = $region8
    $region5: #{outer_part_forward_impl.1} parent=1 // loop_body
      %s23 = ssub.s32 %s18, 1
      %s24 = ssub.s32 %s18, 2
      %s25 = sadd.s32 %s18, 1
      %s26 = ssub.s32 %s18, %s25
      %p27 = scmp.eq.s32.totalorder %s26, 0
      %s29 = sadd.s32 %s28, 1
      %s30 = scalar_select %p27, %s28, %s29
      %p33 = pneg %p27
      %p34 = scmp.eq.s32.totalorder %s18, 1
      %p35 = por %p33, %p34
      %p36 = scmp.ne.s32.totalorder %s28, %s31
      %p37 = scmp.eq.s32.totalorder %s18, 0
      %p38 = por %p36, %p37
      %p39 = scmp.ne.s32.totalorder %s28, %s31
      %p40 = scmp.eq.s32.totalorder %s23, 1
      %p41 = por %p39, %p40
      %p42 = scmp.ne.s32.totalorder %s31, %s32
      %p43 = scmp.eq.s32.totalorder %s23, 0
      %p44 = por %p42, %p43
      %p45 = scmp.ne.s32.totalorder %s31, %s32
      %p46 = scmp.eq.s32.totalorder %s24, 1
      %p47 = por %p45, %p46
      %p49 = scmp.ne.s32.totalorder %s32, %s48
      %p50 = scmp.eq.s32.totalorder %s24, 0
      %p51 = por %p49, %p50
      %s53 = sadd.s32 %s52, 1
      %p56 = scmp.eq.s32.totalorder %s18, 1
      %p57 = scmp.ne.s32.totalorder %s52, %s54
      %p58 = scmp.eq.s32.totalorder %s18, 0
      %p59 = por %p57, %p58
      %p60 = scmp.ne.s32.totalorder %s52, %s54
      %p61 = scmp.eq.s32.totalorder %s23, 1
      %p62 = por %p60, %p61
      %p63 = scmp.ne.s32.totalorder %s54, %s55
      %p64 = scmp.eq.s32.totalorder %s23, 0
      %p65 = por %p63, %p64
      %p66 = scmp.ne.s32.totalorder %s54, %s55
      %p67 = scmp.eq.s32.totalorder %s24, 1
      %p68 = por %p66, %p67
      %p70 = scmp.ne.s32.totalorder %s55, %s69
      %p71 = scmp.eq.s32.totalorder %s24, 0
      %p72 = por %p70, %p71
      %s74 = sadd.s32 %s73, 1
      %p77 = scmp.eq.s32.totalorder %s18, 1
      %p78 = scmp.ne.s32.totalorder %s73, %s75
      %p79 = scmp.eq.s32.totalorder %s18, 0
      %p80 = por %p78, %p79
      %p81 = scmp.ne.s32.totalorder %s73, %s75
      %p82 = scmp.eq.s32.totalorder %s23, 1
      %p83 = por %p81, %p82
      %p84 = scmp.ne.s32.totalorder %s75, %s76
      %p85 = scmp.eq.s32.totalorder %s23, 0
      %p86 = por %p84, %p85
      %p87 = scmp.ne.s32.totalorder %s75, %s76
      %p88 = scmp.eq.s32.totalorder %s24, 1
      %p89 = por %p87, %p88
      %p91 = scmp.ne.s32.totalorder %s76, %s90
      %p92 = scmp.eq.s32.totalorder %s24, 0
      %p93 = por %p91, %p92
      %s95 = sadd.s32 %s94, 1
      %p98 = scmp.eq.s32.totalorder %s18, 1
      %p99 = scmp.ne.s32.totalorder %s94, %s96
      %p100 = scmp.eq.s32.totalorder %s18, 0
      %p101 = por %p99, %p100
      %p102 = scmp.ne.s32.totalorder %s94, %s96
      %p103 = scmp.eq.s32.totalorder %s23, 1
      %p104 = por %p102, %p103
      %p105 = scmp.ne.s32.totalorder %s96, %s97
      %p106 = scmp.eq.s32.totalorder %s23, 0
      %p107 = por %p105, %p106
      %p108 = scmp.ne.s32.totalorder %s96, %s97
      %p109 = scmp.eq.s32.totalorder %s24, 1
      %p110 = por %p108, %p109
      %p112 = scmp.ne.s32.totalorder %s97, %s111
      %p113 = scmp.eq.s32.totalorder %s24, 0
      %p114 = por %p112, %p113
      %s116 = sadd.s32 %s115, 1
      %p119 = scmp.eq.s32.totalorder %s18, 1
      %p120 = scmp.ne.s32.totalorder %s115, %s117
      %p121 = scmp.eq.s32.totalorder %s18, 0
      %p122 = por %p120, %p121
      %p123 = scmp.ne.s32.totalorder %s115, %s117
      %p124 = scmp.eq.s32.totalorder %s23, 1
      %p125 = por %p123, %p124
      %p126 = scmp.ne.s32.totalorder %s117, %s118
      %p127 = scmp.eq.s32.totalorder %s23, 0
      %p128 = por %p126, %p127
      %p129 = scmp.ne.s32.totalorder %s117, %s118
      %p130 = scmp.eq.s32.totalorder %s24, 1
      %p131 = por %p129, %p130
      %p133 = scmp.ne.s32.totalorder %s118, %s132
      %p134 = scmp.eq.s32.totalorder %s24, 0
      %p135 = por %p133, %p134
      %s137 = sadd.s32 %s136, 1
      %p140 = scmp.eq.s32.totalorder %s18, 1
      %p141 = scmp.ne.s32.totalorder %s136, %s138
      %p142 = scmp.eq.s32.totalorder %s18, 0
      %p143 = por %p141, %p142
      %p144 = scmp.ne.s32.totalorder %s136, %s138
      %p145 = scmp.eq.s32.totalorder %s23, 1
      %p146 = por %p144, %p145
      %p147 = scmp.ne.s32.totalorder %s138, %s139
      %p148 = scmp.eq.s32.totalorder %s23, 0
      %p149 = por %p147, %p148
      %p150 = scmp.ne.s32.totalorder %s138, %s139
      %p151 = scmp.eq.s32.totalorder %s24, 1
      %p152 = por %p150, %p151
      %p154 = scmp.ne.s32.totalorder %s139, %s153
      %p155 = scmp.eq.s32.totalorder %s24, 0
      %p156 = por %p154, %p155
      %s158 = sadd.s32 %s157, 1
      %p161 = scmp.eq.s32.totalorder %s18, 1
      %p162 = scmp.ne.s32.totalorder %s157, %s159
      %p163 = scmp.eq.s32.totalorder %s18, 0
      %p164 = por %p162, %p163
      %p165 = scmp.ne.s32.totalorder %s157, %s159
      %p166 = scmp.eq.s32.totalorder %s23, 1
      %p167 = por %p165, %p166
      %p168 = scmp.ne.s32.totalorder %s159, %s160
      %p169 = scmp.eq.s32.totalorder %s23, 0
      %p170 = por %p168, %p169
      %p171 = scmp.ne.s32.totalorder %s159, %s160
      %p172 = scmp.eq.s32.totalorder %s24, 1
      %p173 = por %p171, %p172
      %p175 = scmp.ne.s32.totalorder %s160, %s174
      %p176 = scmp.eq.s32.totalorder %s24, 0
      %p177 = por %p175, %p176
      %s179 = sadd.s32 %s178, 1
      %p182 = scmp.eq.s32.totalorder %s18, 1
      %p183 = scmp.ne.s32.totalorder %s178, %s180
      %p184 = scmp.eq.s32.totalorder %s18, 0
      %p185 = por %p183, %p184
      %p186 = scmp.ne.s32.totalorder %s178, %s180
      %p187 = scmp.eq.s32.totalorder %s23, 1
      %p188 = por %p186, %p187
      %p189 = scmp.ne.s32.totalorder %s180, %s181
      %p190 = scmp.eq.s32.totalorder %s23, 0
      %p191 = por %p189, %p190
      %p192 = scmp.ne.s32.totalorder %s180, %s181
      %p193 = scmp.eq.s32.totalorder %s24, 1
      %p194 = por %p192, %p193
      %p196 = scmp.ne.s32.totalorder %s181, %s195
      %p197 = scmp.eq.s32.totalorder %s24, 0
      %p198 = por %p196, %p197
      %s200 = sadd.s32 %s199, 1
      %p203 = scmp.eq.s32.totalorder %s18, 1
      %p204 = scmp.ne.s32.totalorder %s199, %s201
      %p205 = scmp.eq.s32.totalorder %s18, 0
      %p206 = por %p204, %p205
      %p207 = scmp.ne.s32.totalorder %s199, %s201
      %p208 = scmp.eq.s32.totalorder %s23, 1
      %p209 = por %p207, %p208
      %p210 = scmp.ne.s32.totalorder %s201, %s202
      %p211 = scmp.eq.s32.totalorder %s23, 0
      %p212 = por %p210, %p211
      %p213 = scmp.ne.s32.totalorder %s201, %s202
      %p214 = scmp.eq.s32.totalorder %s24, 1
      %p215 = por %p213, %p214
      %p217 = scmp.ne.s32.totalorder %s202, %s216
      %p218 = scmp.eq.s32.totalorder %s24, 0
      %p219 = por %p217, %p218
      %s220 = ssub.s32 %s18, %s25
      %p221 = scmp.eq.s32.totalorder %s220, 0
      %s223 = sadd.s32 %s222, 1
      %s224 = scalar_select %p221, %s222, %s223
      %p227 = pneg %p221
      %p228 = scmp.eq.s32.totalorder %s18, 1
      %p229 = por %p227, %p228
      %p230 = scmp.ne.s32.totalorder %s222, %s225
      %p231 = scmp.eq.s32.totalorder %s18, 0
      %p232 = por %p230, %p231
      %p233 = scmp.ne.s32.totalorder %s222, %s225
      %p234 = scmp.eq.s32.totalorder %s23, 1
      %p235 = por %p233, %p234
      %p236 = scmp.ne.s32.totalorder %s225, %s226
      %p237 = scmp.eq.s32.totalorder %s23, 0
      %p238 = por %p236, %p237
      %p239 = scmp.ne.s32.totalorder %s225, %s226
      %p240 = scmp.eq.s32.totalorder %s24, 1
      %p241 = por %p239, %p240
      %p243 = scmp.ne.s32.totalorder %s226, %s242
      %p244 = scmp.eq.s32.totalorder %s24, 0
      %p245 = por %p243, %p244
      %p246 = scmp.le.s32.totalorder 1, %s18
      %p247 = scmp.lt.s32.totalorder %s18, 3
      %p248 = pnand %p246, %p247
      %p249 = pneg %p248
      // Predicated region
      $region9: #{outer_part_forward_impl.1} parent=5 // pred_check
        _
      $region10: #{outer_part_forward_impl.1} parent=5 // pred_check_branch
        %251 = sbr.rel (%p248) target = $region12
      $region11: #{outer_part_forward_impl.1} parent=5 // pred_region
        %s252 = ssub.s32 %s18, 1
        // Predicated region
        $region13: #{outer_part_forward_impl.1} parent=11 // pred_check
          %p253 = pneg %p65
        $region14: #{outer_part_forward_impl.1} parent=11 // pred_check_branch
          %255 = sbr.rel (%p253) target = $region16
        $region15: #{outer_part_forward_impl.1} parent=11 // pred_region
          _
        $region16: #{outer_part_forward_impl.1} parent=11 // pred_fallthru
          _
        // Predicated region
        $region17: #{outer_part_forward_impl.1} parent=11 // pred_check
          %p256 = pneg %p86
        $region18: #{outer_part_forward_impl.1} parent=11 // pred_check_branch
          %258 = sbr.rel (%p256) target = $region20
        $region19: #{outer_part_forward_impl.1} parent=11 // pred_region
          _
        $region20: #{outer_part_forward_impl.1} parent=11 // pred_fallthru
          _
        // Predicated region
        $region21: #{outer_part_forward_impl.1} parent=11 // pred_check
          %p259 = pneg %p107
        $region22: #{outer_part_forward_impl.1} parent=11 // pred_check_branch
          %261 = sbr.rel (%p259) target = $region24
        $region23: #{outer_part_forward_impl.1} parent=11 // pred_region
          _
        $region24: #{outer_part_forward_impl.1} parent=11 // pred_fallthru
          _
        // Predicated region
        $region25: #{outer_part_forward_impl.1} parent=11 // pred_check
          %p262 = pneg %p128
        $region26: #{outer_part_forward_impl.1} parent=11 // pred_check_branch
          %264 = sbr.rel (%p262) target = $region28
        $region27: #{outer_part_forward_impl.1} parent=11 // pred_region
          _
        $region28: #{outer_part_forward_impl.1} parent=11 // pred_fallthru
          _
        // Predicated region
        $region29: #{outer_part_forward_impl.1} parent=11 // pred_check
          %p265 = pneg %p149
        $region30: #{outer_part_forward_impl.1} parent=11 // pred_check_branch
          %267 = sbr.rel (%p265) target = $region32
        $region31: #{outer_part_forward_impl.1} parent=11 // pred_region
          _
        $region32: #{outer_part_forward_impl.1} parent=11 // pred_fallthru
          _
        // Predicated region
        $region33: #{outer_part_forward_impl.1} parent=11 // pred_check
          %p268 = pneg %p170
        $region34: #{outer_part_forward_impl.1} parent=11 // pred_check_branch
          %270 = sbr.rel (%p268) target = $region36
        $region35: #{outer_part_forward_impl.1} parent=11 // pred_region
          _
        $region36: #{outer_part_forward_impl.1} parent=11 // pred_fallthru
          _
        // Predicated region
        $region37: #{outer_part_forward_impl.1} parent=11 // pred_check
          %p271 = pneg %p191
        $region38: #{outer_part_forward_impl.1} parent=11 // pred_check_branch
          %273 = sbr.rel (%p271) target = $region40
        $region39: #{outer_part_forward_impl.1} parent=11 // pred_region
          _
        $region40: #{outer_part_forward_impl.1} parent=11 // pred_fallthru
          _
        // Predicated region
        $region41: #{outer_part_forward_impl.1} parent=11 // pred_check
          %p274 = pneg %p212
        $region42: #{outer_part_forward_impl.1} parent=11 // pred_check_branch
          %276 = sbr.rel (%p274) target = $region44
        $region43: #{outer_part_forward_impl.1} parent=11 // pred_region
          _
        $region44: #{outer_part_forward_impl.1} parent=11 // pred_fallthru
          _
      $region12: #{outer_part_forward_impl.1} parent=5 // pred_fallthru
        _
      %p277 = scmp.lt.s32.totalorder %s18, 2
      // Predicated region
      $region45: #{outer_part_forward_impl.1} parent=5 // pred_check
        %p278 = pneg %p277
      $region46: #{outer_part_forward_impl.1} parent=5 // pred_check_branch
        %280 = sbr.rel (%p278) target = $region48
      $region47: #{outer_part_forward_impl.1} parent=5 // pred_region
        // Predicated region
        $region49: #{outer_part_forward_impl.1} parent=47 // pred_check
          %p281 = pneg %p38
        $region50: #{outer_part_forward_impl.1} parent=47 // pred_check_branch
          %283 = sbr.rel (%p281) target = $region52
        $region51: #{outer_part_forward_impl.1} parent=47 // pred_region
          %p284 = scmp.lt.s32.totalorder %s18, 1
          %s285 = scalar_select %p284, %s18, 1
          %s286 = smul.addr %s285, 32
          %s287 = smul.addr %s286, 8
          %s288 = scalar_lea.vmem %s0, %s287
        $region52: #{outer_part_forward_impl.1} parent=47 // pred_fallthru
          _
      $region48: #{outer_part_forward_impl.1} parent=5 // pred_fallthru
        _
      %p289 = scmp.le.s32.totalorder 1, %s18
      %p290 = scmp.lt.s32.totalorder %s18, 3
      %p291 = pnand %p289, %p290
      %p292 = pneg %p291
      // Predicated region
      $region53: #{outer_part_forward_impl.1} parent=5 // pred_check
        _
      $region54: #{outer_part_forward_impl.1} parent=5 // pred_check_branch
        %294 = sbr.rel (%p291) target = $region56
      $region55: #{outer_part_forward_impl.1} parent=5 // pred_region
        %s295 = ssub.s32 %s18, 1
        %p296 = scmp.lt.s32.totalorder %s23, 1
        %s297 = scalar_select %p296, %s23, 1
        %s298 = smul.addr %s297, 32
        %s299 = smul.addr %s298, 8
        %s300 = scalar_lea.vmem %s0, %s299
        %p301 = pneg %p44
        %p302 = pneg %p41
        %p303 = pneg %p65
        %p304 = pneg %p62
        %p305 = pneg %p86
        %p306 = pneg %p83
        %p307 = pneg %p107
        %p308 = pneg %p104
        %p309 = pneg %p128
        %p310 = pneg %p125
        %p311 = pneg %p149
        %p312 = pneg %p146
        %p313 = pneg %p170
        %p314 = pneg %p167
        %p315 = pneg %p191
        %p316 = pneg %p188
        %p317 = pneg %p212
        %p318 = pneg %p209
        %p319 = pneg %p238
        %p320 = pneg %p235
        %s321 = sand.u32 %s225, 1
        %s322 = scalar_lea.sflag [#allocation7], %s321
        %s323 = sand.u32 %s225, 1
        %s324 = smul.addr %s323, 8
        %s325 = scalar_lea.vmem [#allocation6], %s324
        %p326 = scmp.lt.s32.totalorder %s23, 1
        %s327 = scalar_select %p326, %s23, 1
        %s328 = smul.addr %s327, 32
        %s329 = smul.addr %s328, 8
        %s330 = scalar_lea.vmem %s0, %s329
        %vm332 = vcmask 31744
        %333 = vst.msk [vmem:[#allocation2] sm:$0xff] %vm332, 0.0
        %334 = vst.msk [vmem:[#allocation2 + $0x8] sm:$0xff] %vm332, 0.0
        %vm335 = vcmask 25600
        %336 = vst.msk [vmem:[#allocation2 + $0x10] sm:$0x3] %vm335, 0.0
        %s337 = scalar_lea.vmem [#allocation2], 408
        %338 = vst.msk [vmem:[%s337] sm:$0xff] %vm332, 0.0
        %339 = vst.msk [vmem:[%s337 + $0x8] sm:$0xff] %vm332, 0.0
        %340 = vst.msk [vmem:[%s337 + $0x10] sm:$0x3] %vm335, 0.0
        %vm341 = vcmask 24576
        %342 = vst.msk [vmem:[#allocation2] sm:$0x1] %vm341, 0.0
        %343 = vst.msk [vmem:[#allocation2 + $0x18] sm:$0x1] %vm341, 0.0
        %344 = vst.msk [vmem:[#allocation2 + $0x30] sm:$0x1] %vm341, 0.0
        %345 = vst.msk [vmem:[#allocation2 + $0x48] sm:$0x1] %vm341, 0.0
        %346 = vst.msk [vmem:[#allocation2 + $0x60] sm:$0x1] %vm341, 0.0
        %347 = vst.msk [vmem:[#allocation2 + $0x78] sm:$0x1] %vm341, 0.0
        %348 = vst.msk [vmem:[#allocation2 + $0x90] sm:$0x1] %vm341, 0.0
        %349 = vst.msk [vmem:[#allocation2 + $0xa8] sm:$0x1] %vm341, 0.0
        %350 = vst.msk [vmem:[#allocation2 + $0xc0] sm:$0x1] %vm341, 0.0
        %351 = vst.msk [vmem:[#allocation2 + $0xd8] sm:$0x1] %vm341, 0.0
        %352 = vst.msk [vmem:[#allocation2 + $0xf0] sm:$0x1] %vm341, 0.0
        %353 = vst.msk [vmem:[#allocation2 + $0x108] sm:$0x1] %vm341, 0.0
        %354 = vst.msk [vmem:[#allocation2 + $0x120] sm:$0x1] %vm341, 0.0
        %355 = vst.msk [vmem:[#allocation2 + $0x138] sm:$0x1] %vm341, 0.0
        %356 = vst.msk [vmem:[#allocation2 + $0x150] sm:$0x1] %vm341, 0.0
        %357 = vst.msk [vmem:[#allocation2 + $0x168] sm:$0x1] %vm341, 0.0
        %358 = vst.msk [vmem:[#allocation2 + $0x180] sm:$0x1] %vm341, 0.0
        %359 = vst.msk [vmem:[#allocation2 + $0x198] sm:$0x1] %vm341, 0.0
        %360 = vst.msk [vmem:[#allocation2 + $0x11] sm:$0x1] %vm341, 0.0
        %361 = vst.msk [vmem:[#allocation2 + $0x29] sm:$0x1] %vm341, 0.0
        %362 = vst.msk [vmem:[#allocation2 + $0x41] sm:$0x1] %vm341, 0.0
        %363 = vst.msk [vmem:[#allocation2 + $0x59] sm:$0x1] %vm341, 0.0
        %364 = vst.msk [vmem:[#allocation2 + $0x71] sm:$0x1] %vm341, 0.0
        %365 = vst.msk [vmem:[#allocation2 + $0x89] sm:$0x1] %vm341, 0.0
        %366 = vst.msk [vmem:[#allocation2 + $0xa1] sm:$0x1] %vm341, 0.0
        %367 = vst.msk [vmem:[#allocation2 + $0xb9] sm:$0x1] %vm341, 0.0
        %368 = vst.msk [vmem:[#allocation2 + $0xd1] sm:$0x1] %vm341, 0.0
        %369 = vst.msk [vmem:[#allocation2 + $0xe9] sm:$0x1] %vm341, 0.0
        %370 = vst.msk [vmem:[#allocation2 + $0x101] sm:$0x1] %vm341, 0.0
        %371 = vst.msk [vmem:[#allocation2 + $0x119] sm:$0x1] %vm341, 0.0
        %372 = vst.msk [vmem:[#allocation2 + $0x131] sm:$0x1] %vm341, 0.0
        %373 = vst.msk [vmem:[#allocation2 + $0x149] sm:$0x1] %vm341, 0.0
        %374 = vst.msk [vmem:[#allocation2 + $0x161] sm:$0x1] %vm341, 0.0
        %375 = vst.msk [vmem:[#allocation2 + $0x179] sm:$0x1] %vm341, 0.0
        %376 = vst.msk [vmem:[#allocation2 + $0x191] sm:$0x1] %vm341, 0.0
        %377 = vst.msk [vmem:[#allocation2 + $0x1a9] sm:$0x1] %vm341, 0.0
        %vm378 = vcmask 523264
        %379 = vst.msk [vmem:[#allocation3] sm:$0xff] %vm378, 0.0
        %vm380 = vcmask 517120
        %381 = vst.msk [vmem:[#allocation3 + $0x8] sm:$0x3] %vm380, 0.0
        %s382 = scalar_lea.vmem [#allocation3], 144
        %383 = vst.msk [vmem:[%s382] sm:$0xff] %vm378, 0.0
        %384 = vst.msk [vmem:[%s382 + $0x8] sm:$0x3] %vm380, 0.0
        %vm385 = vcmask 516096
        %386 = vst.msk [vmem:[#allocation3] sm:$0x1] %vm385, 0.0
        %387 = vst.msk [vmem:[#allocation3 + $0x10] sm:$0x1] %vm385, 0.0
        %388 = vst.msk [vmem:[#allocation3 + $0x20] sm:$0x1] %vm385, 0.0
        %389 = vst.msk [vmem:[#allocation3 + $0x30] sm:$0x1] %vm385, 0.0
        %390 = vst.msk [vmem:[#allocation3 + $0x40] sm:$0x1] %vm385, 0.0
        %391 = vst.msk [vmem:[#allocation3 + $0x50] sm:$0x1] %vm385, 0.0
        %392 = vst.msk [vmem:[#allocation3 + $0x60] sm:$0x1] %vm385, 0.0
        %393 = vst.msk [vmem:[#allocation3 + $0x70] sm:$0x1] %vm385, 0.0
        %394 = vst.msk [vmem:[#allocation3 + $0x80] sm:$0x1] %vm385, 0.0
        %395 = vst.msk [vmem:[#allocation3 + $0x90] sm:$0x1] %vm385, 0.0
        %396 = vst.msk [vmem:[#allocation3 + $0x9] sm:$0x1] %vm385, 0.0
        %397 = vst.msk [vmem:[#allocation3 + $0x19] sm:$0x1] %vm385, 0.0
        %398 = vst.msk [vmem:[#allocation3 + $0x29] sm:$0x1] %vm385, 0.0
        %399 = vst.msk [vmem:[#allocation3 + $0x39] sm:$0x1] %vm385, 0.0
        %400 = vst.msk [vmem:[#allocation3 + $0x49] sm:$0x1] %vm385, 0.0
        %401 = vst.msk [vmem:[#allocation3 + $0x59] sm:$0x1] %vm385, 0.0
        %402 = vst.msk [vmem:[#allocation3 + $0x69] sm:$0x1] %vm385, 0.0
        %403 = vst.msk [vmem:[#allocation3 + $0x79] sm:$0x1] %vm385, 0.0
        %404 = vst.msk [vmem:[#allocation3 + $0x89] sm:$0x1] %vm385, 0.0
        %405 = vst.msk [vmem:[#allocation3 + $0x99] sm:$0x1] %vm385, 0.0
        %406 = vst [vmem:[#allocation4] sm:$0x3f] 0.0
        %s407 = scalar_lea.vmem [#allocation4], 40
        %408 = vst [vmem:[%s407] sm:$0x3f] 0.0
        %409 = vst [vmem:[#allocation4] sm:$0x1] 0.0
        %410 = vst [vmem:[#allocation4 + $0x8] sm:$0x1] 0.0
        %411 = vst [vmem:[#allocation4 + $0x10] sm:$0x1] 0.0
        %412 = vst [vmem:[#allocation4 + $0x18] sm:$0x1] 0.0
        %413 = vst [vmem:[#allocation4 + $0x20] sm:$0x1] 0.0
        %414 = vst [vmem:[#allocation4 + $0x28] sm:$0x1] 0.0
        %415 = vst [vmem:[#allocation4 + $0x5] sm:$0x1] 0.0
        %416 = vst [vmem:[#allocation4 + $0xd] sm:$0x1] 0.0
        %417 = vst [vmem:[#allocation4 + $0x15] sm:$0x1] 0.0
        %418 = vst [vmem:[#allocation4 + $0x1d] sm:$0x1] 0.0
        %419 = vst [vmem:[#allocation4 + $0x25] sm:$0x1] 0.0
        %420 = vst [vmem:[#allocation4 + $0x2d] sm:$0x1] 0.0
        %421 = vst [vmem:[#allocation5] sm:$0xff] 0.0
        %s422 = scalar_lea.vmem [#allocation5], 24
        %423 = vst [vmem:[%s422] sm:$0xff] 0.0
        %v424 = vlaneseq
        %vm425 = vcmp.ge.s32.totalorder %v424, 0
        %vm426 = vcmp.lt.s32.totalorder %v424, 256
        %vm427 = vmand %vm425, %vm426
        %428 = vst.msk [vmem:[#allocation5] ss:$4 sm:$0x3] %vm427, 0.0
        %s429 = scalar_lea.vmem [#allocation5], 8
        %430 = vst.msk [vmem:[%s429] ss:$4 sm:$0x3] %vm427, 0.0
        %s431 = scalar_lea.vmem [#allocation5], 16
        %432 = vst.msk [vmem:[%s431] ss:$4 sm:$0x3] %vm427, 0.0
        %s433 = scalar_lea.vmem [#allocation5], 24
        %434 = vst.msk [vmem:[%s433] ss:$4 sm:$0x3] %vm427, 0.0
        %s435 = scalar_lea.vmem [#allocation5], 3
        %436 = vst.msk [vmem:[%s435] ss:$4 sm:$0x3] %vm427, 0.0
        %s437 = scalar_lea.vmem [#allocation5], 11
        %438 = vst.msk [vmem:[%s437] ss:$4 sm:$0x3] %vm427, 0.0
        %s439 = scalar_lea.vmem [#allocation5], 19
        %440 = vst.msk [vmem:[%s439] ss:$4 sm:$0x3] %vm427, 0.0
        %s441 = scalar_lea.vmem [#allocation5], 27
        %442 = vst.msk [vmem:[%s441] ss:$4 sm:$0x3] %vm427, 0.0
        %v443 = vld [vmem:[%s330] sm:$0xff]
        %v444 = vld [vmem:[%s330 + $0x8] sm:$0xff]
        %v445 = vld [vmem:[%s330 + $0x10] sm:$0xff]
        %v446 = vld [vmem:[%s330 + $0x18] sm:$0xff]
        %v447 = vld [vmem:[%s330 + $0x20] sm:$0xff]
        %v448 = vld [vmem:[%s330 + $0x28] sm:$0xff]
        %v449 = vld [vmem:[%s330 + $0x30] sm:$0xff]
        %v450 = vld [vmem:[%s330 + $0x38] sm:$0xff]
        %v451 = vld [vmem:[%s330 + $0x40] sm:$0xff]
        %v452 = vld [vmem:[%s330 + $0x48] sm:$0xff]
        %v453 = vld [vmem:[%s330 + $0x50] sm:$0xff]
        %v454 = vld [vmem:[%s330 + $0x58] sm:$0xff]
        %v455 = vld [vmem:[%s330 + $0x60] sm:$0xff]
        %v456 = vld [vmem:[%s330 + $0x68] sm:$0xff]
        %v457 = vld [vmem:[%s330 + $0x70] sm:$0xff]
        %v458 = vld [vmem:[%s330 + $0x78] sm:$0xff]
        %v459 = vld [vmem:[%s330 + $0x80] sm:$0xff]
        %v460 = vld [vmem:[%s330 + $0x88] sm:$0xff]
        %v461 = vld [vmem:[%s330 + $0x90] sm:$0xff]
        %v462 = vld [vmem:[%s330 + $0x98] sm:$0xff]
        %v463 = vld [vmem:[%s330 + $0xa0] sm:$0xff]
        %v464 = vld [vmem:[%s330 + $0xa8] sm:$0xff]
        %v465 = vld [vmem:[%s330 + $0xb0] sm:$0xff]
        %v466 = vld [vmem:[%s330 + $0xb8] sm:$0xff]
        %v467 = vld [vmem:[%s330 + $0xc0] sm:$0xff]
        %v468 = vld [vmem:[%s330 + $0xc8] sm:$0xff]
        %v469 = vld [vmem:[%s330 + $0xd0] sm:$0xff]
        %v470 = vld [vmem:[%s330 + $0xd8] sm:$0xff]
        %v471 = vld [vmem:[%s330 + $0xe0] sm:$0xff]
        %v472 = vld [vmem:[%s330 + $0xe8] sm:$0xff]
        %v473 = vld [vmem:[%s330 + $0xf0] sm:$0xff]
        %v474 = vld [vmem:[%s330 + $0xf8] sm:$0xff]
        %s475 = scalar_lea.vmem [#allocation2], 24
        %476 = vst.msk [vmem:[%s475 + $0x1] sm:$0xff] %vm332, %v443
        %477 = vst.msk [vmem:[%s475 + $0x9] sm:$0xff] %vm332, %v444
        %478 = vst.msk [vmem:[%s475 + $0x19] sm:$0xff] %vm332, %v445
        %479 = vst.msk [vmem:[%s475 + $0x21] sm:$0xff] %vm332, %v446
        %480 = vst.msk [vmem:[%s475 + $0x31] sm:$0xff] %vm332, %v447
        %481 = vst.msk [vmem:[%s475 + $0x39] sm:$0xff] %vm332, %v448
        %482 = vst.msk [vmem:[%s475 + $0x49] sm:$0xff] %vm332, %v449
        %483 = vst.msk [vmem:[%s475 + $0x51] sm:$0xff] %vm332, %v450
        %484 = vst.msk [vmem:[%s475 + $0x61] sm:$0xff] %vm332, %v451
        %485 = vst.msk [vmem:[%s475 + $0x69] sm:$0xff] %vm332, %v452
        %486 = vst.msk [vmem:[%s475 + $0x79] sm:$0xff] %vm332, %v453
        %487 = vst.msk [vmem:[%s475 + $0x81] sm:$0xff] %vm332, %v454
        %488 = vst.msk [vmem:[%s475 + $0x91] sm:$0xff] %vm332, %v455
        %489 = vst.msk [vmem:[%s475 + $0x99] sm:$0xff] %vm332, %v456
        %490 = vst.msk [vmem:[%s475 + $0xa9] sm:$0xff] %vm332, %v457
        %491 = vst.msk [vmem:[%s475 + $0xb1] sm:$0xff] %vm332, %v458
        %492 = vst.msk [vmem:[%s475 + $0xc1] sm:$0xff] %vm332, %v459
        %493 = vst.msk [vmem:[%s475 + $0xc9] sm:$0xff] %vm332, %v460
        %494 = vst.msk [vmem:[%s475 + $0xd9] sm:$0xff] %vm332, %v461
        %495 = vst.msk [vmem:[%s475 + $0xe1] sm:$0xff] %vm332, %v462
        %496 = vst.msk [vmem:[%s475 + $0xf1] sm:$0xff] %vm332, %v463
        %497 = vst.msk [vmem:[%s475 + $0xf9] sm:$0xff] %vm332, %v464
        %498 = vst.msk [vmem:[%s475 + $0x109] sm:$0xff] %vm332, %v465
        %499 = vst.msk [vmem:[%s475 + $0x111] sm:$0xff] %vm332, %v466
        %500 = vst.msk [vmem:[%s475 + $0x121] sm:$0xff] %vm332, %v467
        %501 = vst.msk [vmem:[%s475 + $0x129] sm:$0xff] %vm332, %v468
        %502 = vst.msk [vmem:[%s475 + $0x139] sm:$0xff] %vm332, %v469
        %503 = vst.msk [vmem:[%s475 + $0x141] sm:$0xff] %vm332, %v470
        %504 = vst.msk [vmem:[%s475 + $0x151] sm:$0xff] %vm332, %v471
        %505 = vst.msk [vmem:[%s475 + $0x159] sm:$0xff] %vm332, %v472
        %506 = vst.msk [vmem:[%s475 + $0x169] sm:$0xff] %vm332, %v473
        %507 = vst.msk [vmem:[%s475 + $0x171] sm:$0xff] %vm332, %v474
        %v508 = vld [vmem:[%s1] sm:$0xf]
        %v509 = vld [vmem:[%s1 + $0x4] sm:$0xf]
        %v510 = vld [vmem:[%s1 + $0x8] sm:$0xf]
        %v511 = vld [vmem:[%s1 + $0xc] sm:$0xf]
        %v512 = vld [vmem:[%s1 + $0x10] sm:$0x3]
        %v513 = vld [vmem:[%s2] sm:$0x1]
        %v514 = vld [vmem:[#allocation2] sm:$0xff]
        %v515 = vld [vmem:[#allocation2 + $0x8] sm:$0xff]
        %v516 = vld [vmem:[#allocation2 + $0x18] sm:$0xff]
        %v517 = vld [vmem:[#allocation2 + $0x20] sm:$0xff]
        %v518 = vld [vmem:[#allocation2 + $0x30] sm:$0xff]
        %v519 = vld [vmem:[#allocation2 + $0x38] sm:$0xff]
        %v520 = vld [vmem:[#allocation2 + $0x48] sm:$0xff]
        %v521 = vld [vmem:[#allocation2 + $0x50] sm:$0xff]
        %v522 = vld [vmem:[#allocation2 + $0x60] sm:$0xff]
        %v523 = vld [vmem:[#allocation2 + $0x68] sm:$0xff]
        %v524 = vld [vmem:[#allocation2 + $0x78] sm:$0xff]
        %v525 = vld [vmem:[#allocation2 + $0x80] sm:$0xff]
        %v526 = vld [vmem:[#allocation2 + $0x90] sm:$0xff]
        %v527 = vld [vmem:[#allocation2 + $0x98] sm:$0xff]
        %v528 = vld [vmem:[#allocation2 + $0xa8] sm:$0xff]
        %v529 = vld [vmem:[#allocation2 + $0xb0] sm:$0xff]
        %v530 = vld [vmem:[#allocation2 + $0xc0] sm:$0xff]
        %v531 = vld [vmem:[#allocation2 + $0xc8] sm:$0xff]
        %v532 = vld [vmem:[#allocation2 + $0xd8] sm:$0xff]
        %v533 = vld [vmem:[#allocation2 + $0xe0] sm:$0xff]
        %v534 = vld [vmem:[#allocation2 + $0xf0] sm:$0xff]
        %v535 = vld [vmem:[#allocation2 + $0xf8] sm:$0xff]
        %v536 = vld [vmem:[#allocation2 + $0x108] sm:$0xff]
        %v537 = vld [vmem:[#allocation2 + $0x110] sm:$0xff]
        %v538 = vld [vmem:[#allocation2 + $0x120] sm:$0xff]
        %v539 = vld [vmem:[#allocation2 + $0x128] sm:$0xff]
        %v540 = vld [vmem:[#allocation2 + $0x138] sm:$0xff]
        %v541 = vld [vmem:[#allocation2 + $0x140] sm:$0xff]
        %v542 = vld [vmem:[#allocation2 + $0x150] sm:$0xff]
        %v543 = vld [vmem:[#allocation2 + $0x158] sm:$0xff]
        %v544 = vld [vmem:[#allocation2 + $0x168] sm:$0xff]
        %v545 = vld [vmem:[#allocation2 + $0x170] sm:$0xff]
        %v546 = vld [vmem:[#allocation2 + $0x1] sm:$0xff]
        %v547 = vld [vmem:[#allocation2 + $0x9] sm:$0xff]
        %v548 = vld [vmem:[#allocation2 + $0x19] sm:$0xff]
        %v549 = vld [vmem:[#allocation2 + $0x21] sm:$0xff]
        %v550 = vld [vmem:[#allocation2 + $0x31] sm:$0xff]
        %v551 = vld [vmem:[#allocation2 + $0x39] sm:$0xff]
        %v552 = vld [vmem:[#allocation2 + $0x49] sm:$0xff]
        %v553 = vld [vmem:[#allocation2 + $0x51] sm:$0xff]
        %v554 = vld [vmem:[#allocation2 + $0x61] sm:$0xff]
        %v555 = vld [vmem:[#allocation2 + $0x69] sm:$0xff]
        %v556 = vld [vmem:[#allocation2 + $0x79] sm:$0xff]
        %v557 = vld [vmem:[#allocation2 + $0x81] sm:$0xff]
        %v558 = vld [vmem:[#allocation2 + $0x91] sm:$0xff]
        %v559 = vld [vmem:[#allocation2 + $0x99] sm:$0xff]
        %v560 = vld [vmem:[#allocation2 + $0xa9] sm:$0xff]
        %v561 = vld [vmem:[#allocation2 + $0xb1] sm:$0xff]
        %v562 = vld [vmem:[#allocation2 + $0xc1] sm:$0xff]
        %v563 = vld [vmem:[#allocation2 + $0xc9] sm:$0xff]
        %v564 = vld [vmem:[#allocation2 + $0xd9] sm:$0xff]
        %v565 = vld [vmem:[#allocation2 + $0xe1] sm:$0xff]
        %v566 = vld [vmem:[#allocation2 + $0xf1] sm:$0xff]
        %v567 = vld [vmem:[#allocation2 + $0xf9] sm:$0xff]
        %v568 = vld [vmem:[#allocation2 + $0x109] sm:$0xff]
        %v569 = vld [vmem:[#allocation2 + $0x111] sm:$0xff]
        %v570 = vld [vmem:[#allocation2 + $0x121] sm:$0xff]
        %v571 = vld [vmem:[#allocation2 + $0x129] sm:$0xff]
        %v572 = vld [vmem:[#allocation2 + $0x139] sm:$0xff]
        %v573 = vld [vmem:[#allocation2 + $0x141] sm:$0xff]
        %v574 = vld [vmem:[#allocation2 + $0x151] sm:$0xff]
        %v575 = vld [vmem:[#allocation2 + $0x159] sm:$0xff]
        %v576 = vld [vmem:[#allocation2 + $0x169] sm:$0xff]
        %v577 = vld [vmem:[#allocation2 + $0x171] sm:$0xff]
        %v578 = vld [vmem:[#allocation2 + $0x2] sm:$0xff]
        %v579 = vld [vmem:[#allocation2 + $0xa] sm:$0xff]
        %v580 = vld [vmem:[#allocation2 + $0x1a] sm:$0xff]
        %v581 = vld [vmem:[#allocation2 + $0x22] sm:$0xff]
        %v582 = vld [vmem:[#allocation2 + $0x32] sm:$0xff]
        %v583 = vld [vmem:[#allocation2 + $0x3a] sm:$0xff]
        %v584 = vld [vmem:[#allocation2 + $0x4a] sm:$0xff]
        %v585 = vld [vmem:[#allocation2 + $0x52] sm:$0xff]
        %v586 = vld [vmem:[#allocation2 + $0x62] sm:$0xff]
        %v587 = vld [vmem:[#allocation2 + $0x6a] sm:$0xff]
        %v588 = vld [vmem:[#allocation2 + $0x7a] sm:$0xff]
        %v589 = vld [vmem:[#allocation2 + $0x82] sm:$0xff]
        %v590 = vld [vmem:[#allocation2 + $0x92] sm:$0xff]
        %v591 = vld [vmem:[#allocation2 + $0x9a] sm:$0xff]
        %v592 = vld [vmem:[#allocation2 + $0xaa] sm:$0xff]
        %v593 = vld [vmem:[#allocation2 + $0xb2] sm:$0xff]
        %v594 = vld [vmem:[#allocation2 + $0xc2] sm:$0xff]
        %v595 = vld [vmem:[#allocation2 + $0xca] sm:$0xff]
        %v596 = vld [vmem:[#allocation2 + $0xda] sm:$0xff]
        %v597 = vld [vmem:[#allocation2 + $0xe2] sm:$0xff]
        %v598 = vld [vmem:[#allocation2 + $0xf2] sm:$0xff]
        %v599 = vld [vmem:[#allocation2 + $0xfa] sm:$0xff]
        %v600 = vld [vmem:[#allocation2 + $0x10a] sm:$0xff]
        %v601 = vld [vmem:[#allocation2 + $0x112] sm:$0xff]
        %v602 = vld [vmem:[#allocation2 + $0x122] sm:$0xff]
        %v603 = vld [vmem:[#allocation2 + $0x12a] sm:$0xff]
        %v604 = vld [vmem:[#allocation2 + $0x13a] sm:$0xff]
        %v605 = vld [vmem:[#allocation2 + $0x142] sm:$0xff]
        %v606 = vld [vmem:[#allocation2 + $0x152] sm:$0xff]
        %v607 = vld [vmem:[#allocation2 + $0x15a] sm:$0xff]
        %v608 = vld [vmem:[#allocation2 + $0x16a] sm:$0xff]
        %v609 = vld [vmem:[#allocation2 + $0x172] sm:$0xff]
        %v610 = vld [vmem:[%s475] sm:$0xff]
        %v611 = vld [vmem:[%s475 + $0x8] sm:$0xff]
        %v612 = vld [vmem:[%s475 + $0x18] sm:$0xff]
        %v613 = vld [vmem:[%s475 + $0x20] sm:$0xff]
        %v614 = vld [vmem:[%s475 + $0x30] sm:$0xff]
        %v615 = vld [vmem:[%s475 + $0x38] sm:$0xff]
        %v616 = vld [vmem:[%s475 + $0x48] sm:$0xff]
        %v617 = vld [vmem:[%s475 + $0x50] sm:$0xff]
        %v618 = vld [vmem:[%s475 + $0x60] sm:$0xff]
        %v619 = vld [vmem:[%s475 + $0x68] sm:$0xff]
        %v620 = vld [vmem:[%s475 + $0x78] sm:$0xff]
        %v621 = vld [vmem:[%s475 + $0x80] sm:$0xff]
        %v622 = vld [vmem:[%s475 + $0x90] sm:$0xff]
        %v623 = vld [vmem:[%s475 + $0x98] sm:$0xff]
        %v624 = vld [vmem:[%s475 + $0xa8] sm:$0xff]
        %v625 = vld [vmem:[%s475 + $0xb0] sm:$0xff]
        %v626 = vld [vmem:[%s475 + $0xc0] sm:$0xff]
        %v627 = vld [vmem:[%s475 + $0xc8] sm:$0xff]
        %v628 = vld [vmem:[%s475 + $0xd8] sm:$0xff]
        %v629 = vld [vmem:[%s475 + $0xe0] sm:$0xff]
        %v630 = vld [vmem:[%s475 + $0xf0] sm:$0xff]
        %v631 = vld [vmem:[%s475 + $0xf8] sm:$0xff]
        %v632 = vld [vmem:[%s475 + $0x108] sm:$0xff]
        %v633 = vld [vmem:[%s475 + $0x110] sm:$0xff]
        %v634 = vld [vmem:[%s475 + $0x120] sm:$0xff]
        %v635 = vld [vmem:[%s475 + $0x128] sm:$0xff]
        %v636 = vld [vmem:[%s475 + $0x138] sm:$0xff]
        %v637 = vld [vmem:[%s475 + $0x140] sm:$0xff]
        %v638 = vld [vmem:[%s475 + $0x150] sm:$0xff]
        %v639 = vld [vmem:[%s475 + $0x158] sm:$0xff]
        %v640 = vld [vmem:[%s475 + $0x168] sm:$0xff]
        %v641 = vld [vmem:[%s475 + $0x170] sm:$0xff]
        %v642 = vld [vmem:[%s475 + $0x1] sm:$0xff]
        %v643 = vld [vmem:[%s475 + $0x9] sm:$0xff]
        %v644 = vld [vmem:[%s475 + $0x19] sm:$0xff]
        %v645 = vld [vmem:[%s475 + $0x21] sm:$0xff]
        %v646 = vld [vmem:[%s475 + $0x31] sm:$0xff]
        %v647 = vld [vmem:[%s475 + $0x39] sm:$0xff]
        %v648 = vld [vmem:[%s475 + $0x49] sm:$0xff]
        %v649 = vld [vmem:[%s475 + $0x51] sm:$0xff]
        %v650 = vld [vmem:[%s475 + $0x61] sm:$0xff]
        %v651 = vld [vmem:[%s475 + $0x69] sm:$0xff]
        %v652 = vld [vmem:[%s475 + $0x79] sm:$0xff]
        %v653 = vld [vmem:[%s475 + $0x81] sm:$0xff]
        %v654 = vld [vmem:[%s475 + $0x91] sm:$0xff]
        %v655 = vld [vmem:[%s475 + $0x99] sm:$0xff]
        %v656 = vld [vmem:[%s475 + $0xa9] sm:$0xff]
        %v657 = vld [vmem:[%s475 + $0xb1] sm:$0xff]
        %v658 = vld [vmem:[%s475 + $0xc1] sm:$0xff]
        %v659 = vld [vmem:[%s475 + $0xc9] sm:$0xff]
        %v660 = vld [vmem:[%s475 + $0xd9] sm:$0xff]
        %v661 = vld [vmem:[%s475 + $0xe1] sm:$0xff]
        %v662 = vld [vmem:[%s475 + $0xf1] sm:$0xff]
        %v663 = vld [vmem:[%s475 + $0xf9] sm:$0xff]
        %v664 = vld [vmem:[%s475 + $0x109] sm:$0xff]
        %v665 = vld [vmem:[%s475 + $0x111] sm:$0xff]
        %v666 = vld [vmem:[%s475 + $0x121] sm:$0xff]
        %v667 = vld [vmem:[%s475 + $0x129] sm:$0xff]
        %v668 = vld [vmem:[%s475 + $0x139] sm:$0xff]
        %v669 = vld [vmem:[%s475 + $0x141] sm:$0xff]
        %v670 = vld [vmem:[%s475 + $0x151] sm:$0xff]
        %v671 = vld [vmem:[%s475 + $0x159] sm:$0xff]
        %v672 = vld [vmem:[%s475 + $0x169] sm:$0xff]
        %v673 = vld [vmem:[%s475 + $0x171] sm:$0xff]
        %v674 = vld [vmem:[%s475 + $0x2] sm:$0xff]
        %v675 = vld [vmem:[%s475 + $0xa] sm:$0xff]
        %v676 = vld [vmem:[%s475 + $0x1a] sm:$0xff]
        %v677 = vld [vmem:[%s475 + $0x22] sm:$0xff]
        %v678 = vld [vmem:[%s475 + $0x32] sm:$0xff]
        %v679 = vld [vmem:[%s475 + $0x3a] sm:$0xff]
        %v680 = vld [vmem:[%s475 + $0x4a] sm:$0xff]
        %v681 = vld [vmem:[%s475 + $0x52] sm:$0xff]
        %v682 = vld [vmem:[%s475 + $0x62] sm:$0xff]
        %v683 = vld [vmem:[%s475 + $0x6a] sm:$0xff]
        %v684 = vld [vmem:[%s475 + $0x7a] sm:$0xff]
        %v685 = vld [vmem:[%s475 + $0x82] sm:$0xff]
        %v686 = vld [vmem:[%s475 + $0x92] sm:$0xff]
        %v687 = vld [vmem:[%s475 + $0x9a] sm:$0xff]
        %v688 = vld [vmem:[%s475 + $0xaa] sm:$0xff]
        %v689 = vld [vmem:[%s475 + $0xb2] sm:$0xff]
        %v690 = vld [vmem:[%s475 + $0xc2] sm:$0xff]
        %v691 = vld [vmem:[%s475 + $0xca] sm:$0xff]
        %v692 = vld [vmem:[%s475 + $0xda] sm:$0xff]
        %v693 = vld [vmem:[%s475 + $0xe2] sm:$0xff]
        %v694 = vld [vmem:[%s475 + $0xf2] sm:$0xff]
        %v695 = vld [vmem:[%s475 + $0xfa] sm:$0xff]
        %v696 = vld [vmem:[%s475 + $0x10a] sm:$0xff]
        %v697 = vld [vmem:[%s475 + $0x112] sm:$0xff]
        %v698 = vld [vmem:[%s475 + $0x122] sm:$0xff]
        %v699 = vld [vmem:[%s475 + $0x12a] sm:$0xff]
        %v700 = vld [vmem:[%s475 + $0x13a] sm:$0xff]
        %v701 = vld [vmem:[%s475 + $0x142] sm:$0xff]
        %v702 = vld [vmem:[%s475 + $0x152] sm:$0xff]
        %v703 = vld [vmem:[%s475 + $0x15a] sm:$0xff]
        %v704 = vld [vmem:[%s475 + $0x16a] sm:$0xff]
        %v705 = vld [vmem:[%s475 + $0x172] sm:$0xff]
        %s706 = scalar_lea.vmem [#allocation2], 48
        %v707 = vld [vmem:[%s706] sm:$0xff]
        %v708 = vld [vmem:[%s706 + $0x8] sm:$0xff]
        %v709 = vld [vmem:[%s706 + $0x18] sm:$0xff]
        %v710 = vld [vmem:[%s706 + $0x20] sm:$0xff]
        %v711 = vld [vmem:[%s706 + $0x30] sm:$0xff]
        %v712 = vld [vmem:[%s706 + $0x38] sm:$0xff]
        %v713 = vld [vmem:[%s706 + $0x48] sm:$0xff]
        %v714 = vld [vmem:[%s706 + $0x50] sm:$0xff]
        %v715 = vld [vmem:[%s706 + $0x60] sm:$0xff]
        %v716 = vld [vmem:[%s706 + $0x68] sm:$0xff]
        %v717 = vld [vmem:[%s706 + $0x78] sm:$0xff]
        %v718 = vld [vmem:[%s706 + $0x80] sm:$0xff]
        %v719 = vld [vmem:[%s706 + $0x90] sm:$0xff]
        %v720 = vld [vmem:[%s706 + $0x98] sm:$0xff]
        %v721 = vld [vmem:[%s706 + $0xa8] sm:$0xff]
        %v722 = vld [vmem:[%s706 + $0xb0] sm:$0xff]
        %v723 = vld [vmem:[%s706 + $0xc0] sm:$0xff]
        %v724 = vld [vmem:[%s706 + $0xc8] sm:$0xff]
        %v725 = vld [vmem:[%s706 + $0xd8] sm:$0xff]
        %v726 = vld [vmem:[%s706 + $0xe0] sm:$0xff]
        %v727 = vld [vmem:[%s706 + $0xf0] sm:$0xff]
        %v728 = vld [vmem:[%s706 + $0xf8] sm:$0xff]
        %v729 = vld [vmem:[%s706 + $0x108] sm:$0xff]
        %v730 = vld [vmem:[%s706 + $0x110] sm:$0xff]
        %v731 = vld [vmem:[%s706 + $0x120] sm:$0xff]
        %v732 = vld [vmem:[%s706 + $0x128] sm:$0xff]
        %v733 = vld [vmem:[%s706 + $0x138] sm:$0xff]
        %v734 = vld [vmem:[%s706 + $0x140] sm:$0xff]
        %v735 = vld [vmem:[%s706 + $0x150] sm:$0xff]
        %v736 = vld [vmem:[%s706 + $0x158] sm:$0xff]
        %v737 = vld [vmem:[%s706 + $0x168] sm:$0xff]
        %v738 = vld [vmem:[%s706 + $0x170] sm:$0xff]
        %v739 = vld [vmem:[%s706 + $0x1] sm:$0xff]
        %v740 = vld [vmem:[%s706 + $0x9] sm:$0xff]
        %v741 = vld [vmem:[%s706 + $0x19] sm:$0xff]
        %v742 = vld [vmem:[%s706 + $0x21] sm:$0xff]
        %v743 = vld [vmem:[%s706 + $0x31] sm:$0xff]
        %v744 = vld [vmem:[%s706 + $0x39] sm:$0xff]
        %v745 = vld [vmem:[%s706 + $0x49] sm:$0xff]
        %v746 = vld [vmem:[%s706 + $0x51] sm:$0xff]
        %v747 = vld [vmem:[%s706 + $0x61] sm:$0xff]
        %v748 = vld [vmem:[%s706 + $0x69] sm:$0xff]
        %v749 = vld [vmem:[%s706 + $0x79] sm:$0xff]
        %v750 = vld [vmem:[%s706 + $0x81] sm:$0xff]
        %v751 = vld [vmem:[%s706 + $0x91] sm:$0xff]
        %v752 = vld [vmem:[%s706 + $0x99] sm:$0xff]
        %v753 = vld [vmem:[%s706 + $0xa9] sm:$0xff]
        %v754 = vld [vmem:[%s706 + $0xb1] sm:$0xff]
        %v755 = vld [vmem:[%s706 + $0xc1] sm:$0xff]
        %v756 = vld [vmem:[%s706 + $0xc9] sm:$0xff]
        %v757 = vld [vmem:[%s706 + $0xd9] sm:$0xff]
        %v758 = vld [vmem:[%s706 + $0xe1] sm:$0xff]
        %v759 = vld [vmem:[%s706 + $0xf1] sm:$0xff]
        %v760 = vld [vmem:[%s706 + $0xf9] sm:$0xff]
        %v761 = vld [vmem:[%s706 + $0x109] sm:$0xff]
        %v762 = vld [vmem:[%s706 + $0x111] sm:$0xff]
        %v763 = vld [vmem:[%s706 + $0x121] sm:$0xff]
        %v764 = vld [vmem:[%s706 + $0x129] sm:$0xff]
        %v765 = vld [vmem:[%s706 + $0x139] sm:$0xff]
        %v766 = vld [vmem:[%s706 + $0x141] sm:$0xff]
        %v767 = vld [vmem:[%s706 + $0x151] sm:$0xff]
        %v768 = vld [vmem:[%s706 + $0x159] sm:$0xff]
        %v769 = vld [vmem:[%s706 + $0x169] sm:$0xff]
        %v770 = vld [vmem:[%s706 + $0x171] sm:$0xff]
        %v771 = vld [vmem:[%s706 + $0x2] sm:$0xff]
        %v772 = vld [vmem:[%s706 + $0xa] sm:$0xff]
        %v773 = vld [vmem:[%s706 + $0x1a] sm:$0xff]
        %v774 = vld [vmem:[%s706 + $0x22] sm:$0xff]
        %v775 = vld [vmem:[%s706 + $0x32] sm:$0xff]
        %v776 = vld [vmem:[%s706 + $0x3a] sm:$0xff]
        %v777 = vld [vmem:[%s706 + $0x4a] sm:$0xff]
        %v778 = vld [vmem:[%s706 + $0x52] sm:$0xff]
        %v779 = vld [vmem:[%s706 + $0x62] sm:$0xff]
        %v780 = vld [vmem:[%s706 + $0x6a] sm:$0xff]
        %v781 = vld [vmem:[%s706 + $0x7a] sm:$0xff]
        %v782 = vld [vmem:[%s706 + $0x82] sm:$0xff]
        %v783 = vld [vmem:[%s706 + $0x92] sm:$0xff]
        %v784 = vld [vmem:[%s706 + $0x9a] sm:$0xff]
        %v785 = vld [vmem:[%s706 + $0xaa] sm:$0xff]
        %v786 = vld [vmem:[%s706 + $0xb2] sm:$0xff]
        %v787 = vld [vmem:[%s706 + $0xc2] sm:$0xff]
        %v788 = vld [vmem:[%s706 + $0xca] sm:$0xff]
        %v789 = vld [vmem:[%s706 + $0xda] sm:$0xff]
        %v790 = vld [vmem:[%s706 + $0xe2] sm:$0xff]
        %v791 = vld [vmem:[%s706 + $0xf2] sm:$0xff]
        %v792 = vld [vmem:[%s706 + $0xfa] sm:$0xff]
        %v793 = vld [vmem:[%s706 + $0x10a] sm:$0xff]
        %v794 = vld [vmem:[%s706 + $0x112] sm:$0xff]
        %v795 = vld [vmem:[%s706 + $0x122] sm:$0xff]
        %v796 = vld [vmem:[%s706 + $0x12a] sm:$0xff]
        %v797 = vld [vmem:[%s706 + $0x13a] sm:$0xff]
        %v798 = vld [vmem:[%s706 + $0x142] sm:$0xff]
        %v799 = vld [vmem:[%s706 + $0x152] sm:$0xff]
        %v800 = vld [vmem:[%s706 + $0x15a] sm:$0xff]
        %v801 = vld [vmem:[%s706 + $0x16a] sm:$0xff]
        %v802 = vld [vmem:[%s706 + $0x172] sm:$0xff]
        %835 = vrot.lane.b32.xlu0 %v546, 4
        %v836 = vpop.permute.xlu0 %835
        %837 = vrot.lane.b32.xlu0 %v547, 4
        %v838 = vpop.permute.xlu0 %837
        %839 = vrot.lane.b32.xlu0 %v548, 4
        %v840 = vpop.permute.xlu0 %839
        %841 = vrot.lane.b32.xlu0 %v549, 4
        %v842 = vpop.permute.xlu0 %841
        %843 = vrot.lane.b32.xlu0 %v550, 4
        %v844 = vpop.permute.xlu0 %843
        %845 = vrot.lane.b32.xlu0 %v551, 4
        %v846 = vpop.permute.xlu0 %845
        %847 = vrot.lane.b32.xlu0 %v552, 4
        %v848 = vpop.permute.xlu0 %847
        %849 = vrot.lane.b32.xlu0 %v553, 4
        %v850 = vpop.permute.xlu0 %849
        %851 = vrot.lane.b32.xlu0 %v554, 4
        %v852 = vpop.permute.xlu0 %851
        %853 = vrot.lane.b32.xlu0 %v555, 4
        %v854 = vpop.permute.xlu0 %853
        %855 = vrot.lane.b32.xlu0 %v556, 4
        %v856 = vpop.permute.xlu0 %855
        %857 = vrot.lane.b32.xlu0 %v557, 4
        %v858 = vpop.permute.xlu0 %857
        %859 = vrot.lane.b32.xlu0 %v558, 4
        %v860 = vpop.permute.xlu0 %859
        %861 = vrot.lane.b32.xlu0 %v559, 4
        %v862 = vpop.permute.xlu0 %861
        %863 = vrot.lane.b32.xlu0 %v560, 4
        %v864 = vpop.permute.xlu0 %863
        %865 = vrot.lane.b32.xlu0 %v561, 4
        %v866 = vpop.permute.xlu0 %865
        %867 = vrot.lane.b32.xlu0 %v562, 4
        %v868 = vpop.permute.xlu0 %867
        %869 = vrot.lane.b32.xlu0 %v563, 4
        %v870 = vpop.permute.xlu0 %869
        %871 = vrot.lane.b32.xlu0 %v564, 4
        %v872 = vpop.permute.xlu0 %871
        %873 = vrot.lane.b32.xlu0 %v565, 4
        %v874 = vpop.permute.xlu0 %873
        %875 = vrot.lane.b32.xlu0 %v566, 4
        %v876 = vpop.permute.xlu0 %875
        %877 = vrot.lane.b32.xlu0 %v567, 4
        %v878 = vpop.permute.xlu0 %877
        %879 = vrot.lane.b32.xlu0 %v568, 4
        %v880 = vpop.permute.xlu0 %879
        %881 = vrot.lane.b32.xlu0 %v569, 4
        %v882 = vpop.permute.xlu0 %881
        %883 = vrot.lane.b32.xlu0 %v570, 4
        %v884 = vpop.permute.xlu0 %883
        %885 = vrot.lane.b32.xlu0 %v571, 4
        %v886 = vpop.permute.xlu0 %885
        %887 = vrot.lane.b32.xlu0 %v572, 4
        %v888 = vpop.permute.xlu0 %887
        %889 = vrot.lane.b32.xlu0 %v573, 4
        %v890 = vpop.permute.xlu0 %889
        %891 = vrot.lane.b32.xlu0 %v574, 4
        %v892 = vpop.permute.xlu0 %891
        %893 = vrot.lane.b32.xlu0 %v575, 4
        %v894 = vpop.permute.xlu0 %893
        %895 = vrot.lane.b32.xlu0 %v576, 4
        %v896 = vpop.permute.xlu0 %895
        %897 = vrot.lane.b32.xlu0 %v577, 4
        %v898 = vpop.permute.xlu0 %897
        %963 = vrot.lane.b32.xlu0 %v578, 8
        %v964 = vpop.permute.xlu0 %963
        %965 = vrot.lane.b32.xlu0 %v579, 8
        %v966 = vpop.permute.xlu0 %965
        %967 = vrot.lane.b32.xlu0 %v580, 8
        %v968 = vpop.permute.xlu0 %967
        %969 = vrot.lane.b32.xlu0 %v581, 8
        %v970 = vpop.permute.xlu0 %969
        %971 = vrot.lane.b32.xlu0 %v582, 8
        %v972 = vpop.permute.xlu0 %971
        %973 = vrot.lane.b32.xlu0 %v583, 8
        %v974 = vpop.permute.xlu0 %973
        %975 = vrot.lane.b32.xlu0 %v584, 8
        %v976 = vpop.permute.xlu0 %975
        %977 = vrot.lane.b32.xlu0 %v585, 8
        %v978 = vpop.permute.xlu0 %977
        %979 = vrot.lane.b32.xlu0 %v586, 8
        %v980 = vpop.permute.xlu0 %979
        %981 = vrot.lane.b32.xlu0 %v587, 8
        %v982 = vpop.permute.xlu0 %981
        %983 = vrot.lane.b32.xlu0 %v588, 8
        %v984 = vpop.permute.xlu0 %983
        %985 = vrot.lane.b32.xlu0 %v589, 8
        %v986 = vpop.permute.xlu0 %985
        %987 = vrot.lane.b32.xlu0 %v590, 8
        %v988 = vpop.permute.xlu0 %987
        %989 = vrot.lane.b32.xlu0 %v591, 8
        %v990 = vpop.permute.xlu0 %989
        %991 = vrot.lane.b32.xlu0 %v592, 8
        %v992 = vpop.permute.xlu0 %991
        %993 = vrot.lane.b32.xlu0 %v593, 8
        %v994 = vpop.permute.xlu0 %993
        %995 = vrot.lane.b32.xlu0 %v594, 8
        %v996 = vpop.permute.xlu0 %995
        %997 = vrot.lane.b32.xlu0 %v595, 8
        %v998 = vpop.permute.xlu0 %997
        %999 = vrot.lane.b32.xlu0 %v596, 8
        %v1000 = vpop.permute.xlu0 %999
        %1001 = vrot.lane.b32.xlu0 %v597, 8
        %v1002 = vpop.permute.xlu0 %1001
        %1003 = vrot.lane.b32.xlu0 %v598, 8
        %v1004 = vpop.permute.xlu0 %1003
        %1005 = vrot.lane.b32.xlu0 %v599, 8
        %v1006 = vpop.permute.xlu0 %1005
        %1007 = vrot.lane.b32.xlu0 %v600, 8
        %v1008 = vpop.permute.xlu0 %1007
        %1009 = vrot.lane.b32.xlu0 %v601, 8
        %v1010 = vpop.permute.xlu0 %1009
        %1011 = vrot.lane.b32.xlu0 %v602, 8
        %v1012 = vpop.permute.xlu0 %1011
        %1013 = vrot.lane.b32.xlu0 %v603, 8
        %v1014 = vpop.permute.xlu0 %1013
        %1015 = vrot.lane.b32.xlu0 %v604, 8
        %v1016 = vpop.permute.xlu0 %1015
        %1017 = vrot.lane.b32.xlu0 %v605, 8
        %v1018 = vpop.permute.xlu0 %1017
        %1019 = vrot.lane.b32.xlu0 %v606, 8
        %v1020 = vpop.permute.xlu0 %1019
        %1021 = vrot.lane.b32.xlu0 %v607, 8
        %v1022 = vpop.permute.xlu0 %1021
        %1023 = vrot.lane.b32.xlu0 %v608, 8
        %v1024 = vpop.permute.xlu0 %1023
        %1025 = vrot.lane.b32.xlu0 %v609, 8
        %v1026 = vpop.permute.xlu0 %1025
        %1091 = vrot.lane.b32.xlu0 %v610, 12
        %v1092 = vpop.permute.xlu0 %1091
        %1093 = vrot.lane.b32.xlu0 %v611, 12
        %v1094 = vpop.permute.xlu0 %1093
        %1095 = vrot.lane.b32.xlu0 %v612, 12
        %v1096 = vpop.permute.xlu0 %1095
        %1097 = vrot.lane.b32.xlu0 %v613, 12
        %v1098 = vpop.permute.xlu0 %1097
        %1099 = vrot.lane.b32.xlu0 %v614, 12
        %v1100 = vpop.permute.xlu0 %1099
        %1101 = vrot.lane.b32.xlu0 %v615, 12
        %v1102 = vpop.permute.xlu0 %1101
        %1103 = vrot.lane.b32.xlu0 %v616, 12
        %v1104 = vpop.permute.xlu0 %1103
        %1105 = vrot.lane.b32.xlu0 %v617, 12
        %v1106 = vpop.permute.xlu0 %1105
        %1107 = vrot.lane.b32.xlu0 %v618, 12
        %v1108 = vpop.permute.xlu0 %1107
        %1109 = vrot.lane.b32.xlu0 %v619, 12
        %v1110 = vpop.permute.xlu0 %1109
        %1111 = vrot.lane.b32.xlu0 %v620, 12
        %v1112 = vpop.permute.xlu0 %1111
        %1113 = vrot.lane.b32.xlu0 %v621, 12
        %v1114 = vpop.permute.xlu0 %1113
        %1115 = vrot.lane.b32.xlu0 %v622, 12
        %v1116 = vpop.permute.xlu0 %1115
        %1117 = vrot.lane.b32.xlu0 %v623, 12
        %v1118 = vpop.permute.xlu0 %1117
        %1119 = vrot.lane.b32.xlu0 %v624, 12
        %v1120 = vpop.permute.xlu0 %1119
        %1121 = vrot.lane.b32.xlu0 %v625, 12
        %v1122 = vpop.permute.xlu0 %1121
        %1123 = vrot.lane.b32.xlu0 %v626, 12
        %v1124 = vpop.permute.xlu0 %1123
        %1125 = vrot.lane.b32.xlu0 %v627, 12
        %v1126 = vpop.permute.xlu0 %1125
        %1127 = vrot.lane.b32.xlu0 %v628, 12
        %v1128 = vpop.permute.xlu0 %1127
        %1129 = vrot.lane.b32.xlu0 %v629, 12
        %v1130 = vpop.permute.xlu0 %1129
        %1131 = vrot.lane.b32.xlu0 %v630, 12
        %v1132 = vpop.permute.xlu0 %1131
        %1133 = vrot.lane.b32.xlu0 %v631, 12
        %v1134 = vpop.permute.xlu0 %1133
        %1135 = vrot.lane.b32.xlu0 %v632, 12
        %v1136 = vpop.permute.xlu0 %1135
        %1137 = vrot.lane.b32.xlu0 %v633, 12
        %v1138 = vpop.permute.xlu0 %1137
        %1139 = vrot.lane.b32.xlu0 %v634, 12
        %v1140 = vpop.permute.xlu0 %1139
        %1141 = vrot.lane.b32.xlu0 %v635, 12
        %v1142 = vpop.permute.xlu0 %1141
        %1143 = vrot.lane.b32.xlu0 %v636, 12
        %v1144 = vpop.permute.xlu0 %1143
        %1145 = vrot.lane.b32.xlu0 %v637, 12
        %v1146 = vpop.permute.xlu0 %1145
        %1147 = vrot.lane.b32.xlu0 %v638, 12
        %v1148 = vpop.permute.xlu0 %1147
        %1149 = vrot.lane.b32.xlu0 %v639, 12
        %v1150 = vpop.permute.xlu0 %1149
        %1151 = vrot.lane.b32.xlu0 %v640, 12
        %v1152 = vpop.permute.xlu0 %1151
        %1153 = vrot.lane.b32.xlu0 %v641, 12
        %v1154 = vpop.permute.xlu0 %1153
        %1219 = vrot.lane.b32.xlu0 %v642, 16
        %v1220 = vpop.permute.xlu0 %1219
        %1221 = vrot.lane.b32.xlu0 %v643, 16
        %v1222 = vpop.permute.xlu0 %1221
        %1223 = vrot.lane.b32.xlu0 %v644, 16
        %v1224 = vpop.permute.xlu0 %1223
        %1225 = vrot.lane.b32.xlu0 %v645, 16
        %v1226 = vpop.permute.xlu0 %1225
        %1227 = vrot.lane.b32.xlu0 %v646, 16
        %v1228 = vpop.permute.xlu0 %1227
        %1229 = vrot.lane.b32.xlu0 %v647, 16
        %v1230 = vpop.permute.xlu0 %1229
        %1231 = vrot.lane.b32.xlu0 %v648, 16
        %v1232 = vpop.permute.xlu0 %1231
        %1233 = vrot.lane.b32.xlu0 %v649, 16
        %v1234 = vpop.permute.xlu0 %1233
        %1235 = vrot.lane.b32.xlu0 %v650, 16
        %v1236 = vpop.permute.xlu0 %1235
        %1237 = vrot.lane.b32.xlu0 %v651, 16
        %v1238 = vpop.permute.xlu0 %1237
        %1239 = vrot.lane.b32.xlu0 %v652, 16
        %v1240 = vpop.permute.xlu0 %1239
        %1241 = vrot.lane.b32.xlu0 %v653, 16
        %v1242 = vpop.permute.xlu0 %1241
        %1243 = vrot.lane.b32.xlu0 %v654, 16
        %v1244 = vpop.permute.xlu0 %1243
        %1245 = vrot.lane.b32.xlu0 %v655, 16
        %v1246 = vpop.permute.xlu0 %1245
        %1247 = vrot.lane.b32.xlu0 %v656, 16
        %v1248 = vpop.permute.xlu0 %1247
        %1249 = vrot.lane.b32.xlu0 %v657, 16
        %v1250 = vpop.permute.xlu0 %1249
        %1251 = vrot.lane.b32.xlu0 %v658, 16
        %v1252 = vpop.permute.xlu0 %1251
        %1253 = vrot.lane.b32.xlu0 %v659, 16
        %v1254 = vpop.permute.xlu0 %1253
        %1255 = vrot.lane.b32.xlu0 %v660, 16
        %v1256 = vpop.permute.xlu0 %1255
        %1257 = vrot.lane.b32.xlu0 %v661, 16
        %v1258 = vpop.permute.xlu0 %1257
        %1259 = vrot.lane.b32.xlu0 %v662, 16
        %v1260 = vpop.permute.xlu0 %1259
        %1261 = vrot.lane.b32.xlu0 %v663, 16
        %v1262 = vpop.permute.xlu0 %1261
        %1263 = vrot.lane.b32.xlu0 %v664, 16
        %v1264 = vpop.permute.xlu0 %1263
        %1265 = vrot.lane.b32.xlu0 %v665, 16
        %v1266 = vpop.permute.xlu0 %1265
        %1267 = vrot.lane.b32.xlu0 %v666, 16
        %v1268 = vpop.permute.xlu0 %1267
        %1269 = vrot.lane.b32.xlu0 %v667, 16
        %v1270 = vpop.permute.xlu0 %1269
        %1271 = vrot.lane.b32.xlu0 %v668, 16
        %v1272 = vpop.permute.xlu0 %1271
        %1273 = vrot.lane.b32.xlu0 %v669, 16
        %v1274 = vpop.permute.xlu0 %1273
        %1275 = vrot.lane.b32.xlu0 %v670, 16
        %v1276 = vpop.permute.xlu0 %1275
        %1277 = vrot.lane.b32.xlu0 %v671, 16
        %v1278 = vpop.permute.xlu0 %1277
        %1279 = vrot.lane.b32.xlu0 %v672, 16
        %v1280 = vpop.permute.xlu0 %1279
        %1281 = vrot.lane.b32.xlu0 %v673, 16
        %v1282 = vpop.permute.xlu0 %1281
        %1347 = vrot.lane.b32.xlu0 %v674, 20
        %v1348 = vpop.permute.xlu0 %1347
        %1349 = vrot.lane.b32.xlu0 %v675, 20
        %v1350 = vpop.permute.xlu0 %1349
        %1351 = vrot.lane.b32.xlu0 %v676, 20
        %v1352 = vpop.permute.xlu0 %1351
        %1353 = vrot.lane.b32.xlu0 %v677, 20
        %v1354 = vpop.permute.xlu0 %1353
        %1355 = vrot.lane.b32.xlu0 %v678, 20
        %v1356 = vpop.permute.xlu0 %1355
        %1357 = vrot.lane.b32.xlu0 %v679, 20
        %v1358 = vpop.permute.xlu0 %1357
        %1359 = vrot.lane.b32.xlu0 %v680, 20
        %v1360 = vpop.permute.xlu0 %1359
        %1361 = vrot.lane.b32.xlu0 %v681, 20
        %v1362 = vpop.permute.xlu0 %1361
        %1363 = vrot.lane.b32.xlu0 %v682, 20
        %v1364 = vpop.permute.xlu0 %1363
        %1365 = vrot.lane.b32.xlu0 %v683, 20
        %v1366 = vpop.permute.xlu0 %1365
        %1367 = vrot.lane.b32.xlu0 %v684, 20
        %v1368 = vpop.permute.xlu0 %1367
        %1369 = vrot.lane.b32.xlu0 %v685, 20
        %v1370 = vpop.permute.xlu0 %1369
        %1371 = vrot.lane.b32.xlu0 %v686, 20
        %v1372 = vpop.permute.xlu0 %1371
        %1373 = vrot.lane.b32.xlu0 %v687, 20
        %v1374 = vpop.permute.xlu0 %1373
        %1375 = vrot.lane.b32.xlu0 %v688, 20
        %v1376 = vpop.permute.xlu0 %1375
        %1377 = vrot.lane.b32.xlu0 %v689, 20
        %v1378 = vpop.permute.xlu0 %1377
        %1379 = vrot.lane.b32.xlu0 %v690, 20
        %v1380 = vpop.permute.xlu0 %1379
        %1381 = vrot.lane.b32.xlu0 %v691, 20
        %v1382 = vpop.permute.xlu0 %1381
        %1383 = vrot.lane.b32.xlu0 %v692, 20
        %v1384 = vpop.permute.xlu0 %1383
        %1385 = vrot.lane.b32.xlu0 %v693, 20
        %v1386 = vpop.permute.xlu0 %1385
        %1387 = vrot.lane.b32.xlu0 %v694, 20
        %v1388 = vpop.permute.xlu0 %1387
        %1389 = vrot.lane.b32.xlu0 %v695, 20
        %v1390 = vpop.permute.xlu0 %1389
        %1391 = vrot.lane.b32.xlu0 %v696, 20
        %v1392 = vpop.permute.xlu0 %1391
        %1393 = vrot.lane.b32.xlu0 %v697, 20
        %v1394 = vpop.permute.xlu0 %1393
        %1395 = vrot.lane.b32.xlu0 %v698, 20
        %v1396 = vpop.permute.xlu0 %1395
        %1397 = vrot.lane.b32.xlu0 %v699, 20
        %v1398 = vpop.permute.xlu0 %1397
        %1399 = vrot.lane.b32.xlu0 %v700, 20
        %v1400 = vpop.permute.xlu0 %1399
        %1401 = vrot.lane.b32.xlu0 %v701, 20
        %v1402 = vpop.permute.xlu0 %1401
        %1403 = vrot.lane.b32.xlu0 %v702, 20
        %v1404 = vpop.permute.xlu0 %1403
        %1405 = vrot.lane.b32.xlu0 %v703, 20
        %v1406 = vpop.permute.xlu0 %1405
        %1407 = vrot.lane.b32.xlu0 %v704, 20
        %v1408 = vpop.permute.xlu0 %1407
        %1409 = vrot.lane.b32.xlu0 %v705, 20
        %v1410 = vpop.permute.xlu0 %1409
        %1475 = vrot.lane.b32.xlu0 %v707, 24
        %v1476 = vpop.permute.xlu0 %1475
        %1477 = vrot.lane.b32.xlu0 %v708, 24
        %v1478 = vpop.permute.xlu0 %1477
        %1479 = vrot.lane.b32.xlu0 %v709, 24
        %v1480 = vpop.permute.xlu0 %1479
        %1481 = vrot.lane.b32.xlu0 %v710, 24
        %v1482 = vpop.permute.xlu0 %1481
        %1483 = vrot.lane.b32.xlu0 %v711, 24
        %v1484 = vpop.permute.xlu0 %1483
        %1485 = vrot.lane.b32.xlu0 %v712, 24
        %v1486 = vpop.permute.xlu0 %1485
        %1487 = vrot.lane.b32.xlu0 %v713, 24
        %v1488 = vpop.permute.xlu0 %1487
        %1489 = vrot.lane.b32.xlu0 %v714, 24
        %v1490 = vpop.permute.xlu0 %1489
        %1491 = vrot.lane.b32.xlu0 %v715, 24
        %v1492 = vpop.permute.xlu0 %1491
        %1493 = vrot.lane.b32.xlu0 %v716, 24
        %v1494 = vpop.permute.xlu0 %1493
        %1495 = vrot.lane.b32.xlu0 %v717, 24
        %v1496 = vpop.permute.xlu0 %1495
        %1497 = vrot.lane.b32.xlu0 %v718, 24
        %v1498 = vpop.permute.xlu0 %1497
        %1499 = vrot.lane.b32.xlu0 %v719, 24
        %v1500 = vpop.permute.xlu0 %1499
        %1501 = vrot.lane.b32.xlu0 %v720, 24
        %v1502 = vpop.permute.xlu0 %1501
        %1503 = vrot.lane.b32.xlu0 %v721, 24
        %v1504 = vpop.permute.xlu0 %1503
        %1505 = vrot.lane.b32.xlu0 %v722, 24
        %v1506 = vpop.permute.xlu0 %1505
        %1507 = vrot.lane.b32.xlu0 %v723, 24
        %v1508 = vpop.permute.xlu0 %1507
        %1509 = vrot.lane.b32.xlu0 %v724, 24
        %v1510 = vpop.permute.xlu0 %1509
        %1511 = vrot.lane.b32.xlu0 %v725, 24
        %v1512 = vpop.permute.xlu0 %1511
        %1513 = vrot.lane.b32.xlu0 %v726, 24
        %v1514 = vpop.permute.xlu0 %1513
        %1515 = vrot.lane.b32.xlu0 %v727, 24
        %v1516 = vpop.permute.xlu0 %1515
        %1517 = vrot.lane.b32.xlu0 %v728, 24
        %v1518 = vpop.permute.xlu0 %1517
        %1519 = vrot.lane.b32.xlu0 %v729, 24
        %v1520 = vpop.permute.xlu0 %1519
        %1521 = vrot.lane.b32.xlu0 %v730, 24
        %v1522 = vpop.permute.xlu0 %1521
        %1523 = vrot.lane.b32.xlu0 %v731, 24
        %v1524 = vpop.permute.xlu0 %1523
        %1525 = vrot.lane.b32.xlu0 %v732, 24
        %v1526 = vpop.permute.xlu0 %1525
        %1527 = vrot.lane.b32.xlu0 %v733, 24
        %v1528 = vpop.permute.xlu0 %1527
        %1529 = vrot.lane.b32.xlu0 %v734, 24
        %v1530 = vpop.permute.xlu0 %1529
        %1531 = vrot.lane.b32.xlu0 %v735, 24
        %v1532 = vpop.permute.xlu0 %1531
        %1533 = vrot.lane.b32.xlu0 %v736, 24
        %v1534 = vpop.permute.xlu0 %1533
        %1535 = vrot.lane.b32.xlu0 %v737, 24
        %v1536 = vpop.permute.xlu0 %1535
        %1537 = vrot.lane.b32.xlu0 %v738, 24
        %v1538 = vpop.permute.xlu0 %1537
        %1603 = vrot.lane.b32.xlu0 %v739, 28
        %v1604 = vpop.permute.xlu0 %1603
        %1605 = vrot.lane.b32.xlu0 %v740, 28
        %v1606 = vpop.permute.xlu0 %1605
        %1607 = vrot.lane.b32.xlu0 %v741, 28
        %v1608 = vpop.permute.xlu0 %1607
        %1609 = vrot.lane.b32.xlu0 %v742, 28
        %v1610 = vpop.permute.xlu0 %1609
        %1611 = vrot.lane.b32.xlu0 %v743, 28
        %v1612 = vpop.permute.xlu0 %1611
        %1613 = vrot.lane.b32.xlu0 %v744, 28
        %v1614 = vpop.permute.xlu0 %1613
        %1615 = vrot.lane.b32.xlu0 %v745, 28
        %v1616 = vpop.permute.xlu0 %1615
        %1617 = vrot.lane.b32.xlu0 %v746, 28
        %v1618 = vpop.permute.xlu0 %1617
        %1619 = vrot.lane.b32.xlu0 %v747, 28
        %v1620 = vpop.permute.xlu0 %1619
        %1621 = vrot.lane.b32.xlu0 %v748, 28
        %v1622 = vpop.permute.xlu0 %1621
        %1623 = vrot.lane.b32.xlu0 %v749, 28
        %v1624 = vpop.permute.xlu0 %1623
        %1625 = vrot.lane.b32.xlu0 %v750, 28
        %v1626 = vpop.permute.xlu0 %1625
        %1627 = vrot.lane.b32.xlu0 %v751, 28
        %v1628 = vpop.permute.xlu0 %1627
        %1629 = vrot.lane.b32.xlu0 %v752, 28
        %v1630 = vpop.permute.xlu0 %1629
        %1631 = vrot.lane.b32.xlu0 %v753, 28
        %v1632 = vpop.permute.xlu0 %1631
        %1633 = vrot.lane.b32.xlu0 %v754, 28
        %v1634 = vpop.permute.xlu0 %1633
        %1635 = vrot.lane.b32.xlu0 %v755, 28
        %v1636 = vpop.permute.xlu0 %1635
        %1637 = vrot.lane.b32.xlu0 %v756, 28
        %v1638 = vpop.permute.xlu0 %1637
        %1639 = vrot.lane.b32.xlu0 %v757, 28
        %v1640 = vpop.permute.xlu0 %1639
        %1641 = vrot.lane.b32.xlu0 %v758, 28
        %v1642 = vpop.permute.xlu0 %1641
        %1643 = vrot.lane.b32.xlu0 %v759, 28
        %v1644 = vpop.permute.xlu0 %1643
        %1645 = vrot.lane.b32.xlu0 %v760, 28
        %v1646 = vpop.permute.xlu0 %1645
        %1647 = vrot.lane.b32.xlu0 %v761, 28
        %v1648 = vpop.permute.xlu0 %1647
        %1649 = vrot.lane.b32.xlu0 %v762, 28
        %v1650 = vpop.permute.xlu0 %1649
        %1651 = vrot.lane.b32.xlu0 %v763, 28
        %v1652 = vpop.permute.xlu0 %1651
        %1653 = vrot.lane.b32.xlu0 %v764, 28
        %v1654 = vpop.permute.xlu0 %1653
        %1655 = vrot.lane.b32.xlu0 %v765, 28
        %v1656 = vpop.permute.xlu0 %1655
        %1657 = vrot.lane.b32.xlu0 %v766, 28
        %v1658 = vpop.permute.xlu0 %1657
        %1659 = vrot.lane.b32.xlu0 %v767, 28
        %v1660 = vpop.permute.xlu0 %1659
        %1661 = vrot.lane.b32.xlu0 %v768, 28
        %v1662 = vpop.permute.xlu0 %1661
        %1663 = vrot.lane.b32.xlu0 %v769, 28
        %v1664 = vpop.permute.xlu0 %1663
        %1665 = vrot.lane.b32.xlu0 %v770, 28
        %v1666 = vpop.permute.xlu0 %1665
        %1731 = vrot.lane.b32.xlu0 %v771, 32
        %v1732 = vpop.permute.xlu0 %1731
        %1733 = vrot.lane.b32.xlu0 %v772, 32
        %v1734 = vpop.permute.xlu0 %1733
        %1735 = vrot.lane.b32.xlu0 %v773, 32
        %v1736 = vpop.permute.xlu0 %1735
        %1737 = vrot.lane.b32.xlu0 %v774, 32
        %v1738 = vpop.permute.xlu0 %1737
        %1739 = vrot.lane.b32.xlu0 %v775, 32
        %v1740 = vpop.permute.xlu0 %1739
        %1741 = vrot.lane.b32.xlu0 %v776, 32
        %v1742 = vpop.permute.xlu0 %1741
        %1743 = vrot.lane.b32.xlu0 %v777, 32
        %v1744 = vpop.permute.xlu0 %1743
        %1745 = vrot.lane.b32.xlu0 %v778, 32
        %v1746 = vpop.permute.xlu0 %1745
        %1747 = vrot.lane.b32.xlu0 %v779, 32
        %v1748 = vpop.permute.xlu0 %1747
        %1749 = vrot.lane.b32.xlu0 %v780, 32
        %v1750 = vpop.permute.xlu0 %1749
        %1751 = vrot.lane.b32.xlu0 %v781, 32
        %v1752 = vpop.permute.xlu0 %1751
        %1753 = vrot.lane.b32.xlu0 %v782, 32
        %v1754 = vpop.permute.xlu0 %1753
        %1755 = vrot.lane.b32.xlu0 %v783, 32
        %v1756 = vpop.permute.xlu0 %1755
        %1757 = vrot.lane.b32.xlu0 %v784, 32
        %v1758 = vpop.permute.xlu0 %1757
        %1759 = vrot.lane.b32.xlu0 %v785, 32
        %v1760 = vpop.permute.xlu0 %1759
        %1761 = vrot.lane.b32.xlu0 %v786, 32
        %v1762 = vpop.permute.xlu0 %1761
        %1763 = vrot.lane.b32.xlu0 %v787, 32
        %v1764 = vpop.permute.xlu0 %1763
        %1765 = vrot.lane.b32.xlu0 %v788, 32
        %v1766 = vpop.permute.xlu0 %1765
        %1767 = vrot.lane.b32.xlu0 %v789, 32
        %v1768 = vpop.permute.xlu0 %1767
        %1769 = vrot.lane.b32.xlu0 %v790, 32
        %v1770 = vpop.permute.xlu0 %1769
        %1771 = vrot.lane.b32.xlu0 %v791, 32
        %v1772 = vpop.permute.xlu0 %1771
        %1773 = vrot.lane.b32.xlu0 %v792, 32
        %v1774 = vpop.permute.xlu0 %1773
        %1775 = vrot.lane.b32.xlu0 %v793, 32
        %v1776 = vpop.permute.xlu0 %1775
        %1777 = vrot.lane.b32.xlu0 %v794, 32
        %v1778 = vpop.permute.xlu0 %1777
        %1779 = vrot.lane.b32.xlu0 %v795, 32
        %v1780 = vpop.permute.xlu0 %1779
        %1781 = vrot.lane.b32.xlu0 %v796, 32
        %v1782 = vpop.permute.xlu0 %1781
        %1783 = vrot.lane.b32.xlu0 %v797, 32
        %v1784 = vpop.permute.xlu0 %1783
        %1785 = vrot.lane.b32.xlu0 %v798, 32
        %v1786 = vpop.permute.xlu0 %1785
        %1787 = vrot.lane.b32.xlu0 %v799, 32
        %v1788 = vpop.permute.xlu0 %1787
        %1789 = vrot.lane.b32.xlu0 %v800, 32
        %v1790 = vpop.permute.xlu0 %1789
        %1791 = vrot.lane.b32.xlu0 %v801, 32
        %v1792 = vpop.permute.xlu0 %1791
        %1793 = vrot.lane.b32.xlu0 %v802, 32
        %v1794 = vpop.permute.xlu0 %1793
        %v1827 = vsel %vm332, %v514, %v836
        %v1828 = vsel %vm332, %v515, %v838
        %v1829 = vsel %vm332, %v516, %v840
        %v1830 = vsel %vm332, %v517, %v842
        %v1831 = vsel %vm332, %v518, %v844
        %v1832 = vsel %vm332, %v519, %v846
        %v1833 = vsel %vm332, %v520, %v848
        %v1834 = vsel %vm332, %v521, %v850
        %v1835 = vsel %vm332, %v522, %v852
        %v1836 = vsel %vm332, %v523, %v854
        %v1837 = vsel %vm332, %v524, %v856
        %v1838 = vsel %vm332, %v525, %v858
        %v1839 = vsel %vm332, %v526, %v860
        %v1840 = vsel %vm332, %v527, %v862
        %v1841 = vsel %vm332, %v528, %v864
        %v1842 = vsel %vm332, %v529, %v866
        %v1843 = vsel %vm332, %v530, %v868
        %v1844 = vsel %vm332, %v531, %v870
        %v1845 = vsel %vm332, %v532, %v872
        %v1846 = vsel %vm332, %v533, %v874
        %v1847 = vsel %vm332, %v534, %v876
        %v1848 = vsel %vm332, %v535, %v878
        %v1849 = vsel %vm332, %v536, %v880
        %v1850 = vsel %vm332, %v537, %v882
        %v1851 = vsel %vm332, %v538, %v884
        %v1852 = vsel %vm332, %v539, %v886
        %v1853 = vsel %vm332, %v540, %v888
        %v1854 = vsel %vm332, %v541, %v890
        %v1855 = vsel %vm332, %v542, %v892
        %v1856 = vsel %vm332, %v543, %v894
        %v1857 = vsel %vm332, %v544, %v896
        %v1858 = vsel %vm332, %v545, %v898
        %vm1859 = vcmask 64512
        %v1860 = vsel %vm1859, %v1827, %v964
        %v1861 = vsel %vm1859, %v1828, %v966
        %v1862 = vsel %vm1859, %v1829, %v968
        %v1863 = vsel %vm1859, %v1830, %v970
        %v1864 = vsel %vm1859, %v1831, %v972
        %v1865 = vsel %vm1859, %v1832, %v974
        %v1866 = vsel %vm1859, %v1833, %v976
        %v1867 = vsel %vm1859, %v1834, %v978
        %v1868 = vsel %vm1859, %v1835, %v980
        %v1869 = vsel %vm1859, %v1836, %v982
        %v1870 = vsel %vm1859, %v1837, %v984
        %v1871 = vsel %vm1859, %v1838, %v986
        %v1872 = vsel %vm1859, %v1839, %v988
        %v1873 = vsel %vm1859, %v1840, %v990
        %v1874 = vsel %vm1859, %v1841, %v992
        %v1875 = vsel %vm1859, %v1842, %v994
        %v1876 = vsel %vm1859, %v1843, %v996
        %v1877 = vsel %vm1859, %v1844, %v998
        %v1878 = vsel %vm1859, %v1845, %v1000
        %v1879 = vsel %vm1859, %v1846, %v1002
        %v1880 = vsel %vm1859, %v1847, %v1004
        %v1881 = vsel %vm1859, %v1848, %v1006
        %v1882 = vsel %vm1859, %v1849, %v1008
        %v1883 = vsel %vm1859, %v1850, %v1010
        %v1884 = vsel %vm1859, %v1851, %v1012
        %v1885 = vsel %vm1859, %v1852, %v1014
        %v1886 = vsel %vm1859, %v1853, %v1016
        %v1887 = vsel %vm1859, %v1854, %v1018
        %v1888 = vsel %vm1859, %v1855, %v1020
        %v1889 = vsel %vm1859, %v1856, %v1022
        %v1890 = vsel %vm1859, %v1857, %v1024
        %v1891 = vsel %vm1859, %v1858, %v1026
        %vm1892 = vcmask 97280
        %v1893 = vsel %vm1892, %v1860, %v1092
        %v1894 = vsel %vm1892, %v1861, %v1094
        %v1895 = vsel %vm1892, %v1862, %v1096
        %v1896 = vsel %vm1892, %v1863, %v1098
        %v1897 = vsel %vm1892, %v1864, %v1100
        %v1898 = vsel %vm1892, %v1865, %v1102
        %v1899 = vsel %vm1892, %v1866, %v1104
        %v1900 = vsel %vm1892, %v1867, %v1106
        %v1901 = vsel %vm1892, %v1868, %v1108
        %v1902 = vsel %vm1892, %v1869, %v1110
        %v1903 = vsel %vm1892, %v1870, %v1112
        %v1904 = vsel %vm1892, %v1871, %v1114
        %v1905 = vsel %vm1892, %v1872, %v1116
        %v1906 = vsel %vm1892, %v1873, %v1118
        %v1907 = vsel %vm1892, %v1874, %v1120
        %v1908 = vsel %vm1892, %v1875, %v1122
        %v1909 = vsel %vm1892, %v1876, %v1124
        %v1910 = vsel %vm1892, %v1877, %v1126
        %v1911 = vsel %vm1892, %v1878, %v1128
        %v1912 = vsel %vm1892, %v1879, %v1130
        %v1913 = vsel %vm1892, %v1880, %v1132
        %v1914 = vsel %vm1892, %v1881, %v1134
        %v1915 = vsel %vm1892, %v1882, %v1136
        %v1916 = vsel %vm1892, %v1883, %v1138
        %v1917 = vsel %vm1892, %v1884, %v1140
        %v1918 = vsel %vm1892, %v1885, %v1142
        %v1919 = vsel %vm1892, %v1886, %v1144
        %v1920 = vsel %vm1892, %v1887, %v1146
        %v1921 = vsel %vm1892, %v1888, %v1148
        %v1922 = vsel %vm1892, %v1889, %v1150
        %v1923 = vsel %vm1892, %v1890, %v1152
        %v1924 = vsel %vm1892, %v1891, %v1154
        %vm1925 = vcmask 130048
        %v1926 = vsel %vm1925, %v1893, %v1220
        %v1927 = vsel %vm1925, %v1894, %v1222
        %v1928 = vsel %vm1925, %v1895, %v1224
        %v1929 = vsel %vm1925, %v1896, %v1226
        %v1930 = vsel %vm1925, %v1897, %v1228
        %v1931 = vsel %vm1925, %v1898, %v1230
        %v1932 = vsel %vm1925, %v1899, %v1232
        %v1933 = vsel %vm1925, %v1900, %v1234
        %v1934 = vsel %vm1925, %v1901, %v1236
        %v1935 = vsel %vm1925, %v1902, %v1238
        %v1936 = vsel %vm1925, %v1903, %v1240
        %v1937 = vsel %vm1925, %v1904, %v1242
        %v1938 = vsel %vm1925, %v1905, %v1244
        %v1939 = vsel %vm1925, %v1906, %v1246
        %v1940 = vsel %vm1925, %v1907, %v1248
        %v1941 = vsel %vm1925, %v1908, %v1250
        %v1942 = vsel %vm1925, %v1909, %v1252
        %v1943 = vsel %vm1925, %v1910, %v1254
        %v1944 = vsel %vm1925, %v1911, %v1256
        %v1945 = vsel %vm1925, %v1912, %v1258
        %v1946 = vsel %vm1925, %v1913, %v1260
        %v1947 = vsel %vm1925, %v1914, %v1262
        %v1948 = vsel %vm1925, %v1915, %v1264
        %v1949 = vsel %vm1925, %v1916, %v1266
        %v1950 = vsel %vm1925, %v1917, %v1268
        %v1951 = vsel %vm1925, %v1918, %v1270
        %v1952 = vsel %vm1925, %v1919, %v1272
        %v1953 = vsel %vm1925, %v1920, %v1274
        %v1954 = vsel %vm1925, %v1921, %v1276
        %v1955 = vsel %vm1925, %v1922, %v1278
        %v1956 = vsel %vm1925, %v1923, %v1280
        %v1957 = vsel %vm1925, %v1924, %v1282
        %vm1958 = vcmask 162816
        %v1959 = vsel %vm1958, %v1926, %v1348
        %v1960 = vsel %vm1958, %v1927, %v1350
        %v1961 = vsel %vm1958, %v1928, %v1352
        %v1962 = vsel %vm1958, %v1929, %v1354
        %v1963 = vsel %vm1958, %v1930, %v1356
        %v1964 = vsel %vm1958, %v1931, %v1358
        %v1965 = vsel %vm1958, %v1932, %v1360
        %v1966 = vsel %vm1958, %v1933, %v1362
        %v1967 = vsel %vm1958, %v1934, %v1364
        %v1968 = vsel %vm1958, %v1935, %v1366
        %v1969 = vsel %vm1958, %v1936, %v1368
        %v1970 = vsel %vm1958, %v1937, %v1370
        %v1971 = vsel %vm1958, %v1938, %v1372
        %v1972 = vsel %vm1958, %v1939, %v1374
        %v1973 = vsel %vm1958, %v1940, %v1376
        %v1974 = vsel %vm1958, %v1941, %v1378
        %v1975 = vsel %vm1958, %v1942, %v1380
        %v1976 = vsel %vm1958, %v1943, %v1382
        %v1977 = vsel %vm1958, %v1944, %v1384
        %v1978 = vsel %vm1958, %v1945, %v1386
        %v1979 = vsel %vm1958, %v1946, %v1388
        %v1980 = vsel %vm1958, %v1947, %v1390
        %v1981 = vsel %vm1958, %v1948, %v1392
        %v1982 = vsel %vm1958, %v1949, %v1394
        %v1983 = vsel %vm1958, %v1950, %v1396
        %v1984 = vsel %vm1958, %v1951, %v1398
        %v1985 = vsel %vm1958, %v1952, %v1400
        %v1986 = vsel %vm1958, %v1953, %v1402
        %v1987 = vsel %vm1958, %v1954, %v1404
        %v1988 = vsel %vm1958, %v1955, %v1406
        %v1989 = vsel %vm1958, %v1956, %v1408
        %v1990 = vsel %vm1958, %v1957, %v1410
        %vm1991 = vcmask 195584
        %v1992 = vsel %vm1991, %v1959, %v1476
        %v1993 = vsel %vm1991, %v1960, %v1478
        %v1994 = vsel %vm1991, %v1961, %v1480
        %v1995 = vsel %vm1991, %v1962, %v1482
        %v1996 = vsel %vm1991, %v1963, %v1484
        %v1997 = vsel %vm1991, %v1964, %v1486
        %v1998 = vsel %vm1991, %v1965, %v1488
        %v1999 = vsel %vm1991, %v1966, %v1490
        %v2000 = vsel %vm1991, %v1967, %v1492
        %v2001 = vsel %vm1991, %v1968, %v1494
        %v2002 = vsel %vm1991, %v1969, %v1496
        %v2003 = vsel %vm1991, %v1970, %v1498
        %v2004 = vsel %vm1991, %v1971, %v1500
        %v2005 = vsel %vm1991, %v1972, %v1502
        %v2006 = vsel %vm1991, %v1973, %v1504
        %v2007 = vsel %vm1991, %v1974, %v1506
        %v2008 = vsel %vm1991, %v1975, %v1508
        %v2009 = vsel %vm1991, %v1976, %v1510
        %v2010 = vsel %vm1991, %v1977, %v1512
        %v2011 = vsel %vm1991, %v1978, %v1514
        %v2012 = vsel %vm1991, %v1979, %v1516
        %v2013 = vsel %vm1991, %v1980, %v1518
        %v2014 = vsel %vm1991, %v1981, %v1520
        %v2015 = vsel %vm1991, %v1982, %v1522
        %v2016 = vsel %vm1991, %v1983, %v1524
        %v2017 = vsel %vm1991, %v1984, %v1526
        %v2018 = vsel %vm1991, %v1985, %v1528
        %v2019 = vsel %vm1991, %v1986, %v1530
        %v2020 = vsel %vm1991, %v1987, %v1532
        %v2021 = vsel %vm1991, %v1988, %v1534
        %v2022 = vsel %vm1991, %v1989, %v1536
        %v2023 = vsel %vm1991, %v1990, %v1538
        %vm2024 = vcmask 228352
        %v2025 = vsel %vm2024, %v1992, %v1604
        %v2026 = vsel %vm2024, %v1993, %v1606
        %v2027 = vsel %vm2024, %v1994, %v1608
        %v2028 = vsel %vm2024, %v1995, %v1610
        %v2029 = vsel %vm2024, %v1996, %v1612
        %v2030 = vsel %vm2024, %v1997, %v1614
        %v2031 = vsel %vm2024, %v1998, %v1616
        %v2032 = vsel %vm2024, %v1999, %v1618
        %v2033 = vsel %vm2024, %v2000, %v1620
        %v2034 = vsel %vm2024, %v2001, %v1622
        %v2035 = vsel %vm2024, %v2002, %v1624
        %v2036 = vsel %vm2024, %v2003, %v1626
        %v2037 = vsel %vm2024, %v2004, %v1628
        %v2038 = vsel %vm2024, %v2005, %v1630
        %v2039 = vsel %vm2024, %v2006, %v1632
        %v2040 = vsel %vm2024, %v2007, %v1634
        %v2041 = vsel %vm2024, %v2008, %v1636
        %v2042 = vsel %vm2024, %v2009, %v1638
        %v2043 = vsel %vm2024, %v2010, %v1640
        %v2044 = vsel %vm2024, %v2011, %v1642
        %v2045 = vsel %vm2024, %v2012, %v1644
        %v2046 = vsel %vm2024, %v2013, %v1646
        %v2047 = vsel %vm2024, %v2014, %v1648
        %v2048 = vsel %vm2024, %v2015, %v1650
        %v2049 = vsel %vm2024, %v2016, %v1652
        %v2050 = vsel %vm2024, %v2017, %v1654
        %v2051 = vsel %vm2024, %v2018, %v1656
        %v2052 = vsel %vm2024, %v2019, %v1658
        %v2053 = vsel %vm2024, %v2020, %v1660
        %v2054 = vsel %vm2024, %v2021, %v1662
        %v2055 = vsel %vm2024, %v2022, %v1664
        %v2056 = vsel %vm2024, %v2023, %v1666
        %vm2057 = vcmask 261120
        %v2058 = vsel %vm2057, %v2025, %v1732
        %v2059 = vsel %vm2057, %v2026, %v1734
        %v2060 = vsel %vm2057, %v2027, %v1736
        %v2061 = vsel %vm2057, %v2028, %v1738
        %v2062 = vsel %vm2057, %v2029, %v1740
        %v2063 = vsel %vm2057, %v2030, %v1742
        %v2064 = vsel %vm2057, %v2031, %v1744
        %v2065 = vsel %vm2057, %v2032, %v1746
        %v2066 = vsel %vm2057, %v2033, %v1748
        %v2067 = vsel %vm2057, %v2034, %v1750
        %v2068 = vsel %vm2057, %v2035, %v1752
        %v2069 = vsel %vm2057, %v2036, %v1754
        %v2070 = vsel %vm2057, %v2037, %v1756
        %v2071 = vsel %vm2057, %v2038, %v1758
        %v2072 = vsel %vm2057, %v2039, %v1760
        %v2073 = vsel %vm2057, %v2040, %v1762
        %v2074 = vsel %vm2057, %v2041, %v1764
        %v2075 = vsel %vm2057, %v2042, %v1766
        %v2076 = vsel %vm2057, %v2043, %v1768
        %v2077 = vsel %vm2057, %v2044, %v1770
        %v2078 = vsel %vm2057, %v2045, %v1772
        %v2079 = vsel %vm2057, %v2046, %v1774
        %v2080 = vsel %vm2057, %v2047, %v1776
        %v2081 = vsel %vm2057, %v2048, %v1778
        %v2082 = vsel %vm2057, %v2049, %v1780
        %v2083 = vsel %vm2057, %v2050, %v1782
        %v2084 = vsel %vm2057, %v2051, %v1784
        %v2085 = vsel %vm2057, %v2052, %v1786
        %v2086 = vsel %vm2057, %v2053, %v1788
        %v2087 = vsel %vm2057, %v2054, %v1790
        %v2088 = vsel %vm2057, %v2055, %v1792
        %v2089 = vsel %vm2057, %v2056, %v1794
        %v2090 = vpack.c.bf16 %v2059, %v2058
        %v2091 = vpack.c.bf16 %v2061, %v2060
        %v2092 = vpack.c.bf16 %v2063, %v2062
        %v2093 = vpack.c.bf16 %v2065, %v2064
        %v2094 = vpack.c.bf16 %v2067, %v2066
        %v2095 = vpack.c.bf16 %v2069, %v2068
        %v2096 = vpack.c.bf16 %v2071, %v2070
        %v2097 = vpack.c.bf16 %v2073, %v2072
        %v2098 = vpack.c.bf16 %v2075, %v2074
        %v2099 = vpack.c.bf16 %v2077, %v2076
        %v2100 = vpack.c.bf16 %v2079, %v2078
        %v2101 = vpack.c.bf16 %v2081, %v2080
        %v2102 = vpack.c.bf16 %v2083, %v2082
        %v2103 = vpack.c.bf16 %v2085, %v2084
        %v2104 = vpack.c.bf16 %v2087, %v2086
        %v2105 = vpack.c.bf16 %v2089, %v2088
        %v2107 = vperm.slane %v513, 0
        %v2114 = vunpack.c.l.b16 %v508
        %v2115 = vunpack.c.l.b16 %v509
        %v2116 = vunpack.c.l.b16 %v510
        %v2117 = vunpack.c.l.b16 %v511
        %v2118 = vunpack.c.l.b16 %v512
        %v2119 = vpack.c.b16 %v2115, %v2114
        %v2120 = vpack.c.b16 %v2117, %v2116
        %v2121 = vpack.c.b16 %v2118, %v2118
        %vm2124 = vcmask 293888
        %v2126 = vsel %vm2124, %v2090, 0
        %v2129 = vsel %vm2124, %v2091, 0
        %v2132 = vsel %vm2124, %v2092, 0
        %v2135 = vsel %vm2124, %v2093, 0
        %v2138 = vsel %vm2124, %v2094, 0
        %v2141 = vsel %vm2124, %v2095, 0
        %v2144 = vsel %vm2124, %v2096, 0
        %v2147 = vsel %vm2124, %v2097, 0
        %v2150 = vsel %vm2124, %v2098, 0
        %v2153 = vsel %vm2124, %v2099, 0
        %v2156 = vsel %vm2124, %v2100, 0
        %v2159 = vsel %vm2124, %v2101, 0
        %v2162 = vsel %vm2124, %v2102, 0
        %v2165 = vsel %vm2124, %v2103, 0
        %v2168 = vsel %vm2124, %v2104, 0
        %v2171 = vsel %vm2124, %v2105, 0
        %vm2173 = vcmask 1041408
        %v2175 = vsel %vm2173, %v2121, 0
        %2177 = vmatpush.bf16.msra.mxu0 0
        %2178 = vmatpush.bf16.msra.mxu0 0
        %2179 = vmatpush.bf16.msra.mxu0 0
        %2180 = vmatpush.bf16.msra.mxu0 0
        %2181 = vmatpush.bf16.msra.mxu0 0
        %2182 = vmatpush.bf16.msra.mxu0 %v2175
        %2183 = vmatpush.bf16.msra.mxu0 %v2120
        %2184 = vmatpush.bf16.msra.mxu0 %v2119
        %2185 = vmatmul.bf16.gmra.mxu0 %v2126
        %v2186 = vpop.f32.mrf.mxu0
        %v2187 = vadd.f32 %v2107, %v2186
        %v2188 = vpop.f32.mrf.mxu0
        %v2189 = vadd.f32 %v2107, %v2188
        %2190 = vmatmul.bf16.gmra.mxu0 %v2129
        %v2191 = vpop.f32.mrf.mxu0
        %v2192 = vadd.f32 %v2107, %v2191
        %v2193 = vpop.f32.mrf.mxu0
        %v2194 = vadd.f32 %v2107, %v2193
        %2195 = vmatmul.bf16.gmra.mxu0 %v2132
        %v2196 = vpop.f32.mrf.mxu0
        %v2197 = vadd.f32 %v2107, %v2196
        %v2198 = vpop.f32.mrf.mxu0
        %v2199 = vadd.f32 %v2107, %v2198
        %2200 = vmatmul.bf16.gmra.mxu0 %v2135
        %v2201 = vpop.f32.mrf.mxu0
        %v2202 = vadd.f32 %v2107, %v2201
        %v2203 = vpop.f32.mrf.mxu0
        %v2204 = vadd.f32 %v2107, %v2203
        %2205 = vmatmul.bf16.gmra.mxu0 %v2138
        %v2206 = vpop.f32.mrf.mxu0
        %v2207 = vadd.f32 %v2107, %v2206
        %v2208 = vpop.f32.mrf.mxu0
        %v2209 = vadd.f32 %v2107, %v2208
        %2210 = vmatmul.bf16.gmra.mxu0 %v2141
        %v2211 = vpop.f32.mrf.mxu0
        %v2212 = vadd.f32 %v2107, %v2211
        %v2213 = vpop.f32.mrf.mxu0
        %v2214 = vadd.f32 %v2107, %v2213
        %2215 = vmatmul.bf16.gmra.mxu0 %v2144
        %v2216 = vpop.f32.mrf.mxu0
        %v2217 = vadd.f32 %v2107, %v2216
        %v2218 = vpop.f32.mrf.mxu0
        %v2219 = vadd.f32 %v2107, %v2218
        %2220 = vmatmul.bf16.gmra.mxu0 %v2147
        %v2221 = vpop.f32.mrf.mxu0
        %v2222 = vadd.f32 %v2107, %v2221
        %v2223 = vpop.f32.mrf.mxu0
        %v2224 = vadd.f32 %v2107, %v2223
        %2225 = vmatmul.bf16.gmra.mxu0 %v2150
        %v2226 = vpop.f32.mrf.mxu0
        %v2227 = vadd.f32 %v2107, %v2226
        %v2228 = vpop.f32.mrf.mxu0
        %v2229 = vadd.f32 %v2107, %v2228
        %2230 = vmatmul.bf16.gmra.mxu0 %v2153
        %v2231 = vpop.f32.mrf.mxu0
        %v2232 = vadd.f32 %v2107, %v2231
        %v2233 = vpop.f32.mrf.mxu0
        %v2234 = vadd.f32 %v2107, %v2233
        %2235 = vmatmul.bf16.gmra.mxu0 %v2156
        %v2236 = vpop.f32.mrf.mxu0
        %v2237 = vadd.f32 %v2107, %v2236
        %v2238 = vpop.f32.mrf.mxu0
        %v2239 = vadd.f32 %v2107, %v2238
        %2240 = vmatmul.bf16.gmra.mxu0 %v2159
        %v2241 = vpop.f32.mrf.mxu0
        %v2242 = vadd.f32 %v2107, %v2241
        %v2243 = vpop.f32.mrf.mxu0
        %v2244 = vadd.f32 %v2107, %v2243
        %2245 = vmatmul.bf16.gmra.mxu0 %v2162
        %v2246 = vpop.f32.mrf.mxu0
        %v2247 = vadd.f32 %v2107, %v2246
        %v2248 = vpop.f32.mrf.mxu0
        %v2249 = vadd.f32 %v2107, %v2248
        %2250 = vmatmul.bf16.gmra.mxu0 %v2165
        %v2251 = vpop.f32.mrf.mxu0
        %v2252 = vadd.f32 %v2107, %v2251
        %v2253 = vpop.f32.mrf.mxu0
        %v2254 = vadd.f32 %v2107, %v2253
        %2255 = vmatmul.bf16.gmra.mxu0 %v2168
        %v2256 = vpop.f32.mrf.mxu0
        %v2257 = vadd.f32 %v2107, %v2256
        %v2258 = vpop.f32.mrf.mxu0
        %v2259 = vadd.f32 %v2107, %v2258
        %2260 = vmatmul.bf16.gmra.mxu0 %v2171
        %v2261 = vpop.f32.mrf.mxu0
        %v2262 = vadd.f32 %v2107, %v2261
        %v2263 = vpop.f32.mrf.mxu0
        %v2264 = vadd.f32 %v2107, %v2263
        %2265 = vdwg.mxu0
        %v2266 = vmax.f32 %v2187, 0.0
        %v2267 = vmax.f32 %v2189, 0.0
        %v2268 = vmax.f32 %v2192, 0.0
        %v2269 = vmax.f32 %v2194, 0.0
        %v2270 = vmax.f32 %v2197, 0.0
        %v2271 = vmax.f32 %v2199, 0.0
        %v2272 = vmax.f32 %v2202, 0.0
        %v2273 = vmax.f32 %v2204, 0.0
        %v2274 = vmax.f32 %v2207, 0.0
        %v2275 = vmax.f32 %v2209, 0.0
        %v2276 = vmax.f32 %v2212, 0.0
        %v2277 = vmax.f32 %v2214, 0.0
        %v2278 = vmax.f32 %v2217, 0.0
        %v2279 = vmax.f32 %v2219, 0.0
        %v2280 = vmax.f32 %v2222, 0.0
        %v2281 = vmax.f32 %v2224, 0.0
        %v2282 = vmax.f32 %v2227, 0.0
        %v2283 = vmax.f32 %v2229, 0.0
        %v2284 = vmax.f32 %v2232, 0.0
        %v2285 = vmax.f32 %v2234, 0.0
        %v2286 = vmax.f32 %v2237, 0.0
        %v2287 = vmax.f32 %v2239, 0.0
        %v2288 = vmax.f32 %v2242, 0.0
        %v2289 = vmax.f32 %v2244, 0.0
        %v2290 = vmax.f32 %v2247, 0.0
        %v2291 = vmax.f32 %v2249, 0.0
        %v2292 = vmax.f32 %v2252, 0.0
        %v2293 = vmax.f32 %v2254, 0.0
        %v2294 = vmax.f32 %v2257, 0.0
        %v2295 = vmax.f32 %v2259, 0.0
        %v2296 = vmax.f32 %v2262, 0.0
        %v2297 = vmax.f32 %v2264, 0.0
        %v2298 = vmax.f32 %v2266, %v2268
        %v2299 = vmax.f32 %v2267, %v2269
        %v2300 = vmax.f32 %v2270, %v2272
        %v2301 = vmax.f32 %v2271, %v2273
        %v2302 = vmax.f32 %v2274, %v2276
        %v2303 = vmax.f32 %v2275, %v2277
        %v2304 = vmax.f32 %v2278, %v2280
        %v2305 = vmax.f32 %v2279, %v2281
        %v2306 = vmax.f32 %v2282, %v2284
        %v2307 = vmax.f32 %v2283, %v2285
        %v2308 = vmax.f32 %v2286, %v2288
        %v2309 = vmax.f32 %v2287, %v2289
        %v2310 = vmax.f32 %v2290, %v2292
        %v2311 = vmax.f32 %v2291, %v2293
        %v2312 = vmax.f32 %v2294, %v2296
        %v2313 = vmax.f32 %v2295, %v2297
        %v2330 = vrot.slane %v2298, 2
        %v2331 = vrot.slane %v2298, 4
        %v2332 = vrot.slane %v2298, 6
        %v2333 = vrot.slane %v2299, 2
        %v2334 = vrot.slane %v2299, 4
        %v2335 = vrot.slane %v2299, 6
        %v2336 = vrot.slane %v2300, 2
        %v2337 = vrot.slane %v2300, 4
        %v2338 = vrot.slane %v2300, 6
        %v2339 = vrot.slane %v2301, 2
        %v2340 = vrot.slane %v2301, 4
        %v2341 = vrot.slane %v2301, 6
        %v2342 = vrot.slane %v2302, 2
        %v2343 = vrot.slane %v2302, 4
        %v2344 = vrot.slane %v2302, 6
        %v2345 = vrot.slane %v2303, 2
        %v2346 = vrot.slane %v2303, 4
        %v2347 = vrot.slane %v2303, 6
        %v2348 = vrot.slane %v2304, 2
        %v2349 = vrot.slane %v2304, 4
        %v2350 = vrot.slane %v2304, 6
        %v2351 = vrot.slane %v2305, 2
        %v2352 = vrot.slane %v2305, 4
        %v2353 = vrot.slane %v2305, 6
        %v2354 = vrot.slane %v2306, 2
        %v2355 = vrot.slane %v2306, 4
        %v2356 = vrot.slane %v2306, 6
        %v2357 = vrot.slane %v2307, 2
        %v2358 = vrot.slane %v2307, 4
        %v2359 = vrot.slane %v2307, 6
        %v2360 = vrot.slane %v2308, 2
        %v2361 = vrot.slane %v2308, 4
        %v2362 = vrot.slane %v2308, 6
        %v2363 = vrot.slane %v2309, 2
        %v2364 = vrot.slane %v2309, 4
        %v2365 = vrot.slane %v2309, 6
        %v2366 = vrot.slane %v2310, 2
        %v2367 = vrot.slane %v2310, 4
        %v2368 = vrot.slane %v2310, 6
        %v2369 = vrot.slane %v2311, 2
        %v2370 = vrot.slane %v2311, 4
        %v2371 = vrot.slane %v2311, 6
        %v2372 = vrot.slane %v2312, 2
        %v2373 = vrot.slane %v2312, 4
        %v2374 = vrot.slane %v2312, 6
        %v2375 = vrot.slane %v2313, 2
        %v2376 = vrot.slane %v2313, 4
        %v2377 = vrot.slane %v2313, 6
        %v2426 = vrot.slane %v2298, 7
        %v2427 = vrot.slane %v2426, 2
        %v2428 = vrot.slane %v2330, 7
        %v2429 = vrot.slane %v2428, 2
        %v2430 = vrot.slane %v2331, 7
        %v2431 = vrot.slane %v2430, 2
        %v2432 = vrot.slane %v2332, 7
        %v2433 = vrot.slane %v2432, 2
        %v2434 = vrot.slane %v2299, 7
        %v2435 = vrot.slane %v2434, 2
        %v2436 = vrot.slane %v2333, 7
        %v2437 = vrot.slane %v2436, 2
        %v2438 = vrot.slane %v2334, 7
        %v2439 = vrot.slane %v2438, 2
        %v2440 = vrot.slane %v2335, 7
        %v2441 = vrot.slane %v2440, 2
        %v2442 = vrot.slane %v2300, 7
        %v2443 = vrot.slane %v2442, 2
        %v2444 = vrot.slane %v2336, 7
        %v2445 = vrot.slane %v2444, 2
        %v2446 = vrot.slane %v2337, 7
        %v2447 = vrot.slane %v2446, 2
        %v2448 = vrot.slane %v2338, 7
        %v2449 = vrot.slane %v2448, 2
        %v2450 = vrot.slane %v2301, 7
        %v2451 = vrot.slane %v2450, 2
        %v2452 = vrot.slane %v2339, 7
        %v2453 = vrot.slane %v2452, 2
        %v2454 = vrot.slane %v2340, 7
        %v2455 = vrot.slane %v2454, 2
        %v2456 = vrot.slane %v2341, 7
        %v2457 = vrot.slane %v2456, 2
        %v2458 = vrot.slane %v2302, 7
        %v2459 = vrot.slane %v2458, 2
        %v2460 = vrot.slane %v2342, 7
        %v2461 = vrot.slane %v2460, 2
        %v2462 = vrot.slane %v2343, 7
        %v2463 = vrot.slane %v2462, 2
        %v2464 = vrot.slane %v2344, 7
        %v2465 = vrot.slane %v2464, 2
        %v2466 = vrot.slane %v2303, 7
        %v2467 = vrot.slane %v2466, 2
        %v2468 = vrot.slane %v2345, 7
        %v2469 = vrot.slane %v2468, 2
        %v2470 = vrot.slane %v2346, 7
        %v2471 = vrot.slane %v2470, 2
        %v2472 = vrot.slane %v2347, 7
        %v2473 = vrot.slane %v2472, 2
        %v2474 = vrot.slane %v2304, 7
        %v2475 = vrot.slane %v2474, 2
        %v2476 = vrot.slane %v2348, 7
        %v2477 = vrot.slane %v2476, 2
        %v2478 = vrot.slane %v2349, 7
        %v2479 = vrot.slane %v2478, 2
        %v2480 = vrot.slane %v2350, 7
        %v2481 = vrot.slane %v2480, 2
        %v2482 = vrot.slane %v2305, 7
        %v2483 = vrot.slane %v2482, 2
        %v2484 = vrot.slane %v2351, 7
        %v2485 = vrot.slane %v2484, 2
        %v2486 = vrot.slane %v2352, 7
        %v2487 = vrot.slane %v2486, 2
        %v2488 = vrot.slane %v2353, 7
        %v2489 = vrot.slane %v2488, 2
        %v2490 = vrot.slane %v2306, 7
        %v2491 = vrot.slane %v2490, 2
        %v2492 = vrot.slane %v2354, 7
        %v2493 = vrot.slane %v2492, 2
        %v2494 = vrot.slane %v2355, 7
        %v2495 = vrot.slane %v2494, 2
        %v2496 = vrot.slane %v2356, 7
        %v2497 = vrot.slane %v2496, 2
        %v2498 = vrot.slane %v2307, 7
        %v2499 = vrot.slane %v2498, 2
        %v2500 = vrot.slane %v2357, 7
        %v2501 = vrot.slane %v2500, 2
        %v2502 = vrot.slane %v2358, 7
        %v2503 = vrot.slane %v2502, 2
        %v2504 = vrot.slane %v2359, 7
        %v2505 = vrot.slane %v2504, 2
        %v2506 = vrot.slane %v2308, 7
        %v2507 = vrot.slane %v2506, 2
        %v2508 = vrot.slane %v2360, 7
        %v2509 = vrot.slane %v2508, 2
        %v2510 = vrot.slane %v2361, 7
        %v2511 = vrot.slane %v2510, 2
        %v2512 = vrot.slane %v2362, 7
        %v2513 = vrot.slane %v2512, 2
        %v2514 = vrot.slane %v2309, 7
        %v2515 = vrot.slane %v2514, 2
        %v2516 = vrot.slane %v2363, 7
        %v2517 = vrot.slane %v2516, 2
        %v2518 = vrot.slane %v2364, 7
        %v2519 = vrot.slane %v2518, 2
        %v2520 = vrot.slane %v2365, 7
        %v2521 = vrot.slane %v2520, 2
        %v2522 = vrot.slane %v2310, 7
        %v2523 = vrot.slane %v2522, 2
        %v2524 = vrot.slane %v2366, 7
        %v2525 = vrot.slane %v2524, 2
        %v2526 = vrot.slane %v2367, 7
        %v2527 = vrot.slane %v2526, 2
        %v2528 = vrot.slane %v2368, 7
        %v2529 = vrot.slane %v2528, 2
        %v2530 = vrot.slane %v2311, 7
        %v2531 = vrot.slane %v2530, 2
        %v2532 = vrot.slane %v2369, 7
        %v2533 = vrot.slane %v2532, 2
        %v2534 = vrot.slane %v2370, 7
        %v2535 = vrot.slane %v2534, 2
        %v2536 = vrot.slane %v2371, 7
        %v2537 = vrot.slane %v2536, 2
        %v2538 = vrot.slane %v2312, 7
        %v2539 = vrot.slane %v2538, 2
        %v2540 = vrot.slane %v2372, 7
        %v2541 = vrot.slane %v2540, 2
        %v2542 = vrot.slane %v2373, 7
        %v2543 = vrot.slane %v2542, 2
        %v2544 = vrot.slane %v2374, 7
        %v2545 = vrot.slane %v2544, 2
        %v2546 = vrot.slane %v2313, 7
        %v2547 = vrot.slane %v2546, 2
        %v2548 = vrot.slane %v2375, 7
        %v2549 = vrot.slane %v2548, 2
        %v2550 = vrot.slane %v2376, 7
        %v2551 = vrot.slane %v2550, 2
        %v2552 = vrot.slane %v2377, 7
        %v2553 = vrot.slane %v2552, 2
        %v2618 = vmax.f32 %v2298, %v2427
        %v2619 = vmax.f32 %v2330, %v2429
        %v2620 = vmax.f32 %v2331, %v2431
        %v2621 = vmax.f32 %v2332, %v2433
        %v2622 = vmax.f32 %v2299, %v2435
        %v2623 = vmax.f32 %v2333, %v2437
        %v2624 = vmax.f32 %v2334, %v2439
        %v2625 = vmax.f32 %v2335, %v2441
        %v2626 = vmax.f32 %v2300, %v2443
        %v2627 = vmax.f32 %v2336, %v2445
        %v2628 = vmax.f32 %v2337, %v2447
        %v2629 = vmax.f32 %v2338, %v2449
        %v2630 = vmax.f32 %v2301, %v2451
        %v2631 = vmax.f32 %v2339, %v2453
        %v2632 = vmax.f32 %v2340, %v2455
        %v2633 = vmax.f32 %v2341, %v2457
        %v2634 = vmax.f32 %v2302, %v2459
        %v2635 = vmax.f32 %v2342, %v2461
        %v2636 = vmax.f32 %v2343, %v2463
        %v2637 = vmax.f32 %v2344, %v2465
        %v2638 = vmax.f32 %v2303, %v2467
        %v2639 = vmax.f32 %v2345, %v2469
        %v2640 = vmax.f32 %v2346, %v2471
        %v2641 = vmax.f32 %v2347, %v2473
        %v2642 = vmax.f32 %v2304, %v2475
        %v2643 = vmax.f32 %v2348, %v2477
        %v2644 = vmax.f32 %v2349, %v2479
        %v2645 = vmax.f32 %v2350, %v2481
        %v2646 = vmax.f32 %v2305, %v2483
        %v2647 = vmax.f32 %v2351, %v2485
        %v2648 = vmax.f32 %v2352, %v2487
        %v2649 = vmax.f32 %v2353, %v2489
        %v2650 = vmax.f32 %v2306, %v2491
        %v2651 = vmax.f32 %v2354, %v2493
        %v2652 = vmax.f32 %v2355, %v2495
        %v2653 = vmax.f32 %v2356, %v2497
        %v2654 = vmax.f32 %v2307, %v2499
        %v2655 = vmax.f32 %v2357, %v2501
        %v2656 = vmax.f32 %v2358, %v2503
        %v2657 = vmax.f32 %v2359, %v2505
        %v2658 = vmax.f32 %v2308, %v2507
        %v2659 = vmax.f32 %v2360, %v2509
        %v2660 = vmax.f32 %v2361, %v2511
        %v2661 = vmax.f32 %v2362, %v2513
        %v2662 = vmax.f32 %v2309, %v2515
        %v2663 = vmax.f32 %v2363, %v2517
        %v2664 = vmax.f32 %v2364, %v2519
        %v2665 = vmax.f32 %v2365, %v2521
        %v2666 = vmax.f32 %v2310, %v2523
        %v2667 = vmax.f32 %v2366, %v2525
        %v2668 = vmax.f32 %v2367, %v2527
        %v2669 = vmax.f32 %v2368, %v2529
        %v2670 = vmax.f32 %v2311, %v2531
        %v2671 = vmax.f32 %v2369, %v2533
        %v2672 = vmax.f32 %v2370, %v2535
        %v2673 = vmax.f32 %v2371, %v2537
        %v2674 = vmax.f32 %v2312, %v2539
        %v2675 = vmax.f32 %v2372, %v2541
        %v2676 = vmax.f32 %v2373, %v2543
        %v2677 = vmax.f32 %v2374, %v2545
        %v2678 = vmax.f32 %v2313, %v2547
        %v2679 = vmax.f32 %v2375, %v2549
        %v2680 = vmax.f32 %v2376, %v2551
        %v2681 = vmax.f32 %v2377, %v2553
        %v2746 = vperm.slane %v2618, 0
        %v2747 = vperm.slane %v2619, 0
        %v2748 = vperm.slane %v2620, 0
        %v2749 = vperm.slane %v2621, 0
        %v2750 = vperm.slane %v2622, 0
        %v2751 = vperm.slane %v2623, 0
        %v2752 = vperm.slane %v2624, 0
        %v2753 = vperm.slane %v2625, 0
        %v2754 = vperm.slane %v2626, 0
        %v2755 = vperm.slane %v2627, 0
        %v2756 = vperm.slane %v2628, 0
        %v2757 = vperm.slane %v2629, 0
        %v2758 = vperm.slane %v2630, 0
        %v2759 = vperm.slane %v2631, 0
        %v2760 = vperm.slane %v2632, 0
        %v2761 = vperm.slane %v2633, 0
        %v2762 = vperm.slane %v2634, 0
        %v2763 = vperm.slane %v2635, 0
        %v2764 = vperm.slane %v2636, 0
        %v2765 = vperm.slane %v2637, 0
        %v2766 = vperm.slane %v2638, 0
        %v2767 = vperm.slane %v2639, 0
        %v2768 = vperm.slane %v2640, 0
        %v2769 = vperm.slane %v2641, 0
        %v2770 = vperm.slane %v2642, 0
        %v2771 = vperm.slane %v2643, 0
        %v2772 = vperm.slane %v2644, 0
        %v2773 = vperm.slane %v2645, 0
        %v2774 = vperm.slane %v2646, 0
        %v2775 = vperm.slane %v2647, 0
        %v2776 = vperm.slane %v2648, 0
        %v2777 = vperm.slane %v2649, 0
        %v2778 = vperm.slane %v2650, 0
        %v2779 = vperm.slane %v2651, 0
        %v2780 = vperm.slane %v2652, 0
        %v2781 = vperm.slane %v2653, 0
        %v2782 = vperm.slane %v2654, 0
        %v2783 = vperm.slane %v2655, 0
        %v2784 = vperm.slane %v2656, 0
        %v2785 = vperm.slane %v2657, 0
        %v2786 = vperm.slane %v2658, 0
        %v2787 = vperm.slane %v2659, 0
        %v2788 = vperm.slane %v2660, 0
        %v2789 = vperm.slane %v2661, 0
        %v2790 = vperm.slane %v2662, 0
        %v2791 = vperm.slane %v2663, 0
        %v2792 = vperm.slane %v2664, 0
        %v2793 = vperm.slane %v2665, 0
        %v2794 = vperm.slane %v2666, 0
        %v2795 = vperm.slane %v2667, 0
        %v2796 = vperm.slane %v2668, 0
        %v2797 = vperm.slane %v2669, 0
        %v2798 = vperm.slane %v2670, 0
        %v2799 = vperm.slane %v2671, 0
        %v2800 = vperm.slane %v2672, 0
        %v2801 = vperm.slane %v2673, 0
        %v2802 = vperm.slane %v2674, 0
        %v2803 = vperm.slane %v2675, 0
        %v2804 = vperm.slane %v2676, 0
        %v2805 = vperm.slane %v2677, 0
        %v2806 = vperm.slane %v2678, 0
        %v2807 = vperm.slane %v2679, 0
        %v2808 = vperm.slane %v2680, 0
        %v2809 = vperm.slane %v2681, 0
        %vm2810 = vcmask 1041409
        %v2811 = vsel %vm2810, %v2747, %v2746
        %vm2812 = vcmask 1042434
        %v2813 = vsel %vm2812, %v2748, %v2811
        %vm2814 = vcmask 1043459
        %v2815 = vsel %vm2814, %v2749, %v2813
        %vm2816 = vcmask 1044484
        %v2817 = vsel %vm2816, %v2750, %v2815
        %vm2818 = vcmask 1045509
        %v2819 = vsel %vm2818, %v2751, %v2817
        %vm2820 = vcmask 1046534
        %v2821 = vsel %vm2820, %v2752, %v2819
        %vm2822 = vcmask 1047559
        %v2823 = vsel %vm2822, %v2753, %v2821
        %v2824 = vsel %vm2810, %v2755, %v2754
        %v2825 = vsel %vm2812, %v2756, %v2824
        %v2826 = vsel %vm2814, %v2757, %v2825
        %v2827 = vsel %vm2816, %v2758, %v2826
        %v2828 = vsel %vm2818, %v2759, %v2827
        %v2829 = vsel %vm2820, %v2760, %v2828
        %v2830 = vsel %vm2822, %v2761, %v2829
        %v2831 = vsel %vm2810, %v2763, %v2762
        %v2832 = vsel %vm2812, %v2764, %v2831
        %v2833 = vsel %vm2814, %v2765, %v2832
        %v2834 = vsel %vm2816, %v2766, %v2833
        %v2835 = vsel %vm2818, %v2767, %v2834
        %v2836 = vsel %vm2820, %v2768, %v2835
        %v2837 = vsel %vm2822, %v2769, %v2836
        %v2838 = vsel %vm2810, %v2771, %v2770
        %v2839 = vsel %vm2812, %v2772, %v2838
        %v2840 = vsel %vm2814, %v2773, %v2839
        %v2841 = vsel %vm2816, %v2774, %v2840
        %v2842 = vsel %vm2818, %v2775, %v2841
        %v2843 = vsel %vm2820, %v2776, %v2842
        %v2844 = vsel %vm2822, %v2777, %v2843
        %v2845 = vsel %vm2810, %v2779, %v2778
        %v2846 = vsel %vm2812, %v2780, %v2845
        %v2847 = vsel %vm2814, %v2781, %v2846
        %v2848 = vsel %vm2816, %v2782, %v2847
        %v2849 = vsel %vm2818, %v2783, %v2848
        %v2850 = vsel %vm2820, %v2784, %v2849
        %v2851 = vsel %vm2822, %v2785, %v2850
        %v2852 = vsel %vm2810, %v2787, %v2786
        %v2853 = vsel %vm2812, %v2788, %v2852
        %v2854 = vsel %vm2814, %v2789, %v2853
        %v2855 = vsel %vm2816, %v2790, %v2854
        %v2856 = vsel %vm2818, %v2791, %v2855
        %v2857 = vsel %vm2820, %v2792, %v2856
        %v2858 = vsel %vm2822, %v2793, %v2857
        %v2859 = vsel %vm2810, %v2795, %v2794
        %v2860 = vsel %vm2812, %v2796, %v2859
        %v2861 = vsel %vm2814, %v2797, %v2860
        %v2862 = vsel %vm2816, %v2798, %v2861
        %v2863 = vsel %vm2818, %v2799, %v2862
        %v2864 = vsel %vm2820, %v2800, %v2863
        %v2865 = vsel %vm2822, %v2801, %v2864
        %v2866 = vsel %vm2810, %v2803, %v2802
        %v2867 = vsel %vm2812, %v2804, %v2866
        %v2868 = vsel %vm2814, %v2805, %v2867
        %v2869 = vsel %vm2816, %v2806, %v2868
        %v2870 = vsel %vm2818, %v2807, %v2869
        %v2871 = vsel %vm2820, %v2808, %v2870
        %v2872 = vsel %vm2822, %v2809, %v2871
        %s2881 = scalar_lea.vmem [#allocation3], 16
        %2882 = vst.msk [vmem:[%s2881 + $0x1] sm:$0xff] %vm378, %v2823
        %2883 = vst.msk [vmem:[%s2881 + $0x11] sm:$0xff] %vm378, %v2830
        %2884 = vst.msk [vmem:[%s2881 + $0x21] sm:$0xff] %vm378, %v2837
        %2885 = vst.msk [vmem:[%s2881 + $0x31] sm:$0xff] %vm378, %v2844
        %2886 = vst.msk [vmem:[%s2881 + $0x41] sm:$0xff] %vm378, %v2851
        %2887 = vst.msk [vmem:[%s2881 + $0x51] sm:$0xff] %vm378, %v2858
        %2888 = vst.msk [vmem:[%s2881 + $0x61] sm:$0xff] %vm378, %v2865
        %2889 = vst.msk [vmem:[%s2881 + $0x71] sm:$0xff] %vm378, %v2872
        %v2890 = vld [vmem:[%s4] sm:$0x1]
        %v2891 = vld [vmem:[#allocation3] sm:$0xff]
        %v2892 = vld [vmem:[#allocation3 + $0x10] sm:$0xff]
        %v2893 = vld [vmem:[#allocation3 + $0x20] sm:$0xff]
        %v2894 = vld [vmem:[#allocation3 + $0x30] sm:$0xff]
        %v2895 = vld [vmem:[#allocation3 + $0x40] sm:$0xff]
        %v2896 = vld [vmem:[#allocation3 + $0x50] sm:$0xff]
        %v2897 = vld [vmem:[#allocation3 + $0x60] sm:$0xff]
        %v2898 = vld [vmem:[#allocation3 + $0x70] sm:$0xff]
        %v2899 = vld [vmem:[#allocation3 + $0x80] sm:$0xff]
        %v2900 = vld [vmem:[#allocation3 + $0x90] sm:$0xff]
        %v2901 = vld [vmem:[#allocation3 + $0x1] sm:$0xff]
        %v2902 = vld [vmem:[#allocation3 + $0x11] sm:$0xff]
        %v2903 = vld [vmem:[#allocation3 + $0x21] sm:$0xff]
        %v2904 = vld [vmem:[#allocation3 + $0x31] sm:$0xff]
        %v2905 = vld [vmem:[#allocation3 + $0x41] sm:$0xff]
        %v2906 = vld [vmem:[#allocation3 + $0x51] sm:$0xff]
        %v2907 = vld [vmem:[#allocation3 + $0x61] sm:$0xff]
        %v2908 = vld [vmem:[#allocation3 + $0x71] sm:$0xff]
        %v2909 = vld [vmem:[#allocation3 + $0x81] sm:$0xff]
        %v2910 = vld [vmem:[#allocation3 + $0x91] sm:$0xff]
        %v2911 = vld [vmem:[#allocation3 + $0x2] sm:$0xff]
        %v2912 = vld [vmem:[#allocation3 + $0x12] sm:$0xff]
        %v2913 = vld [vmem:[#allocation3 + $0x22] sm:$0xff]
        %v2914 = vld [vmem:[#allocation3 + $0x32] sm:$0xff]
        %v2915 = vld [vmem:[#allocation3 + $0x42] sm:$0xff]
        %v2916 = vld [vmem:[#allocation3 + $0x52] sm:$0xff]
        %v2917 = vld [vmem:[#allocation3 + $0x62] sm:$0xff]
        %v2918 = vld [vmem:[#allocation3 + $0x72] sm:$0xff]
        %v2919 = vld [vmem:[#allocation3 + $0x82] sm:$0xff]
        %v2920 = vld [vmem:[#allocation3 + $0x92] sm:$0xff]
        %2931 = vrot.lane.b32.xlu0 %v2901, 64
        %v2932 = vpop.permute.xlu0 %2931
        %2933 = vrot.lane.b32.xlu0 %v2902, 64
        %v2934 = vpop.permute.xlu0 %2933
        %2935 = vrot.lane.b32.xlu0 %v2903, 64
        %v2936 = vpop.permute.xlu0 %2935
        %2937 = vrot.lane.b32.xlu0 %v2904, 64
        %v2938 = vpop.permute.xlu0 %2937
        %2939 = vrot.lane.b32.xlu0 %v2905, 64
        %v2940 = vpop.permute.xlu0 %2939
        %2941 = vrot.lane.b32.xlu0 %v2906, 64
        %v2942 = vpop.permute.xlu0 %2941
        %2943 = vrot.lane.b32.xlu0 %v2907, 64
        %v2944 = vpop.permute.xlu0 %2943
        %2945 = vrot.lane.b32.xlu0 %v2908, 64
        %v2946 = vpop.permute.xlu0 %2945
        %2947 = vrot.lane.b32.xlu0 %v2909, 64
        %v2948 = vpop.permute.xlu0 %2947
        %2949 = vrot.lane.b32.xlu0 %v2910, 64
        %v2950 = vpop.permute.xlu0 %2949
        %v2961 = vsel %vm378, %v2891, %v2932
        %v2962 = vsel %vm378, %v2892, %v2934
        %v2963 = vsel %vm378, %v2893, %v2936
        %v2964 = vsel %vm378, %v2894, %v2938
        %v2965 = vsel %vm378, %v2895, %v2940
        %v2966 = vsel %vm378, %v2896, %v2942
        %v2967 = vsel %vm378, %v2897, %v2944
        %v2968 = vsel %vm378, %v2898, %v2946
        %v2969 = vsel %vm378, %v2899, %v2948
        %v2970 = vsel %vm378, %v2900, %v2950
        %v2971 = vpack.c.bf16 %v2911, %v2961
        %v2972 = vpack.c.bf16 %v2912, %v2962
        %v2973 = vpack.c.bf16 %v2913, %v2963
        %v2974 = vpack.c.bf16 %v2914, %v2964
        %v2975 = vpack.c.bf16 %v2915, %v2965
        %v2976 = vpack.c.bf16 %v2916, %v2966
        %v2977 = vpack.c.bf16 %v2917, %v2967
        %v2978 = vpack.c.bf16 %v2918, %v2968
        %v2979 = vpack.c.bf16 %v2919, %v2969
        %v2980 = vpack.c.bf16 %v2920, %v2970
        %v2981 = vld [vmem:[%s3] sm:$0xf]
        %v2982 = vld [vmem:[%s3 + $0x4] sm:$0xf]
        %v2983 = vld [vmem:[%s3 + $0x8] sm:$0xf]
        %v2984 = vld [vmem:[%s3 + $0xc] sm:$0xf]
        %v2985 = vld [vmem:[%s3 + $0x10] sm:$0xf]
        %v2986 = vld [vmem:[%s3 + $0x14] sm:$0xf]
        %v2987 = vld [vmem:[%s3 + $0x18] sm:$0xf]
        %v2988 = vld [vmem:[%s3 + $0x1c] sm:$0xf]
        %v2989 = vld [vmem:[%s3 + $0x20] sm:$0xf]
        %v2990 = vld [vmem:[%s3 + $0x24] sm:$0xf]
        %v2991 = vld [vmem:[%s3 + $0x28] sm:$0xf]
        %v2992 = vld [vmem:[%s3 + $0x2c] sm:$0xf]
        %v2993 = vld [vmem:[%s3 + $0x30] sm:$0xf]
        %v2994 = vld [vmem:[%s3 + $0x34] sm:$0xf]
        %v2995 = vld [vmem:[%s3 + $0x38] sm:$0xf]
        %v2996 = vld [vmem:[%s3 + $0x3c] sm:$0xf]
        %v2997 = vld [vmem:[%s3 + $0x40] sm:$0xf]
        %v2998 = vld [vmem:[%s3 + $0x44] sm:$0xf]
        %v2999 = vld [vmem:[%s3 + $0x48] sm:$0xf]
        %v3000 = vld [vmem:[%s3 + $0x4c] sm:$0xf]
        %v3001 = vld [vmem:[%s3 + $0x50] sm:$0xf]
        %v3002 = vld [vmem:[%s3 + $0x54] sm:$0xf]
        %v3003 = vld [vmem:[%s3 + $0x58] sm:$0xf]
        %v3004 = vld [vmem:[%s3 + $0x5c] sm:$0xf]
        %s3005 = scalar_lea.vmem %s3, 96
        %v3006 = vld [vmem:[%s3005] sm:$0xf]
        %v3007 = vld [vmem:[%s3005 + $0x4] sm:$0xf]
        %v3008 = vld [vmem:[%s3005 + $0x8] sm:$0xf]
        %v3009 = vld [vmem:[%s3005 + $0xc] sm:$0xf]
        %v3010 = vld [vmem:[%s3005 + $0x10] sm:$0xf]
        %v3011 = vld [vmem:[%s3005 + $0x14] sm:$0xf]
        %v3012 = vld [vmem:[%s3005 + $0x18] sm:$0xf]
        %v3013 = vld [vmem:[%s3005 + $0x1c] sm:$0xf]
        %v3014 = vld [vmem:[%s3005 + $0x20] sm:$0xf]
        %v3015 = vld [vmem:[%s3005 + $0x24] sm:$0xf]
        %v3016 = vld [vmem:[%s3005 + $0x28] sm:$0xf]
        %v3017 = vld [vmem:[%s3005 + $0x2c] sm:$0xf]
        %v3018 = vld [vmem:[%s3005 + $0x30] sm:$0xf]
        %v3019 = vld [vmem:[%s3005 + $0x34] sm:$0xf]
        %v3020 = vld [vmem:[%s3005 + $0x38] sm:$0xf]
        %v3021 = vld [vmem:[%s3005 + $0x3c] sm:$0xf]
        %v3022 = vld [vmem:[%s3005 + $0x40] sm:$0xf]
        %v3023 = vld [vmem:[%s3005 + $0x44] sm:$0xf]
        %v3024 = vld [vmem:[%s3005 + $0x48] sm:$0xf]
        %v3025 = vld [vmem:[%s3005 + $0x4c] sm:$0xf]
        %v3026 = vld [vmem:[%s3005 + $0x50] sm:$0xf]
        %v3027 = vld [vmem:[%s3005 + $0x54] sm:$0xf]
        %v3028 = vld [vmem:[%s3005 + $0x58] sm:$0xf]
        %v3029 = vld [vmem:[%s3005 + $0x5c] sm:$0xf]
        %v3038 = vunpack.c.l.b16 %v2972
        %v3039 = vunpack.c.h.b16 %v2972
        %v3040 = vunpack.c.l.b16 %v2973
        %v3041 = vunpack.c.h.b16 %v2973
        %v3042 = vunpack.c.l.b16 %v2974
        %v3043 = vunpack.c.h.b16 %v2974
        %v3044 = vunpack.c.l.b16 %v2975
        %v3045 = vunpack.c.h.b16 %v2975
        %v3046 = vunpack.c.l.b16 %v2976
        %v3047 = vunpack.c.h.b16 %v2976
        %v3048 = vunpack.c.l.b16 %v2977
        %v3049 = vunpack.c.h.b16 %v2977
        %v3050 = vunpack.c.l.b16 %v2978
        %v3051 = vunpack.c.h.b16 %v2978
        %v3052 = vunpack.c.l.b16 %v2979
        %v3053 = vunpack.c.h.b16 %v2979
        %v3054 = vpack.c.b16 %v3040, %v3038
        %v3055 = vpack.c.b16 %v3041, %v3039
        %v3056 = vpack.c.b16 %v3044, %v3042
        %v3057 = vpack.c.b16 %v3045, %v3043
        %v3058 = vpack.c.b16 %v3048, %v3046
        %v3059 = vpack.c.b16 %v3049, %v3047
        %v3060 = vpack.c.b16 %v3052, %v3050
        %v3061 = vpack.c.b16 %v3053, %v3051
        %v3090 = vunpack.c.l.b16 %v3006
        %v3091 = vunpack.c.l.b16 %v3007
        %v3092 = vunpack.c.l.b16 %v3008
        %v3093 = vunpack.c.l.b16 %v3009
        %v3094 = vunpack.c.l.b16 %v3010
        %v3095 = vunpack.c.l.b16 %v3011
        %v3096 = vunpack.c.l.b16 %v3012
        %v3097 = vunpack.c.l.b16 %v3013
        %v3098 = vunpack.c.l.b16 %v3014
        %v3099 = vunpack.c.l.b16 %v3015
        %v3100 = vunpack.c.l.b16 %v3016
        %v3101 = vunpack.c.l.b16 %v3017
        %v3102 = vunpack.c.l.b16 %v3018
        %v3103 = vunpack.c.l.b16 %v3019
        %v3104 = vunpack.c.l.b16 %v3020
        %v3105 = vunpack.c.l.b16 %v3021
        %v3106 = vunpack.c.l.b16 %v3022
        %v3107 = vunpack.c.l.b16 %v3023
        %v3108 = vunpack.c.l.b16 %v3024
        %v3109 = vunpack.c.l.b16 %v3025
        %v3110 = vunpack.c.l.b16 %v3026
        %v3111 = vunpack.c.l.b16 %v3027
        %v3112 = vunpack.c.l.b16 %v3028
        %v3113 = vunpack.c.l.b16 %v3029
        %v3114 = vpack.c.b16 %v3091, %v3090
        %v3115 = vpack.c.b16 %v3093, %v3092
        %v3116 = vpack.c.b16 %v3095, %v3094
        %v3117 = vpack.c.b16 %v3097, %v3096
        %v3118 = vpack.c.b16 %v3099, %v3098
        %v3119 = vpack.c.b16 %v3101, %v3100
        %v3120 = vpack.c.b16 %v3103, %v3102
        %v3121 = vpack.c.b16 %v3105, %v3104
        %v3122 = vpack.c.b16 %v3107, %v3106
        %v3123 = vpack.c.b16 %v3109, %v3108
        %v3124 = vpack.c.b16 %v3111, %v3110
        %v3125 = vpack.c.b16 %v3113, %v3112
        %v3139 = vsel %vm378, %v3055, 0
        %v3142 = vsel %vm378, %v3057, 0
        %v3145 = vsel %vm378, %v3059, 0
        %v3148 = vsel %vm378, %v3061, 0
        %3150 = vmatpush.bf16.msra.mxu0 %v3121
        %3151 = vmatpush.bf16.msra.mxu0 %v3120
        %3152 = vmatpush.bf16.msra.mxu0 %v3119
        %3153 = vmatpush.bf16.msra.mxu0 %v3118
        %3154 = vmatpush.bf16.msra.mxu0 %v3117
        %3155 = vmatpush.bf16.msra.mxu0 %v3116
        %3156 = vmatpush.bf16.msra.mxu0 %v3115
        %3157 = vmatpush.bf16.msra.mxu0 %v3114
        %3158 = vmatmul.bf16.gmra.mxu0 %v3054
        %v3159 = vpop.f32.mrf.mxu0
        %v3160 = vadd.f32 0.0, %v3159
        %v3161 = vpop.f32.mrf.mxu0
        %v3162 = vadd.f32 0.0, %v3161
        %3163 = vmatmul.bf16.gmra.mxu0 %v3056
        %v3164 = vpop.f32.mrf.mxu0
        %v3165 = vadd.f32 0.0, %v3164
        %v3166 = vpop.f32.mrf.mxu0
        %v3167 = vadd.f32 0.0, %v3166
        %3168 = vmatmul.bf16.gmra.mxu0 %v3058
        %v3169 = vpop.f32.mrf.mxu0
        %v3170 = vadd.f32 0.0, %v3169
        %v3171 = vpop.f32.mrf.mxu0
        %v3172 = vadd.f32 0.0, %v3171
        %3173 = vmatmul.bf16.gmra.mxu0 %v3060
        %v3174 = vpop.f32.mrf.mxu0
        %v3175 = vadd.f32 0.0, %v3174
        %v3176 = vpop.f32.mrf.mxu0
        %v3177 = vadd.f32 0.0, %v3176
        %3178 = vdwg.mxu0
        %3179 = vmatpush.bf16.msra.mxu0 0
        %3180 = vmatpush.bf16.msra.mxu0 0
        %3181 = vmatpush.bf16.msra.mxu0 0
        %3182 = vmatpush.bf16.msra.mxu0 0
        %3183 = vmatpush.bf16.msra.mxu0 %v3125
        %3184 = vmatpush.bf16.msra.mxu0 %v3124
        %3185 = vmatpush.bf16.msra.mxu0 %v3123
        %3186 = vmatpush.bf16.msra.mxu0 %v3122
        %3187 = vmatmul.bf16.gmra.mxu0 %v3139
        %v3188 = vpop.f32.mrf.mxu0
        %v3189 = vadd.f32 %v3160, %v3188
        %v3190 = vpop.f32.mrf.mxu0
        %v3191 = vadd.f32 %v3162, %v3190
        %3192 = vmatmul.bf16.gmra.mxu0 %v3142
        %v3193 = vpop.f32.mrf.mxu0
        %v3194 = vadd.f32 %v3165, %v3193
        %v3195 = vpop.f32.mrf.mxu0
        %v3196 = vadd.f32 %v3167, %v3195
        %3197 = vmatmul.bf16.gmra.mxu0 %v3145
        %v3198 = vpop.f32.mrf.mxu0
        %v3199 = vadd.f32 %v3170, %v3198
        %v3200 = vpop.f32.mrf.mxu0
        %v3201 = vadd.f32 %v3172, %v3200
        %3202 = vmatmul.bf16.gmra.mxu0 %v3148
        %v3203 = vpop.f32.mrf.mxu0
        %v3204 = vadd.f32 %v3175, %v3203
        %v3205 = vpop.f32.mrf.mxu0
        %v3206 = vadd.f32 %v3177, %v3205
        %3207 = vdwg.mxu0
        %v3209 = vunpack.c.l.b16 %v2971
        %v3210 = vunpack.c.h.b16 %v2971
        %v3211 = vpack.c.b16 %v3038, %v3209
        %v3212 = vpack.c.b16 %v3039, %v3210
        %v3213 = vpack.c.b16 %v3042, %v3040
        %v3214 = vpack.c.b16 %v3043, %v3041
        %v3215 = vpack.c.b16 %v3046, %v3044
        %v3216 = vpack.c.b16 %v3047, %v3045
        %v3217 = vpack.c.b16 %v3050, %v3048
        %v3218 = vpack.c.b16 %v3051, %v3049
        %v3247 = vunpack.c.l.b16 %v2981
        %v3248 = vunpack.c.l.b16 %v2982
        %v3249 = vunpack.c.l.b16 %v2983
        %v3250 = vunpack.c.l.b16 %v2984
        %v3251 = vunpack.c.l.b16 %v2985
        %v3252 = vunpack.c.l.b16 %v2986
        %v3253 = vunpack.c.l.b16 %v2987
        %v3254 = vunpack.c.l.b16 %v2988
        %v3255 = vunpack.c.l.b16 %v2989
        %v3256 = vunpack.c.l.b16 %v2990
        %v3257 = vunpack.c.l.b16 %v2991
        %v3258 = vunpack.c.l.b16 %v2992
        %v3259 = vunpack.c.l.b16 %v2993
        %v3260 = vunpack.c.l.b16 %v2994
        %v3261 = vunpack.c.l.b16 %v2995
        %v3262 = vunpack.c.l.b16 %v2996
        %v3263 = vunpack.c.l.b16 %v2997
        %v3264 = vunpack.c.l.b16 %v2998
        %v3265 = vunpack.c.l.b16 %v2999
        %v3266 = vunpack.c.l.b16 %v3000
        %v3267 = vunpack.c.l.b16 %v3001
        %v3268 = vunpack.c.l.b16 %v3002
        %v3269 = vunpack.c.l.b16 %v3003
        %v3270 = vunpack.c.l.b16 %v3004
        %v3271 = vpack.c.b16 %v3248, %v3247
        %v3272 = vpack.c.b16 %v3250, %v3249
        %v3273 = vpack.c.b16 %v3252, %v3251
        %v3274 = vpack.c.b16 %v3254, %v3253
        %v3275 = vpack.c.b16 %v3256, %v3255
        %v3276 = vpack.c.b16 %v3258, %v3257
        %v3277 = vpack.c.b16 %v3260, %v3259
        %v3278 = vpack.c.b16 %v3262, %v3261
        %v3279 = vpack.c.b16 %v3264, %v3263
        %v3280 = vpack.c.b16 %v3266, %v3265
        %v3281 = vpack.c.b16 %v3268, %v3267
        %v3282 = vpack.c.b16 %v3270, %v3269
        %v3296 = vsel %vm378, %v3212, 0
        %v3299 = vsel %vm378, %v3214, 0
        %v3302 = vsel %vm378, %v3216, 0
        %v3305 = vsel %vm378, %v3218, 0
        %3307 = vmatpush.bf16.msra.mxu0 %v3278
        %3308 = vmatpush.bf16.msra.mxu0 %v3277
        %3309 = vmatpush.bf16.msra.mxu0 %v3276
        %3310 = vmatpush.bf16.msra.mxu0 %v3275
        %3311 = vmatpush.bf16.msra.mxu0 %v3274
        %3312 = vmatpush.bf16.msra.mxu0 %v3273
        %3313 = vmatpush.bf16.msra.mxu0 %v3272
        %3314 = vmatpush.bf16.msra.mxu0 %v3271
        %3315 = vmatmul.bf16.gmra.mxu0 %v3211
        %v3316 = vpop.f32.mrf.mxu0
        %v3317 = vadd.f32 %v3189, %v3316
        %v3318 = vpop.f32.mrf.mxu0
        %v3319 = vadd.f32 %v3191, %v3318
        %3320 = vmatmul.bf16.gmra.mxu0 %v3213
        %v3321 = vpop.f32.mrf.mxu0
        %v3322 = vadd.f32 %v3194, %v3321
        %v3323 = vpop.f32.mrf.mxu0
        %v3324 = vadd.f32 %v3196, %v3323
        %3325 = vmatmul.bf16.gmra.mxu0 %v3215
        %v3326 = vpop.f32.mrf.mxu0
        %v3327 = vadd.f32 %v3199, %v3326
        %v3328 = vpop.f32.mrf.mxu0
        %v3329 = vadd.f32 %v3201, %v3328
        %3330 = vmatmul.bf16.gmra.mxu0 %v3217
        %v3331 = vpop.f32.mrf.mxu0
        %v3332 = vadd.f32 %v3204, %v3331
        %v3333 = vpop.f32.mrf.mxu0
        %v3334 = vadd.f32 %v3206, %v3333
        %3335 = vdwg.mxu0
        %3336 = vmatpush.bf16.msra.mxu0 0
        %3337 = vmatpush.bf16.msra.mxu0 0
        %3338 = vmatpush.bf16.msra.mxu0 0
        %3339 = vmatpush.bf16.msra.mxu0 0
        %3340 = vmatpush.bf16.msra.mxu0 %v3282
        %3341 = vmatpush.bf16.msra.mxu0 %v3281
        %3342 = vmatpush.bf16.msra.mxu0 %v3280
        %3343 = vmatpush.bf16.msra.mxu0 %v3279
        %3344 = vmatmul.bf16.gmra.mxu0 %v3296
        %v3345 = vpop.f32.mrf.mxu0
        %v3346 = vadd.f32 %v3317, %v3345
        %v3347 = vpop.f32.mrf.mxu0
        %v3348 = vadd.f32 %v3319, %v3347
        %3349 = vmatmul.bf16.gmra.mxu0 %v3299
        %v3350 = vpop.f32.mrf.mxu0
        %v3351 = vadd.f32 %v3322, %v3350
        %v3352 = vpop.f32.mrf.mxu0
        %v3353 = vadd.f32 %v3324, %v3352
        %3354 = vmatmul.bf16.gmra.mxu0 %v3302
        %v3355 = vpop.f32.mrf.mxu0
        %v3356 = vadd.f32 %v3327, %v3355
        %v3357 = vpop.f32.mrf.mxu0
        %v3358 = vadd.f32 %v3329, %v3357
        %3359 = vmatmul.bf16.gmra.mxu0 %v3305
        %v3360 = vpop.f32.mrf.mxu0
        %v3361 = vadd.f32 %v3332, %v3360
        %v3362 = vpop.f32.mrf.mxu0
        %v3363 = vadd.f32 %v3334, %v3362
        %3364 = vdwg.mxu0
        %s3365 = scalar_lea.vmem %s3, 192
        %v3366 = vld [vmem:[%s3365] sm:$0xf]
        %v3367 = vld [vmem:[%s3365 + $0x4] sm:$0xf]
        %v3368 = vld [vmem:[%s3365 + $0x8] sm:$0xf]
        %v3369 = vld [vmem:[%s3365 + $0xc] sm:$0xf]
        %v3370 = vld [vmem:[%s3365 + $0x10] sm:$0xf]
        %v3371 = vld [vmem:[%s3365 + $0x14] sm:$0xf]
        %v3372 = vld [vmem:[%s3365 + $0x18] sm:$0xf]
        %v3373 = vld [vmem:[%s3365 + $0x1c] sm:$0xf]
        %v3374 = vld [vmem:[%s3365 + $0x20] sm:$0xf]
        %v3375 = vld [vmem:[%s3365 + $0x24] sm:$0xf]
        %v3376 = vld [vmem:[%s3365 + $0x28] sm:$0xf]
        %v3377 = vld [vmem:[%s3365 + $0x2c] sm:$0xf]
        %v3378 = vld [vmem:[%s3365 + $0x30] sm:$0xf]
        %v3379 = vld [vmem:[%s3365 + $0x34] sm:$0xf]
        %v3380 = vld [vmem:[%s3365 + $0x38] sm:$0xf]
        %v3381 = vld [vmem:[%s3365 + $0x3c] sm:$0xf]
        %v3382 = vld [vmem:[%s3365 + $0x40] sm:$0xf]
        %v3383 = vld [vmem:[%s3365 + $0x44] sm:$0xf]
        %v3384 = vld [vmem:[%s3365 + $0x48] sm:$0xf]
        %v3385 = vld [vmem:[%s3365 + $0x4c] sm:$0xf]
        %v3386 = vld [vmem:[%s3365 + $0x50] sm:$0xf]
        %v3387 = vld [vmem:[%s3365 + $0x54] sm:$0xf]
        %v3388 = vld [vmem:[%s3365 + $0x58] sm:$0xf]
        %v3389 = vld [vmem:[%s3365 + $0x5c] sm:$0xf]
        %v3391 = vunpack.c.l.b16 %v2980
        %v3392 = vunpack.c.h.b16 %v2980
        %v3393 = vpack.c.b16 %v3391, %v3052
        %v3394 = vpack.c.b16 %v3392, %v3053
        %v3420 = vunpack.c.l.b16 %v3366
        %v3421 = vunpack.c.l.b16 %v3367
        %v3422 = vunpack.c.l.b16 %v3368
        %v3423 = vunpack.c.l.b16 %v3369
        %v3424 = vunpack.c.l.b16 %v3370
        %v3425 = vunpack.c.l.b16 %v3371
        %v3426 = vunpack.c.l.b16 %v3372
        %v3427 = vunpack.c.l.b16 %v3373
        %v3428 = vunpack.c.l.b16 %v3374
        %v3429 = vunpack.c.l.b16 %v3375
        %v3430 = vunpack.c.l.b16 %v3376
        %v3431 = vunpack.c.l.b16 %v3377
        %v3432 = vunpack.c.l.b16 %v3378
        %v3433 = vunpack.c.l.b16 %v3379
        %v3434 = vunpack.c.l.b16 %v3380
        %v3435 = vunpack.c.l.b16 %v3381
        %v3436 = vunpack.c.l.b16 %v3382
        %v3437 = vunpack.c.l.b16 %v3383
        %v3438 = vunpack.c.l.b16 %v3384
        %v3439 = vunpack.c.l.b16 %v3385
        %v3440 = vunpack.c.l.b16 %v3386
        %v3441 = vunpack.c.l.b16 %v3387
        %v3442 = vunpack.c.l.b16 %v3388
        %v3443 = vunpack.c.l.b16 %v3389
        %v3444 = vpack.c.b16 %v3421, %v3420
        %v3445 = vpack.c.b16 %v3423, %v3422
        %v3446 = vpack.c.b16 %v3425, %v3424
        %v3447 = vpack.c.b16 %v3427, %v3426
        %v3448 = vpack.c.b16 %v3429, %v3428
        %v3449 = vpack.c.b16 %v3431, %v3430
        %v3450 = vpack.c.b16 %v3433, %v3432
        %v3451 = vpack.c.b16 %v3435, %v3434
        %v3452 = vpack.c.b16 %v3437, %v3436
        %v3453 = vpack.c.b16 %v3439, %v3438
        %v3454 = vpack.c.b16 %v3441, %v3440
        %v3455 = vpack.c.b16 %v3443, %v3442
        %v3469 = vsel %vm378, %v3394, 0
        %3471 = vmatpush.bf16.msra.mxu0 %v3451
        %3472 = vmatpush.bf16.msra.mxu0 %v3450
        %3473 = vmatpush.bf16.msra.mxu0 %v3449
        %3474 = vmatpush.bf16.msra.mxu0 %v3448
        %3475 = vmatpush.bf16.msra.mxu0 %v3447
        %3476 = vmatpush.bf16.msra.mxu0 %v3446
        %3477 = vmatpush.bf16.msra.mxu0 %v3445
        %3478 = vmatpush.bf16.msra.mxu0 %v3444
        %3479 = vmatmul.bf16.gmra.mxu0 %v3213
        %v3480 = vpop.f32.mrf.mxu0
        %v3481 = vadd.f32 0.0, %v3480
        %v3482 = vpop.f32.mrf.mxu0
        %v3483 = vadd.f32 0.0, %v3482
        %3484 = vmatmul.bf16.gmra.mxu0 %v3215
        %v3485 = vpop.f32.mrf.mxu0
        %v3486 = vadd.f32 0.0, %v3485
        %v3487 = vpop.f32.mrf.mxu0
        %v3488 = vadd.f32 0.0, %v3487
        %3489 = vmatmul.bf16.gmra.mxu0 %v3217
        %v3490 = vpop.f32.mrf.mxu0
        %v3491 = vadd.f32 0.0, %v3490
        %v3492 = vpop.f32.mrf.mxu0
        %v3493 = vadd.f32 0.0, %v3492
        %3494 = vmatmul.bf16.gmra.mxu0 %v3393
        %v3495 = vpop.f32.mrf.mxu0
        %v3496 = vadd.f32 0.0, %v3495
        %v3497 = vpop.f32.mrf.mxu0
        %v3498 = vadd.f32 0.0, %v3497
        %3499 = vdwg.mxu0
        %3500 = vmatpush.bf16.msra.mxu0 0
        %3501 = vmatpush.bf16.msra.mxu0 0
        %3502 = vmatpush.bf16.msra.mxu0 0
        %3503 = vmatpush.bf16.msra.mxu0 0
        %3504 = vmatpush.bf16.msra.mxu0 %v3455
        %3505 = vmatpush.bf16.msra.mxu0 %v3454
        %3506 = vmatpush.bf16.msra.mxu0 %v3453
        %3507 = vmatpush.bf16.msra.mxu0 %v3452
        %3508 = vmatmul.bf16.gmra.mxu0 %v3299
        %v3509 = vpop.f32.mrf.mxu0
        %v3510 = vadd.f32 %v3481, %v3509
        %v3511 = vpop.f32.mrf.mxu0
        %v3512 = vadd.f32 %v3483, %v3511
        %3513 = vmatmul.bf16.gmra.mxu0 %v3302
        %v3514 = vpop.f32.mrf.mxu0
        %v3515 = vadd.f32 %v3486, %v3514
        %v3516 = vpop.f32.mrf.mxu0
        %v3517 = vadd.f32 %v3488, %v3516
        %3518 = vmatmul.bf16.gmra.mxu0 %v3305
        %v3519 = vpop.f32.mrf.mxu0
        %v3520 = vadd.f32 %v3491, %v3519
        %v3521 = vpop.f32.mrf.mxu0
        %v3522 = vadd.f32 %v3493, %v3521
        %3523 = vmatmul.bf16.gmra.mxu0 %v3469
        %v3524 = vpop.f32.mrf.mxu0
        %v3525 = vadd.f32 %v3496, %v3524
        %v3526 = vpop.f32.mrf.mxu0
        %v3527 = vadd.f32 %v3498, %v3526
        %3528 = vdwg.mxu0
        %v3529 = vadd.f32 %v3346, %v3510
        %v3530 = vadd.f32 %v3348, %v3512
        %v3531 = vadd.f32 %v3351, %v3515
        %v3532 = vadd.f32 %v3353, %v3517
        %v3533 = vadd.f32 %v3356, %v3520
        %v3534 = vadd.f32 %v3358, %v3522
        %v3535 = vadd.f32 %v3361, %v3525
        %v3536 = vadd.f32 %v3363, %v3527
        %v3538 = vperm.slane %v2890, 0
        %v3540 = vadd.f32 %v3529, %v3538
        %v3541 = vadd.f32 %v3530, %v3538
        %v3542 = vadd.f32 %v3531, %v3538
        %v3543 = vadd.f32 %v3532, %v3538
        %v3544 = vadd.f32 %v3533, %v3538
        %v3545 = vadd.f32 %v3534, %v3538
        %v3546 = vadd.f32 %v3535, %v3538
        %v3547 = vadd.f32 %v3536, %v3538
        %v3548 = vmax.f32 %v3540, 0.0
        %v3549 = vmax.f32 %v3541, 0.0
        %v3550 = vmax.f32 %v3542, 0.0
        %v3551 = vmax.f32 %v3543, 0.0
        %v3552 = vmax.f32 %v3544, 0.0
        %v3553 = vmax.f32 %v3545, 0.0
        %v3554 = vmax.f32 %v3546, 0.0
        %v3555 = vmax.f32 %v3547, 0.0
        %v3556 = vmax.f32 %v3548, %v3549
        %v3557 = vmax.f32 %v3550, %v3551
        %v3558 = vmax.f32 %v3552, %v3553
        %v3559 = vmax.f32 %v3554, %v3555
        %v3564 = vrot.slane %v3556, 2
        %v3565 = vrot.slane %v3556, 4
        %v3566 = vrot.slane %v3556, 6
        %v3567 = vrot.slane %v3557, 2
        %v3568 = vrot.slane %v3557, 4
        %v3569 = vrot.slane %v3557, 6
        %v3570 = vrot.slane %v3558, 2
        %v3571 = vrot.slane %v3558, 4
        %v3572 = vrot.slane %v3558, 6
        %v3573 = vrot.slane %v3559, 2
        %v3574 = vrot.slane %v3559, 4
        %v3575 = vrot.slane %v3559, 6
        %v3588 = vrot.slane %v3556, 7
        %v3589 = vrot.slane %v3588, 2
        %v3590 = vrot.slane %v3564, 7
        %v3591 = vrot.slane %v3590, 2
        %v3592 = vrot.slane %v3565, 7
        %v3593 = vrot.slane %v3592, 2
        %v3594 = vrot.slane %v3566, 7
        %v3595 = vrot.slane %v3594, 2
        %v3596 = vrot.slane %v3557, 7
        %v3597 = vrot.slane %v3596, 2
        %v3598 = vrot.slane %v3567, 7
        %v3599 = vrot.slane %v3598, 2
        %v3600 = vrot.slane %v3568, 7
        %v3601 = vrot.slane %v3600, 2
        %v3602 = vrot.slane %v3569, 7
        %v3603 = vrot.slane %v3602, 2
        %v3604 = vrot.slane %v3558, 7
        %v3605 = vrot.slane %v3604, 2
        %v3606 = vrot.slane %v3570, 7
        %v3607 = vrot.slane %v3606, 2
        %v3608 = vrot.slane %v3571, 7
        %v3609 = vrot.slane %v3608, 2
        %v3610 = vrot.slane %v3572, 7
        %v3611 = vrot.slane %v3610, 2
        %v3612 = vrot.slane %v3559, 7
        %v3613 = vrot.slane %v3612, 2
        %v3614 = vrot.slane %v3573, 7
        %v3615 = vrot.slane %v3614, 2
        %v3616 = vrot.slane %v3574, 7
        %v3617 = vrot.slane %v3616, 2
        %v3618 = vrot.slane %v3575, 7
        %v3619 = vrot.slane %v3618, 2
        %v3636 = vmax.f32 %v3556, %v3589
        %v3637 = vmax.f32 %v3564, %v3591
        %v3638 = vmax.f32 %v3565, %v3593
        %v3639 = vmax.f32 %v3566, %v3595
        %v3640 = vmax.f32 %v3557, %v3597
        %v3641 = vmax.f32 %v3567, %v3599
        %v3642 = vmax.f32 %v3568, %v3601
        %v3643 = vmax.f32 %v3569, %v3603
        %v3644 = vmax.f32 %v3558, %v3605
        %v3645 = vmax.f32 %v3570, %v3607
        %v3646 = vmax.f32 %v3571, %v3609
        %v3647 = vmax.f32 %v3572, %v3611
        %v3648 = vmax.f32 %v3559, %v3613
        %v3649 = vmax.f32 %v3573, %v3615
        %v3650 = vmax.f32 %v3574, %v3617
        %v3651 = vmax.f32 %v3575, %v3619
        %v3668 = vperm.slane %v3636, 0
        %v3669 = vperm.slane %v3637, 0
        %v3670 = vperm.slane %v3638, 0
        %v3671 = vperm.slane %v3639, 0
        %v3672 = vperm.slane %v3640, 0
        %v3673 = vperm.slane %v3641, 0
        %v3674 = vperm.slane %v3642, 0
        %v3675 = vperm.slane %v3643, 0
        %v3676 = vperm.slane %v3644, 0
        %v3677 = vperm.slane %v3645, 0
        %v3678 = vperm.slane %v3646, 0
        %v3679 = vperm.slane %v3647, 0
        %v3680 = vperm.slane %v3648, 0
        %v3681 = vperm.slane %v3649, 0
        %v3682 = vperm.slane %v3650, 0
        %v3683 = vperm.slane %v3651, 0
        %v3684 = vsel %vm2810, %v3669, %v3668
        %v3685 = vsel %vm2812, %v3670, %v3684
        %v3686 = vsel %vm2814, %v3671, %v3685
        %v3687 = vsel %vm2810, %v3673, %v3672
        %v3688 = vsel %vm2812, %v3674, %v3687
        %v3689 = vsel %vm2814, %v3675, %v3688
        %v3690 = vsel %vm2810, %v3677, %v3676
        %v3691 = vsel %vm2812, %v3678, %v3690
        %v3692 = vsel %vm2814, %v3679, %v3691
        %v3693 = vsel %vm2810, %v3681, %v3680
        %v3694 = vsel %vm2812, %v3682, %v3693
        %v3695 = vsel %vm2814, %v3683, %v3694
        %s3700 = scalar_lea.vmem [#allocation4], 8
        %3701 = vst [vmem:[%s3700 + $0x1] sm:$0xf] %v3686
        %3702 = vst [vmem:[%s3700 + $0x9] sm:$0xf] %v3689
        %3703 = vst [vmem:[%s3700 + $0x11] sm:$0xf] %v3692
        %3704 = vst [vmem:[%s3700 + $0x19] sm:$0xf] %v3695
        %v3705 = vld [vmem:[%s6] sm:$0x3]
        %v3706 = vld [vmem:[#allocation4] sm:$0xf]
        %v3707 = vld [vmem:[#allocation4 + $0x8] sm:$0xf]
        %v3708 = vld [vmem:[#allocation4 + $0x10] sm:$0xf]
        %v3709 = vld [vmem:[#allocation4 + $0x18] sm:$0xf]
        %v3710 = vld [vmem:[#allocation4 + $0x20] sm:$0xf]
        %v3711 = vld [vmem:[#allocation4 + $0x28] sm:$0xf]
        %v3712 = vld [vmem:[#allocation4 + $0x1] sm:$0xf]
        %v3713 = vld [vmem:[#allocation4 + $0x9] sm:$0xf]
        %v3714 = vld [vmem:[#allocation4 + $0x11] sm:$0xf]
        %v3715 = vld [vmem:[#allocation4 + $0x19] sm:$0xf]
        %v3716 = vld [vmem:[#allocation4 + $0x21] sm:$0xf]
        %v3717 = vld [vmem:[#allocation4 + $0x29] sm:$0xf]
        %v3718 = vld [vmem:[#allocation4 + $0x2] sm:$0xf]
        %v3719 = vld [vmem:[#allocation4 + $0xa] sm:$0xf]
        %v3720 = vld [vmem:[#allocation4 + $0x12] sm:$0xf]
        %v3721 = vld [vmem:[#allocation4 + $0x1a] sm:$0xf]
        %v3722 = vld [vmem:[#allocation4 + $0x22] sm:$0xf]
        %v3723 = vld [vmem:[#allocation4 + $0x2a] sm:$0xf]
        %v3724 = vpack.c.bf16 %v3712, %v3706
        %v3725 = vpack.c.bf16 %v3718, %v3718
        %v3726 = vpack.c.bf16 %v3713, %v3707
        %v3727 = vpack.c.bf16 %v3719, %v3719
        %v3728 = vpack.c.bf16 %v3714, %v3708
        %v3729 = vpack.c.bf16 %v3720, %v3720
        %v3730 = vpack.c.bf16 %v3715, %v3709
        %v3731 = vpack.c.bf16 %v3721, %v3721
        %v3732 = vpack.c.bf16 %v3716, %v3710
        %v3733 = vpack.c.bf16 %v3722, %v3722
        %v3734 = vpack.c.bf16 %v3717, %v3711
        %v3735 = vpack.c.bf16 %v3723, %v3723
        %v3744 = vrot.slane %v3724, 2
        %v3745 = vrot.slane %v3725, 4
        %v3746 = vrot.slane %v3725, 6
        %v3747 = vrot.slane %v3726, 2
        %v3748 = vrot.slane %v3727, 4
        %v3749 = vrot.slane %v3727, 6
        %v3750 = vrot.slane %v3728, 2
        %v3751 = vrot.slane %v3729, 4
        %v3752 = vrot.slane %v3729, 6
        %v3753 = vrot.slane %v3730, 2
        %v3754 = vrot.slane %v3731, 4
        %v3755 = vrot.slane %v3731, 6
        %v3758 = vsel %vm2173, %v3724, %v3744
        %vm3759 = vcmask 1045508
        %v3762 = vsel %vm3759, %v3745, %v3746
        %vm3763 = vcmask 1043456
        %v3764 = vsel %vm3763, %v3758, %v3762
        %v3767 = vsel %vm2173, %v3726, %v3747
        %v3770 = vsel %vm3759, %v3748, %v3749
        %v3771 = vsel %vm3763, %v3767, %v3770
        %v3774 = vsel %vm2173, %v3728, %v3750
        %v3777 = vsel %vm3759, %v3751, %v3752
        %v3778 = vsel %vm3763, %v3774, %v3777
        %v3781 = vsel %vm2173, %v3730, %v3753
        %v3784 = vsel %vm3759, %v3754, %v3755
        %v3785 = vsel %vm3763, %v3781, %v3784
        %v3786 = vld [vmem:[%s5] sm:$0xff]
        %v3787 = vld [vmem:[%s5 + $0x8] sm:$0xff]
        %v3788 = vld [vmem:[%s5 + $0x10] sm:$0xff]
        %v3789 = vld [vmem:[%s5 + $0x18] sm:$0xff]
        %v3790 = vld [vmem:[%s5 + $0x20] sm:$0xff]
        %v3791 = vld [vmem:[%s5 + $0x28] sm:$0xff]
        %v3792 = vld [vmem:[%s5 + $0x30] sm:$0xff]
        %v3793 = vld [vmem:[%s5 + $0x38] sm:$0xff]
        %v3794 = vld [vmem:[%s5 + $0x40] sm:$0xff]
        %v3795 = vld [vmem:[%s5 + $0x48] sm:$0xff]
        %v3796 = vld [vmem:[%s5 + $0x50] sm:$0xff]
        %v3797 = vld [vmem:[%s5 + $0x58] sm:$0xff]
        %v3798 = vld [vmem:[%s5 + $0x60] sm:$0xff]
        %v3799 = vld [vmem:[%s5 + $0x68] sm:$0xff]
        %v3800 = vld [vmem:[%s5 + $0x70] sm:$0xff]
        %v3801 = vld [vmem:[%s5 + $0x78] sm:$0xff]
        %v3802 = vld [vmem:[%s5 + $0x80] sm:$0xff]
        %v3803 = vld [vmem:[%s5 + $0x88] sm:$0xff]
        %v3804 = vld [vmem:[%s5 + $0x90] sm:$0xff]
        %v3805 = vld [vmem:[%s5 + $0x98] sm:$0xff]
        %v3806 = vld [vmem:[%s5 + $0xa0] sm:$0xff]
        %v3807 = vld [vmem:[%s5 + $0xa8] sm:$0xff]
        %v3808 = vld [vmem:[%s5 + $0xb0] sm:$0xff]
        %v3809 = vld [vmem:[%s5 + $0xb8] sm:$0xff]
        %v3810 = vld [vmem:[%s5 + $0xc0] sm:$0xff]
        %v3811 = vld [vmem:[%s5 + $0xc8] sm:$0xff]
        %v3812 = vld [vmem:[%s5 + $0xd0] sm:$0xff]
        %v3813 = vld [vmem:[%s5 + $0xd8] sm:$0xff]
        %v3814 = vld [vmem:[%s5 + $0xe0] sm:$0xff]
        %v3815 = vld [vmem:[%s5 + $0xe8] sm:$0xff]
        %v3816 = vld [vmem:[%s5 + $0xf0] sm:$0xff]
        %v3817 = vld [vmem:[%s5 + $0xf8] sm:$0xff]
        %v3818 = vld [vmem:[%s5 + $0x100] sm:$0xff]
        %v3819 = vld [vmem:[%s5 + $0x108] sm:$0xff]
        %v3820 = vld [vmem:[%s5 + $0x110] sm:$0xff]
        %v3821 = vld [vmem:[%s5 + $0x118] sm:$0xff]
        %v3822 = vld [vmem:[%s5 + $0x120] sm:$0xff]
        %v3823 = vld [vmem:[%s5 + $0x128] sm:$0xff]
        %v3824 = vld [vmem:[%s5 + $0x130] sm:$0xff]
        %v3825 = vld [vmem:[%s5 + $0x138] sm:$0xff]
        %v3826 = vld [vmem:[%s5 + $0x140] sm:$0xff]
        %v3827 = vld [vmem:[%s5 + $0x148] sm:$0xff]
        %v3828 = vld [vmem:[%s5 + $0x150] sm:$0xff]
        %v3829 = vld [vmem:[%s5 + $0x158] sm:$0xff]
        %v3830 = vld [vmem:[%s5 + $0x160] sm:$0xff]
        %v3831 = vld [vmem:[%s5 + $0x168] sm:$0xff]
        %v3832 = vld [vmem:[%s5 + $0x170] sm:$0xff]
        %v3833 = vld [vmem:[%s5 + $0x178] sm:$0xff]
        %v3836 = vrot.slane %v3732, 2
        %v3837 = vrot.slane %v3733, 4
        %v3838 = vrot.slane %v3733, 6
        %v3841 = vsel %vm2173, %v3732, %v3836
        %v3844 = vsel %vm3759, %v3837, %v3838
        %v3845 = vsel %vm3763, %v3841, %v3844
        %s3846 = scalar_lea.vmem %s5, 384
        %v3847 = vld [vmem:[%s3846] sm:$0xff]
        %v3848 = vld [vmem:[%s3846 + $0x8] sm:$0xff]
        %v3849 = vld [vmem:[%s3846 + $0x10] sm:$0xff]
        %v3850 = vld [vmem:[%s3846 + $0x18] sm:$0xff]
        %v3851 = vld [vmem:[%s3846 + $0x20] sm:$0xff]
        %v3852 = vld [vmem:[%s3846 + $0x28] sm:$0xff]
        %v3853 = vld [vmem:[%s3846 + $0x30] sm:$0xff]
        %v3854 = vld [vmem:[%s3846 + $0x38] sm:$0xff]
        %v3855 = vld [vmem:[%s3846 + $0x40] sm:$0xff]
        %v3856 = vld [vmem:[%s3846 + $0x48] sm:$0xff]
        %v3857 = vld [vmem:[%s3846 + $0x50] sm:$0xff]
        %v3858 = vld [vmem:[%s3846 + $0x58] sm:$0xff]
        %v3859 = vld [vmem:[%s3846 + $0x60] sm:$0xff]
        %v3860 = vld [vmem:[%s3846 + $0x68] sm:$0xff]
        %v3861 = vld [vmem:[%s3846 + $0x70] sm:$0xff]
        %v3862 = vld [vmem:[%s3846 + $0x78] sm:$0xff]
        %v3863 = vld [vmem:[%s3846 + $0x80] sm:$0xff]
        %v3864 = vld [vmem:[%s3846 + $0x88] sm:$0xff]
        %v3865 = vld [vmem:[%s3846 + $0x90] sm:$0xff]
        %v3866 = vld [vmem:[%s3846 + $0x98] sm:$0xff]
        %v3867 = vld [vmem:[%s3846 + $0xa0] sm:$0xff]
        %v3868 = vld [vmem:[%s3846 + $0xa8] sm:$0xff]
        %v3869 = vld [vmem:[%s3846 + $0xb0] sm:$0xff]
        %v3870 = vld [vmem:[%s3846 + $0xb8] sm:$0xff]
        %v3871 = vld [vmem:[%s3846 + $0xc0] sm:$0xff]
        %v3872 = vld [vmem:[%s3846 + $0xc8] sm:$0xff]
        %v3873 = vld [vmem:[%s3846 + $0xd0] sm:$0xff]
        %v3874 = vld [vmem:[%s3846 + $0xd8] sm:$0xff]
        %v3875 = vld [vmem:[%s3846 + $0xe0] sm:$0xff]
        %v3876 = vld [vmem:[%s3846 + $0xe8] sm:$0xff]
        %v3877 = vld [vmem:[%s3846 + $0xf0] sm:$0xff]
        %v3878 = vld [vmem:[%s3846 + $0xf8] sm:$0xff]
        %v3879 = vld [vmem:[%s3846 + $0x100] sm:$0xff]
        %v3880 = vld [vmem:[%s3846 + $0x108] sm:$0xff]
        %v3881 = vld [vmem:[%s3846 + $0x110] sm:$0xff]
        %v3882 = vld [vmem:[%s3846 + $0x118] sm:$0xff]
        %v3883 = vld [vmem:[%s3846 + $0x120] sm:$0xff]
        %v3884 = vld [vmem:[%s3846 + $0x128] sm:$0xff]
        %v3885 = vld [vmem:[%s3846 + $0x130] sm:$0xff]
        %v3886 = vld [vmem:[%s3846 + $0x138] sm:$0xff]
        %v3887 = vld [vmem:[%s3846 + $0x140] sm:$0xff]
        %v3888 = vld [vmem:[%s3846 + $0x148] sm:$0xff]
        %v3889 = vld [vmem:[%s3846 + $0x150] sm:$0xff]
        %v3890 = vld [vmem:[%s3846 + $0x158] sm:$0xff]
        %v3891 = vld [vmem:[%s3846 + $0x160] sm:$0xff]
        %v3892 = vld [vmem:[%s3846 + $0x168] sm:$0xff]
        %v3893 = vld [vmem:[%s3846 + $0x170] sm:$0xff]
        %v3894 = vld [vmem:[%s3846 + $0x178] sm:$0xff]
        %3895 = vst [vmem:[#allocation1] ss:$4 sm:$0xff] %v3771
        %s3896 = scalar_lea.vmem [#allocation1], 1
        %3897 = vst [vmem:[%s3896] ss:$4 sm:$0xff] %v3778
        %s3898 = scalar_lea.vmem [#allocation1], 2
        %3899 = vst [vmem:[%s3898] ss:$4 sm:$0xff] %v3785
        %s3900 = scalar_lea.vmem [#allocation1], 3
        %3901 = vst [vmem:[%s3900] ss:$4 sm:$0xff] %v3845
        %v3902 = vld.sshfl [vmem:[#allocation1] sm:$0xff pattern:$0x73625140]
        %v3903 = vld.sshfl [vmem:[#allocation1 + $0x8] sm:$0xff pattern:$0x73625140]
        %v3904 = vld.sshfl [vmem:[#allocation1 + $0x10] sm:$0xff pattern:$0x73625140]
        %v3956 = vunpack.c.l.b16 %v3847
        %v3957 = vunpack.c.h.b16 %v3847
        %v3958 = vunpack.c.l.b16 %v3848
        %v3959 = vunpack.c.h.b16 %v3848
        %v3960 = vunpack.c.l.b16 %v3849
        %v3961 = vunpack.c.h.b16 %v3849
        %v3962 = vunpack.c.l.b16 %v3850
        %v3963 = vunpack.c.h.b16 %v3850
        %v3964 = vunpack.c.l.b16 %v3851
        %v3965 = vunpack.c.h.b16 %v3851
        %v3966 = vunpack.c.l.b16 %v3852
        %v3967 = vunpack.c.h.b16 %v3852
        %v3968 = vunpack.c.l.b16 %v3853
        %v3969 = vunpack.c.h.b16 %v3853
        %v3970 = vunpack.c.l.b16 %v3854
        %v3971 = vunpack.c.h.b16 %v3854
        %v3972 = vunpack.c.l.b16 %v3855
        %v3973 = vunpack.c.h.b16 %v3855
        %v3974 = vunpack.c.l.b16 %v3856
        %v3975 = vunpack.c.h.b16 %v3856
        %v3976 = vunpack.c.l.b16 %v3857
        %v3977 = vunpack.c.h.b16 %v3857
        %v3978 = vunpack.c.l.b16 %v3858
        %v3979 = vunpack.c.h.b16 %v3858
        %v3980 = vunpack.c.l.b16 %v3859
        %v3981 = vunpack.c.h.b16 %v3859
        %v3982 = vunpack.c.l.b16 %v3860
        %v3983 = vunpack.c.h.b16 %v3860
        %v3984 = vunpack.c.l.b16 %v3861
        %v3985 = vunpack.c.h.b16 %v3861
        %v3986 = vunpack.c.l.b16 %v3862
        %v3987 = vunpack.c.h.b16 %v3862
        %v3988 = vunpack.c.l.b16 %v3863
        %v3989 = vunpack.c.h.b16 %v3863
        %v3990 = vunpack.c.l.b16 %v3864
        %v3991 = vunpack.c.h.b16 %v3864
        %v3992 = vunpack.c.l.b16 %v3865
        %v3993 = vunpack.c.h.b16 %v3865
        %v3994 = vunpack.c.l.b16 %v3866
        %v3995 = vunpack.c.h.b16 %v3866
        %v3996 = vunpack.c.l.b16 %v3867
        %v3997 = vunpack.c.h.b16 %v3867
        %v3998 = vunpack.c.l.b16 %v3868
        %v3999 = vunpack.c.h.b16 %v3868
        %v4000 = vunpack.c.l.b16 %v3869
        %v4001 = vunpack.c.h.b16 %v3869
        %v4002 = vunpack.c.l.b16 %v3870
        %v4003 = vunpack.c.h.b16 %v3870
        %v4004 = vunpack.c.l.b16 %v3871
        %v4005 = vunpack.c.h.b16 %v3871
        %v4006 = vunpack.c.l.b16 %v3872
        %v4007 = vunpack.c.h.b16 %v3872
        %v4008 = vunpack.c.l.b16 %v3873
        %v4009 = vunpack.c.h.b16 %v3873
        %v4010 = vunpack.c.l.b16 %v3874
        %v4011 = vunpack.c.h.b16 %v3874
        %v4012 = vunpack.c.l.b16 %v3875
        %v4013 = vunpack.c.h.b16 %v3875
        %v4014 = vunpack.c.l.b16 %v3876
        %v4015 = vunpack.c.h.b16 %v3876
        %v4016 = vunpack.c.l.b16 %v3877
        %v4017 = vunpack.c.h.b16 %v3877
        %v4018 = vunpack.c.l.b16 %v3878
        %v4019 = vunpack.c.h.b16 %v3878
        %v4020 = vunpack.c.l.b16 %v3879
        %v4021 = vunpack.c.h.b16 %v3879
        %v4022 = vunpack.c.l.b16 %v3880
        %v4023 = vunpack.c.h.b16 %v3880
        %v4024 = vunpack.c.l.b16 %v3881
        %v4025 = vunpack.c.h.b16 %v3881
        %v4026 = vunpack.c.l.b16 %v3882
        %v4027 = vunpack.c.h.b16 %v3882
        %v4028 = vunpack.c.l.b16 %v3883
        %v4029 = vunpack.c.h.b16 %v3883
        %v4030 = vunpack.c.l.b16 %v3884
        %v4031 = vunpack.c.h.b16 %v3884
        %v4032 = vunpack.c.l.b16 %v3885
        %v4033 = vunpack.c.h.b16 %v3885
        %v4034 = vunpack.c.l.b16 %v3886
        %v4035 = vunpack.c.h.b16 %v3886
        %v4036 = vunpack.c.l.b16 %v3887
        %v4037 = vunpack.c.h.b16 %v3887
        %v4038 = vunpack.c.l.b16 %v3888
        %v4039 = vunpack.c.h.b16 %v3888
        %v4040 = vunpack.c.l.b16 %v3889
        %v4041 = vunpack.c.h.b16 %v3889
        %v4042 = vunpack.c.l.b16 %v3890
        %v4043 = vunpack.c.h.b16 %v3890
        %v4044 = vunpack.c.l.b16 %v3891
        %v4045 = vunpack.c.h.b16 %v3891
        %v4046 = vunpack.c.l.b16 %v3892
        %v4047 = vunpack.c.h.b16 %v3892
        %v4048 = vunpack.c.l.b16 %v3893
        %v4049 = vunpack.c.h.b16 %v3893
        %v4050 = vunpack.c.l.b16 %v3894
        %v4051 = vunpack.c.h.b16 %v3894
        %v4052 = vpack.c.b16 %v3958, %v3956
        %v4053 = vpack.c.b16 %v3959, %v3957
        %v4054 = vpack.c.b16 %v3962, %v3960
        %v4055 = vpack.c.b16 %v3963, %v3961
        %v4056 = vpack.c.b16 %v3966, %v3964
        %v4057 = vpack.c.b16 %v3967, %v3965
        %v4058 = vpack.c.b16 %v3970, %v3968
        %v4059 = vpack.c.b16 %v3971, %v3969
        %v4060 = vpack.c.b16 %v3974, %v3972
        %v4061 = vpack.c.b16 %v3975, %v3973
        %v4062 = vpack.c.b16 %v3978, %v3976
        %v4063 = vpack.c.b16 %v3979, %v3977
        %v4064 = vpack.c.b16 %v3982, %v3980
        %v4065 = vpack.c.b16 %v3983, %v3981
        %v4066 = vpack.c.b16 %v3986, %v3984
        %v4067 = vpack.c.b16 %v3987, %v3985
        %v4068 = vpack.c.b16 %v3990, %v3988
        %v4069 = vpack.c.b16 %v3991, %v3989
        %v4070 = vpack.c.b16 %v3994, %v3992
        %v4071 = vpack.c.b16 %v3995, %v3993
        %v4072 = vpack.c.b16 %v3998, %v3996
        %v4073 = vpack.c.b16 %v3999, %v3997
        %v4074 = vpack.c.b16 %v4002, %v4000
        %v4075 = vpack.c.b16 %v4003, %v4001
        %v4076 = vpack.c.b16 %v4006, %v4004
        %v4077 = vpack.c.b16 %v4007, %v4005
        %v4078 = vpack.c.b16 %v4010, %v4008
        %v4079 = vpack.c.b16 %v4011, %v4009
        %v4080 = vpack.c.b16 %v4014, %v4012
        %v4081 = vpack.c.b16 %v4015, %v4013
        %v4082 = vpack.c.b16 %v4018, %v4016
        %v4083 = vpack.c.b16 %v4019, %v4017
        %v4084 = vpack.c.b16 %v4022, %v4020
        %v4085 = vpack.c.b16 %v4023, %v4021
        %v4086 = vpack.c.b16 %v4026, %v4024
        %v4087 = vpack.c.b16 %v4027, %v4025
        %v4088 = vpack.c.b16 %v4030, %v4028
        %v4089 = vpack.c.b16 %v4031, %v4029
        %v4090 = vpack.c.b16 %v4034, %v4032
        %v4091 = vpack.c.b16 %v4035, %v4033
        %v4092 = vpack.c.b16 %v4038, %v4036
        %v4093 = vpack.c.b16 %v4039, %v4037
        %v4094 = vpack.c.b16 %v4042, %v4040
        %v4095 = vpack.c.b16 %v4043, %v4041
        %v4096 = vpack.c.b16 %v4046, %v4044
        %v4097 = vpack.c.b16 %v4047, %v4045
        %v4098 = vpack.c.b16 %v4050, %v4048
        %v4099 = vpack.c.b16 %v4051, %v4049
        %4148 = vmatpush.bf16.msra.mxu0 %v4066
        %4149 = vmatpush.bf16.msra.mxu0 %v4064
        %4150 = vmatpush.bf16.msra.mxu0 %v4062
        %4151 = vmatpush.bf16.msra.mxu0 %v4060
        %4152 = vmatpush.bf16.msra.mxu0 %v4058
        %4153 = vmatpush.bf16.msra.mxu0 %v4056
        %4154 = vmatpush.bf16.msra.mxu0 %v4054
        %4155 = vmatpush.bf16.msra.mxu0 %v4052
        %4156 = vmatmul.bf16.gmra.mxu0 %v3902
        %v4157 = vpop.f32.mrf.mxu0
        %v4158 = vadd.f32 0.0, %v4157
        %v4159 = vpop.f32.mrf.mxu0
        %v4160 = vadd.f32 0.0, %v4159
        %4161 = vdwg.mxu0
        %4162 = vmatpush.bf16.msra.mxu0 %v4082
        %4163 = vmatpush.bf16.msra.mxu0 %v4080
        %4164 = vmatpush.bf16.msra.mxu0 %v4078
        %4165 = vmatpush.bf16.msra.mxu0 %v4076
        %4166 = vmatpush.bf16.msra.mxu0 %v4074
        %4167 = vmatpush.bf16.msra.mxu0 %v4072
        %4168 = vmatpush.bf16.msra.mxu0 %v4070
        %4169 = vmatpush.bf16.msra.mxu0 %v4068
        %4170 = vmatmul.bf16.gmra.mxu0 %v3903
        %v4171 = vpop.f32.mrf.mxu0
        %v4172 = vadd.f32 %v4158, %v4171
        %v4173 = vpop.f32.mrf.mxu0
        %v4174 = vadd.f32 %v4160, %v4173
        %4175 = vdwg.mxu0
        %4176 = vmatpush.bf16.msra.mxu0 %v4098
        %4177 = vmatpush.bf16.msra.mxu0 %v4096
        %4178 = vmatpush.bf16.msra.mxu0 %v4094
        %4179 = vmatpush.bf16.msra.mxu0 %v4092
        %4180 = vmatpush.bf16.msra.mxu0 %v4090
        %4181 = vmatpush.bf16.msra.mxu0 %v4088
        %4182 = vmatpush.bf16.msra.mxu0 %v4086
        %4183 = vmatpush.bf16.msra.mxu0 %v4084
        %4184 = vmatmul.bf16.gmra.mxu0 %v3904
        %v4185 = vpop.f32.mrf.mxu0
        %v4186 = vadd.f32 %v4172, %v4185
        %v4187 = vpop.f32.mrf.mxu0
        %v4188 = vadd.f32 %v4174, %v4187
        %4189 = vdwg.mxu0
        %4190 = vmatpush.bf16.msra.mxu0 %v4067
        %4191 = vmatpush.bf16.msra.mxu0 %v4065
        %4192 = vmatpush.bf16.msra.mxu0 %v4063
        %4193 = vmatpush.bf16.msra.mxu0 %v4061
        %4194 = vmatpush.bf16.msra.mxu0 %v4059
        %4195 = vmatpush.bf16.msra.mxu0 %v4057
        %4196 = vmatpush.bf16.msra.mxu0 %v4055
        %4197 = vmatpush.bf16.msra.mxu0 %v4053
        %4198 = vmatmul.bf16.gmra.mxu0 %v3902
        %v4199 = vpop.f32.mrf.mxu0
        %v4200 = vadd.f32 0.0, %v4199
        %v4201 = vpop.f32.mrf.mxu0
        %v4202 = vadd.f32 0.0, %v4201
        %4203 = vdwg.mxu0
        %4204 = vmatpush.bf16.msra.mxu0 %v4083
        %4205 = vmatpush.bf16.msra.mxu0 %v4081
        %4206 = vmatpush.bf16.msra.mxu0 %v4079
        %4207 = vmatpush.bf16.msra.mxu0 %v4077
        %4208 = vmatpush.bf16.msra.mxu0 %v4075
        %4209 = vmatpush.bf16.msra.mxu0 %v4073
        %4210 = vmatpush.bf16.msra.mxu0 %v4071
        %4211 = vmatpush.bf16.msra.mxu0 %v4069
        %4212 = vmatmul.bf16.gmra.mxu0 %v3903
        %v4213 = vpop.f32.mrf.mxu0
        %v4214 = vadd.f32 %v4200, %v4213
        %v4215 = vpop.f32.mrf.mxu0
        %v4216 = vadd.f32 %v4202, %v4215
        %4217 = vdwg.mxu0
        %4218 = vmatpush.bf16.msra.mxu0 %v4099
        %4219 = vmatpush.bf16.msra.mxu0 %v4097
        %4220 = vmatpush.bf16.msra.mxu0 %v4095
        %4221 = vmatpush.bf16.msra.mxu0 %v4093
        %4222 = vmatpush.bf16.msra.mxu0 %v4091
        %4223 = vmatpush.bf16.msra.mxu0 %v4089
        %4224 = vmatpush.bf16.msra.mxu0 %v4087
        %4225 = vmatpush.bf16.msra.mxu0 %v4085
        %4226 = vmatmul.bf16.gmra.mxu0 %v3904
        %v4227 = vpop.f32.mrf.mxu0
        %v4228 = vadd.f32 %v4214, %v4227
        %v4229 = vpop.f32.mrf.mxu0
        %v4230 = vadd.f32 %v4216, %v4229
        %4231 = vdwg.mxu0
        %4232 = vst [vmem:[#allocation1] ss:$4 sm:$0xff] %v3764
        %s4233 = scalar_lea.vmem [#allocation1], 1
        %4234 = vst [vmem:[%s4233] ss:$4 sm:$0xff] %v3771
        %s4235 = scalar_lea.vmem [#allocation1], 2
        %4236 = vst [vmem:[%s4235] ss:$4 sm:$0xff] %v3778
        %s4237 = scalar_lea.vmem [#allocation1], 3
        %4238 = vst [vmem:[%s4237] ss:$4 sm:$0xff] %v3785
        %v4239 = vld.sshfl [vmem:[#allocation1] sm:$0xff pattern:$0x73625140]
        %v4240 = vld.sshfl [vmem:[#allocation1 + $0x8] sm:$0xff pattern:$0x73625140]
        %v4241 = vld.sshfl [vmem:[#allocation1 + $0x10] sm:$0xff pattern:$0x73625140]
        %v4293 = vunpack.c.l.b16 %v3786
        %v4294 = vunpack.c.h.b16 %v3786
        %v4295 = vunpack.c.l.b16 %v3787
        %v4296 = vunpack.c.h.b16 %v3787
        %v4297 = vunpack.c.l.b16 %v3788
        %v4298 = vunpack.c.h.b16 %v3788
        %v4299 = vunpack.c.l.b16 %v3789
        %v4300 = vunpack.c.h.b16 %v3789
        %v4301 = vunpack.c.l.b16 %v3790
        %v4302 = vunpack.c.h.b16 %v3790
        %v4303 = vunpack.c.l.b16 %v3791
        %v4304 = vunpack.c.h.b16 %v3791
        %v4305 = vunpack.c.l.b16 %v3792
        %v4306 = vunpack.c.h.b16 %v3792
        %v4307 = vunpack.c.l.b16 %v3793
        %v4308 = vunpack.c.h.b16 %v3793
        %v4309 = vunpack.c.l.b16 %v3794
        %v4310 = vunpack.c.h.b16 %v3794
        %v4311 = vunpack.c.l.b16 %v3795
        %v4312 = vunpack.c.h.b16 %v3795
        %v4313 = vunpack.c.l.b16 %v3796
        %v4314 = vunpack.c.h.b16 %v3796
        %v4315 = vunpack.c.l.b16 %v3797
        %v4316 = vunpack.c.h.b16 %v3797
        %v4317 = vunpack.c.l.b16 %v3798
        %v4318 = vunpack.c.h.b16 %v3798
        %v4319 = vunpack.c.l.b16 %v3799
        %v4320 = vunpack.c.h.b16 %v3799
        %v4321 = vunpack.c.l.b16 %v3800
        %v4322 = vunpack.c.h.b16 %v3800
        %v4323 = vunpack.c.l.b16 %v3801
        %v4324 = vunpack.c.h.b16 %v3801
        %v4325 = vunpack.c.l.b16 %v3802
        %v4326 = vunpack.c.h.b16 %v3802
        %v4327 = vunpack.c.l.b16 %v3803
        %v4328 = vunpack.c.h.b16 %v3803
        %v4329 = vunpack.c.l.b16 %v3804
        %v4330 = vunpack.c.h.b16 %v3804
        %v4331 = vunpack.c.l.b16 %v3805
        %v4332 = vunpack.c.h.b16 %v3805
        %v4333 = vunpack.c.l.b16 %v3806
        %v4334 = vunpack.c.h.b16 %v3806
        %v4335 = vunpack.c.l.b16 %v3807
        %v4336 = vunpack.c.h.b16 %v3807
        %v4337 = vunpack.c.l.b16 %v3808
        %v4338 = vunpack.c.h.b16 %v3808
        %v4339 = vunpack.c.l.b16 %v3809
        %v4340 = vunpack.c.h.b16 %v3809
        %v4341 = vunpack.c.l.b16 %v3810
        %v4342 = vunpack.c.h.b16 %v3810
        %v4343 = vunpack.c.l.b16 %v3811
        %v4344 = vunpack.c.h.b16 %v3811
        %v4345 = vunpack.c.l.b16 %v3812
        %v4346 = vunpack.c.h.b16 %v3812
        %v4347 = vunpack.c.l.b16 %v3813
        %v4348 = vunpack.c.h.b16 %v3813
        %v4349 = vunpack.c.l.b16 %v3814
        %v4350 = vunpack.c.h.b16 %v3814
        %v4351 = vunpack.c.l.b16 %v3815
        %v4352 = vunpack.c.h.b16 %v3815
        %v4353 = vunpack.c.l.b16 %v3816
        %v4354 = vunpack.c.h.b16 %v3816
        %v4355 = vunpack.c.l.b16 %v3817
        %v4356 = vunpack.c.h.b16 %v3817
        %v4357 = vunpack.c.l.b16 %v3818
        %v4358 = vunpack.c.h.b16 %v3818
        %v4359 = vunpack.c.l.b16 %v3819
        %v4360 = vunpack.c.h.b16 %v3819
        %v4361 = vunpack.c.l.b16 %v3820
        %v4362 = vunpack.c.h.b16 %v3820
        %v4363 = vunpack.c.l.b16 %v3821
        %v4364 = vunpack.c.h.b16 %v3821
        %v4365 = vunpack.c.l.b16 %v3822
        %v4366 = vunpack.c.h.b16 %v3822
        %v4367 = vunpack.c.l.b16 %v3823
        %v4368 = vunpack.c.h.b16 %v3823
        %v4369 = vunpack.c.l.b16 %v3824
        %v4370 = vunpack.c.h.b16 %v3824
        %v4371 = vunpack.c.l.b16 %v3825
        %v4372 = vunpack.c.h.b16 %v3825
        %v4373 = vunpack.c.l.b16 %v3826
        %v4374 = vunpack.c.h.b16 %v3826
        %v4375 = vunpack.c.l.b16 %v3827
        %v4376 = vunpack.c.h.b16 %v3827
        %v4377 = vunpack.c.l.b16 %v3828
        %v4378 = vunpack.c.h.b16 %v3828
        %v4379 = vunpack.c.l.b16 %v3829
        %v4380 = vunpack.c.h.b16 %v3829
        %v4381 = vunpack.c.l.b16 %v3830
        %v4382 = vunpack.c.h.b16 %v3830
        %v4383 = vunpack.c.l.b16 %v3831
        %v4384 = vunpack.c.h.b16 %v3831
        %v4385 = vunpack.c.l.b16 %v3832
        %v4386 = vunpack.c.h.b16 %v3832
        %v4387 = vunpack.c.l.b16 %v3833
        %v4388 = vunpack.c.h.b16 %v3833
        %v4389 = vpack.c.b16 %v4295, %v4293
        %v4390 = vpack.c.b16 %v4296, %v4294
        %v4391 = vpack.c.b16 %v4299, %v4297
        %v4392 = vpack.c.b16 %v4300, %v4298
        %v4393 = vpack.c.b16 %v4303, %v4301
        %v4394 = vpack.c.b16 %v4304, %v4302
        %v4395 = vpack.c.b16 %v4307, %v4305
        %v4396 = vpack.c.b16 %v4308, %v4306
        %v4397 = vpack.c.b16 %v4311, %v4309
        %v4398 = vpack.c.b16 %v4312, %v4310
        %v4399 = vpack.c.b16 %v4315, %v4313
        %v4400 = vpack.c.b16 %v4316, %v4314
        %v4401 = vpack.c.b16 %v4319, %v4317
        %v4402 = vpack.c.b16 %v4320, %v4318
        %v4403 = vpack.c.b16 %v4323, %v4321
        %v4404 = vpack.c.b16 %v4324, %v4322
        %v4405 = vpack.c.b16 %v4327, %v4325
        %v4406 = vpack.c.b16 %v4328, %v4326
        %v4407 = vpack.c.b16 %v4331, %v4329
        %v4408 = vpack.c.b16 %v4332, %v4330
        %v4409 = vpack.c.b16 %v4335, %v4333
        %v4410 = vpack.c.b16 %v4336, %v4334
        %v4411 = vpack.c.b16 %v4339, %v4337
        %v4412 = vpack.c.b16 %v4340, %v4338
        %v4413 = vpack.c.b16 %v4343, %v4341
        %v4414 = vpack.c.b16 %v4344, %v4342
        %v4415 = vpack.c.b16 %v4347, %v4345
        %v4416 = vpack.c.b16 %v4348, %v4346
        %v4417 = vpack.c.b16 %v4351, %v4349
        %v4418 = vpack.c.b16 %v4352, %v4350
        %v4419 = vpack.c.b16 %v4355, %v4353
        %v4420 = vpack.c.b16 %v4356, %v4354
        %v4421 = vpack.c.b16 %v4359, %v4357
        %v4422 = vpack.c.b16 %v4360, %v4358
        %v4423 = vpack.c.b16 %v4363, %v4361
        %v4424 = vpack.c.b16 %v4364, %v4362
        %v4425 = vpack.c.b16 %v4367, %v4365
        %v4426 = vpack.c.b16 %v4368, %v4366
        %v4427 = vpack.c.b16 %v4371, %v4369
        %v4428 = vpack.c.b16 %v4372, %v4370
        %v4429 = vpack.c.b16 %v4375, %v4373
        %v4430 = vpack.c.b16 %v4376, %v4374
        %v4431 = vpack.c.b16 %v4379, %v4377
        %v4432 = vpack.c.b16 %v4380, %v4378
        %v4433 = vpack.c.b16 %v4383, %v4381
        %v4434 = vpack.c.b16 %v4384, %v4382
        %v4435 = vpack.c.b16 %v4387, %v4385
        %v4436 = vpack.c.b16 %v4388, %v4386
        %4485 = vmatpush.bf16.msra.mxu0 %v4403
        %4486 = vmatpush.bf16.msra.mxu0 %v4401
        %4487 = vmatpush.bf16.msra.mxu0 %v4399
        %4488 = vmatpush.bf16.msra.mxu0 %v4397
        %4489 = vmatpush.bf16.msra.mxu0 %v4395
        %4490 = vmatpush.bf16.msra.mxu0 %v4393
        %4491 = vmatpush.bf16.msra.mxu0 %v4391
        %4492 = vmatpush.bf16.msra.mxu0 %v4389
        %4493 = vmatmul.bf16.gmra.mxu0 %v4239
        %v4494 = vpop.f32.mrf.mxu0
        %v4495 = vadd.f32 %v4186, %v4494
        %v4496 = vpop.f32.mrf.mxu0
        %v4497 = vadd.f32 %v4188, %v4496
        %4498 = vdwg.mxu0
        %4499 = vmatpush.bf16.msra.mxu0 %v4419
        %4500 = vmatpush.bf16.msra.mxu0 %v4417
        %4501 = vmatpush.bf16.msra.mxu0 %v4415
        %4502 = vmatpush.bf16.msra.mxu0 %v4413
        %4503 = vmatpush.bf16.msra.mxu0 %v4411
        %4504 = vmatpush.bf16.msra.mxu0 %v4409
        %4505 = vmatpush.bf16.msra.mxu0 %v4407
        %4506 = vmatpush.bf16.msra.mxu0 %v4405
        %4507 = vmatmul.bf16.gmra.mxu0 %v4240
        %v4508 = vpop.f32.mrf.mxu0
        %v4509 = vadd.f32 %v4495, %v4508
        %v4510 = vpop.f32.mrf.mxu0
        %v4511 = vadd.f32 %v4497, %v4510
        %4512 = vdwg.mxu0
        %4513 = vmatpush.bf16.msra.mxu0 %v4435
        %4514 = vmatpush.bf16.msra.mxu0 %v4433
        %4515 = vmatpush.bf16.msra.mxu0 %v4431
        %4516 = vmatpush.bf16.msra.mxu0 %v4429
        %4517 = vmatpush.bf16.msra.mxu0 %v4427
        %4518 = vmatpush.bf16.msra.mxu0 %v4425
        %4519 = vmatpush.bf16.msra.mxu0 %v4423
        %4520 = vmatpush.bf16.msra.mxu0 %v4421
        %4521 = vmatmul.bf16.gmra.mxu0 %v4241
        %v4522 = vpop.f32.mrf.mxu0
        %v4523 = vadd.f32 %v4509, %v4522
        %v4524 = vpop.f32.mrf.mxu0
        %v4525 = vadd.f32 %v4511, %v4524
        %4526 = vdwg.mxu0
        %4527 = vmatpush.bf16.msra.mxu0 %v4404
        %4528 = vmatpush.bf16.msra.mxu0 %v4402
        %4529 = vmatpush.bf16.msra.mxu0 %v4400
        %4530 = vmatpush.bf16.msra.mxu0 %v4398
        %4531 = vmatpush.bf16.msra.mxu0 %v4396
        %4532 = vmatpush.bf16.msra.mxu0 %v4394
        %4533 = vmatpush.bf16.msra.mxu0 %v4392
        %4534 = vmatpush.bf16.msra.mxu0 %v4390
        %4535 = vmatmul.bf16.gmra.mxu0 %v4239
        %v4536 = vpop.f32.mrf.mxu0
        %v4537 = vadd.f32 %v4228, %v4536
        %v4538 = vpop.f32.mrf.mxu0
        %v4539 = vadd.f32 %v4230, %v4538
        %4540 = vdwg.mxu0
        %4541 = vmatpush.bf16.msra.mxu0 %v4420
        %4542 = vmatpush.bf16.msra.mxu0 %v4418
        %4543 = vmatpush.bf16.msra.mxu0 %v4416
        %4544 = vmatpush.bf16.msra.mxu0 %v4414
        %4545 = vmatpush.bf16.msra.mxu0 %v4412
        %4546 = vmatpush.bf16.msra.mxu0 %v4410
        %4547 = vmatpush.bf16.msra.mxu0 %v4408
        %4548 = vmatpush.bf16.msra.mxu0 %v4406
        %4549 = vmatmul.bf16.gmra.mxu0 %v4240
        %v4550 = vpop.f32.mrf.mxu0
        %v4551 = vadd.f32 %v4537, %v4550
        %v4552 = vpop.f32.mrf.mxu0
        %v4553 = vadd.f32 %v4539, %v4552
        %4554 = vdwg.mxu0
        %4555 = vmatpush.bf16.msra.mxu0 %v4436
        %4556 = vmatpush.bf16.msra.mxu0 %v4434
        %4557 = vmatpush.bf16.msra.mxu0 %v4432
        %4558 = vmatpush.bf16.msra.mxu0 %v4430
        %4559 = vmatpush.bf16.msra.mxu0 %v4428
        %4560 = vmatpush.bf16.msra.mxu0 %v4426
        %4561 = vmatpush.bf16.msra.mxu0 %v4424
        %4562 = vmatpush.bf16.msra.mxu0 %v4422
        %4563 = vmatmul.bf16.gmra.mxu0 %v4241
        %v4564 = vpop.f32.mrf.mxu0
        %v4565 = vadd.f32 %v4551, %v4564
        %v4566 = vpop.f32.mrf.mxu0
        %v4567 = vadd.f32 %v4553, %v4566
        %4568 = vdwg.mxu0
        %v4571 = vrot.slane %v3734, 2
        %v4572 = vrot.slane %v3735, 4
        %v4573 = vrot.slane %v3735, 6
        %v4576 = vsel %vm2173, %v3734, %v4571
        %v4579 = vsel %vm3759, %v4572, %v4573
        %v4580 = vsel %vm3763, %v4576, %v4579
        %s4581 = scalar_lea.vmem %s5, 768
        %v4582 = vld [vmem:[%s4581] sm:$0xff]
        %v4583 = vld [vmem:[%s4581 + $0x8] sm:$0xff]
        %v4584 = vld [vmem:[%s4581 + $0x10] sm:$0xff]
        %v4585 = vld [vmem:[%s4581 + $0x18] sm:$0xff]
        %v4586 = vld [vmem:[%s4581 + $0x20] sm:$0xff]
        %v4587 = vld [vmem:[%s4581 + $0x28] sm:$0xff]
        %v4588 = vld [vmem:[%s4581 + $0x30] sm:$0xff]
        %v4589 = vld [vmem:[%s4581 + $0x38] sm:$0xff]
        %v4590 = vld [vmem:[%s4581 + $0x40] sm:$0xff]
        %v4591 = vld [vmem:[%s4581 + $0x48] sm:$0xff]
        %v4592 = vld [vmem:[%s4581 + $0x50] sm:$0xff]
        %v4593 = vld [vmem:[%s4581 + $0x58] sm:$0xff]
        %v4594 = vld [vmem:[%s4581 + $0x60] sm:$0xff]
        %v4595 = vld [vmem:[%s4581 + $0x68] sm:$0xff]
        %v4596 = vld [vmem:[%s4581 + $0x70] sm:$0xff]
        %v4597 = vld [vmem:[%s4581 + $0x78] sm:$0xff]
        %v4598 = vld [vmem:[%s4581 + $0x80] sm:$0xff]
        %v4599 = vld [vmem:[%s4581 + $0x88] sm:$0xff]
        %v4600 = vld [vmem:[%s4581 + $0x90] sm:$0xff]
        %v4601 = vld [vmem:[%s4581 + $0x98] sm:$0xff]
        %v4602 = vld [vmem:[%s4581 + $0xa0] sm:$0xff]
        %v4603 = vld [vmem:[%s4581 + $0xa8] sm:$0xff]
        %v4604 = vld [vmem:[%s4581 + $0xb0] sm:$0xff]
        %v4605 = vld [vmem:[%s4581 + $0xb8] sm:$0xff]
        %v4606 = vld [vmem:[%s4581 + $0xc0] sm:$0xff]
        %v4607 = vld [vmem:[%s4581 + $0xc8] sm:$0xff]
        %v4608 = vld [vmem:[%s4581 + $0xd0] sm:$0xff]
        %v4609 = vld [vmem:[%s4581 + $0xd8] sm:$0xff]
        %v4610 = vld [vmem:[%s4581 + $0xe0] sm:$0xff]
        %v4611 = vld [vmem:[%s4581 + $0xe8] sm:$0xff]
        %v4612 = vld [vmem:[%s4581 + $0xf0] sm:$0xff]
        %v4613 = vld [vmem:[%s4581 + $0xf8] sm:$0xff]
        %v4614 = vld [vmem:[%s4581 + $0x100] sm:$0xff]
        %v4615 = vld [vmem:[%s4581 + $0x108] sm:$0xff]
        %v4616 = vld [vmem:[%s4581 + $0x110] sm:$0xff]
        %v4617 = vld [vmem:[%s4581 + $0x118] sm:$0xff]
        %v4618 = vld [vmem:[%s4581 + $0x120] sm:$0xff]
        %v4619 = vld [vmem:[%s4581 + $0x128] sm:$0xff]
        %v4620 = vld [vmem:[%s4581 + $0x130] sm:$0xff]
        %v4621 = vld [vmem:[%s4581 + $0x138] sm:$0xff]
        %v4622 = vld [vmem:[%s4581 + $0x140] sm:$0xff]
        %v4623 = vld [vmem:[%s4581 + $0x148] sm:$0xff]
        %v4624 = vld [vmem:[%s4581 + $0x150] sm:$0xff]
        %v4625 = vld [vmem:[%s4581 + $0x158] sm:$0xff]
        %v4626 = vld [vmem:[%s4581 + $0x160] sm:$0xff]
        %v4627 = vld [vmem:[%s4581 + $0x168] sm:$0xff]
        %v4628 = vld [vmem:[%s4581 + $0x170] sm:$0xff]
        %v4629 = vld [vmem:[%s4581 + $0x178] sm:$0xff]
        %4630 = vst [vmem:[#allocation1] ss:$4 sm:$0xff] %v3778
        %s4631 = scalar_lea.vmem [#allocation1], 1
        %4632 = vst [vmem:[%s4631] ss:$4 sm:$0xff] %v3785
        %s4633 = scalar_lea.vmem [#allocation1], 2
        %4634 = vst [vmem:[%s4633] ss:$4 sm:$0xff] %v3845
        %s4635 = scalar_lea.vmem [#allocation1], 3
        %4636 = vst [vmem:[%s4635] ss:$4 sm:$0xff] %v4580
        %v4637 = vld.sshfl [vmem:[#allocation1] sm:$0xff pattern:$0x73625140]
        %v4638 = vld.sshfl [vmem:[#allocation1 + $0x8] sm:$0xff pattern:$0x73625140]
        %v4639 = vld.sshfl [vmem:[#allocation1 + $0x10] sm:$0xff pattern:$0x73625140]
        %v4691 = vunpack.c.l.b16 %v4582
        %v4692 = vunpack.c.h.b16 %v4582
        %v4693 = vunpack.c.l.b16 %v4583
        %v4694 = vunpack.c.h.b16 %v4583
        %v4695 = vunpack.c.l.b16 %v4584
        %v4696 = vunpack.c.h.b16 %v4584
        %v4697 = vunpack.c.l.b16 %v4585
        %v4698 = vunpack.c.h.b16 %v4585
        %v4699 = vunpack.c.l.b16 %v4586
        %v4700 = vunpack.c.h.b16 %v4586
        %v4701 = vunpack.c.l.b16 %v4587
        %v4702 = vunpack.c.h.b16 %v4587
        %v4703 = vunpack.c.l.b16 %v4588
        %v4704 = vunpack.c.h.b16 %v4588
        %v4705 = vunpack.c.l.b16 %v4589
        %v4706 = vunpack.c.h.b16 %v4589
        %v4707 = vunpack.c.l.b16 %v4590
        %v4708 = vunpack.c.h.b16 %v4590
        %v4709 = vunpack.c.l.b16 %v4591
        %v4710 = vunpack.c.h.b16 %v4591
        %v4711 = vunpack.c.l.b16 %v4592
        %v4712 = vunpack.c.h.b16 %v4592
        %v4713 = vunpack.c.l.b16 %v4593
        %v4714 = vunpack.c.h.b16 %v4593
        %v4715 = vunpack.c.l.b16 %v4594
        %v4716 = vunpack.c.h.b16 %v4594
        %v4717 = vunpack.c.l.b16 %v4595
        %v4718 = vunpack.c.h.b16 %v4595
        %v4719 = vunpack.c.l.b16 %v4596
        %v4720 = vunpack.c.h.b16 %v4596
        %v4721 = vunpack.c.l.b16 %v4597
        %v4722 = vunpack.c.h.b16 %v4597
        %v4723 = vunpack.c.l.b16 %v4598
        %v4724 = vunpack.c.h.b16 %v4598
        %v4725 = vunpack.c.l.b16 %v4599
        %v4726 = vunpack.c.h.b16 %v4599
        %v4727 = vunpack.c.l.b16 %v4600
        %v4728 = vunpack.c.h.b16 %v4600
        %v4729 = vunpack.c.l.b16 %v4601
        %v4730 = vunpack.c.h.b16 %v4601
        %v4731 = vunpack.c.l.b16 %v4602
        %v4732 = vunpack.c.h.b16 %v4602
        %v4733 = vunpack.c.l.b16 %v4603
        %v4734 = vunpack.c.h.b16 %v4603
        %v4735 = vunpack.c.l.b16 %v4604
        %v4736 = vunpack.c.h.b16 %v4604
        %v4737 = vunpack.c.l.b16 %v4605
        %v4738 = vunpack.c.h.b16 %v4605
        %v4739 = vunpack.c.l.b16 %v4606
        %v4740 = vunpack.c.h.b16 %v4606
        %v4741 = vunpack.c.l.b16 %v4607
        %v4742 = vunpack.c.h.b16 %v4607
        %v4743 = vunpack.c.l.b16 %v4608
        %v4744 = vunpack.c.h.b16 %v4608
        %v4745 = vunpack.c.l.b16 %v4609
        %v4746 = vunpack.c.h.b16 %v4609
        %v4747 = vunpack.c.l.b16 %v4610
        %v4748 = vunpack.c.h.b16 %v4610
        %v4749 = vunpack.c.l.b16 %v4611
        %v4750 = vunpack.c.h.b16 %v4611
        %v4751 = vunpack.c.l.b16 %v4612
        %v4752 = vunpack.c.h.b16 %v4612
        %v4753 = vunpack.c.l.b16 %v4613
        %v4754 = vunpack.c.h.b16 %v4613
        %v4755 = vunpack.c.l.b16 %v4614
        %v4756 = vunpack.c.h.b16 %v4614
        %v4757 = vunpack.c.l.b16 %v4615
        %v4758 = vunpack.c.h.b16 %v4615
        %v4759 = vunpack.c.l.b16 %v4616
        %v4760 = vunpack.c.h.b16 %v4616
        %v4761 = vunpack.c.l.b16 %v4617
        %v4762 = vunpack.c.h.b16 %v4617
        %v4763 = vunpack.c.l.b16 %v4618
        %v4764 = vunpack.c.h.b16 %v4618
        %v4765 = vunpack.c.l.b16 %v4619
        %v4766 = vunpack.c.h.b16 %v4619
        %v4767 = vunpack.c.l.b16 %v4620
        %v4768 = vunpack.c.h.b16 %v4620
        %v4769 = vunpack.c.l.b16 %v4621
        %v4770 = vunpack.c.h.b16 %v4621
        %v4771 = vunpack.c.l.b16 %v4622
        %v4772 = vunpack.c.h.b16 %v4622
        %v4773 = vunpack.c.l.b16 %v4623
        %v4774 = vunpack.c.h.b16 %v4623
        %v4775 = vunpack.c.l.b16 %v4624
        %v4776 = vunpack.c.h.b16 %v4624
        %v4777 = vunpack.c.l.b16 %v4625
        %v4778 = vunpack.c.h.b16 %v4625
        %v4779 = vunpack.c.l.b16 %v4626
        %v4780 = vunpack.c.h.b16 %v4626
        %v4781 = vunpack.c.l.b16 %v4627
        %v4782 = vunpack.c.h.b16 %v4627
        %v4783 = vunpack.c.l.b16 %v4628
        %v4784 = vunpack.c.h.b16 %v4628
        %v4785 = vunpack.c.l.b16 %v4629
        %v4786 = vunpack.c.h.b16 %v4629
        %v4787 = vpack.c.b16 %v4693, %v4691
        %v4788 = vpack.c.b16 %v4694, %v4692
        %v4789 = vpack.c.b16 %v4697, %v4695
        %v4790 = vpack.c.b16 %v4698, %v4696
        %v4791 = vpack.c.b16 %v4701, %v4699
        %v4792 = vpack.c.b16 %v4702, %v4700
        %v4793 = vpack.c.b16 %v4705, %v4703
        %v4794 = vpack.c.b16 %v4706, %v4704
        %v4795 = vpack.c.b16 %v4709, %v4707
        %v4796 = vpack.c.b16 %v4710, %v4708
        %v4797 = vpack.c.b16 %v4713, %v4711
        %v4798 = vpack.c.b16 %v4714, %v4712
        %v4799 = vpack.c.b16 %v4717, %v4715
        %v4800 = vpack.c.b16 %v4718, %v4716
        %v4801 = vpack.c.b16 %v4721, %v4719
        %v4802 = vpack.c.b16 %v4722, %v4720
        %v4803 = vpack.c.b16 %v4725, %v4723
        %v4804 = vpack.c.b16 %v4726, %v4724
        %v4805 = vpack.c.b16 %v4729, %v4727
        %v4806 = vpack.c.b16 %v4730, %v4728
        %v4807 = vpack.c.b16 %v4733, %v4731
        %v4808 = vpack.c.b16 %v4734, %v4732
        %v4809 = vpack.c.b16 %v4737, %v4735
        %v4810 = vpack.c.b16 %v4738, %v4736
        %v4811 = vpack.c.b16 %v4741, %v4739
        %v4812 = vpack.c.b16 %v4742, %v4740
        %v4813 = vpack.c.b16 %v4745, %v4743
        %v4814 = vpack.c.b16 %v4746, %v4744
        %v4815 = vpack.c.b16 %v4749, %v4747
        %v4816 = vpack.c.b16 %v4750, %v4748
        %v4817 = vpack.c.b16 %v4753, %v4751
        %v4818 = vpack.c.b16 %v4754, %v4752
        %v4819 = vpack.c.b16 %v4757, %v4755
        %v4820 = vpack.c.b16 %v4758, %v4756
        %v4821 = vpack.c.b16 %v4761, %v4759
        %v4822 = vpack.c.b16 %v4762, %v4760
        %v4823 = vpack.c.b16 %v4765, %v4763
        %v4824 = vpack.c.b16 %v4766, %v4764
        %v4825 = vpack.c.b16 %v4769, %v4767
        %v4826 = vpack.c.b16 %v4770, %v4768
        %v4827 = vpack.c.b16 %v4773, %v4771
        %v4828 = vpack.c.b16 %v4774, %v4772
        %v4829 = vpack.c.b16 %v4777, %v4775
        %v4830 = vpack.c.b16 %v4778, %v4776
        %v4831 = vpack.c.b16 %v4781, %v4779
        %v4832 = vpack.c.b16 %v4782, %v4780
        %v4833 = vpack.c.b16 %v4785, %v4783
        %v4834 = vpack.c.b16 %v4786, %v4784
        %4883 = vmatpush.bf16.msra.mxu0 %v4801
        %4884 = vmatpush.bf16.msra.mxu0 %v4799
        %4885 = vmatpush.bf16.msra.mxu0 %v4797
        %4886 = vmatpush.bf16.msra.mxu0 %v4795
        %4887 = vmatpush.bf16.msra.mxu0 %v4793
        %4888 = vmatpush.bf16.msra.mxu0 %v4791
        %4889 = vmatpush.bf16.msra.mxu0 %v4789
        %4890 = vmatpush.bf16.msra.mxu0 %v4787
        %4891 = vmatmul.bf16.gmra.mxu0 %v4637
        %v4892 = vpop.f32.mrf.mxu0
        %v4893 = vadd.f32 0.0, %v4892
        %v4894 = vpop.f32.mrf.mxu0
        %v4895 = vadd.f32 0.0, %v4894
        %4896 = vdwg.mxu0
        %4897 = vmatpush.bf16.msra.mxu0 %v4817
        %4898 = vmatpush.bf16.msra.mxu0 %v4815
        %4899 = vmatpush.bf16.msra.mxu0 %v4813
        %4900 = vmatpush.bf16.msra.mxu0 %v4811
        %4901 = vmatpush.bf16.msra.mxu0 %v4809
        %4902 = vmatpush.bf16.msra.mxu0 %v4807
        %4903 = vmatpush.bf16.msra.mxu0 %v4805
        %4904 = vmatpush.bf16.msra.mxu0 %v4803
        %4905 = vmatmul.bf16.gmra.mxu0 %v4638
        %v4906 = vpop.f32.mrf.mxu0
        %v4907 = vadd.f32 %v4893, %v4906
        %v4908 = vpop.f32.mrf.mxu0
        %v4909 = vadd.f32 %v4895, %v4908
        %4910 = vdwg.mxu0
        %4911 = vmatpush.bf16.msra.mxu0 %v4833
        %4912 = vmatpush.bf16.msra.mxu0 %v4831
        %4913 = vmatpush.bf16.msra.mxu0 %v4829
        %4914 = vmatpush.bf16.msra.mxu0 %v4827
        %4915 = vmatpush.bf16.msra.mxu0 %v4825
        %4916 = vmatpush.bf16.msra.mxu0 %v4823
        %4917 = vmatpush.bf16.msra.mxu0 %v4821
        %4918 = vmatpush.bf16.msra.mxu0 %v4819
        %4919 = vmatmul.bf16.gmra.mxu0 %v4639
        %v4920 = vpop.f32.mrf.mxu0
        %v4921 = vadd.f32 %v4907, %v4920
        %v4922 = vpop.f32.mrf.mxu0
        %v4923 = vadd.f32 %v4909, %v4922
        %4924 = vdwg.mxu0
        %4925 = vmatpush.bf16.msra.mxu0 %v4802
        %4926 = vmatpush.bf16.msra.mxu0 %v4800
        %4927 = vmatpush.bf16.msra.mxu0 %v4798
        %4928 = vmatpush.bf16.msra.mxu0 %v4796
        %4929 = vmatpush.bf16.msra.mxu0 %v4794
        %4930 = vmatpush.bf16.msra.mxu0 %v4792
        %4931 = vmatpush.bf16.msra.mxu0 %v4790
        %4932 = vmatpush.bf16.msra.mxu0 %v4788
        %4933 = vmatmul.bf16.gmra.mxu0 %v4637
        %v4934 = vpop.f32.mrf.mxu0
        %v4935 = vadd.f32 0.0, %v4934
        %v4936 = vpop.f32.mrf.mxu0
        %v4937 = vadd.f32 0.0, %v4936
        %4938 = vdwg.mxu0
        %4939 = vmatpush.bf16.msra.mxu0 %v4818
        %4940 = vmatpush.bf16.msra.mxu0 %v4816
        %4941 = vmatpush.bf16.msra.mxu0 %v4814
        %4942 = vmatpush.bf16.msra.mxu0 %v4812
        %4943 = vmatpush.bf16.msra.mxu0 %v4810
        %4944 = vmatpush.bf16.msra.mxu0 %v4808
        %4945 = vmatpush.bf16.msra.mxu0 %v4806
        %4946 = vmatpush.bf16.msra.mxu0 %v4804
        %4947 = vmatmul.bf16.gmra.mxu0 %v4638
        %v4948 = vpop.f32.mrf.mxu0
        %v4949 = vadd.f32 %v4935, %v4948
        %v4950 = vpop.f32.mrf.mxu0
        %v4951 = vadd.f32 %v4937, %v4950
        %4952 = vdwg.mxu0
        %4953 = vmatpush.bf16.msra.mxu0 %v4834
        %4954 = vmatpush.bf16.msra.mxu0 %v4832
        %4955 = vmatpush.bf16.msra.mxu0 %v4830
        %4956 = vmatpush.bf16.msra.mxu0 %v4828
        %4957 = vmatpush.bf16.msra.mxu0 %v4826
        %4958 = vmatpush.bf16.msra.mxu0 %v4824
        %4959 = vmatpush.bf16.msra.mxu0 %v4822
        %4960 = vmatpush.bf16.msra.mxu0 %v4820
        %4961 = vmatmul.bf16.gmra.mxu0 %v4639
        %v4962 = vpop.f32.mrf.mxu0
        %v4963 = vadd.f32 %v4949, %v4962
        %v4964 = vpop.f32.mrf.mxu0
        %v4965 = vadd.f32 %v4951, %v4964
        %4966 = vdwg.mxu0
        %v4967 = vadd.f32 %v4523, %v4921
        %v4968 = vadd.f32 %v4565, %v4963
        %v4969 = vadd.f32 %v4525, %v4923
        %v4970 = vadd.f32 %v4567, %v4965
        %v4972 = vperm.slane %v3705, 0
        %v4973 = vperm.slane %v3705, 1
        %v4976 = vadd.f32 %v4967, %v4972
        %v4977 = vadd.f32 %v4968, %v4973
        %v4978 = vadd.f32 %v4969, %v4972
        %v4979 = vadd.f32 %v4970, %v4973
        %v4980 = vmax.f32 %v4976, 0.0
        %v4981 = vmax.f32 %v4977, 0.0
        %v4982 = vmax.f32 %v4978, 0.0
        %v4983 = vmax.f32 %v4979, 0.0
        %v4988 = vrot.slane %v4981, 4
        %v4989 = vrot.slane %v4983, 4
        %v4990 = vsel %vm3763, %v4980, %v4988
        %v4991 = vsel %vm3763, %v4988, %v4980
        %v4992 = vrot.slane %v4991, 4
        %v4993 = vsel %vm3763, %v4982, %v4989
        %v4994 = vsel %vm3763, %v4989, %v4982
        %v4995 = vrot.slane %v4994, 4
        %v5000 = vmax.f32 %v4990, %v4992
        %v5001 = vmax.f32 %v4993, %v4995
        %v5004 = vrot.slane %v5000, 2
        %v5005 = vrot.slane %v5001, 2
        %v5006 = vsel %vm2173, %v5000, %v5004
        %vm5007 = vcmask 1043458
        %v5008 = vsel %vm5007, %v5000, %v5004
        %v5009 = vrot.slane %v5008, 2
        %v5010 = vsel %vm2173, %v5001, %v5005
        %v5011 = vsel %vm5007, %v5001, %v5005
        %v5012 = vrot.slane %v5011, 2
        %v5017 = vrot.slane %v5006, 7
        %v5018 = vrot.slane %v5017, 2
        %v5019 = vrot.slane %v5009, 7
        %v5020 = vrot.slane %v5019, 2
        %v5021 = vrot.slane %v5010, 7
        %v5022 = vrot.slane %v5021, 2
        %v5023 = vrot.slane %v5012, 7
        %v5024 = vrot.slane %v5023, 2
        %v5029 = vmax.f32 %v5006, %v5018
        %v5030 = vmax.f32 %v5009, %v5020
        %v5031 = vmax.f32 %v5010, %v5022
        %v5032 = vmax.f32 %v5012, %v5024
        %v5038 = vunpack.c.l.s4 572653568
        %v5039 = vunpack.c.0.s8 %v5038
        %v5040 = vperm.slane %v5029, %v5039
        %v5042 = vunpack.c.l.s4 572653568
        %v5043 = vunpack.c.0.s8 %v5042
        %v5044 = vperm.slane %v5030, %v5043
        %v5046 = vunpack.c.l.s4 572653568
        %v5047 = vunpack.c.0.s8 %v5046
        %v5048 = vperm.slane %v5031, %v5047
        %v5050 = vunpack.c.l.s4 572653568
        %v5051 = vunpack.c.0.s8 %v5050
        %v5052 = vperm.slane %v5032, %v5051
        %v5053 = vsel %vm2812, %v5044, %v5040
        %v5054 = vsel %vm2820, %v5044, %v5053
        %v5055 = vsel %vm2812, %v5052, %v5048
        %v5056 = vsel %vm2820, %v5052, %v5055
        %s5059 = scalar_lea.vmem [#allocation5], 8
        %5060 = vst [vmem:[%s5059] sm:$0x66] %v5054
        %5061 = vst [vmem:[%s5059 + $0x8] sm:$0x66] %v5056
        %v5062 = vld [vmem:[%s8] sm:$0x3]
        %v5063 = vld [vmem:[#allocation5] sm:$0x33]
        %v5064 = vld [vmem:[#allocation5 + $0x8] sm:$0x33]
        %v5065 = vld [vmem:[#allocation5 + $0x10] sm:$0x33]
        %v5066 = vld [vmem:[#allocation5 + $0x18] sm:$0x33]
        %v5067 = vld [vmem:[#allocation5] sm:$0x66]
        %v5068 = vld [vmem:[#allocation5 + $0x8] sm:$0x66]
        %v5069 = vld [vmem:[#allocation5 + $0x10] sm:$0x66]
        %v5070 = vld [vmem:[#allocation5 + $0x18] sm:$0x66]
        %v5071 = vld [vmem:[#allocation5] sm:$0xcc]
        %v5072 = vld [vmem:[#allocation5 + $0x8] sm:$0xcc]
        %v5073 = vld [vmem:[#allocation5 + $0x10] sm:$0xcc]
        %v5074 = vld [vmem:[#allocation5 + $0x18] sm:$0xcc]
        %5079 = vst [vmem:[#allocation1] ss:$2 sm:$0xff] %v5063
        %v5080 = vld.sshfl [vmem:[#allocation1] sm:$0xff pattern:$0x75316420]
        %v5081 = vld.sshfl [vmem:[#allocation1 + $0x8] sm:$0xff pattern:$0x75316420]
        %s5082 = scalar_lea.vmem [#allocation1], 16
        %5083 = vst [vmem:[%s5082] ss:$2 sm:$0xff] %v5064
        %v5084 = vld.sshfl [vmem:[#allocation1 + $0x10] sm:$0xff pattern:$0x75316420]
        %v5085 = vld.sshfl [vmem:[#allocation1 + $0x18] sm:$0xff pattern:$0x75316420]
        %s5086 = scalar_lea.vmem [#allocation1], 32
        %5087 = vst [vmem:[%s5086] ss:$2 sm:$0xff] %v5065
        %v5088 = vld.sshfl [vmem:[#allocation1 + $0x20] sm:$0xff pattern:$0x75316420]
        %v5089 = vld.sshfl [vmem:[#allocation1 + $0x28] sm:$0xff pattern:$0x75316420]
        %s5090 = scalar_lea.vmem [#allocation1], 48
        %5091 = vst [vmem:[%s5090] ss:$2 sm:$0xff] %v5066
        %v5092 = vld.sshfl [vmem:[#allocation1 + $0x30] sm:$0xff pattern:$0x75316420]
        %v5093 = vld.sshfl [vmem:[#allocation1 + $0x38] sm:$0xff pattern:$0x75316420]
        %5106 = vst [vmem:[#allocation1] ss:$2 sm:$0xff] %v5067
        %v5107 = vld.sshfl [vmem:[#allocation1] sm:$0xff pattern:$0x75316420]
        %v5108 = vld.sshfl [vmem:[#allocation1 + $0x8] sm:$0xff pattern:$0x75316420]
        %s5109 = scalar_lea.vmem [#allocation1], 16
        %5110 = vst [vmem:[%s5109] ss:$2 sm:$0xff] %v5068
        %v5111 = vld.sshfl [vmem:[#allocation1 + $0x10] sm:$0xff pattern:$0x75316420]
        %v5112 = vld.sshfl [vmem:[#allocation1 + $0x18] sm:$0xff pattern:$0x75316420]
        %s5113 = scalar_lea.vmem [#allocation1], 32
        %5114 = vst [vmem:[%s5113] ss:$2 sm:$0xff] %v5069
        %v5115 = vld.sshfl [vmem:[#allocation1 + $0x20] sm:$0xff pattern:$0x75316420]
        %v5116 = vld.sshfl [vmem:[#allocation1 + $0x28] sm:$0xff pattern:$0x75316420]
        %s5117 = scalar_lea.vmem [#allocation1], 48
        %5118 = vst [vmem:[%s5117] ss:$2 sm:$0xff] %v5070
        %v5119 = vld.sshfl [vmem:[#allocation1 + $0x30] sm:$0xff pattern:$0x75316420]
        %v5120 = vld.sshfl [vmem:[#allocation1 + $0x38] sm:$0xff pattern:$0x75316420]
        %v5121 = vrot.slane %v5107, 1
        %v5122 = vrot.slane %v5108, 1
        %v5123 = vrot.slane %v5111, 1
        %v5124 = vrot.slane %v5112, 1
        %v5125 = vrot.slane %v5115, 1
        %v5126 = vrot.slane %v5116, 1
        %v5127 = vrot.slane %v5119, 1
        %v5128 = vrot.slane %v5120, 1
        %5141 = vst [vmem:[#allocation1] ss:$2 sm:$0xff] %v5071
        %v5142 = vld.sshfl [vmem:[#allocation1] sm:$0xff pattern:$0x75316420]
        %v5143 = vld.sshfl [vmem:[#allocation1 + $0x8] sm:$0xff pattern:$0x75316420]
        %s5144 = scalar_lea.vmem [#allocation1], 16
        %5145 = vst [vmem:[%s5144] ss:$2 sm:$0xff] %v5072
        %v5146 = vld.sshfl [vmem:[#allocation1 + $0x10] sm:$0xff pattern:$0x75316420]
        %v5147 = vld.sshfl [vmem:[#allocation1 + $0x18] sm:$0xff pattern:$0x75316420]
        %s5148 = scalar_lea.vmem [#allocation1], 32
        %5149 = vst [vmem:[%s5148] ss:$2 sm:$0xff] %v5073
        %v5150 = vld.sshfl [vmem:[#allocation1 + $0x20] sm:$0xff pattern:$0x75316420]
        %v5151 = vld.sshfl [vmem:[#allocation1 + $0x28] sm:$0xff pattern:$0x75316420]
        %s5152 = scalar_lea.vmem [#allocation1], 48
        %5153 = vst [vmem:[%s5152] ss:$2 sm:$0xff] %v5074
        %v5154 = vld.sshfl [vmem:[#allocation1 + $0x30] sm:$0xff pattern:$0x75316420]
        %v5155 = vld.sshfl [vmem:[#allocation1 + $0x38] sm:$0xff pattern:$0x75316420]
        %v5156 = vrot.slane %v5142, 2
        %v5157 = vrot.slane %v5143, 2
        %v5158 = vrot.slane %v5146, 2
        %v5159 = vrot.slane %v5147, 2
        %v5160 = vrot.slane %v5150, 2
        %v5161 = vrot.slane %v5151, 2
        %v5162 = vrot.slane %v5154, 2
        %v5163 = vrot.slane %v5155, 2
        %v5172 = vpack.c.bf16 %v5081, %v5080
        %v5173 = vpack.c.bf16 %v5122, %v5121
        %v5174 = vpack.c.bf16 %v5157, %v5156
        %v5175 = vpack.c.bf16 %v5085, %v5084
        %v5176 = vpack.c.bf16 %v5124, %v5123
        %v5177 = vpack.c.bf16 %v5159, %v5158
        %v5178 = vpack.c.bf16 %v5089, %v5088
        %v5179 = vpack.c.bf16 %v5126, %v5125
        %v5180 = vpack.c.bf16 %v5161, %v5160
        %v5181 = vpack.c.bf16 %v5093, %v5092
        %v5182 = vpack.c.bf16 %v5128, %v5127
        %v5183 = vpack.c.bf16 %v5163, %v5162
        %v5190 = vrot.slane %v5172, 3
        %v5191 = vrot.slane %v5173, 6
        %v5192 = vrot.slane %v5173, 1
        %v5193 = vrot.slane %v5174, 4
        %v5194 = vrot.slane %v5174, 7
        %v5195 = vrot.slane %v5175, 3
        %v5196 = vrot.slane %v5176, 6
        %v5197 = vrot.slane %v5176, 1
        %v5198 = vrot.slane %v5177, 4
        %v5199 = vrot.slane %v5177, 7
        %vm5200 = vcmask 1040384
        %v5203 = vsel %vm5200, %v5172, %v5190
        %v5205 = vsel %vm2173, %v5203, %v5191
        %v5208 = vsel %vm2814, %v5192, %v5193
        %vm5209 = vcmask 1044483
        %v5211 = vsel %vm5209, %v5208, %v5194
        %vm5212 = vcmask 1042432
        %v5213 = vsel %vm5212, %v5205, %v5211
        %v5216 = vsel %vm5200, %v5175, %v5195
        %v5218 = vsel %vm2173, %v5216, %v5196
        %v5221 = vsel %vm2814, %v5197, %v5198
        %v5223 = vsel %vm5209, %v5221, %v5199
        %v5224 = vsel %vm5212, %v5218, %v5223
        %v5225 = vld [vmem:[%s7] sm:$0xff]
        %v5226 = vld [vmem:[%s7 + $0x8] sm:$0xff]
        %v5227 = vld [vmem:[%s7 + $0x10] sm:$0xff]
        %v5228 = vld [vmem:[%s7 + $0x18] sm:$0xff]
        %v5229 = vld [vmem:[%s7 + $0x20] sm:$0xff]
        %v5230 = vld [vmem:[%s7 + $0x28] sm:$0xff]
        %v5231 = vld [vmem:[%s7 + $0x30] sm:$0xff]
        %v5232 = vld [vmem:[%s7 + $0x38] sm:$0xff]
        %v5233 = vld [vmem:[%s7 + $0x40] sm:$0xff]
        %v5234 = vld [vmem:[%s7 + $0x48] sm:$0xff]
        %v5235 = vld [vmem:[%s7 + $0x50] sm:$0xff]
        %v5236 = vld [vmem:[%s7 + $0x58] sm:$0xff]
        %v5237 = vld [vmem:[%s7 + $0x60] sm:$0xff]
        %v5238 = vld [vmem:[%s7 + $0x68] sm:$0xff]
        %v5239 = vld [vmem:[%s7 + $0x70] sm:$0xff]
        %v5240 = vld [vmem:[%s7 + $0x78] sm:$0xff]
        %v5241 = vld [vmem:[%s7 + $0x80] sm:$0xff]
        %v5242 = vld [vmem:[%s7 + $0x88] sm:$0xff]
        %v5243 = vld [vmem:[%s7 + $0x90] sm:$0xff]
        %v5244 = vld [vmem:[%s7 + $0x98] sm:$0xff]
        %v5245 = vld [vmem:[%s7 + $0xa0] sm:$0xff]
        %v5246 = vld [vmem:[%s7 + $0xa8] sm:$0xff]
        %v5247 = vld [vmem:[%s7 + $0xb0] sm:$0xff]
        %v5248 = vld [vmem:[%s7 + $0xb8] sm:$0xff]
        %v5249 = vld [vmem:[%s7 + $0xc0] sm:$0xff]
        %v5250 = vld [vmem:[%s7 + $0xc8] sm:$0xff]
        %v5251 = vld [vmem:[%s7 + $0xd0] sm:$0xff]
        %v5252 = vld [vmem:[%s7 + $0xd8] sm:$0xff]
        %v5253 = vld [vmem:[%s7 + $0xe0] sm:$0xff]
        %v5254 = vld [vmem:[%s7 + $0xe8] sm:$0xff]
        %v5255 = vld [vmem:[%s7 + $0xf0] sm:$0xff]
        %v5256 = vld [vmem:[%s7 + $0xf8] sm:$0xff]
        %v5257 = vld [vmem:[%s7 + $0x100] sm:$0xff]
        %v5258 = vld [vmem:[%s7 + $0x108] sm:$0xff]
        %v5259 = vld [vmem:[%s7 + $0x110] sm:$0xff]
        %v5260 = vld [vmem:[%s7 + $0x118] sm:$0xff]
        %v5261 = vld [vmem:[%s7 + $0x120] sm:$0xff]
        %v5262 = vld [vmem:[%s7 + $0x128] sm:$0xff]
        %v5263 = vld [vmem:[%s7 + $0x130] sm:$0xff]
        %v5264 = vld [vmem:[%s7 + $0x138] sm:$0xff]
        %v5265 = vld [vmem:[%s7 + $0x140] sm:$0xff]
        %v5266 = vld [vmem:[%s7 + $0x148] sm:$0xff]
        %v5267 = vld [vmem:[%s7 + $0x150] sm:$0xff]
        %v5268 = vld [vmem:[%s7 + $0x158] sm:$0xff]
        %v5269 = vld [vmem:[%s7 + $0x160] sm:$0xff]
        %v5270 = vld [vmem:[%s7 + $0x168] sm:$0xff]
        %v5271 = vld [vmem:[%s7 + $0x170] sm:$0xff]
        %v5272 = vld [vmem:[%s7 + $0x178] sm:$0xff]
        %v5273 = vld [vmem:[%s7 + $0x180] sm:$0xff]
        %v5274 = vld [vmem:[%s7 + $0x188] sm:$0xff]
        %v5275 = vld [vmem:[%s7 + $0x190] sm:$0xff]
        %v5276 = vld [vmem:[%s7 + $0x198] sm:$0xff]
        %v5277 = vld [vmem:[%s7 + $0x1a0] sm:$0xff]
        %v5278 = vld [vmem:[%s7 + $0x1a8] sm:$0xff]
        %v5279 = vld [vmem:[%s7 + $0x1b0] sm:$0xff]
        %v5280 = vld [vmem:[%s7 + $0x1b8] sm:$0xff]
        %v5281 = vld [vmem:[%s7 + $0x1c0] sm:$0xff]
        %v5282 = vld [vmem:[%s7 + $0x1c8] sm:$0xff]
        %v5283 = vld [vmem:[%s7 + $0x1d0] sm:$0xff]
        %v5284 = vld [vmem:[%s7 + $0x1d8] sm:$0xff]
        %v5285 = vld [vmem:[%s7 + $0x1e0] sm:$0xff]
        %v5286 = vld [vmem:[%s7 + $0x1e8] sm:$0xff]
        %v5287 = vld [vmem:[%s7 + $0x1f0] sm:$0xff]
        %v5288 = vld [vmem:[%s7 + $0x1f8] sm:$0xff]
        %v5289 = vld [vmem:[%s7 + $0x200] sm:$0xff]
        %v5290 = vld [vmem:[%s7 + $0x208] sm:$0xff]
        %v5291 = vld [vmem:[%s7 + $0x210] sm:$0xff]
        %v5292 = vld [vmem:[%s7 + $0x218] sm:$0xff]
        %v5293 = vld [vmem:[%s7 + $0x220] sm:$0xff]
        %v5294 = vld [vmem:[%s7 + $0x228] sm:$0xff]
        %v5295 = vld [vmem:[%s7 + $0x230] sm:$0xff]
        %v5296 = vld [vmem:[%s7 + $0x238] sm:$0xff]
        %v5297 = vld [vmem:[%s7 + $0x240] sm:$0xff]
        %v5298 = vld [vmem:[%s7 + $0x248] sm:$0xff]
        %v5299 = vld [vmem:[%s7 + $0x250] sm:$0xff]
        %v5300 = vld [vmem:[%s7 + $0x258] sm:$0xff]
        %v5301 = vld [vmem:[%s7 + $0x260] sm:$0xff]
        %v5302 = vld [vmem:[%s7 + $0x268] sm:$0xff]
        %v5303 = vld [vmem:[%s7 + $0x270] sm:$0xff]
        %v5304 = vld [vmem:[%s7 + $0x278] sm:$0xff]
        %v5305 = vld [vmem:[%s7 + $0x280] sm:$0xff]
        %v5306 = vld [vmem:[%s7 + $0x288] sm:$0xff]
        %v5307 = vld [vmem:[%s7 + $0x290] sm:$0xff]
        %v5308 = vld [vmem:[%s7 + $0x298] sm:$0xff]
        %v5309 = vld [vmem:[%s7 + $0x2a0] sm:$0xff]
        %v5310 = vld [vmem:[%s7 + $0x2a8] sm:$0xff]
        %v5311 = vld [vmem:[%s7 + $0x2b0] sm:$0xff]
        %v5312 = vld [vmem:[%s7 + $0x2b8] sm:$0xff]
        %v5313 = vld [vmem:[%s7 + $0x2c0] sm:$0xff]
        %v5314 = vld [vmem:[%s7 + $0x2c8] sm:$0xff]
        %v5315 = vld [vmem:[%s7 + $0x2d0] sm:$0xff]
        %v5316 = vld [vmem:[%s7 + $0x2d8] sm:$0xff]
        %v5317 = vld [vmem:[%s7 + $0x2e0] sm:$0xff]
        %v5318 = vld [vmem:[%s7 + $0x2e8] sm:$0xff]
        %v5319 = vld [vmem:[%s7 + $0x2f0] sm:$0xff]
        %v5320 = vld [vmem:[%s7 + $0x2f8] sm:$0xff]
        %v5324 = vrot.slane %v5178, 3
        %v5325 = vrot.slane %v5179, 6
        %v5326 = vrot.slane %v5179, 1
        %v5327 = vrot.slane %v5180, 4
        %v5328 = vrot.slane %v5180, 7
        %v5331 = vsel %vm5200, %v5178, %v5324
        %v5333 = vsel %vm2173, %v5331, %v5325
        %v5336 = vsel %vm2814, %v5326, %v5327
        %v5338 = vsel %vm5209, %v5336, %v5328
        %v5339 = vsel %vm5212, %v5333, %v5338
        %s5340 = scalar_lea.vmem %s7, 768
        %v5341 = vld [vmem:[%s5340] sm:$0xff]
        %v5342 = vld [vmem:[%s5340 + $0x8] sm:$0xff]
        %v5343 = vld [vmem:[%s5340 + $0x10] sm:$0xff]
        %v5344 = vld [vmem:[%s5340 + $0x18] sm:$0xff]
        %v5345 = vld [vmem:[%s5340 + $0x20] sm:$0xff]
        %v5346 = vld [vmem:[%s5340 + $0x28] sm:$0xff]
        %v5347 = vld [vmem:[%s5340 + $0x30] sm:$0xff]
        %v5348 = vld [vmem:[%s5340 + $0x38] sm:$0xff]
        %v5349 = vld [vmem:[%s5340 + $0x40] sm:$0xff]
        %v5350 = vld [vmem:[%s5340 + $0x48] sm:$0xff]
        %v5351 = vld [vmem:[%s5340 + $0x50] sm:$0xff]
        %v5352 = vld [vmem:[%s5340 + $0x58] sm:$0xff]
        %v5353 = vld [vmem:[%s5340 + $0x60] sm:$0xff]
        %v5354 = vld [vmem:[%s5340 + $0x68] sm:$0xff]
        %v5355 = vld [vmem:[%s5340 + $0x70] sm:$0xff]
        %v5356 = vld [vmem:[%s5340 + $0x78] sm:$0xff]
        %v5357 = vld [vmem:[%s5340 + $0x80] sm:$0xff]
        %v5358 = vld [vmem:[%s5340 + $0x88] sm:$0xff]
        %v5359 = vld [vmem:[%s5340 + $0x90] sm:$0xff]
        %v5360 = vld [vmem:[%s5340 + $0x98] sm:$0xff]
        %v5361 = vld [vmem:[%s5340 + $0xa0] sm:$0xff]
        %v5362 = vld [vmem:[%s5340 + $0xa8] sm:$0xff]
        %v5363 = vld [vmem:[%s5340 + $0xb0] sm:$0xff]
        %v5364 = vld [vmem:[%s5340 + $0xb8] sm:$0xff]
        %v5365 = vld [vmem:[%s5340 + $0xc0] sm:$0xff]
        %v5366 = vld [vmem:[%s5340 + $0xc8] sm:$0xff]
        %v5367 = vld [vmem:[%s5340 + $0xd0] sm:$0xff]
        %v5368 = vld [vmem:[%s5340 + $0xd8] sm:$0xff]
        %v5369 = vld [vmem:[%s5340 + $0xe0] sm:$0xff]
        %v5370 = vld [vmem:[%s5340 + $0xe8] sm:$0xff]
        %v5371 = vld [vmem:[%s5340 + $0xf0] sm:$0xff]
        %v5372 = vld [vmem:[%s5340 + $0xf8] sm:$0xff]
        %v5373 = vld [vmem:[%s5340 + $0x100] sm:$0xff]
        %v5374 = vld [vmem:[%s5340 + $0x108] sm:$0xff]
        %v5375 = vld [vmem:[%s5340 + $0x110] sm:$0xff]
        %v5376 = vld [vmem:[%s5340 + $0x118] sm:$0xff]
        %v5377 = vld [vmem:[%s5340 + $0x120] sm:$0xff]
        %v5378 = vld [vmem:[%s5340 + $0x128] sm:$0xff]
        %v5379 = vld [vmem:[%s5340 + $0x130] sm:$0xff]
        %v5380 = vld [vmem:[%s5340 + $0x138] sm:$0xff]
        %v5381 = vld [vmem:[%s5340 + $0x140] sm:$0xff]
        %v5382 = vld [vmem:[%s5340 + $0x148] sm:$0xff]
        %v5383 = vld [vmem:[%s5340 + $0x150] sm:$0xff]
        %v5384 = vld [vmem:[%s5340 + $0x158] sm:$0xff]
        %v5385 = vld [vmem:[%s5340 + $0x160] sm:$0xff]
        %v5386 = vld [vmem:[%s5340 + $0x168] sm:$0xff]
        %v5387 = vld [vmem:[%s5340 + $0x170] sm:$0xff]
        %v5388 = vld [vmem:[%s5340 + $0x178] sm:$0xff]
        %v5389 = vld [vmem:[%s5340 + $0x180] sm:$0xff]
        %v5390 = vld [vmem:[%s5340 + $0x188] sm:$0xff]
        %v5391 = vld [vmem:[%s5340 + $0x190] sm:$0xff]
        %v5392 = vld [vmem:[%s5340 + $0x198] sm:$0xff]
        %v5393 = vld [vmem:[%s5340 + $0x1a0] sm:$0xff]
        %v5394 = vld [vmem:[%s5340 + $0x1a8] sm:$0xff]
        %v5395 = vld [vmem:[%s5340 + $0x1b0] sm:$0xff]
        %v5396 = vld [vmem:[%s5340 + $0x1b8] sm:$0xff]
        %v5397 = vld [vmem:[%s5340 + $0x1c0] sm:$0xff]
        %v5398 = vld [vmem:[%s5340 + $0x1c8] sm:$0xff]
        %v5399 = vld [vmem:[%s5340 + $0x1d0] sm:$0xff]
        %v5400 = vld [vmem:[%s5340 + $0x1d8] sm:$0xff]
        %v5401 = vld [vmem:[%s5340 + $0x1e0] sm:$0xff]
        %v5402 = vld [vmem:[%s5340 + $0x1e8] sm:$0xff]
        %v5403 = vld [vmem:[%s5340 + $0x1f0] sm:$0xff]
        %v5404 = vld [vmem:[%s5340 + $0x1f8] sm:$0xff]
        %v5405 = vld [vmem:[%s5340 + $0x200] sm:$0xff]
        %v5406 = vld [vmem:[%s5340 + $0x208] sm:$0xff]
        %v5407 = vld [vmem:[%s5340 + $0x210] sm:$0xff]
        %v5408 = vld [vmem:[%s5340 + $0x218] sm:$0xff]
        %v5409 = vld [vmem:[%s5340 + $0x220] sm:$0xff]
        %v5410 = vld [vmem:[%s5340 + $0x228] sm:$0xff]
        %v5411 = vld [vmem:[%s5340 + $0x230] sm:$0xff]
        %v5412 = vld [vmem:[%s5340 + $0x238] sm:$0xff]
        %v5413 = vld [vmem:[%s5340 + $0x240] sm:$0xff]
        %v5414 = vld [vmem:[%s5340 + $0x248] sm:$0xff]
        %v5415 = vld [vmem:[%s5340 + $0x250] sm:$0xff]
        %v5416 = vld [vmem:[%s5340 + $0x258] sm:$0xff]
        %v5417 = vld [vmem:[%s5340 + $0x260] sm:$0xff]
        %v5418 = vld [vmem:[%s5340 + $0x268] sm:$0xff]
        %v5419 = vld [vmem:[%s5340 + $0x270] sm:$0xff]
        %v5420 = vld [vmem:[%s5340 + $0x278] sm:$0xff]
        %v5421 = vld [vmem:[%s5340 + $0x280] sm:$0xff]
        %v5422 = vld [vmem:[%s5340 + $0x288] sm:$0xff]
        %v5423 = vld [vmem:[%s5340 + $0x290] sm:$0xff]
        %v5424 = vld [vmem:[%s5340 + $0x298] sm:$0xff]
        %v5425 = vld [vmem:[%s5340 + $0x2a0] sm:$0xff]
        %v5426 = vld [vmem:[%s5340 + $0x2a8] sm:$0xff]
        %v5427 = vld [vmem:[%s5340 + $0x2b0] sm:$0xff]
        %v5428 = vld [vmem:[%s5340 + $0x2b8] sm:$0xff]
        %v5429 = vld [vmem:[%s5340 + $0x2c0] sm:$0xff]
        %v5430 = vld [vmem:[%s5340 + $0x2c8] sm:$0xff]
        %v5431 = vld [vmem:[%s5340 + $0x2d0] sm:$0xff]
        %v5432 = vld [vmem:[%s5340 + $0x2d8] sm:$0xff]
        %v5433 = vld [vmem:[%s5340 + $0x2e0] sm:$0xff]
        %v5434 = vld [vmem:[%s5340 + $0x2e8] sm:$0xff]
        %v5435 = vld [vmem:[%s5340 + $0x2f0] sm:$0xff]
        %v5436 = vld [vmem:[%s5340 + $0x2f8] sm:$0xff]
        %5437 = vst [vmem:[#allocation1] ss:$9 sm:$0xff] %v5224
        %s5438 = scalar_lea.vmem [#allocation1], 1
        %5439 = vst [vmem:[%s5438] ss:$9 sm:$0xff] %v5339
        %v5440 = vld [vmem:[#allocation1] sm:$0xff]
        %v5441 = vld [vmem:[#allocation1 + $0x9] sm:$0xff]
        %v5442 = vld [vmem:[#allocation1 + $0x12] sm:$0xff]
        %v5443 = vld [vmem:[#allocation1 + $0x1b] sm:$0xff]
        %v5444 = vld [vmem:[#allocation1 + $0x24] sm:$0xff]
        %v5445 = vld [vmem:[#allocation1 + $0x2d] sm:$0xff]
        %v5548 = vunpack.c.l.b16 %v5341
        %v5549 = vunpack.c.h.b16 %v5341
        %v5550 = vunpack.c.l.b16 %v5342
        %v5551 = vunpack.c.h.b16 %v5342
        %v5552 = vunpack.c.l.b16 %v5343
        %v5553 = vunpack.c.h.b16 %v5343
        %v5554 = vunpack.c.l.b16 %v5344
        %v5555 = vunpack.c.h.b16 %v5344
        %v5556 = vunpack.c.l.b16 %v5345
        %v5557 = vunpack.c.h.b16 %v5345
        %v5558 = vunpack.c.l.b16 %v5346
        %v5559 = vunpack.c.h.b16 %v5346
        %v5560 = vunpack.c.l.b16 %v5347
        %v5561 = vunpack.c.h.b16 %v5347
        %v5562 = vunpack.c.l.b16 %v5348
        %v5563 = vunpack.c.h.b16 %v5348
        %v5564 = vunpack.c.l.b16 %v5349
        %v5565 = vunpack.c.h.b16 %v5349
        %v5566 = vunpack.c.l.b16 %v5350
        %v5567 = vunpack.c.h.b16 %v5350
        %v5568 = vunpack.c.l.b16 %v5351
        %v5569 = vunpack.c.h.b16 %v5351
        %v5570 = vunpack.c.l.b16 %v5352
        %v5571 = vunpack.c.h.b16 %v5352
        %v5572 = vunpack.c.l.b16 %v5353
        %v5573 = vunpack.c.h.b16 %v5353
        %v5574 = vunpack.c.l.b16 %v5354
        %v5575 = vunpack.c.h.b16 %v5354
        %v5576 = vunpack.c.l.b16 %v5355
        %v5577 = vunpack.c.h.b16 %v5355
        %v5578 = vunpack.c.l.b16 %v5356
        %v5579 = vunpack.c.h.b16 %v5356
        %v5580 = vunpack.c.l.b16 %v5357
        %v5581 = vunpack.c.h.b16 %v5357
        %v5582 = vunpack.c.l.b16 %v5358
        %v5583 = vunpack.c.h.b16 %v5358
        %v5584 = vunpack.c.l.b16 %v5359
        %v5585 = vunpack.c.h.b16 %v5359
        %v5586 = vunpack.c.l.b16 %v5360
        %v5587 = vunpack.c.h.b16 %v5360
        %v5588 = vunpack.c.l.b16 %v5361
        %v5589 = vunpack.c.h.b16 %v5361
        %v5590 = vunpack.c.l.b16 %v5362
        %v5591 = vunpack.c.h.b16 %v5362
        %v5592 = vunpack.c.l.b16 %v5363
        %v5593 = vunpack.c.h.b16 %v5363
        %v5594 = vunpack.c.l.b16 %v5364
        %v5595 = vunpack.c.h.b16 %v5364
        %v5596 = vunpack.c.l.b16 %v5365
        %v5597 = vunpack.c.h.b16 %v5365
        %v5598 = vunpack.c.l.b16 %v5366
        %v5599 = vunpack.c.h.b16 %v5366
        %v5600 = vunpack.c.l.b16 %v5367
        %v5601 = vunpack.c.h.b16 %v5367
        %v5602 = vunpack.c.l.b16 %v5368
        %v5603 = vunpack.c.h.b16 %v5368
        %v5604 = vunpack.c.l.b16 %v5369
        %v5605 = vunpack.c.h.b16 %v5369
        %v5606 = vunpack.c.l.b16 %v5370
        %v5607 = vunpack.c.h.b16 %v5370
        %v5608 = vunpack.c.l.b16 %v5371
        %v5609 = vunpack.c.h.b16 %v5371
        %v5610 = vunpack.c.l.b16 %v5372
        %v5611 = vunpack.c.h.b16 %v5372
        %v5612 = vunpack.c.l.b16 %v5373
        %v5613 = vunpack.c.h.b16 %v5373
        %v5614 = vunpack.c.l.b16 %v5374
        %v5615 = vunpack.c.h.b16 %v5374
        %v5616 = vunpack.c.l.b16 %v5375
        %v5617 = vunpack.c.h.b16 %v5375
        %v5618 = vunpack.c.l.b16 %v5376
        %v5619 = vunpack.c.h.b16 %v5376
        %v5620 = vunpack.c.l.b16 %v5377
        %v5621 = vunpack.c.h.b16 %v5377
        %v5622 = vunpack.c.l.b16 %v5378
        %v5623 = vunpack.c.h.b16 %v5378
        %v5624 = vunpack.c.l.b16 %v5379
        %v5625 = vunpack.c.h.b16 %v5379
        %v5626 = vunpack.c.l.b16 %v5380
        %v5627 = vunpack.c.h.b16 %v5380
        %v5628 = vunpack.c.l.b16 %v5381
        %v5629 = vunpack.c.h.b16 %v5381
        %v5630 = vunpack.c.l.b16 %v5382
        %v5631 = vunpack.c.h.b16 %v5382
        %v5632 = vunpack.c.l.b16 %v5383
        %v5633 = vunpack.c.h.b16 %v5383
        %v5634 = vunpack.c.l.b16 %v5384
        %v5635 = vunpack.c.h.b16 %v5384
        %v5636 = vunpack.c.l.b16 %v5385
        %v5637 = vunpack.c.h.b16 %v5385
        %v5638 = vunpack.c.l.b16 %v5386
        %v5639 = vunpack.c.h.b16 %v5386
        %v5640 = vunpack.c.l.b16 %v5387
        %v5641 = vunpack.c.h.b16 %v5387
        %v5642 = vunpack.c.l.b16 %v5388
        %v5643 = vunpack.c.h.b16 %v5388
        %v5644 = vunpack.c.l.b16 %v5389
        %v5645 = vunpack.c.h.b16 %v5389
        %v5646 = vunpack.c.l.b16 %v5390
        %v5647 = vunpack.c.h.b16 %v5390
        %v5648 = vunpack.c.l.b16 %v5391
        %v5649 = vunpack.c.h.b16 %v5391
        %v5650 = vunpack.c.l.b16 %v5392
        %v5651 = vunpack.c.h.b16 %v5392
        %v5652 = vunpack.c.l.b16 %v5393
        %v5653 = vunpack.c.h.b16 %v5393
        %v5654 = vunpack.c.l.b16 %v5394
        %v5655 = vunpack.c.h.b16 %v5394
        %v5656 = vunpack.c.l.b16 %v5395
        %v5657 = vunpack.c.h.b16 %v5395
        %v5658 = vunpack.c.l.b16 %v5396
        %v5659 = vunpack.c.h.b16 %v5396
        %v5660 = vunpack.c.l.b16 %v5397
        %v5661 = vunpack.c.h.b16 %v5397
        %v5662 = vunpack.c.l.b16 %v5398
        %v5663 = vunpack.c.h.b16 %v5398
        %v5664 = vunpack.c.l.b16 %v5399
        %v5665 = vunpack.c.h.b16 %v5399
        %v5666 = vunpack.c.l.b16 %v5400
        %v5667 = vunpack.c.h.b16 %v5400
        %v5668 = vunpack.c.l.b16 %v5401
        %v5669 = vunpack.c.h.b16 %v5401
        %v5670 = vunpack.c.l.b16 %v5402
        %v5671 = vunpack.c.h.b16 %v5402
        %v5672 = vunpack.c.l.b16 %v5403
        %v5673 = vunpack.c.h.b16 %v5403
        %v5674 = vunpack.c.l.b16 %v5404
        %v5675 = vunpack.c.h.b16 %v5404
        %v5676 = vunpack.c.l.b16 %v5405
        %v5677 = vunpack.c.h.b16 %v5405
        %v5678 = vunpack.c.l.b16 %v5406
        %v5679 = vunpack.c.h.b16 %v5406
        %v5680 = vunpack.c.l.b16 %v5407
        %v5681 = vunpack.c.h.b16 %v5407
        %v5682 = vunpack.c.l.b16 %v5408
        %v5683 = vunpack.c.h.b16 %v5408
        %v5684 = vunpack.c.l.b16 %v5409
        %v5685 = vunpack.c.h.b16 %v5409
        %v5686 = vunpack.c.l.b16 %v5410
        %v5687 = vunpack.c.h.b16 %v5410
        %v5688 = vunpack.c.l.b16 %v5411
        %v5689 = vunpack.c.h.b16 %v5411
        %v5690 = vunpack.c.l.b16 %v5412
        %v5691 = vunpack.c.h.b16 %v5412
        %v5692 = vunpack.c.l.b16 %v5413
        %v5693 = vunpack.c.h.b16 %v5413
        %v5694 = vunpack.c.l.b16 %v5414
        %v5695 = vunpack.c.h.b16 %v5414
        %v5696 = vunpack.c.l.b16 %v5415
        %v5697 = vunpack.c.h.b16 %v5415
        %v5698 = vunpack.c.l.b16 %v5416
        %v5699 = vunpack.c.h.b16 %v5416
        %v5700 = vunpack.c.l.b16 %v5417
        %v5701 = vunpack.c.h.b16 %v5417
        %v5702 = vunpack.c.l.b16 %v5418
        %v5703 = vunpack.c.h.b16 %v5418
        %v5704 = vunpack.c.l.b16 %v5419
        %v5705 = vunpack.c.h.b16 %v5419
        %v5706 = vunpack.c.l.b16 %v5420
        %v5707 = vunpack.c.h.b16 %v5420
        %v5708 = vunpack.c.l.b16 %v5421
        %v5709 = vunpack.c.h.b16 %v5421
        %v5710 = vunpack.c.l.b16 %v5422
        %v5711 = vunpack.c.h.b16 %v5422
        %v5712 = vunpack.c.l.b16 %v5423
        %v5713 = vunpack.c.h.b16 %v5423
        %v5714 = vunpack.c.l.b16 %v5424
        %v5715 = vunpack.c.h.b16 %v5424
        %v5716 = vunpack.c.l.b16 %v5425
        %v5717 = vunpack.c.h.b16 %v5425
        %v5718 = vunpack.c.l.b16 %v5426
        %v5719 = vunpack.c.h.b16 %v5426
        %v5720 = vunpack.c.l.b16 %v5427
        %v5721 = vunpack.c.h.b16 %v5427
        %v5722 = vunpack.c.l.b16 %v5428
        %v5723 = vunpack.c.h.b16 %v5428
        %v5724 = vunpack.c.l.b16 %v5429
        %v5725 = vunpack.c.h.b16 %v5429
        %v5726 = vunpack.c.l.b16 %v5430
        %v5727 = vunpack.c.h.b16 %v5430
        %v5728 = vunpack.c.l.b16 %v5431
        %v5729 = vunpack.c.h.b16 %v5431
        %v5730 = vunpack.c.l.b16 %v5432
        %v5731 = vunpack.c.h.b16 %v5432
        %v5732 = vunpack.c.l.b16 %v5433
        %v5733 = vunpack.c.h.b16 %v5433
        %v5734 = vunpack.c.l.b16 %v5434
        %v5735 = vunpack.c.h.b16 %v5434
        %v5736 = vunpack.c.l.b16 %v5435
        %v5737 = vunpack.c.h.b16 %v5435
        %v5738 = vunpack.c.l.b16 %v5436
        %v5739 = vunpack.c.h.b16 %v5436
        %v5740 = vpack.c.b16 %v5550, %v5548
        %v5741 = vpack.c.b16 %v5551, %v5549
        %v5742 = vpack.c.b16 %v5554, %v5552
        %v5743 = vpack.c.b16 %v5555, %v5553
        %v5744 = vpack.c.b16 %v5558, %v5556
        %v5745 = vpack.c.b16 %v5559, %v5557
        %v5746 = vpack.c.b16 %v5562, %v5560
        %v5747 = vpack.c.b16 %v5563, %v5561
        %v5748 = vpack.c.b16 %v5566, %v5564
        %v5749 = vpack.c.b16 %v5567, %v5565
        %v5750 = vpack.c.b16 %v5570, %v5568
        %v5751 = vpack.c.b16 %v5571, %v5569
        %v5752 = vpack.c.b16 %v5574, %v5572
        %v5753 = vpack.c.b16 %v5575, %v5573
        %v5754 = vpack.c.b16 %v5578, %v5576
        %v5755 = vpack.c.b16 %v5579, %v5577
        %v5756 = vpack.c.b16 %v5582, %v5580
        %v5757 = vpack.c.b16 %v5583, %v5581
        %v5758 = vpack.c.b16 %v5586, %v5584
        %v5759 = vpack.c.b16 %v5587, %v5585
        %v5760 = vpack.c.b16 %v5590, %v5588
        %v5761 = vpack.c.b16 %v5591, %v5589
        %v5762 = vpack.c.b16 %v5594, %v5592
        %v5763 = vpack.c.b16 %v5595, %v5593
        %v5764 = vpack.c.b16 %v5598, %v5596
        %v5765 = vpack.c.b16 %v5599, %v5597
        %v5766 = vpack.c.b16 %v5602, %v5600
        %v5767 = vpack.c.b16 %v5603, %v5601
        %v5768 = vpack.c.b16 %v5606, %v5604
        %v5769 = vpack.c.b16 %v5607, %v5605
        %v5770 = vpack.c.b16 %v5610, %v5608
        %v5771 = vpack.c.b16 %v5611, %v5609
        %v5772 = vpack.c.b16 %v5614, %v5612
        %v5773 = vpack.c.b16 %v5615, %v5613
        %v5774 = vpack.c.b16 %v5618, %v5616
        %v5775 = vpack.c.b16 %v5619, %v5617
        %v5776 = vpack.c.b16 %v5622, %v5620
        %v5777 = vpack.c.b16 %v5623, %v5621
        %v5778 = vpack.c.b16 %v5626, %v5624
        %v5779 = vpack.c.b16 %v5627, %v5625
        %v5780 = vpack.c.b16 %v5630, %v5628
        %v5781 = vpack.c.b16 %v5631, %v5629
        %v5782 = vpack.c.b16 %v5634, %v5632
        %v5783 = vpack.c.b16 %v5635, %v5633
        %v5784 = vpack.c.b16 %v5638, %v5636
        %v5785 = vpack.c.b16 %v5639, %v5637
        %v5786 = vpack.c.b16 %v5642, %v5640
        %v5787 = vpack.c.b16 %v5643, %v5641
        %v5788 = vpack.c.b16 %v5646, %v5644
        %v5789 = vpack.c.b16 %v5647, %v5645
        %v5790 = vpack.c.b16 %v5650, %v5648
        %v5791 = vpack.c.b16 %v5651, %v5649
        %v5792 = vpack.c.b16 %v5654, %v5652
        %v5793 = vpack.c.b16 %v5655, %v5653
        %v5794 = vpack.c.b16 %v5658, %v5656
        %v5795 = vpack.c.b16 %v5659, %v5657
        %v5796 = vpack.c.b16 %v5662, %v5660
        %v5797 = vpack.c.b16 %v5663, %v5661
        %v5798 = vpack.c.b16 %v5666, %v5664
        %v5799 = vpack.c.b16 %v5667, %v5665
        %v5800 = vpack.c.b16 %v5670, %v5668
        %v5801 = vpack.c.b16 %v5671, %v5669
        %v5802 = vpack.c.b16 %v5674, %v5672
        %v5803 = vpack.c.b16 %v5675, %v5673
        %v5804 = vpack.c.b16 %v5678, %v5676
        %v5805 = vpack.c.b16 %v5679, %v5677
        %v5806 = vpack.c.b16 %v5682, %v5680
        %v5807 = vpack.c.b16 %v5683, %v5681
        %v5808 = vpack.c.b16 %v5686, %v5684
        %v5809 = vpack.c.b16 %v5687, %v5685
        %v5810 = vpack.c.b16 %v5690, %v5688
        %v5811 = vpack.c.b16 %v5691, %v5689
        %v5812 = vpack.c.b16 %v5694, %v5692
        %v5813 = vpack.c.b16 %v5695, %v5693
        %v5814 = vpack.c.b16 %v5698, %v5696
        %v5815 = vpack.c.b16 %v5699, %v5697
        %v5816 = vpack.c.b16 %v5702, %v5700
        %v5817 = vpack.c.b16 %v5703, %v5701
        %v5818 = vpack.c.b16 %v5706, %v5704
        %v5819 = vpack.c.b16 %v5707, %v5705
        %v5820 = vpack.c.b16 %v5710, %v5708
        %v5821 = vpack.c.b16 %v5711, %v5709
        %v5822 = vpack.c.b16 %v5714, %v5712
        %v5823 = vpack.c.b16 %v5715, %v5713
        %v5824 = vpack.c.b16 %v5718, %v5716
        %v5825 = vpack.c.b16 %v5719, %v5717
        %v5826 = vpack.c.b16 %v5722, %v5720
        %v5827 = vpack.c.b16 %v5723, %v5721
        %v5828 = vpack.c.b16 %v5726, %v5724
        %v5829 = vpack.c.b16 %v5727, %v5725
        %v5830 = vpack.c.b16 %v5730, %v5728
        %v5831 = vpack.c.b16 %v5731, %v5729
        %v5832 = vpack.c.b16 %v5734, %v5732
        %v5833 = vpack.c.b16 %v5735, %v5733
        %v5834 = vpack.c.b16 %v5738, %v5736
        %v5835 = vpack.c.b16 %v5739, %v5737
        %5932 = vmatpush.bf16.msra.mxu0 %v5754
        %5933 = vmatpush.bf16.msra.mxu0 %v5752
        %5934 = vmatpush.bf16.msra.mxu0 %v5750
        %5935 = vmatpush.bf16.msra.mxu0 %v5748
        %5936 = vmatpush.bf16.msra.mxu0 %v5746
        %5937 = vmatpush.bf16.msra.mxu0 %v5744
        %5938 = vmatpush.bf16.msra.mxu0 %v5742
        %5939 = vmatpush.bf16.msra.mxu0 %v5740
        %5940 = vmatmul.bf16.gmra.mxu0 %v5440
        %v5941 = vpop.f32.mrf.mxu0
        %v5942 = vadd.f32 0.0, %v5941
        %v5943 = vpop.f32.mrf.mxu0
        %5944 = vdwg.mxu0
        %5945 = vmatpush.bf16.msra.mxu0 %v5770
        %5946 = vmatpush.bf16.msra.mxu0 %v5768
        %5947 = vmatpush.bf16.msra.mxu0 %v5766
        %5948 = vmatpush.bf16.msra.mxu0 %v5764
        %5949 = vmatpush.bf16.msra.mxu0 %v5762
        %5950 = vmatpush.bf16.msra.mxu0 %v5760
        %5951 = vmatpush.bf16.msra.mxu0 %v5758
        %5952 = vmatpush.bf16.msra.mxu0 %v5756
        %5953 = vmatmul.bf16.gmra.mxu0 %v5441
        %v5954 = vpop.f32.mrf.mxu0
        %v5955 = vadd.f32 %v5942, %v5954
        %v5956 = vpop.f32.mrf.mxu0
        %5957 = vdwg.mxu0
        %5958 = vmatpush.bf16.msra.mxu0 %v5786
        %5959 = vmatpush.bf16.msra.mxu0 %v5784
        %5960 = vmatpush.bf16.msra.mxu0 %v5782
        %5961 = vmatpush.bf16.msra.mxu0 %v5780
        %5962 = vmatpush.bf16.msra.mxu0 %v5778
        %5963 = vmatpush.bf16.msra.mxu0 %v5776
        %5964 = vmatpush.bf16.msra.mxu0 %v5774
        %5965 = vmatpush.bf16.msra.mxu0 %v5772
        %5966 = vmatmul.bf16.gmra.mxu0 %v5442
        %v5967 = vpop.f32.mrf.mxu0
        %v5968 = vadd.f32 %v5955, %v5967
        %v5969 = vpop.f32.mrf.mxu0
        %5970 = vdwg.mxu0
        %5971 = vmatpush.bf16.msra.mxu0 %v5802
        %5972 = vmatpush.bf16.msra.mxu0 %v5800
        %5973 = vmatpush.bf16.msra.mxu0 %v5798
        %5974 = vmatpush.bf16.msra.mxu0 %v5796
        %5975 = vmatpush.bf16.msra.mxu0 %v5794
        %5976 = vmatpush.bf16.msra.mxu0 %v5792
        %5977 = vmatpush.bf16.msra.mxu0 %v5790
        %5978 = vmatpush.bf16.msra.mxu0 %v5788
        %5979 = vmatmul.bf16.gmra.mxu0 %v5443
        %v5980 = vpop.f32.mrf.mxu0
        %v5981 = vadd.f32 %v5968, %v5980
        %v5982 = vpop.f32.mrf.mxu0
        %5983 = vdwg.mxu0
        %5984 = vmatpush.bf16.msra.mxu0 %v5818
        %5985 = vmatpush.bf16.msra.mxu0 %v5816
        %5986 = vmatpush.bf16.msra.mxu0 %v5814
        %5987 = vmatpush.bf16.msra.mxu0 %v5812
        %5988 = vmatpush.bf16.msra.mxu0 %v5810
        %5989 = vmatpush.bf16.msra.mxu0 %v5808
        %5990 = vmatpush.bf16.msra.mxu0 %v5806
        %5991 = vmatpush.bf16.msra.mxu0 %v5804
        %5992 = vmatmul.bf16.gmra.mxu0 %v5444
        %v5993 = vpop.f32.mrf.mxu0
        %v5994 = vadd.f32 %v5981, %v5993
        %v5995 = vpop.f32.mrf.mxu0
        %5996 = vdwg.mxu0
        %5997 = vmatpush.bf16.msra.mxu0 %v5834
        %5998 = vmatpush.bf16.msra.mxu0 %v5832
        %5999 = vmatpush.bf16.msra.mxu0 %v5830
        %6000 = vmatpush.bf16.msra.mxu0 %v5828
        %6001 = vmatpush.bf16.msra.mxu0 %v5826
        %6002 = vmatpush.bf16.msra.mxu0 %v5824
        %6003 = vmatpush.bf16.msra.mxu0 %v5822
        %6004 = vmatpush.bf16.msra.mxu0 %v5820
        %6005 = vmatmul.bf16.gmra.mxu0 %v5445
        %v6006 = vpop.f32.mrf.mxu0
        %v6007 = vadd.f32 %v5994, %v6006
        %v6008 = vpop.f32.mrf.mxu0
        %6009 = vdwg.mxu0
        %6010 = vmatpush.bf16.msra.mxu0 %v5755
        %6011 = vmatpush.bf16.msra.mxu0 %v5753
        %6012 = vmatpush.bf16.msra.mxu0 %v5751
        %6013 = vmatpush.bf16.msra.mxu0 %v5749
        %6014 = vmatpush.bf16.msra.mxu0 %v5747
        %6015 = vmatpush.bf16.msra.mxu0 %v5745
        %6016 = vmatpush.bf16.msra.mxu0 %v5743
        %6017 = vmatpush.bf16.msra.mxu0 %v5741
        %6018 = vmatmul.bf16.gmra.mxu0 %v5440
        %v6019 = vpop.f32.mrf.mxu0
        %v6020 = vadd.f32 0.0, %v6019
        %v6021 = vpop.f32.mrf.mxu0
        %6022 = vdwg.mxu0
        %6023 = vmatpush.bf16.msra.mxu0 %v5771
        %6024 = vmatpush.bf16.msra.mxu0 %v5769
        %6025 = vmatpush.bf16.msra.mxu0 %v5767
        %6026 = vmatpush.bf16.msra.mxu0 %v5765
        %6027 = vmatpush.bf16.msra.mxu0 %v5763
        %6028 = vmatpush.bf16.msra.mxu0 %v5761
        %6029 = vmatpush.bf16.msra.mxu0 %v5759
        %6030 = vmatpush.bf16.msra.mxu0 %v5757
        %6031 = vmatmul.bf16.gmra.mxu0 %v5441
        %v6032 = vpop.f32.mrf.mxu0
        %v6033 = vadd.f32 %v6020, %v6032
        %v6034 = vpop.f32.mrf.mxu0
        %6035 = vdwg.mxu0
        %6036 = vmatpush.bf16.msra.mxu0 %v5787
        %6037 = vmatpush.bf16.msra.mxu0 %v5785
        %6038 = vmatpush.bf16.msra.mxu0 %v5783
        %6039 = vmatpush.bf16.msra.mxu0 %v5781
        %6040 = vmatpush.bf16.msra.mxu0 %v5779
        %6041 = vmatpush.bf16.msra.mxu0 %v5777
        %6042 = vmatpush.bf16.msra.mxu0 %v5775
        %6043 = vmatpush.bf16.msra.mxu0 %v5773
        %6044 = vmatmul.bf16.gmra.mxu0 %v5442
        %v6045 = vpop.f32.mrf.mxu0
        %v6046 = vadd.f32 %v6033, %v6045
        %v6047 = vpop.f32.mrf.mxu0
        %6048 = vdwg.mxu0
        %6049 = vmatpush.bf16.msra.mxu0 %v5803
        %6050 = vmatpush.bf16.msra.mxu0 %v5801
        %6051 = vmatpush.bf16.msra.mxu0 %v5799
        %6052 = vmatpush.bf16.msra.mxu0 %v5797
        %6053 = vmatpush.bf16.msra.mxu0 %v5795
        %6054 = vmatpush.bf16.msra.mxu0 %v5793
        %6055 = vmatpush.bf16.msra.mxu0 %v5791
        %6056 = vmatpush.bf16.msra.mxu0 %v5789
        %6057 = vmatmul.bf16.gmra.mxu0 %v5443
        %v6058 = vpop.f32.mrf.mxu0
        %v6059 = vadd.f32 %v6046, %v6058
        %v6060 = vpop.f32.mrf.mxu0
        %6061 = vdwg.mxu0
        %6062 = vmatpush.bf16.msra.mxu0 %v5819
        %6063 = vmatpush.bf16.msra.mxu0 %v5817
        %6064 = vmatpush.bf16.msra.mxu0 %v5815
        %6065 = vmatpush.bf16.msra.mxu0 %v5813
        %6066 = vmatpush.bf16.msra.mxu0 %v5811
        %6067 = vmatpush.bf16.msra.mxu0 %v5809
        %6068 = vmatpush.bf16.msra.mxu0 %v5807
        %6069 = vmatpush.bf16.msra.mxu0 %v5805
        %6070 = vmatmul.bf16.gmra.mxu0 %v5444
        %v6071 = vpop.f32.mrf.mxu0
        %v6072 = vadd.f32 %v6059, %v6071
        %v6073 = vpop.f32.mrf.mxu0
        %6074 = vdwg.mxu0
        %6075 = vmatpush.bf16.msra.mxu0 %v5835
        %6076 = vmatpush.bf16.msra.mxu0 %v5833
        %6077 = vmatpush.bf16.msra.mxu0 %v5831
        %6078 = vmatpush.bf16.msra.mxu0 %v5829
        %6079 = vmatpush.bf16.msra.mxu0 %v5827
        %6080 = vmatpush.bf16.msra.mxu0 %v5825
        %6081 = vmatpush.bf16.msra.mxu0 %v5823
        %6082 = vmatpush.bf16.msra.mxu0 %v5821
        %6083 = vmatmul.bf16.gmra.mxu0 %v5445
        %v6084 = vpop.f32.mrf.mxu0
        %v6085 = vadd.f32 %v6072, %v6084
        %v6086 = vpop.f32.mrf.mxu0
        %6087 = vdwg.mxu0
        %6088 = vst [vmem:[#allocation1] ss:$9 sm:$0xff] %v5213
        %s6089 = scalar_lea.vmem [#allocation1], 1
        %6090 = vst [vmem:[%s6089] ss:$9 sm:$0xff] %v5224
        %v6091 = vld [vmem:[#allocation1] sm:$0xff]
        %v6092 = vld [vmem:[#allocation1 + $0x9] sm:$0xff]
        %v6093 = vld [vmem:[#allocation1 + $0x12] sm:$0xff]
        %v6094 = vld [vmem:[#allocation1 + $0x1b] sm:$0xff]
        %v6095 = vld [vmem:[#allocation1 + $0x24] sm:$0xff]
        %v6096 = vld [vmem:[#allocation1 + $0x2d] sm:$0xff]
        %v6199 = vunpack.c.l.b16 %v5225
        %v6200 = vunpack.c.h.b16 %v5225
        %v6201 = vunpack.c.l.b16 %v5226
        %v6202 = vunpack.c.h.b16 %v5226
        %v6203 = vunpack.c.l.b16 %v5227
        %v6204 = vunpack.c.h.b16 %v5227
        %v6205 = vunpack.c.l.b16 %v5228
        %v6206 = vunpack.c.h.b16 %v5228
        %v6207 = vunpack.c.l.b16 %v5229
        %v6208 = vunpack.c.h.b16 %v5229
        %v6209 = vunpack.c.l.b16 %v5230
        %v6210 = vunpack.c.h.b16 %v5230
        %v6211 = vunpack.c.l.b16 %v5231
        %v6212 = vunpack.c.h.b16 %v5231
        %v6213 = vunpack.c.l.b16 %v5232
        %v6214 = vunpack.c.h.b16 %v5232
        %v6215 = vunpack.c.l.b16 %v5233
        %v6216 = vunpack.c.h.b16 %v5233
        %v6217 = vunpack.c.l.b16 %v5234
        %v6218 = vunpack.c.h.b16 %v5234
        %v6219 = vunpack.c.l.b16 %v5235
        %v6220 = vunpack.c.h.b16 %v5235
        %v6221 = vunpack.c.l.b16 %v5236
        %v6222 = vunpack.c.h.b16 %v5236
        %v6223 = vunpack.c.l.b16 %v5237
        %v6224 = vunpack.c.h.b16 %v5237
        %v6225 = vunpack.c.l.b16 %v5238
        %v6226 = vunpack.c.h.b16 %v5238
        %v6227 = vunpack.c.l.b16 %v5239
        %v6228 = vunpack.c.h.b16 %v5239
        %v6229 = vunpack.c.l.b16 %v5240
        %v6230 = vunpack.c.h.b16 %v5240
        %v6231 = vunpack.c.l.b16 %v5241
        %v6232 = vunpack.c.h.b16 %v5241
        %v6233 = vunpack.c.l.b16 %v5242
        %v6234 = vunpack.c.h.b16 %v5242
        %v6235 = vunpack.c.l.b16 %v5243
        %v6236 = vunpack.c.h.b16 %v5243
        %v6237 = vunpack.c.l.b16 %v5244
        %v6238 = vunpack.c.h.b16 %v5244
        %v6239 = vunpack.c.l.b16 %v5245
        %v6240 = vunpack.c.h.b16 %v5245
        %v6241 = vunpack.c.l.b16 %v5246
        %v6242 = vunpack.c.h.b16 %v5246
        %v6243 = vunpack.c.l.b16 %v5247
        %v6244 = vunpack.c.h.b16 %v5247
        %v6245 = vunpack.c.l.b16 %v5248
        %v6246 = vunpack.c.h.b16 %v5248
        %v6247 = vunpack.c.l.b16 %v5249
        %v6248 = vunpack.c.h.b16 %v5249
        %v6249 = vunpack.c.l.b16 %v5250
        %v6250 = vunpack.c.h.b16 %v5250
        %v6251 = vunpack.c.l.b16 %v5251
        %v6252 = vunpack.c.h.b16 %v5251
        %v6253 = vunpack.c.l.b16 %v5252
        %v6254 = vunpack.c.h.b16 %v5252
        %v6255 = vunpack.c.l.b16 %v5253
        %v6256 = vunpack.c.h.b16 %v5253
        %v6257 = vunpack.c.l.b16 %v5254
        %v6258 = vunpack.c.h.b16 %v5254
        %v6259 = vunpack.c.l.b16 %v5255
        %v6260 = vunpack.c.h.b16 %v5255
        %v6261 = vunpack.c.l.b16 %v5256
        %v6262 = vunpack.c.h.b16 %v5256
        %v6263 = vunpack.c.l.b16 %v5257
        %v6264 = vunpack.c.h.b16 %v5257
        %v6265 = vunpack.c.l.b16 %v5258
        %v6266 = vunpack.c.h.b16 %v5258
        %v6267 = vunpack.c.l.b16 %v5259
        %v6268 = vunpack.c.h.b16 %v5259
        %v6269 = vunpack.c.l.b16 %v5260
        %v6270 = vunpack.c.h.b16 %v5260
        %v6271 = vunpack.c.l.b16 %v5261
        %v6272 = vunpack.c.h.b16 %v5261
        %v6273 = vunpack.c.l.b16 %v5262
        %v6274 = vunpack.c.h.b16 %v5262
        %v6275 = vunpack.c.l.b16 %v5263
        %v6276 = vunpack.c.h.b16 %v5263
        %v6277 = vunpack.c.l.b16 %v5264
        %v6278 = vunpack.c.h.b16 %v5264
        %v6279 = vunpack.c.l.b16 %v5265
        %v6280 = vunpack.c.h.b16 %v5265
        %v6281 = vunpack.c.l.b16 %v5266
        %v6282 = vunpack.c.h.b16 %v5266
        %v6283 = vunpack.c.l.b16 %v5267
        %v6284 = vunpack.c.h.b16 %v5267
        %v6285 = vunpack.c.l.b16 %v5268
        %v6286 = vunpack.c.h.b16 %v5268
        %v6287 = vunpack.c.l.b16 %v5269
        %v6288 = vunpack.c.h.b16 %v5269
        %v6289 = vunpack.c.l.b16 %v5270
        %v6290 = vunpack.c.h.b16 %v5270
        %v6291 = vunpack.c.l.b16 %v5271
        %v6292 = vunpack.c.h.b16 %v5271
        %v6293 = vunpack.c.l.b16 %v5272
        %v6294 = vunpack.c.h.b16 %v5272
        %v6295 = vunpack.c.l.b16 %v5273
        %v6296 = vunpack.c.h.b16 %v5273
        %v6297 = vunpack.c.l.b16 %v5274
        %v6298 = vunpack.c.h.b16 %v5274
        %v6299 = vunpack.c.l.b16 %v5275
        %v6300 = vunpack.c.h.b16 %v5275
        %v6301 = vunpack.c.l.b16 %v5276
        %v6302 = vunpack.c.h.b16 %v5276
        %v6303 = vunpack.c.l.b16 %v5277
        %v6304 = vunpack.c.h.b16 %v5277
        %v6305 = vunpack.c.l.b16 %v5278
        %v6306 = vunpack.c.h.b16 %v5278
        %v6307 = vunpack.c.l.b16 %v5279
        %v6308 = vunpack.c.h.b16 %v5279
        %v6309 = vunpack.c.l.b16 %v5280
        %v6310 = vunpack.c.h.b16 %v5280
        %v6311 = vunpack.c.l.b16 %v5281
        %v6312 = vunpack.c.h.b16 %v5281
        %v6313 = vunpack.c.l.b16 %v5282
        %v6314 = vunpack.c.h.b16 %v5282
        %v6315 = vunpack.c.l.b16 %v5283
        %v6316 = vunpack.c.h.b16 %v5283
        %v6317 = vunpack.c.l.b16 %v5284
        %v6318 = vunpack.c.h.b16 %v5284
        %v6319 = vunpack.c.l.b16 %v5285
        %v6320 = vunpack.c.h.b16 %v5285
        %v6321 = vunpack.c.l.b16 %v5286
        %v6322 = vunpack.c.h.b16 %v5286
        %v6323 = vunpack.c.l.b16 %v5287
        %v6324 = vunpack.c.h.b16 %v5287
        %v6325 = vunpack.c.l.b16 %v5288
        %v6326 = vunpack.c.h.b16 %v5288
        %v6327 = vunpack.c.l.b16 %v5289
        %v6328 = vunpack.c.h.b16 %v5289
        %v6329 = vunpack.c.l.b16 %v5290
        %v6330 = vunpack.c.h.b16 %v5290
        %v6331 = vunpack.c.l.b16 %v5291
        %v6332 = vunpack.c.h.b16 %v5291
        %v6333 = vunpack.c.l.b16 %v5292
        %v6334 = vunpack.c.h.b16 %v5292
        %v6335 = vunpack.c.l.b16 %v5293
        %v6336 = vunpack.c.h.b16 %v5293
        %v6337 = vunpack.c.l.b16 %v5294
        %v6338 = vunpack.c.h.b16 %v5294
        %v6339 = vunpack.c.l.b16 %v5295
        %v6340 = vunpack.c.h.b16 %v5295
        %v6341 = vunpack.c.l.b16 %v5296
        %v6342 = vunpack.c.h.b16 %v5296
        %v6343 = vunpack.c.l.b16 %v5297
        %v6344 = vunpack.c.h.b16 %v5297
        %v6345 = vunpack.c.l.b16 %v5298
        %v6346 = vunpack.c.h.b16 %v5298
        %v6347 = vunpack.c.l.b16 %v5299
        %v6348 = vunpack.c.h.b16 %v5299
        %v6349 = vunpack.c.l.b16 %v5300
        %v6350 = vunpack.c.h.b16 %v5300
        %v6351 = vunpack.c.l.b16 %v5301
        %v6352 = vunpack.c.h.b16 %v5301
        %v6353 = vunpack.c.l.b16 %v5302
        %v6354 = vunpack.c.h.b16 %v5302
        %v6355 = vunpack.c.l.b16 %v5303
        %v6356 = vunpack.c.h.b16 %v5303
        %v6357 = vunpack.c.l.b16 %v5304
        %v6358 = vunpack.c.h.b16 %v5304
        %v6359 = vunpack.c.l.b16 %v5305
        %v6360 = vunpack.c.h.b16 %v5305
        %v6361 = vunpack.c.l.b16 %v5306
        %v6362 = vunpack.c.h.b16 %v5306
        %v6363 = vunpack.c.l.b16 %v5307
        %v6364 = vunpack.c.h.b16 %v5307
        %v6365 = vunpack.c.l.b16 %v5308
        %v6366 = vunpack.c.h.b16 %v5308
        %v6367 = vunpack.c.l.b16 %v5309
        %v6368 = vunpack.c.h.b16 %v5309
        %v6369 = vunpack.c.l.b16 %v5310
        %v6370 = vunpack.c.h.b16 %v5310
        %v6371 = vunpack.c.l.b16 %v5311
        %v6372 = vunpack.c.h.b16 %v5311
        %v6373 = vunpack.c.l.b16 %v5312
        %v6374 = vunpack.c.h.b16 %v5312
        %v6375 = vunpack.c.l.b16 %v5313
        %v6376 = vunpack.c.h.b16 %v5313
        %v6377 = vunpack.c.l.b16 %v5314
        %v6378 = vunpack.c.h.b16 %v5314
        %v6379 = vunpack.c.l.b16 %v5315
        %v6380 = vunpack.c.h.b16 %v5315
        %v6381 = vunpack.c.l.b16 %v5316
        %v6382 = vunpack.c.h.b16 %v5316
        %v6383 = vunpack.c.l.b16 %v5317
        %v6384 = vunpack.c.h.b16 %v5317
        %v6385 = vunpack.c.l.b16 %v5318
        %v6386 = vunpack.c.h.b16 %v5318
        %v6387 = vunpack.c.l.b16 %v5319
        %v6388 = vunpack.c.h.b16 %v5319
        %v6389 = vunpack.c.l.b16 %v5320
        %v6390 = vunpack.c.h.b16 %v5320
        %v6391 = vpack.c.b16 %v6201, %v6199
        %v6392 = vpack.c.b16 %v6202, %v6200
        %v6393 = vpack.c.b16 %v6205, %v6203
        %v6394 = vpack.c.b16 %v6206, %v6204
        %v6395 = vpack.c.b16 %v6209, %v6207
        %v6396 = vpack.c.b16 %v6210, %v6208
        %v6397 = vpack.c.b16 %v6213, %v6211
        %v6398 = vpack.c.b16 %v6214, %v6212
        %v6399 = vpack.c.b16 %v6217, %v6215
        %v6400 = vpack.c.b16 %v6218, %v6216
        %v6401 = vpack.c.b16 %v6221, %v6219
        %v6402 = vpack.c.b16 %v6222, %v6220
        %v6403 = vpack.c.b16 %v6225, %v6223
        %v6404 = vpack.c.b16 %v6226, %v6224
        %v6405 = vpack.c.b16 %v6229, %v6227
        %v6406 = vpack.c.b16 %v6230, %v6228
        %v6407 = vpack.c.b16 %v6233, %v6231
        %v6408 = vpack.c.b16 %v6234, %v6232
        %v6409 = vpack.c.b16 %v6237, %v6235
        %v6410 = vpack.c.b16 %v6238, %v6236
        %v6411 = vpack.c.b16 %v6241, %v6239
        %v6412 = vpack.c.b16 %v6242, %v6240
        %v6413 = vpack.c.b16 %v6245, %v6243
        %v6414 = vpack.c.b16 %v6246, %v6244
        %v6415 = vpack.c.b16 %v6249, %v6247
        %v6416 = vpack.c.b16 %v6250, %v6248
        %v6417 = vpack.c.b16 %v6253, %v6251
        %v6418 = vpack.c.b16 %v6254, %v6252
        %v6419 = vpack.c.b16 %v6257, %v6255
        %v6420 = vpack.c.b16 %v6258, %v6256
        %v6421 = vpack.c.b16 %v6261, %v6259
        %v6422 = vpack.c.b16 %v6262, %v6260
        %v6423 = vpack.c.b16 %v6265, %v6263
        %v6424 = vpack.c.b16 %v6266, %v6264
        %v6425 = vpack.c.b16 %v6269, %v6267
        %v6426 = vpack.c.b16 %v6270, %v6268
        %v6427 = vpack.c.b16 %v6273, %v6271
        %v6428 = vpack.c.b16 %v6274, %v6272
        %v6429 = vpack.c.b16 %v6277, %v6275
        %v6430 = vpack.c.b16 %v6278, %v6276
        %v6431 = vpack.c.b16 %v6281, %v6279
        %v6432 = vpack.c.b16 %v6282, %v6280
        %v6433 = vpack.c.b16 %v6285, %v6283
        %v6434 = vpack.c.b16 %v6286, %v6284
        %v6435 = vpack.c.b16 %v6289, %v6287
        %v6436 = vpack.c.b16 %v6290, %v6288
        %v6437 = vpack.c.b16 %v6293, %v6291
        %v6438 = vpack.c.b16 %v6294, %v6292
        %v6439 = vpack.c.b16 %v6297, %v6295
        %v6440 = vpack.c.b16 %v6298, %v6296
        %v6441 = vpack.c.b16 %v6301, %v6299
        %v6442 = vpack.c.b16 %v6302, %v6300
        %v6443 = vpack.c.b16 %v6305, %v6303
        %v6444 = vpack.c.b16 %v6306, %v6304
        %v6445 = vpack.c.b16 %v6309, %v6307
        %v6446 = vpack.c.b16 %v6310, %v6308
        %v6447 = vpack.c.b16 %v6313, %v6311
        %v6448 = vpack.c.b16 %v6314, %v6312
        %v6449 = vpack.c.b16 %v6317, %v6315
        %v6450 = vpack.c.b16 %v6318, %v6316
        %v6451 = vpack.c.b16 %v6321, %v6319
        %v6452 = vpack.c.b16 %v6322, %v6320
        %v6453 = vpack.c.b16 %v6325, %v6323
        %v6454 = vpack.c.b16 %v6326, %v6324
        %v6455 = vpack.c.b16 %v6329, %v6327
        %v6456 = vpack.c.b16 %v6330, %v6328
        %v6457 = vpack.c.b16 %v6333, %v6331
        %v6458 = vpack.c.b16 %v6334, %v6332
        %v6459 = vpack.c.b16 %v6337, %v6335
        %v6460 = vpack.c.b16 %v6338, %v6336
        %v6461 = vpack.c.b16 %v6341, %v6339
        %v6462 = vpack.c.b16 %v6342, %v6340
        %v6463 = vpack.c.b16 %v6345, %v6343
        %v6464 = vpack.c.b16 %v6346, %v6344
        %v6465 = vpack.c.b16 %v6349, %v6347
        %v6466 = vpack.c.b16 %v6350, %v6348
        %v6467 = vpack.c.b16 %v6353, %v6351
        %v6468 = vpack.c.b16 %v6354, %v6352
        %v6469 = vpack.c.b16 %v6357, %v6355
        %v6470 = vpack.c.b16 %v6358, %v6356
        %v6471 = vpack.c.b16 %v6361, %v6359
        %v6472 = vpack.c.b16 %v6362, %v6360
        %v6473 = vpack.c.b16 %v6365, %v6363
        %v6474 = vpack.c.b16 %v6366, %v6364
        %v6475 = vpack.c.b16 %v6369, %v6367
        %v6476 = vpack.c.b16 %v6370, %v6368
        %v6477 = vpack.c.b16 %v6373, %v6371
        %v6478 = vpack.c.b16 %v6374, %v6372
        %v6479 = vpack.c.b16 %v6377, %v6375
        %v6480 = vpack.c.b16 %v6378, %v6376
        %v6481 = vpack.c.b16 %v6381, %v6379
        %v6482 = vpack.c.b16 %v6382, %v6380
        %v6483 = vpack.c.b16 %v6385, %v6383
        %v6484 = vpack.c.b16 %v6386, %v6384
        %v6485 = vpack.c.b16 %v6389, %v6387
        %v6486 = vpack.c.b16 %v6390, %v6388
        %6583 = vmatpush.bf16.msra.mxu0 %v6405
        %6584 = vmatpush.bf16.msra.mxu0 %v6403
        %6585 = vmatpush.bf16.msra.mxu0 %v6401
        %6586 = vmatpush.bf16.msra.mxu0 %v6399
        %6587 = vmatpush.bf16.msra.mxu0 %v6397
        %6588 = vmatpush.bf16.msra.mxu0 %v6395
        %6589 = vmatpush.bf16.msra.mxu0 %v6393
        %6590 = vmatpush.bf16.msra.mxu0 %v6391
        %6591 = vmatmul.bf16.gmra.mxu0 %v6091
        %v6592 = vpop.f32.mrf.mxu0
        %v6593 = vadd.f32 %v6007, %v6592
        %v6594 = vpop.f32.mrf.mxu0
        %6595 = vdwg.mxu0
        %6596 = vmatpush.bf16.msra.mxu0 %v6421
        %6597 = vmatpush.bf16.msra.mxu0 %v6419
        %6598 = vmatpush.bf16.msra.mxu0 %v6417
        %6599 = vmatpush.bf16.msra.mxu0 %v6415
        %6600 = vmatpush.bf16.msra.mxu0 %v6413
        %6601 = vmatpush.bf16.msra.mxu0 %v6411
        %6602 = vmatpush.bf16.msra.mxu0 %v6409
        %6603 = vmatpush.bf16.msra.mxu0 %v6407
        %6604 = vmatmul.bf16.gmra.mxu0 %v6092
        %v6605 = vpop.f32.mrf.mxu0
        %v6606 = vadd.f32 %v6593, %v6605
        %v6607 = vpop.f32.mrf.mxu0
        %6608 = vdwg.mxu0
        %6609 = vmatpush.bf16.msra.mxu0 %v6437
        %6610 = vmatpush.bf16.msra.mxu0 %v6435
        %6611 = vmatpush.bf16.msra.mxu0 %v6433
        %6612 = vmatpush.bf16.msra.mxu0 %v6431
        %6613 = vmatpush.bf16.msra.mxu0 %v6429
        %6614 = vmatpush.bf16.msra.mxu0 %v6427
        %6615 = vmatpush.bf16.msra.mxu0 %v6425
        %6616 = vmatpush.bf16.msra.mxu0 %v6423
        %6617 = vmatmul.bf16.gmra.mxu0 %v6093
        %v6618 = vpop.f32.mrf.mxu0
        %v6619 = vadd.f32 %v6606, %v6618
        %v6620 = vpop.f32.mrf.mxu0
        %6621 = vdwg.mxu0
        %6622 = vmatpush.bf16.msra.mxu0 %v6453
        %6623 = vmatpush.bf16.msra.mxu0 %v6451
        %6624 = vmatpush.bf16.msra.mxu0 %v6449
        %6625 = vmatpush.bf16.msra.mxu0 %v6447
        %6626 = vmatpush.bf16.msra.mxu0 %v6445
        %6627 = vmatpush.bf16.msra.mxu0 %v6443
        %6628 = vmatpush.bf16.msra.mxu0 %v6441
        %6629 = vmatpush.bf16.msra.mxu0 %v6439
        %6630 = vmatmul.bf16.gmra.mxu0 %v6094
        %v6631 = vpop.f32.mrf.mxu0
        %v6632 = vadd.f32 %v6619, %v6631
        %v6633 = vpop.f32.mrf.mxu0
        %6634 = vdwg.mxu0
        %6635 = vmatpush.bf16.msra.mxu0 %v6469
        %6636 = vmatpush.bf16.msra.mxu0 %v6467
        %6637 = vmatpush.bf16.msra.mxu0 %v6465
        %6638 = vmatpush.bf16.msra.mxu0 %v6463
        %6639 = vmatpush.bf16.msra.mxu0 %v6461
        %6640 = vmatpush.bf16.msra.mxu0 %v6459
        %6641 = vmatpush.bf16.msra.mxu0 %v6457
        %6642 = vmatpush.bf16.msra.mxu0 %v6455
        %6643 = vmatmul.bf16.gmra.mxu0 %v6095
        %v6644 = vpop.f32.mrf.mxu0
        %v6645 = vadd.f32 %v6632, %v6644
        %v6646 = vpop.f32.mrf.mxu0
        %6647 = vdwg.mxu0
        %6648 = vmatpush.bf16.msra.mxu0 %v6485
        %6649 = vmatpush.bf16.msra.mxu0 %v6483
        %6650 = vmatpush.bf16.msra.mxu0 %v6481
        %6651 = vmatpush.bf16.msra.mxu0 %v6479
        %6652 = vmatpush.bf16.msra.mxu0 %v6477
        %6653 = vmatpush.bf16.msra.mxu0 %v6475
        %6654 = vmatpush.bf16.msra.mxu0 %v6473
        %6655 = vmatpush.bf16.msra.mxu0 %v6471
        %6656 = vmatmul.bf16.gmra.mxu0 %v6096
        %v6657 = vpop.f32.mrf.mxu0
        %v6658 = vadd.f32 %v6645, %v6657
        %v6659 = vpop.f32.mrf.mxu0
        %6660 = vdwg.mxu0
        %6661 = vmatpush.bf16.msra.mxu0 %v6406
        %6662 = vmatpush.bf16.msra.mxu0 %v6404
        %6663 = vmatpush.bf16.msra.mxu0 %v6402
        %6664 = vmatpush.bf16.msra.mxu0 %v6400
        %6665 = vmatpush.bf16.msra.mxu0 %v6398
        %6666 = vmatpush.bf16.msra.mxu0 %v6396
        %6667 = vmatpush.bf16.msra.mxu0 %v6394
        %6668 = vmatpush.bf16.msra.mxu0 %v6392
        %6669 = vmatmul.bf16.gmra.mxu0 %v6091
        %v6670 = vpop.f32.mrf.mxu0
        %v6671 = vadd.f32 %v6085, %v6670
        %v6672 = vpop.f32.mrf.mxu0
        %6673 = vdwg.mxu0
        %6674 = vmatpush.bf16.msra.mxu0 %v6422
        %6675 = vmatpush.bf16.msra.mxu0 %v6420
        %6676 = vmatpush.bf16.msra.mxu0 %v6418
        %6677 = vmatpush.bf16.msra.mxu0 %v6416
        %6678 = vmatpush.bf16.msra.mxu0 %v6414
        %6679 = vmatpush.bf16.msra.mxu0 %v6412
        %6680 = vmatpush.bf16.msra.mxu0 %v6410
        %6681 = vmatpush.bf16.msra.mxu0 %v6408
        %6682 = vmatmul.bf16.gmra.mxu0 %v6092
        %v6683 = vpop.f32.mrf.mxu0
        %v6684 = vadd.f32 %v6671, %v6683
        %v6685 = vpop.f32.mrf.mxu0
        %6686 = vdwg.mxu0
        %6687 = vmatpush.bf16.msra.mxu0 %v6438
        %6688 = vmatpush.bf16.msra.mxu0 %v6436
        %6689 = vmatpush.bf16.msra.mxu0 %v6434
        %6690 = vmatpush.bf16.msra.mxu0 %v6432
        %6691 = vmatpush.bf16.msra.mxu0 %v6430
        %6692 = vmatpush.bf16.msra.mxu0 %v6428
        %6693 = vmatpush.bf16.msra.mxu0 %v6426
        %6694 = vmatpush.bf16.msra.mxu0 %v6424
        %6695 = vmatmul.bf16.gmra.mxu0 %v6093
        %v6696 = vpop.f32.mrf.mxu0
        %v6697 = vadd.f32 %v6684, %v6696
        %v6698 = vpop.f32.mrf.mxu0
        %6699 = vdwg.mxu0
        %6700 = vmatpush.bf16.msra.mxu0 %v6454
        %6701 = vmatpush.bf16.msra.mxu0 %v6452
        %6702 = vmatpush.bf16.msra.mxu0 %v6450
        %6703 = vmatpush.bf16.msra.mxu0 %v6448
        %6704 = vmatpush.bf16.msra.mxu0 %v6446
        %6705 = vmatpush.bf16.msra.mxu0 %v6444
        %6706 = vmatpush.bf16.msra.mxu0 %v6442
        %6707 = vmatpush.bf16.msra.mxu0 %v6440
        %6708 = vmatmul.bf16.gmra.mxu0 %v6094
        %v6709 = vpop.f32.mrf.mxu0
        %v6710 = vadd.f32 %v6697, %v6709
        %v6711 = vpop.f32.mrf.mxu0
        %6712 = vdwg.mxu0
        %6713 = vmatpush.bf16.msra.mxu0 %v6470
        %6714 = vmatpush.bf16.msra.mxu0 %v6468
        %6715 = vmatpush.bf16.msra.mxu0 %v6466
        %6716 = vmatpush.bf16.msra.mxu0 %v6464
        %6717 = vmatpush.bf16.msra.mxu0 %v6462
        %6718 = vmatpush.bf16.msra.mxu0 %v6460
        %6719 = vmatpush.bf16.msra.mxu0 %v6458
        %6720 = vmatpush.bf16.msra.mxu0 %v6456
        %6721 = vmatmul.bf16.gmra.mxu0 %v6095
        %v6722 = vpop.f32.mrf.mxu0
        %v6723 = vadd.f32 %v6710, %v6722
        %v6724 = vpop.f32.mrf.mxu0
        %6725 = vdwg.mxu0
        %6726 = vmatpush.bf16.msra.mxu0 %v6486
        %6727 = vmatpush.bf16.msra.mxu0 %v6484
        %6728 = vmatpush.bf16.msra.mxu0 %v6482
        %6729 = vmatpush.bf16.msra.mxu0 %v6480
        %6730 = vmatpush.bf16.msra.mxu0 %v6478
        %6731 = vmatpush.bf16.msra.mxu0 %v6476
        %6732 = vmatpush.bf16.msra.mxu0 %v6474
        %6733 = vmatpush.bf16.msra.mxu0 %v6472
        %6734 = vmatmul.bf16.gmra.mxu0 %v6096
        %v6735 = vpop.f32.mrf.mxu0
        %v6736 = vadd.f32 %v6723, %v6735
        %v6737 = vpop.f32.mrf.mxu0
        %6738 = vdwg.mxu0
        %v6742 = vrot.slane %v5181, 3
        %v6743 = vrot.slane %v5182, 6
        %v6744 = vrot.slane %v5182, 1
        %v6745 = vrot.slane %v5183, 4
        %v6746 = vrot.slane %v5183, 7
        %v6749 = vsel %vm5200, %v5181, %v6742
        %v6751 = vsel %vm2173, %v6749, %v6743
        %v6754 = vsel %vm2814, %v6744, %v6745
        %v6756 = vsel %vm5209, %v6754, %v6746
        %v6757 = vsel %vm5212, %v6751, %v6756
        %s6758 = scalar_lea.vmem %s7, 1536
        %v6759 = vld [vmem:[%s6758] sm:$0xff]
        %v6760 = vld [vmem:[%s6758 + $0x8] sm:$0xff]
        %v6761 = vld [vmem:[%s6758 + $0x10] sm:$0xff]
        %v6762 = vld [vmem:[%s6758 + $0x18] sm:$0xff]
        %v6763 = vld [vmem:[%s6758 + $0x20] sm:$0xff]
        %v6764 = vld [vmem:[%s6758 + $0x28] sm:$0xff]
        %v6765 = vld [vmem:[%s6758 + $0x30] sm:$0xff]
        %v6766 = vld [vmem:[%s6758 + $0x38] sm:$0xff]
        %v6767 = vld [vmem:[%s6758 + $0x40] sm:$0xff]
        %v6768 = vld [vmem:[%s6758 + $0x48] sm:$0xff]
        %v6769 = vld [vmem:[%s6758 + $0x50] sm:$0xff]
        %v6770 = vld [vmem:[%s6758 + $0x58] sm:$0xff]
        %v6771 = vld [vmem:[%s6758 + $0x60] sm:$0xff]
        %v6772 = vld [vmem:[%s6758 + $0x68] sm:$0xff]
        %v6773 = vld [vmem:[%s6758 + $0x70] sm:$0xff]
        %v6774 = vld [vmem:[%s6758 + $0x78] sm:$0xff]
        %v6775 = vld [vmem:[%s6758 + $0x80] sm:$0xff]
        %v6776 = vld [vmem:[%s6758 + $0x88] sm:$0xff]
        %v6777 = vld [vmem:[%s6758 + $0x90] sm:$0xff]
        %v6778 = vld [vmem:[%s6758 + $0x98] sm:$0xff]
        %v6779 = vld [vmem:[%s6758 + $0xa0] sm:$0xff]
        %v6780 = vld [vmem:[%s6758 + $0xa8] sm:$0xff]
        %v6781 = vld [vmem:[%s6758 + $0xb0] sm:$0xff]
        %v6782 = vld [vmem:[%s6758 + $0xb8] sm:$0xff]
        %v6783 = vld [vmem:[%s6758 + $0xc0] sm:$0xff]
        %v6784 = vld [vmem:[%s6758 + $0xc8] sm:$0xff]
        %v6785 = vld [vmem:[%s6758 + $0xd0] sm:$0xff]
        %v6786 = vld [vmem:[%s6758 + $0xd8] sm:$0xff]
        %v6787 = vld [vmem:[%s6758 + $0xe0] sm:$0xff]
        %v6788 = vld [vmem:[%s6758 + $0xe8] sm:$0xff]
        %v6789 = vld [vmem:[%s6758 + $0xf0] sm:$0xff]
        %v6790 = vld [vmem:[%s6758 + $0xf8] sm:$0xff]
        %v6791 = vld [vmem:[%s6758 + $0x100] sm:$0xff]
        %v6792 = vld [vmem:[%s6758 + $0x108] sm:$0xff]
        %v6793 = vld [vmem:[%s6758 + $0x110] sm:$0xff]
        %v6794 = vld [vmem:[%s6758 + $0x118] sm:$0xff]
        %v6795 = vld [vmem:[%s6758 + $0x120] sm:$0xff]
        %v6796 = vld [vmem:[%s6758 + $0x128] sm:$0xff]
        %v6797 = vld [vmem:[%s6758 + $0x130] sm:$0xff]
        %v6798 = vld [vmem:[%s6758 + $0x138] sm:$0xff]
        %v6799 = vld [vmem:[%s6758 + $0x140] sm:$0xff]
        %v6800 = vld [vmem:[%s6758 + $0x148] sm:$0xff]
        %v6801 = vld [vmem:[%s6758 + $0x150] sm:$0xff]
        %v6802 = vld [vmem:[%s6758 + $0x158] sm:$0xff]
        %v6803 = vld [vmem:[%s6758 + $0x160] sm:$0xff]
        %v6804 = vld [vmem:[%s6758 + $0x168] sm:$0xff]
        %v6805 = vld [vmem:[%s6758 + $0x170] sm:$0xff]
        %v6806 = vld [vmem:[%s6758 + $0x178] sm:$0xff]
        %v6807 = vld [vmem:[%s6758 + $0x180] sm:$0xff]
        %v6808 = vld [vmem:[%s6758 + $0x188] sm:$0xff]
        %v6809 = vld [vmem:[%s6758 + $0x190] sm:$0xff]
        %v6810 = vld [vmem:[%s6758 + $0x198] sm:$0xff]
        %v6811 = vld [vmem:[%s6758 + $0x1a0] sm:$0xff]
        %v6812 = vld [vmem:[%s6758 + $0x1a8] sm:$0xff]
        %v6813 = vld [vmem:[%s6758 + $0x1b0] sm:$0xff]
        %v6814 = vld [vmem:[%s6758 + $0x1b8] sm:$0xff]
        %v6815 = vld [vmem:[%s6758 + $0x1c0] sm:$0xff]
        %v6816 = vld [vmem:[%s6758 + $0x1c8] sm:$0xff]
        %v6817 = vld [vmem:[%s6758 + $0x1d0] sm:$0xff]
        %v6818 = vld [vmem:[%s6758 + $0x1d8] sm:$0xff]
        %v6819 = vld [vmem:[%s6758 + $0x1e0] sm:$0xff]
        %v6820 = vld [vmem:[%s6758 + $0x1e8] sm:$0xff]
        %v6821 = vld [vmem:[%s6758 + $0x1f0] sm:$0xff]
        %v6822 = vld [vmem:[%s6758 + $0x1f8] sm:$0xff]
        %v6823 = vld [vmem:[%s6758 + $0x200] sm:$0xff]
        %v6824 = vld [vmem:[%s6758 + $0x208] sm:$0xff]
        %v6825 = vld [vmem:[%s6758 + $0x210] sm:$0xff]
        %v6826 = vld [vmem:[%s6758 + $0x218] sm:$0xff]
        %v6827 = vld [vmem:[%s6758 + $0x220] sm:$0xff]
        %v6828 = vld [vmem:[%s6758 + $0x228] sm:$0xff]
        %v6829 = vld [vmem:[%s6758 + $0x230] sm:$0xff]
        %v6830 = vld [vmem:[%s6758 + $0x238] sm:$0xff]
        %v6831 = vld [vmem:[%s6758 + $0x240] sm:$0xff]
        %v6832 = vld [vmem:[%s6758 + $0x248] sm:$0xff]
        %v6833 = vld [vmem:[%s6758 + $0x250] sm:$0xff]
        %v6834 = vld [vmem:[%s6758 + $0x258] sm:$0xff]
        %v6835 = vld [vmem:[%s6758 + $0x260] sm:$0xff]
        %v6836 = vld [vmem:[%s6758 + $0x268] sm:$0xff]
        %v6837 = vld [vmem:[%s6758 + $0x270] sm:$0xff]
        %v6838 = vld [vmem:[%s6758 + $0x278] sm:$0xff]
        %v6839 = vld [vmem:[%s6758 + $0x280] sm:$0xff]
        %v6840 = vld [vmem:[%s6758 + $0x288] sm:$0xff]
        %v6841 = vld [vmem:[%s6758 + $0x290] sm:$0xff]
        %v6842 = vld [vmem:[%s6758 + $0x298] sm:$0xff]
        %v6843 = vld [vmem:[%s6758 + $0x2a0] sm:$0xff]
        %v6844 = vld [vmem:[%s6758 + $0x2a8] sm:$0xff]
        %v6845 = vld [vmem:[%s6758 + $0x2b0] sm:$0xff]
        %v6846 = vld [vmem:[%s6758 + $0x2b8] sm:$0xff]
        %v6847 = vld [vmem:[%s6758 + $0x2c0] sm:$0xff]
        %v6848 = vld [vmem:[%s6758 + $0x2c8] sm:$0xff]
        %v6849 = vld [vmem:[%s6758 + $0x2d0] sm:$0xff]
        %v6850 = vld [vmem:[%s6758 + $0x2d8] sm:$0xff]
        %v6851 = vld [vmem:[%s6758 + $0x2e0] sm:$0xff]
        %v6852 = vld [vmem:[%s6758 + $0x2e8] sm:$0xff]
        %v6853 = vld [vmem:[%s6758 + $0x2f0] sm:$0xff]
        %v6854 = vld [vmem:[%s6758 + $0x2f8] sm:$0xff]
        %6855 = vst [vmem:[#allocation1] ss:$9 sm:$0xff] %v5339
        %s6856 = scalar_lea.vmem [#allocation1], 1
        %6857 = vst [vmem:[%s6856] ss:$9 sm:$0xff] %v6757
        %v6858 = vld [vmem:[#allocation1] sm:$0xff]
        %v6859 = vld [vmem:[#allocation1 + $0x9] sm:$0xff]
        %v6860 = vld [vmem:[#allocation1 + $0x12] sm:$0xff]
        %v6861 = vld [vmem:[#allocation1 + $0x1b] sm:$0xff]
        %v6862 = vld [vmem:[#allocation1 + $0x24] sm:$0xff]
        %v6863 = vld [vmem:[#allocation1 + $0x2d] sm:$0xff]
        %v6966 = vunpack.c.l.b16 %v6759
        %v6967 = vunpack.c.h.b16 %v6759
        %v6968 = vunpack.c.l.b16 %v6760
        %v6969 = vunpack.c.h.b16 %v6760
        %v6970 = vunpack.c.l.b16 %v6761
        %v6971 = vunpack.c.h.b16 %v6761
        %v6972 = vunpack.c.l.b16 %v6762
        %v6973 = vunpack.c.h.b16 %v6762
        %v6974 = vunpack.c.l.b16 %v6763
        %v6975 = vunpack.c.h.b16 %v6763
        %v6976 = vunpack.c.l.b16 %v6764
        %v6977 = vunpack.c.h.b16 %v6764
        %v6978 = vunpack.c.l.b16 %v6765
        %v6979 = vunpack.c.h.b16 %v6765
        %v6980 = vunpack.c.l.b16 %v6766
        %v6981 = vunpack.c.h.b16 %v6766
        %v6982 = vunpack.c.l.b16 %v6767
        %v6983 = vunpack.c.h.b16 %v6767
        %v6984 = vunpack.c.l.b16 %v6768
        %v6985 = vunpack.c.h.b16 %v6768
        %v6986 = vunpack.c.l.b16 %v6769
        %v6987 = vunpack.c.h.b16 %v6769
        %v6988 = vunpack.c.l.b16 %v6770
        %v6989 = vunpack.c.h.b16 %v6770
        %v6990 = vunpack.c.l.b16 %v6771
        %v6991 = vunpack.c.h.b16 %v6771
        %v6992 = vunpack.c.l.b16 %v6772
        %v6993 = vunpack.c.h.b16 %v6772
        %v6994 = vunpack.c.l.b16 %v6773
        %v6995 = vunpack.c.h.b16 %v6773
        %v6996 = vunpack.c.l.b16 %v6774
        %v6997 = vunpack.c.h.b16 %v6774
        %v6998 = vunpack.c.l.b16 %v6775
        %v6999 = vunpack.c.h.b16 %v6775
        %v7000 = vunpack.c.l.b16 %v6776
        %v7001 = vunpack.c.h.b16 %v6776
        %v7002 = vunpack.c.l.b16 %v6777
        %v7003 = vunpack.c.h.b16 %v6777
        %v7004 = vunpack.c.l.b16 %v6778
        %v7005 = vunpack.c.h.b16 %v6778
        %v7006 = vunpack.c.l.b16 %v6779
        %v7007 = vunpack.c.h.b16 %v6779
        %v7008 = vunpack.c.l.b16 %v6780
        %v7009 = vunpack.c.h.b16 %v6780
        %v7010 = vunpack.c.l.b16 %v6781
        %v7011 = vunpack.c.h.b16 %v6781
        %v7012 = vunpack.c.l.b16 %v6782
        %v7013 = vunpack.c.h.b16 %v6782
        %v7014 = vunpack.c.l.b16 %v6783
        %v7015 = vunpack.c.h.b16 %v6783
        %v7016 = vunpack.c.l.b16 %v6784
        %v7017 = vunpack.c.h.b16 %v6784
        %v7018 = vunpack.c.l.b16 %v6785
        %v7019 = vunpack.c.h.b16 %v6785
        %v7020 = vunpack.c.l.b16 %v6786
        %v7021 = vunpack.c.h.b16 %v6786
        %v7022 = vunpack.c.l.b16 %v6787
        %v7023 = vunpack.c.h.b16 %v6787
        %v7024 = vunpack.c.l.b16 %v6788
        %v7025 = vunpack.c.h.b16 %v6788
        %v7026 = vunpack.c.l.b16 %v6789
        %v7027 = vunpack.c.h.b16 %v6789
        %v7028 = vunpack.c.l.b16 %v6790
        %v7029 = vunpack.c.h.b16 %v6790
        %v7030 = vunpack.c.l.b16 %v6791
        %v7031 = vunpack.c.h.b16 %v6791
        %v7032 = vunpack.c.l.b16 %v6792
        %v7033 = vunpack.c.h.b16 %v6792
        %v7034 = vunpack.c.l.b16 %v6793
        %v7035 = vunpack.c.h.b16 %v6793
        %v7036 = vunpack.c.l.b16 %v6794
        %v7037 = vunpack.c.h.b16 %v6794
        %v7038 = vunpack.c.l.b16 %v6795
        %v7039 = vunpack.c.h.b16 %v6795
        %v7040 = vunpack.c.l.b16 %v6796
        %v7041 = vunpack.c.h.b16 %v6796
        %v7042 = vunpack.c.l.b16 %v6797
        %v7043 = vunpack.c.h.b16 %v6797
        %v7044 = vunpack.c.l.b16 %v6798
        %v7045 = vunpack.c.h.b16 %v6798
        %v7046 = vunpack.c.l.b16 %v6799
        %v7047 = vunpack.c.h.b16 %v6799
        %v7048 = vunpack.c.l.b16 %v6800
        %v7049 = vunpack.c.h.b16 %v6800
        %v7050 = vunpack.c.l.b16 %v6801
        %v7051 = vunpack.c.h.b16 %v6801
        %v7052 = vunpack.c.l.b16 %v6802
        %v7053 = vunpack.c.h.b16 %v6802
        %v7054 = vunpack.c.l.b16 %v6803
        %v7055 = vunpack.c.h.b16 %v6803
        %v7056 = vunpack.c.l.b16 %v6804
        %v7057 = vunpack.c.h.b16 %v6804
        %v7058 = vunpack.c.l.b16 %v6805
        %v7059 = vunpack.c.h.b16 %v6805
        %v7060 = vunpack.c.l.b16 %v6806
        %v7061 = vunpack.c.h.b16 %v6806
        %v7062 = vunpack.c.l.b16 %v6807
        %v7063 = vunpack.c.h.b16 %v6807
        %v7064 = vunpack.c.l.b16 %v6808
        %v7065 = vunpack.c.h.b16 %v6808
        %v7066 = vunpack.c.l.b16 %v6809
        %v7067 = vunpack.c.h.b16 %v6809
        %v7068 = vunpack.c.l.b16 %v6810
        %v7069 = vunpack.c.h.b16 %v6810
        %v7070 = vunpack.c.l.b16 %v6811
        %v7071 = vunpack.c.h.b16 %v6811
        %v7072 = vunpack.c.l.b16 %v6812
        %v7073 = vunpack.c.h.b16 %v6812
        %v7074 = vunpack.c.l.b16 %v6813
        %v7075 = vunpack.c.h.b16 %v6813
        %v7076 = vunpack.c.l.b16 %v6814
        %v7077 = vunpack.c.h.b16 %v6814
        %v7078 = vunpack.c.l.b16 %v6815
        %v7079 = vunpack.c.h.b16 %v6815
        %v7080 = vunpack.c.l.b16 %v6816
        %v7081 = vunpack.c.h.b16 %v6816
        %v7082 = vunpack.c.l.b16 %v6817
        %v7083 = vunpack.c.h.b16 %v6817
        %v7084 = vunpack.c.l.b16 %v6818
        %v7085 = vunpack.c.h.b16 %v6818
        %v7086 = vunpack.c.l.b16 %v6819
        %v7087 = vunpack.c.h.b16 %v6819
        %v7088 = vunpack.c.l.b16 %v6820
        %v7089 = vunpack.c.h.b16 %v6820
        %v7090 = vunpack.c.l.b16 %v6821
        %v7091 = vunpack.c.h.b16 %v6821
        %v7092 = vunpack.c.l.b16 %v6822
        %v7093 = vunpack.c.h.b16 %v6822
        %v7094 = vunpack.c.l.b16 %v6823
        %v7095 = vunpack.c.h.b16 %v6823
        %v7096 = vunpack.c.l.b16 %v6824
        %v7097 = vunpack.c.h.b16 %v6824
        %v7098 = vunpack.c.l.b16 %v6825
        %v7099 = vunpack.c.h.b16 %v6825
        %v7100 = vunpack.c.l.b16 %v6826
        %v7101 = vunpack.c.h.b16 %v6826
        %v7102 = vunpack.c.l.b16 %v6827
        %v7103 = vunpack.c.h.b16 %v6827
        %v7104 = vunpack.c.l.b16 %v6828
        %v7105 = vunpack.c.h.b16 %v6828
        %v7106 = vunpack.c.l.b16 %v6829
        %v7107 = vunpack.c.h.b16 %v6829
        %v7108 = vunpack.c.l.b16 %v6830
        %v7109 = vunpack.c.h.b16 %v6830
        %v7110 = vunpack.c.l.b16 %v6831
        %v7111 = vunpack.c.h.b16 %v6831
        %v7112 = vunpack.c.l.b16 %v6832
        %v7113 = vunpack.c.h.b16 %v6832
        %v7114 = vunpack.c.l.b16 %v6833
        %v7115 = vunpack.c.h.b16 %v6833
        %v7116 = vunpack.c.l.b16 %v6834
        %v7117 = vunpack.c.h.b16 %v6834
        %v7118 = vunpack.c.l.b16 %v6835
        %v7119 = vunpack.c.h.b16 %v6835
        %v7120 = vunpack.c.l.b16 %v6836
        %v7121 = vunpack.c.h.b16 %v6836
        %v7122 = vunpack.c.l.b16 %v6837
        %v7123 = vunpack.c.h.b16 %v6837
        %v7124 = vunpack.c.l.b16 %v6838
        %v7125 = vunpack.c.h.b16 %v6838
        %v7126 = vunpack.c.l.b16 %v6839
        %v7127 = vunpack.c.h.b16 %v6839
        %v7128 = vunpack.c.l.b16 %v6840
        %v7129 = vunpack.c.h.b16 %v6840
        %v7130 = vunpack.c.l.b16 %v6841
        %v7131 = vunpack.c.h.b16 %v6841
        %v7132 = vunpack.c.l.b16 %v6842
        %v7133 = vunpack.c.h.b16 %v6842
        %v7134 = vunpack.c.l.b16 %v6843
        %v7135 = vunpack.c.h.b16 %v6843
        %v7136 = vunpack.c.l.b16 %v6844
        %v7137 = vunpack.c.h.b16 %v6844
        %v7138 = vunpack.c.l.b16 %v6845
        %v7139 = vunpack.c.h.b16 %v6845
        %v7140 = vunpack.c.l.b16 %v6846
        %v7141 = vunpack.c.h.b16 %v6846
        %v7142 = vunpack.c.l.b16 %v6847
        %v7143 = vunpack.c.h.b16 %v6847
        %v7144 = vunpack.c.l.b16 %v6848
        %v7145 = vunpack.c.h.b16 %v6848
        %v7146 = vunpack.c.l.b16 %v6849
        %v7147 = vunpack.c.h.b16 %v6849
        %v7148 = vunpack.c.l.b16 %v6850
        %v7149 = vunpack.c.h.b16 %v6850
        %v7150 = vunpack.c.l.b16 %v6851
        %v7151 = vunpack.c.h.b16 %v6851
        %v7152 = vunpack.c.l.b16 %v6852
        %v7153 = vunpack.c.h.b16 %v6852
        %v7154 = vunpack.c.l.b16 %v6853
        %v7155 = vunpack.c.h.b16 %v6853
        %v7156 = vunpack.c.l.b16 %v6854
        %v7157 = vunpack.c.h.b16 %v6854
        %v7158 = vpack.c.b16 %v6968, %v6966
        %v7159 = vpack.c.b16 %v6969, %v6967
        %v7160 = vpack.c.b16 %v6972, %v6970
        %v7161 = vpack.c.b16 %v6973, %v6971
        %v7162 = vpack.c.b16 %v6976, %v6974
        %v7163 = vpack.c.b16 %v6977, %v6975
        %v7164 = vpack.c.b16 %v6980, %v6978
        %v7165 = vpack.c.b16 %v6981, %v6979
        %v7166 = vpack.c.b16 %v6984, %v6982
        %v7167 = vpack.c.b16 %v6985, %v6983
        %v7168 = vpack.c.b16 %v6988, %v6986
        %v7169 = vpack.c.b16 %v6989, %v6987
        %v7170 = vpack.c.b16 %v6992, %v6990
        %v7171 = vpack.c.b16 %v6993, %v6991
        %v7172 = vpack.c.b16 %v6996, %v6994
        %v7173 = vpack.c.b16 %v6997, %v6995
        %v7174 = vpack.c.b16 %v7000, %v6998
        %v7175 = vpack.c.b16 %v7001, %v6999
        %v7176 = vpack.c.b16 %v7004, %v7002
        %v7177 = vpack.c.b16 %v7005, %v7003
        %v7178 = vpack.c.b16 %v7008, %v7006
        %v7179 = vpack.c.b16 %v7009, %v7007
        %v7180 = vpack.c.b16 %v7012, %v7010
        %v7181 = vpack.c.b16 %v7013, %v7011
        %v7182 = vpack.c.b16 %v7016, %v7014
        %v7183 = vpack.c.b16 %v7017, %v7015
        %v7184 = vpack.c.b16 %v7020, %v7018
        %v7185 = vpack.c.b16 %v7021, %v7019
        %v7186 = vpack.c.b16 %v7024, %v7022
        %v7187 = vpack.c.b16 %v7025, %v7023
        %v7188 = vpack.c.b16 %v7028, %v7026
        %v7189 = vpack.c.b16 %v7029, %v7027
        %v7190 = vpack.c.b16 %v7032, %v7030
        %v7191 = vpack.c.b16 %v7033, %v7031
        %v7192 = vpack.c.b16 %v7036, %v7034
        %v7193 = vpack.c.b16 %v7037, %v7035
        %v7194 = vpack.c.b16 %v7040, %v7038
        %v7195 = vpack.c.b16 %v7041, %v7039
        %v7196 = vpack.c.b16 %v7044, %v7042
        %v7197 = vpack.c.b16 %v7045, %v7043
        %v7198 = vpack.c.b16 %v7048, %v7046
        %v7199 = vpack.c.b16 %v7049, %v7047
        %v7200 = vpack.c.b16 %v7052, %v7050
        %v7201 = vpack.c.b16 %v7053, %v7051
        %v7202 = vpack.c.b16 %v7056, %v7054
        %v7203 = vpack.c.b16 %v7057, %v7055
        %v7204 = vpack.c.b16 %v7060, %v7058
        %v7205 = vpack.c.b16 %v7061, %v7059
        %v7206 = vpack.c.b16 %v7064, %v7062
        %v7207 = vpack.c.b16 %v7065, %v7063
        %v7208 = vpack.c.b16 %v7068, %v7066
        %v7209 = vpack.c.b16 %v7069, %v7067
        %v7210 = vpack.c.b16 %v7072, %v7070
        %v7211 = vpack.c.b16 %v7073, %v7071
        %v7212 = vpack.c.b16 %v7076, %v7074
        %v7213 = vpack.c.b16 %v7077, %v7075
        %v7214 = vpack.c.b16 %v7080, %v7078
        %v7215 = vpack.c.b16 %v7081, %v7079
        %v7216 = vpack.c.b16 %v7084, %v7082
        %v7217 = vpack.c.b16 %v7085, %v7083
        %v7218 = vpack.c.b16 %v7088, %v7086
        %v7219 = vpack.c.b16 %v7089, %v7087
        %v7220 = vpack.c.b16 %v7092, %v7090
        %v7221 = vpack.c.b16 %v7093, %v7091
        %v7222 = vpack.c.b16 %v7096, %v7094
        %v7223 = vpack.c.b16 %v7097, %v7095
        %v7224 = vpack.c.b16 %v7100, %v7098
        %v7225 = vpack.c.b16 %v7101, %v7099
        %v7226 = vpack.c.b16 %v7104, %v7102
        %v7227 = vpack.c.b16 %v7105, %v7103
        %v7228 = vpack.c.b16 %v7108, %v7106
        %v7229 = vpack.c.b16 %v7109, %v7107
        %v7230 = vpack.c.b16 %v7112, %v7110
        %v7231 = vpack.c.b16 %v7113, %v7111
        %v7232 = vpack.c.b16 %v7116, %v7114
        %v7233 = vpack.c.b16 %v7117, %v7115
        %v7234 = vpack.c.b16 %v7120, %v7118
        %v7235 = vpack.c.b16 %v7121, %v7119
        %v7236 = vpack.c.b16 %v7124, %v7122
        %v7237 = vpack.c.b16 %v7125, %v7123
        %v7238 = vpack.c.b16 %v7128, %v7126
        %v7239 = vpack.c.b16 %v7129, %v7127
        %v7240 = vpack.c.b16 %v7132, %v7130
        %v7241 = vpack.c.b16 %v7133, %v7131
        %v7242 = vpack.c.b16 %v7136, %v7134
        %v7243 = vpack.c.b16 %v7137, %v7135
        %v7244 = vpack.c.b16 %v7140, %v7138
        %v7245 = vpack.c.b16 %v7141, %v7139
        %v7246 = vpack.c.b16 %v7144, %v7142
        %v7247 = vpack.c.b16 %v7145, %v7143
        %v7248 = vpack.c.b16 %v7148, %v7146
        %v7249 = vpack.c.b16 %v7149, %v7147
        %v7250 = vpack.c.b16 %v7152, %v7150
        %v7251 = vpack.c.b16 %v7153, %v7151
        %v7252 = vpack.c.b16 %v7156, %v7154
        %v7253 = vpack.c.b16 %v7157, %v7155
        %7350 = vmatpush.bf16.msra.mxu0 %v7172
        %7351 = vmatpush.bf16.msra.mxu0 %v7170
        %7352 = vmatpush.bf16.msra.mxu0 %v7168
        %7353 = vmatpush.bf16.msra.mxu0 %v7166
        %7354 = vmatpush.bf16.msra.mxu0 %v7164
        %7355 = vmatpush.bf16.msra.mxu0 %v7162
        %7356 = vmatpush.bf16.msra.mxu0 %v7160
        %7357 = vmatpush.bf16.msra.mxu0 %v7158
        %7358 = vmatmul.bf16.gmra.mxu0 %v6858
        %v7359 = vpop.f32.mrf.mxu0
        %v7360 = vadd.f32 0.0, %v7359
        %v7361 = vpop.f32.mrf.mxu0
        %7362 = vdwg.mxu0
        %7363 = vmatpush.bf16.msra.mxu0 %v7188
        %7364 = vmatpush.bf16.msra.mxu0 %v7186
        %7365 = vmatpush.bf16.msra.mxu0 %v7184
        %7366 = vmatpush.bf16.msra.mxu0 %v7182
        %7367 = vmatpush.bf16.msra.mxu0 %v7180
        %7368 = vmatpush.bf16.msra.mxu0 %v7178
        %7369 = vmatpush.bf16.msra.mxu0 %v7176
        %7370 = vmatpush.bf16.msra.mxu0 %v7174
        %7371 = vmatmul.bf16.gmra.mxu0 %v6859
        %v7372 = vpop.f32.mrf.mxu0
        %v7373 = vadd.f32 %v7360, %v7372
        %v7374 = vpop.f32.mrf.mxu0
        %7375 = vdwg.mxu0
        %7376 = vmatpush.bf16.msra.mxu0 %v7204
        %7377 = vmatpush.bf16.msra.mxu0 %v7202
        %7378 = vmatpush.bf16.msra.mxu0 %v7200
        %7379 = vmatpush.bf16.msra.mxu0 %v7198
        %7380 = vmatpush.bf16.msra.mxu0 %v7196
        %7381 = vmatpush.bf16.msra.mxu0 %v7194
        %7382 = vmatpush.bf16.msra.mxu0 %v7192
        %7383 = vmatpush.bf16.msra.mxu0 %v7190
        %7384 = vmatmul.bf16.gmra.mxu0 %v6860
        %v7385 = vpop.f32.mrf.mxu0
        %v7386 = vadd.f32 %v7373, %v7385
        %v7387 = vpop.f32.mrf.mxu0
        %7388 = vdwg.mxu0
        %7389 = vmatpush.bf16.msra.mxu0 %v7220
        %7390 = vmatpush.bf16.msra.mxu0 %v7218
        %7391 = vmatpush.bf16.msra.mxu0 %v7216
        %7392 = vmatpush.bf16.msra.mxu0 %v7214
        %7393 = vmatpush.bf16.msra.mxu0 %v7212
        %7394 = vmatpush.bf16.msra.mxu0 %v7210
        %7395 = vmatpush.bf16.msra.mxu0 %v7208
        %7396 = vmatpush.bf16.msra.mxu0 %v7206
        %7397 = vmatmul.bf16.gmra.mxu0 %v6861
        %v7398 = vpop.f32.mrf.mxu0
        %v7399 = vadd.f32 %v7386, %v7398
        %v7400 = vpop.f32.mrf.mxu0
        %7401 = vdwg.mxu0
        %7402 = vmatpush.bf16.msra.mxu0 %v7236
        %7403 = vmatpush.bf16.msra.mxu0 %v7234
        %7404 = vmatpush.bf16.msra.mxu0 %v7232
        %7405 = vmatpush.bf16.msra.mxu0 %v7230
        %7406 = vmatpush.bf16.msra.mxu0 %v7228
        %7407 = vmatpush.bf16.msra.mxu0 %v7226
        %7408 = vmatpush.bf16.msra.mxu0 %v7224
        %7409 = vmatpush.bf16.msra.mxu0 %v7222
        %7410 = vmatmul.bf16.gmra.mxu0 %v6862
        %v7411 = vpop.f32.mrf.mxu0
        %v7412 = vadd.f32 %v7399, %v7411
        %v7413 = vpop.f32.mrf.mxu0
        %7414 = vdwg.mxu0
        %7415 = vmatpush.bf16.msra.mxu0 %v7252
        %7416 = vmatpush.bf16.msra.mxu0 %v7250
        %7417 = vmatpush.bf16.msra.mxu0 %v7248
        %7418 = vmatpush.bf16.msra.mxu0 %v7246
        %7419 = vmatpush.bf16.msra.mxu0 %v7244
        %7420 = vmatpush.bf16.msra.mxu0 %v7242
        %7421 = vmatpush.bf16.msra.mxu0 %v7240
        %7422 = vmatpush.bf16.msra.mxu0 %v7238
        %7423 = vmatmul.bf16.gmra.mxu0 %v6863
        %v7424 = vpop.f32.mrf.mxu0
        %v7425 = vadd.f32 %v7412, %v7424
        %v7426 = vpop.f32.mrf.mxu0
        %7427 = vdwg.mxu0
        %7428 = vmatpush.bf16.msra.mxu0 %v7173
        %7429 = vmatpush.bf16.msra.mxu0 %v7171
        %7430 = vmatpush.bf16.msra.mxu0 %v7169
        %7431 = vmatpush.bf16.msra.mxu0 %v7167
        %7432 = vmatpush.bf16.msra.mxu0 %v7165
        %7433 = vmatpush.bf16.msra.mxu0 %v7163
        %7434 = vmatpush.bf16.msra.mxu0 %v7161
        %7435 = vmatpush.bf16.msra.mxu0 %v7159
        %7436 = vmatmul.bf16.gmra.mxu0 %v6858
        %v7437 = vpop.f32.mrf.mxu0
        %v7438 = vadd.f32 0.0, %v7437
        %v7439 = vpop.f32.mrf.mxu0
        %7440 = vdwg.mxu0
        %7441 = vmatpush.bf16.msra.mxu0 %v7189
        %7442 = vmatpush.bf16.msra.mxu0 %v7187
        %7443 = vmatpush.bf16.msra.mxu0 %v7185
        %7444 = vmatpush.bf16.msra.mxu0 %v7183
        %7445 = vmatpush.bf16.msra.mxu0 %v7181
        %7446 = vmatpush.bf16.msra.mxu0 %v7179
        %7447 = vmatpush.bf16.msra.mxu0 %v7177
        %7448 = vmatpush.bf16.msra.mxu0 %v7175
        %7449 = vmatmul.bf16.gmra.mxu0 %v6859
        %v7450 = vpop.f32.mrf.mxu0
        %v7451 = vadd.f32 %v7438, %v7450
        %v7452 = vpop.f32.mrf.mxu0
        %7453 = vdwg.mxu0
        %7454 = vmatpush.bf16.msra.mxu0 %v7205
        %7455 = vmatpush.bf16.msra.mxu0 %v7203
        %7456 = vmatpush.bf16.msra.mxu0 %v7201
        %7457 = vmatpush.bf16.msra.mxu0 %v7199
        %7458 = vmatpush.bf16.msra.mxu0 %v7197
        %7459 = vmatpush.bf16.msra.mxu0 %v7195
        %7460 = vmatpush.bf16.msra.mxu0 %v7193
        %7461 = vmatpush.bf16.msra.mxu0 %v7191
        %7462 = vmatmul.bf16.gmra.mxu0 %v6860
        %v7463 = vpop.f32.mrf.mxu0
        %v7464 = vadd.f32 %v7451, %v7463
        %v7465 = vpop.f32.mrf.mxu0
        %7466 = vdwg.mxu0
        %7467 = vmatpush.bf16.msra.mxu0 %v7221
        %7468 = vmatpush.bf16.msra.mxu0 %v7219
        %7469 = vmatpush.bf16.msra.mxu0 %v7217
        %7470 = vmatpush.bf16.msra.mxu0 %v7215
        %7471 = vmatpush.bf16.msra.mxu0 %v7213
        %7472 = vmatpush.bf16.msra.mxu0 %v7211
        %7473 = vmatpush.bf16.msra.mxu0 %v7209
        %7474 = vmatpush.bf16.msra.mxu0 %v7207
        %7475 = vmatmul.bf16.gmra.mxu0 %v6861
        %v7476 = vpop.f32.mrf.mxu0
        %v7477 = vadd.f32 %v7464, %v7476
        %v7478 = vpop.f32.mrf.mxu0
        %7479 = vdwg.mxu0
        %7480 = vmatpush.bf16.msra.mxu0 %v7237
        %7481 = vmatpush.bf16.msra.mxu0 %v7235
        %7482 = vmatpush.bf16.msra.mxu0 %v7233
        %7483 = vmatpush.bf16.msra.mxu0 %v7231
        %7484 = vmatpush.bf16.msra.mxu0 %v7229
        %7485 = vmatpush.bf16.msra.mxu0 %v7227
        %7486 = vmatpush.bf16.msra.mxu0 %v7225
        %7487 = vmatpush.bf16.msra.mxu0 %v7223
        %7488 = vmatmul.bf16.gmra.mxu0 %v6862
        %v7489 = vpop.f32.mrf.mxu0
        %v7490 = vadd.f32 %v7477, %v7489
        %v7491 = vpop.f32.mrf.mxu0
        %7492 = vdwg.mxu0
        %7493 = vmatpush.bf16.msra.mxu0 %v7253
        %7494 = vmatpush.bf16.msra.mxu0 %v7251
        %7495 = vmatpush.bf16.msra.mxu0 %v7249
        %7496 = vmatpush.bf16.msra.mxu0 %v7247
        %7497 = vmatpush.bf16.msra.mxu0 %v7245
        %7498 = vmatpush.bf16.msra.mxu0 %v7243
        %7499 = vmatpush.bf16.msra.mxu0 %v7241
        %7500 = vmatpush.bf16.msra.mxu0 %v7239
        %7501 = vmatmul.bf16.gmra.mxu0 %v6863
        %v7502 = vpop.f32.mrf.mxu0
        %v7503 = vadd.f32 %v7490, %v7502
        %v7504 = vpop.f32.mrf.mxu0
        %7505 = vdwg.mxu0
        %v7506 = vadd.f32 %v6658, %v7425
        %v7507 = vadd.f32 %v6736, %v7503
        %v7509 = vperm.slane %v5062, 0
        %v7510 = vperm.slane %v5062, 1
        %v7513 = vadd.f32 %v7506, %v7509
        %v7514 = vadd.f32 %v7507, %v7510
        %v7515 = vmax.f32 %v7513, 0.0
        %v7516 = vmax.f32 %v7514, 0.0
        %v7519 = vrot.slane %v7516, 6
        %v7520 = vsel %vm2173, %v7515, %v7519
        %v7521 = vsel %vm5007, %v7515, %v7519
        %v7522 = vrot.slane %v7521, 2
        %7525 = vst [vmem:[%s325] sm:$0xf] %v7520
        %7526 = vst [vmem:[%s325 + $0x4] sm:$0xf] %v7522
        %s7527 = sand.u32 %s225, 1
        %s7528 = scalar_lea.sflag [#allocation7], %s7527
        %s7529 = sand.u32 %s225, 1
        %s7530 = smul.addr %s7529, 8
        %s7531 = scalar_lea.vmem [#allocation6], %s7530
        // Predicated region
        $region57: #{outer_part_forward_impl.1} parent=55 // pred_check
          %p7532 = pneg %p235
        $region58: #{outer_part_forward_impl.1} parent=55 // pred_check_branch
          %7534 = sbr.rel (%p7532) target = $region60
        $region59: #{outer_part_forward_impl.1} parent=55 // pred_region
          %7536 = vsyncadd %s7528, 0
          %s7537 = smul.addr %s23, 4
          %s7538 = smul.addr %s7537, 2
          %s7539 = scalar_lea.hbm %s9, %s7538
          %s7540 = sshll.u32 %s7531, 4
          %s7541 = int_to_ptr.vmem [resolvable:$true] %s7540
          %s7542 = sshll.u32 %s7539, 4
          %s7543 = int_to_ptr.hbm [resolvable:$true] %s7542
          %7548 = dma.vmem_to_hbm [thread:$0]  %s7541, 128, %s7543, %s7528, 64, 64, 4
        $region60: #{outer_part_forward_impl.1} parent=55 // pred_fallthru
          _
      $region56: #{outer_part_forward_impl.1} parent=5 // pred_fallthru
        _
      %p7549 = scmp.le.s32.totalorder 2, %s18
      // Predicated region
      $region61: #{outer_part_forward_impl.1} parent=5 // pred_check
        %p7550 = pneg %p7549
      $region62: #{outer_part_forward_impl.1} parent=5 // pred_check_branch
        %7552 = sbr.rel (%p7550) target = $region64
      $region63: #{outer_part_forward_impl.1} parent=5 // pred_region
        %s7553 = ssub.s32 %s18, 2
        // Predicated region
        $region65: #{outer_part_forward_impl.1} parent=63 // pred_check
          %p7554 = pneg %p241
        $region66: #{outer_part_forward_impl.1} parent=63 // pred_check_branch
          %7556 = sbr.rel (%p7554) target = $region68
        $region67: #{outer_part_forward_impl.1} parent=63 // pred_region
          %s7557 = sand.u32 %s226, 1
          %s7558 = scalar_lea.sflag [#allocation7], %s7557
          %s7559 = sand.u32 %s226, 1
          %s7560 = smul.addr %s7559, 8
          %s7561 = scalar_lea.vmem [#allocation6], %s7560
          %7563 = dma.done %s7558, 128
        $region68: #{outer_part_forward_impl.1} parent=63 // pred_fallthru
          _
      $region64: #{outer_part_forward_impl.1} parent=5 // pred_fallthru
        _
    $region6: #{outer_part_forward_impl.1} parent=1 // loop_footer
      %s22 = sadd.s32 1, %s18
    $region7: #{outer_part_forward_impl.1} parent=1 // loop_footer_branch
      %17 = sbr.rel target = $region3
    $region8: #{outer_part_forward_impl.1} parent=1 // loop_exit
      _
    %7564 = vsyncpa [#allocation7], 1
    %s7565 = scalar_lea.sflag [#allocation7], 1
    %7566 = vsyncpa %s7565, 1

</llo_original>
